<compile_context>
chip_gen: v6e
topology: v6e:2x2x1
jax: 0.10.0
libtpu: 0.0.40
codegen_flags: <defaults>
</compile_context>

<pallas_src>
import jax
import jax.numpy as jnp
from jax.experimental import pallas as pl
from jax.experimental.pallas import tpu as pltpu


# ----------------------------------------------------------------------------
# Pallas kernels
# ----------------------------------------------------------------------------

def _conv1_pool_relu_add_kernel(p_ref, w_ref, b_ref, o_ref):
    """Fused conv1_a/conv1_b + maxpool2x2 + ReLU + add.

    p_ref : (8, 25, NT) bf16  im2col patches; group g = branch*4 + pool_phase,
                              lane n = batch*144 + pooled spatial (12x12)
    w_ref : (8, 10, 25) bf16  conv weights, replicated over the 4 pool phases
    b_ref : (2, 10, 1)  f32   per-branch conv bias
    o_ref : (10, NT)    bf16  relu(pool(conv_a)) + relu(pool(conv_b)); lane-dense
    """
    # ONE batched matmul: 8 x [(10,25) @ (25,NT)], NT large -> well amortized.
    z = jnp.einsum("gmk,gkn->gmn", w_ref[...], p_ref[...],
                   preferred_element_type=jnp.float32)            # (8, 10, NT)
    z = z.reshape(2, 4, 10, z.shape[-1])                           # leading dims only
    z = jnp.max(z, axis=1)                                         # maxpool = phase max
    z = jnp.maximum(z + b_ref[...], 0.0)                           # bias + ReLU (f32)
    o_ref[...] = (z[0] + z[1]).astype(o_ref.dtype)                 # branch add -> bf16


def _conv2_fc_head_kernel(p2_ref, w2_ref, b2_ref, w1_ref, b1_ref, wo_ref,
                          bo_ref, o_ref):
    """Fused conv2 + maxpool2x2 + LeakyReLU + fc1 + ReLU + fc2 + log_softmax.

    p2_ref : (4, 16, TB, 250) bf16  conv2 im2col patches (phase, pooled pos, batch, K)
    w2_ref : (250, 20)  bf16        conv2 weight (K = cin*25 + kh*5 + kw)
    b2_ref : (1, 1, 20) f32
    w1_ref : (16, 20, 50) bf16      fc1 weight split per pooled spatial position
    b1_ref : (1, 50)    f32
    wo_ref : (50, 10)   bf16        fc2 weight
    bo_ref : (1, 10)    f32
    o_ref  : (TB, 10)   f32         log-probabilities
    """
    tb = p2_ref.shape[2]

    # ONE big matmul replaces the previous 16x4 unrolled tiny dots.
    pf = p2_ref[...].reshape(4 * 16 * tb, 250)                     # sublane-aligned
    z = jnp.dot(pf, w2_ref[...], preferred_element_type=jnp.float32)  # (64*TB, 20)
    z = z.reshape(4, 16, tb, 20)
    z = jnp.max(z, axis=0)                                         # maxpool: (16, TB, 20)
    a = z + b2_ref[...]
    a = jnp.where(a >= 0.0, a, 0.01 * a)                           # LeakyReLU (default slope)

    # fc1 folded in per spatial position: batched matmul + reduction over positions.
    t = jnp.einsum("sbc,sco->sbo", a.astype(jnp.bfloat16), w1_ref[...],
                   preferred_element_type=jnp.float32)             # (16, TB, 50)
    h1 = jnp.maximum(jnp.sum(t, axis=0) + b1_ref[...], 0.0)        # fc1 bias + ReLU

    # TODO(synk): nn.Dropout is identity (eval mode); training-mode Bernoulli
    # mask via pltpu.prng_* not implemented.
    logits = jnp.dot(h1.astype(jnp.bfloat16), wo_ref[...],
                     preferred_element_type=jnp.float32) + bo_ref[...]
    m = jnp.max(logits, axis=1, keepdims=True)
    lse = m + jnp.log(jnp.sum(jnp.exp(logits - m), axis=1, keepdims=True))
    o_ref[...] = logits - lse


# ----------------------------------------------------------------------------
# pallas_call wrappers (batch-tiled "parallel" grid, weights broadcast)
# ----------------------------------------------------------------------------

_CPARAMS = pltpu.CompilerParams(dimension_semantics=("parallel",),
                                vmem_limit_bytes=32 * 1024 * 1024)


def _bcast(shape):
    return pl.BlockSpec(shape, lambda i: (0,) * len(shape))


def conv1_block(patches, packed, b_pad, tb):
    nt = tb * 144
    return pl.pallas_call(
        _conv1_pool_relu_add_kernel,
        out_shape=jax.ShapeDtypeStruct((10, b_pad * 144), jnp.bfloat16),
        grid=(b_pad // tb,),
        in_specs=[
            pl.BlockSpec((8, 25, nt), lambda i: (0, 0, i)),
            _bcast((8, 10, 25)),
            _bcast((2, 10, 1)),
        ],
        out_specs=pl.BlockSpec((10, nt), lambda i: (0, i)),
        compiler_params=_CPARAMS,
    )(patches, packed["w_conv1"], packed["b_conv1"])


def head_block(p2, packed, b_pad, tb):
    return pl.pallas_call(
        _conv2_fc_head_kernel,
        out_shape=jax.ShapeDtypeStruct((b_pad, 10), jnp.float32),
        grid=(b_pad // tb,),
        in_specs=[
            pl.BlockSpec((4, 16, tb, 250), lambda i: (0, 0, i, 0)),
            _bcast((250, 20)), _bcast((1, 1, 20)),
            _bcast((16, 20, 50)), _bcast((1, 50)),
            _bcast((50, 10)), _bcast((1, 10)),
        ],
        out_specs=pl.BlockSpec((tb, 10), lambda i: (i, 0)),
        compiler_params=_CPARAMS,
    )(p2, packed["w2"], packed["b2"], packed["fc1"], packed["b_fc1"],
      packed["fc2"], packed["b_fc2"])


# ----------------------------------------------------------------------------
# Plain-JAX glue: pool-phase patch extraction, one-time parameter packing
# ----------------------------------------------------------------------------

def conv1_phase_patches(x1, x2):
    """x1, x2: (B, 28, 28) f32 -> (8, 25, B*144) bf16.

    [br*4 + pi*2+pj, i*5+j, b*144 + oh*12 + ow] = x_br[b, 2*oh+pi+i, 2*ow+pj+j]
    """
    b = x1.shape[0]

    def one(x):
        full = jnp.stack([x[:, i:i + 24, j:j + 24]
                          for i in range(5) for j in range(5)], axis=0)  # (25,B,24,24)
        ph = jnp.stack([full[:, :, pi::2, pj::2]
                        for pi in (0, 1) for pj in (0, 1)], axis=0)      # (4,25,B,12,12)
        return ph.reshape(4, 25, b * 144)

    return jnp.concatenate([one(x1), one(x2)], axis=0).astype(jnp.bfloat16)


def conv2_phase_patches(act4):
    """act4: (10, B, 12, 12) bf16 -> (4, 16, B, 250) bf16.

    [pi*2+pj, h*4+w, b, c*25 + i*5 + j] = act4[c, b, 2*h + pi + i, 2*w + pj + j]
    """
    b = act4.shape[1]
    full = jnp.stack([act4[:, :, i:i + 8, j:j + 8]
                      for i in range(5) for j in range(5)], axis=0)      # (25,10,B,8,8)
    ph = jnp.stack([full[..., pi::2, pj::2]
                    for pi in (0, 1) for pj in (0, 1)], axis=0)          # (4,25,10,B,4,4)
    p = jnp.transpose(ph, (0, 4, 5, 3, 2, 1))                            # (4,4,4,B,10,25)
    return p.reshape(4, 16, b, 250).astype(jnp.bfloat16)


def init_params(key):
    """Deterministic synthetic parameters with PyTorch-convention shapes."""
    ks = jax.random.split(key, 10)

    def n(k, shape, scale):
        return (scale * jax.random.normal(k, shape)).astype(jnp.float32)

    return {
        "conv1_a_w": n(ks[0], (10, 1, 5, 5), 0.1),
        "conv1_a_b": n(ks[1], (10,), 0.1),
        "conv1_b_w": n(ks[2], (10, 1, 5, 5), 0.1),
        "conv1_b_b": n(ks[3], (10,), 0.1),
        "conv2_w": n(ks[4], (20, 10, 5, 5), 0.05),
        "conv2_b": n(ks[5], (20,), 0.05),
        "fc1_w": n(ks[6], (50, 320), 0.05),
        "fc1_b": n(ks[7], (50,), 0.05),
        "fc2_w": n(ks[8], (10, 50), 0.1),
        "fc2_b": n(ks[9], (10,), 0.1),
    }


def pack_params(p):
    """One-time layout packing (hoisted out of the per-step jitted graph)."""
    bf16, f32 = jnp.bfloat16, jnp.float32
    w1a = p["conv1_a_w"].reshape(10, 25)
    w1b = p["conv1_b_w"].reshape(10, 25)
    w_conv1 = jnp.concatenate([jnp.tile(w1a[None], (4, 1, 1)),
                               jnp.tile(w1b[None], (4, 1, 1))], axis=0)   # (8,10,25)
    b_conv1 = jnp.stack([p["conv1_a_b"].reshape(10, 1),
                         p["conv1_b_b"].reshape(10, 1)], axis=0)          # (2,10,1)
    fc1 = p["fc1_w"].reshape(50, 20, 4, 4)                                # (o, c, h, w)
    fc1 = jnp.transpose(fc1, (2, 3, 1, 0)).reshape(16, 20, 50)            # (h*4+w, c, o)
    return {
        "w_conv1": w_conv1.astype(bf16),
        "b_conv1": b_conv1.astype(f32),
        "w2":      p["conv2_w"].reshape(20, 250).T.astype(bf16),          # (250, 20)
        "b2":      p["conv2_b"].reshape(1, 1, 20).astype(f32),
        "fc1":     fc1.astype(bf16),                                      # (16, 20, 50)
        "b_fc1":   p["fc1_b"].reshape(1, 50).astype(f32),
        "fc2":     p["fc2_w"].T.astype(bf16),                             # (50, 10)
        "b_fc2":   p["fc2_b"].reshape(1, 10).astype(f32),
    }


# ----------------------------------------------------------------------------
# Forward pass
# ----------------------------------------------------------------------------

def _pick_tiling(batch):
    # TB multiple of 16 (keeps in-kernel bf16 sublane reshapes tile-aligned),
    # capped at 64 so double-buffered kernel-1 blocks (~7 MiB) fit the v5e /
    # v6e / v7x VMEM budgets with the 32 MiB scoped limit set above.
    tb = min(64, 16 * pl.cdiv(batch, 32))
    # Pad the batch so the "parallel" grid always has >= 2 steps -> both v7x
    # TensorCores are used (v5e/v6e: just an extra pipeline step).
    b_pad = tb * max(2, pl.cdiv(batch, tb))
    return tb, b_pad


@jax.jit
def model_forward(x1_nchw, x2_nchw, packed):
    b = x1_nchw.shape[0]
    tb, b_pad = _pick_tiling(b)

    x1 = x1_nchw.reshape(b, 28, 28).astype(jnp.float32)
    x2 = x2_nchw.reshape(b, 28, 28).astype(jnp.float32)
    if b_pad != b:   # zero-pad: padded rows stay finite and are sliced away
        pad = ((0, b_pad - b), (0, 0), (0, 0))
        x1 = jnp.pad(x1, pad)
        x2 = jnp.pad(x2, pad)

    # ---- kernel 1: conv1_a/conv1_b + maxpool + relu + add ------------------
    patches = conv1_phase_patches(x1, x2)            # (8, 25, B*144) bf16
    act = conv1_block(patches, packed, b_pad, tb)    # (10, B*144) bf16, lane-dense
    act4 = act.reshape(10, b_pad, 12, 12)

    # ---- kernel 2: conv2 + maxpool + leaky_relu + fc1 + relu + fc2 + logsm -
    p2 = conv2_phase_patches(act4)                   # (4, 16, B, 250) bf16
    out = head_block(p2, packed, b_pad, tb)          # (B_pad, 10) log-probs
    return out[:b]


# ----------------------------------------------------------------------------
# Pure-JAX reference (for validation only)
# ----------------------------------------------------------------------------

@jax.jit
def reference_forward(x1, x2, p):
    def conv(x, w, b):
        y = jax.lax.conv_general_dilated(
            x, w, (1, 1), "VALID", dimension_numbers=("NCHW", "OIHW", "NCHW"))
        return y + b.reshape(1, -1, 1, 1)

    def pool(x):
        return jax.lax.reduce_window(x, -jnp.inf, jax.lax.max,
                                     (1, 1, 2, 2), (1, 1, 2, 2), "VALID")

    a = jax.nn.relu(pool(conv(x1, p["conv1_a_w"], p["conv1_a_b"])))
    b = jax.nn.relu(pool(conv(x2, p["conv1_b_w"], p["conv1_b_b"])))
    x = a + b
    x = pool(conv(x, p["conv2_w"], p["conv2_b"]))
    x = jnp.where(x >= 0.0, x, 0.01 * x)
    x = x.reshape(x.shape[0], -1)
    x = jax.nn.relu(x @ p["fc1_w"].T + p["fc1_b"])
    x = x @ p["fc2_w"].T + p["fc2_b"]
    return jax.nn.log_softmax(x, axis=1)


# ----------------------------------------------------------------------------
# Driver
# ----------------------------------------------------------------------------

if __name__ == "__main__":
    key = jax.random.PRNGKey(0)
    k_params, k_x1, k_x2 = jax.random.split(key, 3)

    params = init_params(k_params)
    packed = pack_params(params)

    # fc1 expects 320 = 20 * 4 * 4 features, which pins the input to 1x28x28.
    x1 = jax.random.normal(k_x1, (2, 1, 28, 28), dtype=jnp.float32)
    x2 = jax.random.normal(k_x2, (2, 1, 28, 28), dtype=jnp.float32)

    out = jax.block_until_ready(model_forward(x1, x2, packed))
    ref = jax.block_until_ready(reference_forward(x1, x2, params))

    assert out.shape == (2, 10)
    # log-softmax rows must sum to 1 in probability space
    assert bool(jnp.all(jnp.abs(jnp.sum(jnp.exp(out), axis=1) - 1.0) < 1e-4))
    # match the f32 reference within bf16-matmul tolerance
    assert bool(jnp.max(jnp.abs(out - ref)) < 0.1), float(jnp.max(jnp.abs(out - ref)))
    print("KERNEL_OK")
</pallas_src>

<mosaic_0001>
module attributes {stable_mosaic.version = 11 : i64} {
  func.func @_conv1_pool_relu_add_kernel(%arg0: i32, %arg1: memref<8x25x2304xbf16, #tpu.memory_space<vmem>>, %arg2: memref<8x10x25xbf16, #tpu.memory_space<vmem>>, %arg3: memref<2x10x1xf32, #tpu.memory_space<vmem>>, %arg4: memref<10x2304xbf16, #tpu.memory_space<vmem>>) attributes {dimension_semantics = [#tpu.dimension_semantics<parallel>], iteration_bounds = array<i64: 2>, scalar_prefetch = 0 : i64, scratch_operands = 0 : i64, tpu.core_type = #tpu.core_type<tc>, window_params = [{transform_indices = @transform_0, window_bounds = array<i64: 8, 25, 2304>}, {pipeline_mode = #tpu.pipeline_mode<synchronous>, transform_indices = @transform_1, window_bounds = array<i64: 8, 10, 25>}, {pipeline_mode = #tpu.pipeline_mode<synchronous>, transform_indices = @transform_2, window_bounds = array<i64: 2, 10, 1>}, {transform_indices = @transform_3, window_bounds = array<i64: 10, 2304>}]} {
    %c0 = arith.constant 0 : index
    %c0_0 = arith.constant 0 : index
    %c0_1 = arith.constant 0 : index
    %0 = vector.load %arg2[%c0, %c0_0, %c0_1] : memref<8x10x25xbf16, #tpu.memory_space<vmem>>, vector<8x10x25xbf16>
    %c0_2 = arith.constant 0 : index
    %c0_3 = arith.constant 0 : index
    %c0_4 = arith.constant 0 : index
    %1 = vector.load %arg1[%c0_2, %c0_3, %c0_4] : memref<8x25x2304xbf16, #tpu.memory_space<vmem>>, vector<8x25x2304xbf16>
    "tpu.trace_start"() <{level = 10 : i32, message = "gmk,gkn->gmn"}> : () -> ()
    %cst = arith.constant dense<0.000000e+00> : vector<8x10x2304xf32>
    %2 = tpu.matmul %0, %1, %cst {dimension_numbers = #tpu.dot_dimension_numbers<[2], [1], [1], [2], [0, 0, 0, 1, 1, 2], [0], [0]>} : vector<8x10x25xbf16>, vector<8x25x2304xbf16>, vector<8x10x2304xf32> -> vector<8x10x2304xf32>
    "tpu.trace_stop"() : () -> ()
    %3 = vector.shape_cast %2 : vector<8x10x2304xf32> to vector<2x4x10x2304xf32>
    %cst_5 = arith.constant dense<0xFF800000> : vector<2x10x2304xf32>
    %4 = vector.multi_reduction <maximumf>, %3, %cst_5 [1] : vector<2x4x10x2304xf32> to vector<2x10x2304xf32>
    %c0_6 = arith.constant 0 : index
    %c0_7 = arith.constant 0 : index
    %c0_8 = arith.constant 0 : index
    %5 = vector.load %arg3[%c0_6, %c0_7, %c0_8] : memref<2x10x1xf32, #tpu.memory_space<vmem>>, vector<2x10x1xf32>
    %6 = vector.broadcast %5 : vector<2x10x1xf32> to vector<2x10x2304xf32>
    %7 = arith.addf %4, %6 : vector<2x10x2304xf32>
    %cst_9 = arith.constant 0.000000e+00 : f32
    %8 = vector.broadcast %cst_9 : f32 to vector<2x10x2304xf32>
    %9 = arith.maximumf %7, %8 : vector<2x10x2304xf32>
    %10 = vector.extract_strided_slice %9 {offsets = [0, 0, 0], sizes = [1, 10, 2304], strides = [1, 1, 1]} : vector<2x10x2304xf32> to vector<1x10x2304xf32>
    %11 = vector.shape_cast %10 : vector<1x10x2304xf32> to vector<10x2304xf32>
    %12 = vector.extract_strided_slice %9 {offsets = [1, 0, 0], sizes = [1, 10, 2304], strides = [1, 1, 1]} : vector<2x10x2304xf32> to vector<1x10x2304xf32>
    %13 = vector.shape_cast %12 : vector<1x10x2304xf32> to vector<10x2304xf32>
    %14 = arith.addf %11, %13 : vector<10x2304xf32>
    %15 = arith.truncf %14 : vector<10x2304xf32> to vector<10x2304xbf16>
    %c0_10 = arith.constant 0 : index
    %c0_11 = arith.constant 0 : index
    %16 = vector.load %arg4[%c0_10, %c0_11] : memref<10x2304xbf16, #tpu.memory_space<vmem>>, vector<10x2304xbf16>
    tpu.vector_store %arg4[%c0_10, %c0_11], %15 {strides = array<i32>} : memref<10x2304xbf16, #tpu.memory_space<vmem>>, vector<10x2304xbf16>,
    return
  }
  func.func @transform_0(%arg0: i32) -> (i32, i32, i32) {
    %c0_i32 = arith.constant 0 : i32
    %c0_i32_0 = arith.constant 0 : i32
    %c0_i32_1 = arith.constant 0 : i32
    return %c0_i32, %c0_i32_0, %arg0 : i32, i32, i32
  }
  func.func @transform_1(%arg0: i32) -> (i32, i32, i32) {
    %c0_i32 = arith.constant 0 : i32
    %c0_i32_0 = arith.constant 0 : i32
    %c0_i32_1 = arith.constant 0 : i32
    %c0_i32_2 = arith.constant 0 : i32
    return %c0_i32, %c0_i32_0, %c0_i32_1 : i32, i32, i32
  }
  func.func @transform_2(%arg0: i32) -> (i32, i32, i32) {
    %c0_i32 = arith.constant 0 : i32
    %c0_i32_0 = arith.constant 0 : i32
    %c0_i32_1 = arith.constant 0 : i32
    %c0_i32_2 = arith.constant 0 : i32
    return %c0_i32, %c0_i32_0, %c0_i32_1 : i32, i32, i32
  }
  func.func @transform_3(%arg0: i32) -> (i32, i32) {
    %c0_i32 = arith.constant 0 : i32
    %c0_i32_0 = arith.constant 0 : i32
    return %c0_i32, %arg0 : i32, i32
  }
}

module attributes {stable_mosaic.version = 11 : i64} {
  func.func @_conv2_fc_head_kernel(%arg0: i32, %arg1: memref<4x16x16x250xbf16, #tpu.memory_space<vmem>>, %arg2: memref<250x20xbf16, #tpu.memory_space<vmem>>, %arg3: memref<1x1x20xf32, #tpu.memory_space<vmem>>, %arg4: memref<16x20x50xbf16, #tpu.memory_space<vmem>>, %arg5: memref<1x50xf32, #tpu.memory_space<vmem>>, %arg6: memref<50x10xbf16, #tpu.memory_space<vmem>>, %arg7: memref<1x10xf32, #tpu.memory_space<vmem>>, %arg8: memref<16x10xf32, #tpu.memory_space<vmem>>) attributes {dimension_semantics = [#tpu.dimension_semantics<parallel>], iteration_bounds = array<i64: 2>, scalar_prefetch = 0 : i64, scratch_operands = 0 : i64, tpu.core_type = #tpu.core_type<tc>, window_params = [{transform_indices = @transform_0, window_bounds = array<i64: 4, 16, 16, 250>}, {pipeline_mode = #tpu.pipeline_mode<synchronous>, transform_indices = @transform_1, window_bounds = array<i64: 250, 20>}, {pipeline_mode = #tpu.pipeline_mode<synchronous>, transform_indices = @transform_2, window_bounds = array<i64: 1, 1, 20>}, {pipeline_mode = #tpu.pipeline_mode<synchronous>, transform_indices = @transform_3, window_bounds = array<i64: 16, 20, 50>}, {pipeline_mode = #tpu.pipeline_mode<synchronous>, transform_indices = @transform_4, window_bounds = array<i64: 1, 50>}, {pipeline_mode = #tpu.pipeline_mode<synchronous>, transform_indices = @transform_5, window_bounds = array<i64: 50, 10>}, {pipeline_mode = #tpu.pipeline_mode<synchronous>, transform_indices = @transform_6, window_bounds = array<i64: 1, 10>}, {transform_indices = @transform_7, window_bounds = array<i64: 16, 10>}]} {
    %c0 = arith.constant 0 : index
    %c0_0 = arith.constant 0 : index
    %c0_1 = arith.constant 0 : index
    %c0_2 = arith.constant 0 : index
    %0 = vector.load %arg1[%c0, %c0_0, %c0_1, %c0_2] : memref<4x16x16x250xbf16, #tpu.memory_space<vmem>>, vector<4x16x16x250xbf16>
    %1 = vector.shape_cast %0 : vector<4x16x16x250xbf16> to vector<1024x250xbf16>
    %c0_3 = arith.constant 0 : index
    %c0_4 = arith.constant 0 : index
    %2 = vector.load %arg2[%c0_3, %c0_4] : memref<250x20xbf16, #tpu.memory_space<vmem>>, vector<250x20xbf16>
    %cst = arith.constant dense<0.000000e+00> : vector<1024x20xf32>
    %3 = tpu.matmul %1, %2, %cst {dimension_numbers = #tpu.dot_dimension_numbers<[1], [0], [0], [1], [0, 0, 1, 1], [], []>} : vector<1024x250xbf16>, vector<250x20xbf16>, vector<1024x20xf32> -> vector<1024x20xf32>
    %4 = vector.shape_cast %3 : vector<1024x20xf32> to vector<4x16x16x20xf32>
    %cst_5 = arith.constant dense<0xFF800000> : vector<16x16x20xf32>
    %5 = vector.multi_reduction <maximumf>, %4, %cst_5 [0] : vector<4x16x16x20xf32> to vector<16x16x20xf32>
    %c0_6 = arith.constant 0 : index
    %c0_7 = arith.constant 0 : index
    %c0_8 = arith.constant 0 : index
    %6 = vector.load %arg3[%c0_6, %c0_7, %c0_8] : memref<1x1x20xf32, #tpu.memory_space<vmem>>, vector<1x1x20xf32>
    %7 = vector.broadcast %6 : vector<1x1x20xf32> to vector<16x16x20xf32>
    %8 = arith.addf %5, %7 : vector<16x16x20xf32>
    %cst_9 = arith.constant 0.000000e+00 : f32
    %9 = vector.broadcast %cst_9 : f32 to vector<16x16x20xf32>
    %10 = arith.cmpf oge, %8, %9 : vector<16x16x20xf32>
    %cst_10 = arith.constant 0.00999999977 : f32
    %11 = vector.broadcast %cst_10 : f32 to vector<16x16x20xf32>
    %12 = arith.mulf %11, %8 : vector<16x16x20xf32>
    %13 = arith.select %10, %8, %12 : vector<16x16x20xi1>, vector<16x16x20xf32>
    %14 = arith.truncf %13 : vector<16x16x20xf32> to vector<16x16x20xbf16>
    %c0_11 = arith.constant 0 : index
    %c0_12 = arith.constant 0 : index
    %c0_13 = arith.constant 0 : index
    %15 = vector.load %arg4[%c0_11, %c0_12, %c0_13] : memref<16x20x50xbf16, #tpu.memory_space<vmem>>, vector<16x20x50xbf16>
    "tpu.trace_start"() <{level = 10 : i32, message = "sbc,sco->sbo"}> : () -> ()
    %cst_14 = arith.constant dense<0.000000e+00> : vector<16x16x50xf32>
    %16 = tpu.matmul %14, %15, %cst_14 {dimension_numbers = #tpu.dot_dimension_numbers<[2], [1], [1], [2], [0, 0, 0, 1, 1, 2], [0], [0]>} : vector<16x16x20xbf16>, vector<16x20x50xbf16>, vector<16x16x50xf32> -> vector<16x16x50xf32>
    "tpu.trace_stop"() : () -> ()
    %cst_15 = arith.constant dense<0.000000e+00> : vector<16x50xf32>
    %17 = vector.multi_reduction <add>, %16, %cst_15 [0] : vector<16x16x50xf32> to vector<16x50xf32>
    %c0_16 = arith.constant 0 : index
    %c0_17 = arith.constant 0 : index
    %18 = vector.load %arg5[%c0_16, %c0_17] : memref<1x50xf32, #tpu.memory_space<vmem>>, vector<1x50xf32>
    %19 = vector.broadcast %18 : vector<1x50xf32> to vector<16x50xf32>
    %20 = arith.addf %17, %19 : vector<16x50xf32>
    %cst_18 = arith.constant 0.000000e+00 : f32
    %21 = vector.broadcast %cst_18 : f32 to vector<16x50xf32>
    %22 = arith.maximumf %20, %21 : vector<16x50xf32>
    %23 = arith.truncf %22 : vector<16x50xf32> to vector<16x50xbf16>
    %c0_19 = arith.constant 0 : index
    %c0_20 = arith.constant 0 : index
    %24 = vector.load %arg6[%c0_19, %c0_20] : memref<50x10xbf16, #tpu.memory_space<vmem>>, vector<50x10xbf16>
    %cst_21 = arith.constant dense<0.000000e+00> : vector<16x10xf32>
    %25 = tpu.matmul %23, %24, %cst_21 {dimension_numbers = #tpu.dot_dimension_numbers<[1], [0], [0], [1], [0, 0, 1, 1], [], []>} : vector<16x50xbf16>, vector<50x10xbf16>, vector<16x10xf32> -> vector<16x10xf32>
    %c0_22 = arith.constant 0 : index
    %c0_23 = arith.constant 0 : index
    %26 = vector.load %arg7[%c0_22, %c0_23] : memref<1x10xf32, #tpu.memory_space<vmem>>, vector<1x10xf32>
    %27 = vector.broadcast %26 : vector<1x10xf32> to vector<16x10xf32>
    %28 = arith.addf %25, %27 : vector<16x10xf32>
    %cst_24 = arith.constant dense<0xFF800000> : vector<16xf32>
    %29 = vector.multi_reduction <maximumf>, %28, %cst_24 [1] : vector<16x10xf32> to vector<16xf32>
    %30 = vector.shape_cast %29 : vector<16xf32> to vector<16x1xf32>
    %31 = vector.broadcast %30 : vector<16x1xf32> to vector<16x10xf32>
    %32 = arith.subf %28, %31 : vector<16x10xf32>
    %33 = math.exp %32 : vector<16x10xf32>
    %cst_25 = arith.constant dense<0.000000e+00> : vector<16xf32>
    %34 = vector.multi_reduction <add>, %33, %cst_25 [1] : vector<16x10xf32> to vector<16xf32>
    %35 = vector.shape_cast %34 : vector<16xf32> to vector<16x1xf32>
    %36 = math.log %35 : vector<16x1xf32>
    %37 = arith.addf %30, %36 : vector<16x1xf32>
    %38 = vector.broadcast %37 : vector<16x1xf32> to vector<16x10xf32>
    %39 = arith.subf %28, %38 : vector<16x10xf32>
    %c0_26 = arith.constant 0 : index
    %c0_27 = arith.constant 0 : index
    %40 = vector.load %arg8[%c0_26, %c0_27] : memref<16x10xf32, #tpu.memory_space<vmem>>, vector<16x10xf32>
    tpu.vector_store %arg8[%c0_26, %c0_27], %39 {strides = array<i32>} : memref<16x10xf32, #tpu.memory_space<vmem>>, vector<16x10xf32>,
    return
  }
  func.func @transform_0(%arg0: i32) -> (i32, i32, i32, i32) {
    %c0_i32 = arith.constant 0 : i32
    %c0_i32_0 = arith.constant 0 : i32
    %c0_i32_1 = arith.constant 0 : i32
    %c0_i32_2 = arith.constant 0 : i32
    return %c0_i32, %c0_i32_0, %arg0, %c0_i32_1 : i32, i32, i32, i32
  }
  func.func @transform_1(%arg0: i32) -> (i32, i32) {
    %c0_i32 = arith.constant 0 : i32
    %c0_i32_0 = arith.constant 0 : i32
    %c0_i32_1 = arith.constant 0 : i32
    return %c0_i32, %c0_i32_0 : i32, i32
  }
  func.func @transform_2(%arg0: i32) -> (i32, i32, i32) {
    %c0_i32 = arith.constant 0 : i32
    %c0_i32_0 = arith.constant 0 : i32
    %c0_i32_1 = arith.constant 0 : i32
    %c0_i32_2 = arith.constant 0 : i32
    return %c0_i32, %c0_i32_0, %c0_i32_1 : i32, i32, i32
  }
  func.func @transform_3(%arg0: i32) -> (i32, i32, i32) {
    %c0_i32 = arith.constant 0 : i32
    %c0_i32_0 = arith.constant 0 : i32
    %c0_i32_1 = arith.constant 0 : i32
    %c0_i32_2 = arith.constant 0 : i32
    return %c0_i32, %c0_i32_0, %c0_i32_1 : i32, i32, i32
  }
  func.func @transform_4(%arg0: i32) -> (i32, i32) {
    %c0_i32 = arith.constant 0 : i32
    %c0_i32_0 = arith.constant 0 : i32
    %c0_i32_1 = arith.constant 0 : i32
    return %c0_i32, %c0_i32_0 : i32, i32
  }
  func.func @transform_5(%arg0: i32) -> (i32, i32) {
    %c0_i32 = arith.constant 0 : i32
    %c0_i32_0 = arith.constant 0 : i32
    %c0_i32_1 = arith.constant 0 : i32
    return %c0_i32, %c0_i32_0 : i32, i32
  }
  func.func @transform_6(%arg0: i32) -> (i32, i32) {
    %c0_i32 = arith.constant 0 : i32
    %c0_i32_0 = arith.constant 0 : i32
    %c0_i32_1 = arith.constant 0 : i32
    return %c0_i32, %c0_i32_0 : i32, i32
  }
  func.func @transform_7(%arg0: i32) -> (i32, i32) {
    %c0_i32 = arith.constant 0 : i32
    %c0_i32_0 = arith.constant 0 : i32
    return %arg0, %c0_i32 : i32, i32
  }
}

</mosaic_0001>

<llo_original>
// kernel: model_forward.2
$region0: #{model_forward.2}
  #allocation0 [shape = 'u32[]', space=smem, size = 0x4, offset = 0x4, fixed_abs, tag = 'smem constant byte address 0x4 - core index']
  #allocation1 [shape = 'u32[144,128]{1,0:T(1,128)}', space=vmem, size = 0x12000, scoped, tag = 'internal scratch']
  %s0 = inlined_call_operand.vmem [shape: bf16[8,25,4608], index: 0, kind: input, shape index: {}]
  %s1 = inlined_call_operand.vmem [shape: bf16[8,10,25], index: 1, kind: input, shape index: {}]
  %s2 = inlined_call_operand.vmem [shape: f32[2,10,1], index: 2, kind: input, shape index: {}]
  %s3 = inlined_call_operand.vmem [shape: bf16[10,4608], index: 3, kind: output, shape index: {}]
  %s4 = sld [smem:[#allocation0]]
  $region87: #{model_forward.2} parent=0
    _
  %s6 = ssub.s32 1, %s4
  %s7 = scalar_select 0, %s6, %s4
  $region1: #{model_forward.2} parent=0
    #allocation2 [shape = 'u8[2359296]{0}', space=vmem, size = 0x240000, scoped, tag = 'input window, operand 0']
    #allocation3 [shape = 'u8[147456]{0}', space=vmem, size = 0x24000, scoped, tag = 'output window, operand 0']
    loop: start=0, step=1, limit=4
    $region2: #{model_forward.2} parent=1 // loop_pre_header
      _
    $region3: #{model_forward.2} parent=1 // loop_header
      %s9 = sphi 0, %s13
      %p10 = scmp.ge.s32.totalorder %s9, 4
      %s19 = sphi 0, %s21
      %s22 = sphi 0, %s19
      %s23 = sphi 0, %s22
      %s39 = sphi 0, %s23
      %s43 = sphi 0, %s43
      %s45 = sphi 0, %s43
      %s46 = sphi 0, %s45
      %s60 = sphi 0, %s46
      %s64 = sphi 0, %s64
      %s66 = sphi 0, %s64
      %s67 = sphi 0, %s66
      %s81 = sphi 0, %s67
      %s87 = sphi 0, %s89
      %s90 = sphi 0, %s87
      %s91 = sphi 0, %s90
      %s107 = sphi 0, %s91
    $region4: #{model_forward.2} parent=1 // loop_header_branch
      %12 = sbr.rel (%p10) target = $region8
    $region5: #{model_forward.2} parent=1 // loop_body
      %s14 = ssub.s32 %s9, 1
      %s15 = ssub.s32 %s9, 2
      %s16 = sadd.s32 %s9, 1
      %s17 = ssub.s32 %s9, %s16
      %p18 = scmp.eq.s32.totalorder %s17, 0
      %s20 = sadd.s32 %s19, 1
      %s21 = scalar_select %p18, %s19, %s20
      %p24 = pneg %p18
      %p25 = scmp.eq.s32.totalorder %s9, 1
      %p26 = por %p24, %p25
      %p27 = scmp.ne.s32.totalorder %s19, %s22
      %p28 = scmp.eq.s32.totalorder %s9, 0
      %p29 = por %p27, %p28
      %p30 = scmp.ne.s32.totalorder %s19, %s22
      %p31 = scmp.eq.s32.totalorder %s14, 1
      %p32 = por %p30, %p31
      %p33 = scmp.ne.s32.totalorder %s22, %s23
      %p34 = scmp.eq.s32.totalorder %s14, 0
      %p35 = por %p33, %p34
      %p36 = scmp.ne.s32.totalorder %s22, %s23
      %p37 = scmp.eq.s32.totalorder %s15, 1
      %p38 = por %p36, %p37
      %p40 = scmp.ne.s32.totalorder %s23, %s39
      %p41 = scmp.eq.s32.totalorder %s15, 0
      %p42 = por %p40, %p41
      %s44 = sadd.s32 %s43, 1
      %p47 = scmp.eq.s32.totalorder %s9, 1
      %p48 = scmp.ne.s32.totalorder %s43, %s45
      %p49 = scmp.eq.s32.totalorder %s9, 0
      %p50 = por %p48, %p49
      %p51 = scmp.ne.s32.totalorder %s43, %s45
      %p52 = scmp.eq.s32.totalorder %s14, 1
      %p53 = por %p51, %p52
      %p54 = scmp.ne.s32.totalorder %s45, %s46
      %p55 = scmp.eq.s32.totalorder %s14, 0
      %p56 = por %p54, %p55
      %p57 = scmp.ne.s32.totalorder %s45, %s46
      %p58 = scmp.eq.s32.totalorder %s15, 1
      %p59 = por %p57, %p58
      %p61 = scmp.ne.s32.totalorder %s46, %s60
      %p62 = scmp.eq.s32.totalorder %s15, 0
      %p63 = por %p61, %p62
      %s65 = sadd.s32 %s64, 1
      %p68 = scmp.eq.s32.totalorder %s9, 1
      %p69 = scmp.ne.s32.totalorder %s64, %s66
      %p70 = scmp.eq.s32.totalorder %s9, 0
      %p71 = por %p69, %p70
      %p72 = scmp.ne.s32.totalorder %s64, %s66
      %p73 = scmp.eq.s32.totalorder %s14, 1
      %p74 = por %p72, %p73
      %p75 = scmp.ne.s32.totalorder %s66, %s67
      %p76 = scmp.eq.s32.totalorder %s14, 0
      %p77 = por %p75, %p76
      %p78 = scmp.ne.s32.totalorder %s66, %s67
      %p79 = scmp.eq.s32.totalorder %s15, 1
      %p80 = por %p78, %p79
      %p82 = scmp.ne.s32.totalorder %s67, %s81
      %p83 = scmp.eq.s32.totalorder %s15, 0
      %p84 = por %p82, %p83
      %s85 = ssub.s32 %s9, %s16
      %p86 = scmp.eq.s32.totalorder %s85, 0
      %s88 = sadd.s32 %s87, 1
      %s89 = scalar_select %p86, %s87, %s88
      %p92 = pneg %p86
      %p93 = scmp.eq.s32.totalorder %s9, 1
      %p94 = por %p92, %p93
      %p95 = scmp.ne.s32.totalorder %s87, %s90
      %p96 = scmp.eq.s32.totalorder %s9, 0
      %p97 = por %p95, %p96
      %p98 = scmp.ne.s32.totalorder %s87, %s90
      %p99 = scmp.eq.s32.totalorder %s14, 1
      %p100 = por %p98, %p99
      %p101 = scmp.ne.s32.totalorder %s90, %s91
      %p102 = scmp.eq.s32.totalorder %s14, 0
      %p103 = por %p101, %p102
      %p104 = scmp.ne.s32.totalorder %s90, %s91
      %p105 = scmp.eq.s32.totalorder %s15, 1
      %p106 = por %p104, %p105
      %p108 = scmp.ne.s32.totalorder %s91, %s107
      %p109 = scmp.eq.s32.totalorder %s15, 0
      %p110 = por %p108, %p109
      %p111 = scmp.le.s32.totalorder 1, %s9
      %p112 = scmp.lt.s32.totalorder %s9, 3
      %p113 = pnand %p111, %p112
      %p114 = pneg %p113
      // Predicated region
      $region9: #{model_forward.2} parent=5 // pred_check
        _
      $region10: #{model_forward.2} parent=5 // pred_check_branch
        %116 = sbr.rel (%p113) target = $region12
      $region11: #{model_forward.2} parent=5 // pred_region
        %s117 = ssub.s32 %s9, 1
        // Predicated region
        $region13: #{model_forward.2} parent=11 // pred_check
          %p118 = pneg %p56
        $region14: #{model_forward.2} parent=11 // pred_check_branch
          %120 = sbr.rel (%p118) target = $region16
        $region15: #{model_forward.2} parent=11 // pred_region
          _
        $region16: #{model_forward.2} parent=11 // pred_fallthru
          _
        // Predicated region
        $region17: #{model_forward.2} parent=11 // pred_check
          %p121 = pneg %p77
        $region18: #{model_forward.2} parent=11 // pred_check_branch
          %123 = sbr.rel (%p121) target = $region20
        $region19: #{model_forward.2} parent=11 // pred_region
          _
        $region20: #{model_forward.2} parent=11 // pred_fallthru
          _
      $region12: #{model_forward.2} parent=5 // pred_fallthru
        _
      %p124 = scmp.lt.s32.totalorder %s9, 2
      // Predicated region
      $region21: #{model_forward.2} parent=5 // pred_check
        %p125 = pneg %p124
      $region22: #{model_forward.2} parent=5 // pred_check_branch
        %127 = sbr.rel (%p125) target = $region24
      $region23: #{model_forward.2} parent=5 // pred_region
        // Predicated region
        $region25: #{model_forward.2} parent=23 // pred_check
          %p128 = pneg %p29
        $region26: #{model_forward.2} parent=23 // pred_check_branch
          %130 = sbr.rel (%p128) target = $region28
        $region27: #{model_forward.2} parent=23 // pred_region
          %s131 = sand.u32 %s19, 1
          %s132 = sand.u32 %s19, 1
          %s133 = smul.addr %s132, 2304
          %s134 = scalar_lea.vmem [#allocation2], %s133
          %s135 = smul.u32 18, %s9
          %s136 = smul.addr %s135, 4
          %s137 = scalar_lea.vmem %s0, %s136
          // Predicated region
          $region29: #{model_forward.2} parent=27 // pred_check
            _
          $region30: #{model_forward.2} parent=27 // pred_check_branch
            %139 = sbr.rel (0) target = $region32
          $region31: #{model_forward.2} parent=27 // pred_region
            // Predicated region
            $region33: #{model_forward.2} parent=31 // pred_check
              _
            $region34: #{model_forward.2} parent=31 // pred_check_branch
              %141 = sbr.rel (0) target = $region36
            $region35: #{model_forward.2} parent=31 // pred_region
              loop: start=0, step=1, limit=1
              $region37: #{model_forward.2} parent=35 // loop_pre_header
                _
              $region38: #{model_forward.2} parent=35 // loop_header
                %s143 = sphi 0, %s147
                %p144 = scmp.ge.s32.totalorder %s143, 1
                %s148 = sphi %s137, %s137
                %s149 = sphi %s134, %s134
              $region39: #{model_forward.2} parent=35 // loop_header_branch
                %146 = sbr.rel (%p144) target = $region43
              $region40: #{model_forward.2} parent=35 // loop_body
                %v150 = vld [vmem:[%s148] sm:$0xff]
                %151 = vst [vmem:[%s149] sm:$0xff] %v150
                %v152 = vld [vmem:[%s148 + $0x8] sm:$0xff]
                %153 = vst [vmem:[%s149 + $0x8] sm:$0xff] %v152
                %v154 = vld [vmem:[%s148 + $0x10] sm:$0xff]
                %155 = vst [vmem:[%s149 + $0x10] sm:$0xff] %v154
                %v156 = vld [vmem:[%s148 + $0x18] sm:$0xff]
                %157 = vst [vmem:[%s149 + $0x18] sm:$0xff] %v156
                %v158 = vld [vmem:[%s148 + $0x20] sm:$0xff]
                %159 = vst [vmem:[%s149 + $0x20] sm:$0xff] %v158
                %v160 = vld [vmem:[%s148 + $0x28] sm:$0xff]
                %161 = vst [vmem:[%s149 + $0x28] sm:$0xff] %v160
                %v162 = vld [vmem:[%s148 + $0x30] sm:$0xff]
                %163 = vst [vmem:[%s149 + $0x30] sm:$0xff] %v162
                %v164 = vld [vmem:[%s148 + $0x38] sm:$0xff]
                %165 = vst [vmem:[%s149 + $0x38] sm:$0xff] %v164
                %v166 = vld [vmem:[%s148 + $0x40] sm:$0xff]
                %167 = vst [vmem:[%s149 + $0x40] sm:$0xff] %v166
                %v168 = vld [vmem:[%s148 + $0x90] sm:$0xff]
                %169 = vst [vmem:[%s149 + $0x48] sm:$0xff] %v168
                %v170 = vld [vmem:[%s148 + $0x98] sm:$0xff]
                %171 = vst [vmem:[%s149 + $0x50] sm:$0xff] %v170
                %v172 = vld [vmem:[%s148 + $0xa0] sm:$0xff]
                %173 = vst [vmem:[%s149 + $0x58] sm:$0xff] %v172
                %v174 = vld [vmem:[%s148 + $0xa8] sm:$0xff]
                %175 = vst [vmem:[%s149 + $0x60] sm:$0xff] %v174
                %v176 = vld [vmem:[%s148 + $0xb0] sm:$0xff]
                %177 = vst [vmem:[%s149 + $0x68] sm:$0xff] %v176
                %v178 = vld [vmem:[%s148 + $0xb8] sm:$0xff]
                %179 = vst [vmem:[%s149 + $0x70] sm:$0xff] %v178
                %v180 = vld [vmem:[%s148 + $0xc0] sm:$0xff]
                %181 = vst [vmem:[%s149 + $0x78] sm:$0xff] %v180
                %v182 = vld [vmem:[%s148 + $0xc8] sm:$0xff]
                %183 = vst [vmem:[%s149 + $0x80] sm:$0xff] %v182
                %v184 = vld [vmem:[%s148 + $0xd0] sm:$0xff]
                %185 = vst [vmem:[%s149 + $0x88] sm:$0xff] %v184
                %v186 = vld [vmem:[%s148 + $0x120] sm:$0xff]
                %187 = vst [vmem:[%s149 + $0x90] sm:$0xff] %v186
                %v188 = vld [vmem:[%s148 + $0x128] sm:$0xff]
                %189 = vst [vmem:[%s149 + $0x98] sm:$0xff] %v188
                %v190 = vld [vmem:[%s148 + $0x130] sm:$0xff]
                %191 = vst [vmem:[%s149 + $0xa0] sm:$0xff] %v190
                %v192 = vld [vmem:[%s148 + $0x138] sm:$0xff]
                %193 = vst [vmem:[%s149 + $0xa8] sm:$0xff] %v192
                %v194 = vld [vmem:[%s148 + $0x140] sm:$0xff]
                %195 = vst [vmem:[%s149 + $0xb0] sm:$0xff] %v194
                %v196 = vld [vmem:[%s148 + $0x148] sm:$0xff]
                %197 = vst [vmem:[%s149 + $0xb8] sm:$0xff] %v196
                %v198 = vld [vmem:[%s148 + $0x150] sm:$0xff]
                %199 = vst [vmem:[%s149 + $0xc0] sm:$0xff] %v198
                %v200 = vld [vmem:[%s148 + $0x158] sm:$0xff]
                %201 = vst [vmem:[%s149 + $0xc8] sm:$0xff] %v200
                %v202 = vld [vmem:[%s148 + $0x160] sm:$0xff]
                %203 = vst [vmem:[%s149 + $0xd0] sm:$0xff] %v202
                %v204 = vld [vmem:[%s148 + $0x1b0] sm:$0xff]
                %205 = vst [vmem:[%s149 + $0xd8] sm:$0xff] %v204
                %v206 = vld [vmem:[%s148 + $0x1b8] sm:$0xff]
                %207 = vst [vmem:[%s149 + $0xe0] sm:$0xff] %v206
                %v208 = vld [vmem:[%s148 + $0x1c0] sm:$0xff]
                %209 = vst [vmem:[%s149 + $0xe8] sm:$0xff] %v208
                %v210 = vld [vmem:[%s148 + $0x1c8] sm:$0xff]
                %211 = vst [vmem:[%s149 + $0xf0] sm:$0xff] %v210
                %v212 = vld [vmem:[%s148 + $0x1d0] sm:$0xff]
                %213 = vst [vmem:[%s149 + $0xf8] sm:$0xff] %v212
                %v214 = vld [vmem:[%s148 + $0x1d8] sm:$0xff]
                %215 = vst [vmem:[%s149 + $0x100] sm:$0xff] %v214
                %v216 = vld [vmem:[%s148 + $0x1e0] sm:$0xff]
                %217 = vst [vmem:[%s149 + $0x108] sm:$0xff] %v216
                %v218 = vld [vmem:[%s148 + $0x1e8] sm:$0xff]
                %219 = vst [vmem:[%s149 + $0x110] sm:$0xff] %v218
                %v220 = vld [vmem:[%s148 + $0x1f0] sm:$0xff]
                %221 = vst [vmem:[%s149 + $0x118] sm:$0xff] %v220
                %v222 = vld [vmem:[%s148 + $0x240] sm:$0xff]
                %223 = vst [vmem:[%s149 + $0x120] sm:$0xff] %v222
                %v224 = vld [vmem:[%s148 + $0x248] sm:$0xff]
                %225 = vst [vmem:[%s149 + $0x128] sm:$0xff] %v224
                %v226 = vld [vmem:[%s148 + $0x250] sm:$0xff]
                %227 = vst [vmem:[%s149 + $0x130] sm:$0xff] %v226
                %v228 = vld [vmem:[%s148 + $0x258] sm:$0xff]
                %229 = vst [vmem:[%s149 + $0x138] sm:$0xff] %v228
                %v230 = vld [vmem:[%s148 + $0x260] sm:$0xff]
                %231 = vst [vmem:[%s149 + $0x140] sm:$0xff] %v230
                %v232 = vld [vmem:[%s148 + $0x268] sm:$0xff]
                %233 = vst [vmem:[%s149 + $0x148] sm:$0xff] %v232
                %v234 = vld [vmem:[%s148 + $0x270] sm:$0xff]
                %235 = vst [vmem:[%s149 + $0x150] sm:$0xff] %v234
                %v236 = vld [vmem:[%s148 + $0x278] sm:$0xff]
                %237 = vst [vmem:[%s149 + $0x158] sm:$0xff] %v236
                %v238 = vld [vmem:[%s148 + $0x280] sm:$0xff]
                %239 = vst [vmem:[%s149 + $0x160] sm:$0xff] %v238
                %v240 = vld [vmem:[%s148 + $0x2d0] sm:$0xff]
                %241 = vst [vmem:[%s149 + $0x168] sm:$0xff] %v240
                %v242 = vld [vmem:[%s148 + $0x2d8] sm:$0xff]
                %243 = vst [vmem:[%s149 + $0x170] sm:$0xff] %v242
                %v244 = vld [vmem:[%s148 + $0x2e0] sm:$0xff]
                %245 = vst [vmem:[%s149 + $0x178] sm:$0xff] %v244
                %v246 = vld [vmem:[%s148 + $0x2e8] sm:$0xff]
                %247 = vst [vmem:[%s149 + $0x180] sm:$0xff] %v246
                %v248 = vld [vmem:[%s148 + $0x2f0] sm:$0xff]
                %249 = vst [vmem:[%s149 + $0x188] sm:$0xff] %v248
                %v250 = vld [vmem:[%s148 + $0x2f8] sm:$0xff]
                %251 = vst [vmem:[%s149 + $0x190] sm:$0xff] %v250
                %v252 = vld [vmem:[%s148 + $0x300] sm:$0xff]
                %253 = vst [vmem:[%s149 + $0x198] sm:$0xff] %v252
                %v254 = vld [vmem:[%s148 + $0x308] sm:$0xff]
                %255 = vst [vmem:[%s149 + $0x1a0] sm:$0xff] %v254
                %v256 = vld [vmem:[%s148 + $0x310] sm:$0xff]
                %257 = vst [vmem:[%s149 + $0x1a8] sm:$0xff] %v256
                %v258 = vld [vmem:[%s148 + $0x360] sm:$0xff]
                %259 = vst [vmem:[%s149 + $0x1b0] sm:$0xff] %v258
                %v260 = vld [vmem:[%s148 + $0x368] sm:$0xff]
                %261 = vst [vmem:[%s149 + $0x1b8] sm:$0xff] %v260
                %v262 = vld [vmem:[%s148 + $0x370] sm:$0xff]
                %263 = vst [vmem:[%s149 + $0x1c0] sm:$0xff] %v262
                %v264 = vld [vmem:[%s148 + $0x378] sm:$0xff]
                %265 = vst [vmem:[%s149 + $0x1c8] sm:$0xff] %v264
                %v266 = vld [vmem:[%s148 + $0x380] sm:$0xff]
                %267 = vst [vmem:[%s149 + $0x1d0] sm:$0xff] %v266
                %v268 = vld [vmem:[%s148 + $0x388] sm:$0xff]
                %269 = vst [vmem:[%s149 + $0x1d8] sm:$0xff] %v268
                %v270 = vld [vmem:[%s148 + $0x390] sm:$0xff]
                %271 = vst [vmem:[%s149 + $0x1e0] sm:$0xff] %v270
                %v272 = vld [vmem:[%s148 + $0x398] sm:$0xff]
                %273 = vst [vmem:[%s149 + $0x1e8] sm:$0xff] %v272
                %v274 = vld [vmem:[%s148 + $0x3a0] sm:$0xff]
                %275 = vst [vmem:[%s149 + $0x1f0] sm:$0xff] %v274
                %v276 = vld [vmem:[%s148 + $0x3f0] sm:$0xff]
                %277 = vst [vmem:[%s149 + $0x1f8] sm:$0xff] %v276
                %v278 = vld [vmem:[%s148 + $0x3f8] sm:$0xff]
                %279 = vst [vmem:[%s149 + $0x200] sm:$0xff] %v278
                %v280 = vld [vmem:[%s148 + $0x400] sm:$0xff]
                %281 = vst [vmem:[%s149 + $0x208] sm:$0xff] %v280
                %v282 = vld [vmem:[%s148 + $0x408] sm:$0xff]
                %283 = vst [vmem:[%s149 + $0x210] sm:$0xff] %v282
                %v284 = vld [vmem:[%s148 + $0x410] sm:$0xff]
                %285 = vst [vmem:[%s149 + $0x218] sm:$0xff] %v284
                %v286 = vld [vmem:[%s148 + $0x418] sm:$0xff]
                %287 = vst [vmem:[%s149 + $0x220] sm:$0xff] %v286
                %v288 = vld [vmem:[%s148 + $0x420] sm:$0xff]
                %289 = vst [vmem:[%s149 + $0x228] sm:$0xff] %v288
                %v290 = vld [vmem:[%s148 + $0x428] sm:$0xff]
                %291 = vst [vmem:[%s149 + $0x230] sm:$0xff] %v290
                %v292 = vld [vmem:[%s148 + $0x430] sm:$0xff]
                %293 = vst [vmem:[%s149 + $0x238] sm:$0xff] %v292
                %v294 = vld [vmem:[%s148 + $0x480] sm:$0xff]
                %295 = vst [vmem:[%s149 + $0x240] sm:$0xff] %v294
                %v296 = vld [vmem:[%s148 + $0x488] sm:$0xff]
                %297 = vst [vmem:[%s149 + $0x248] sm:$0xff] %v296
                %v298 = vld [vmem:[%s148 + $0x490] sm:$0xff]
                %299 = vst [vmem:[%s149 + $0x250] sm:$0xff] %v298
                %v300 = vld [vmem:[%s148 + $0x498] sm:$0xff]
                %301 = vst [vmem:[%s149 + $0x258] sm:$0xff] %v300
                %v302 = vld [vmem:[%s148 + $0x4a0] sm:$0xff]
                %303 = vst [vmem:[%s149 + $0x260] sm:$0xff] %v302
                %v304 = vld [vmem:[%s148 + $0x4a8] sm:$0xff]
                %305 = vst [vmem:[%s149 + $0x268] sm:$0xff] %v304
                %v306 = vld [vmem:[%s148 + $0x4b0] sm:$0xff]
                %307 = vst [vmem:[%s149 + $0x270] sm:$0xff] %v306
                %v308 = vld [vmem:[%s148 + $0x4b8] sm:$0xff]
                %309 = vst [vmem:[%s149 + $0x278] sm:$0xff] %v308
                %v310 = vld [vmem:[%s148 + $0x4c0] sm:$0xff]
                %311 = vst [vmem:[%s149 + $0x280] sm:$0xff] %v310
                %v312 = vld [vmem:[%s148 + $0x510] sm:$0xff]
                %313 = vst [vmem:[%s149 + $0x288] sm:$0xff] %v312
                %v314 = vld [vmem:[%s148 + $0x518] sm:$0xff]
                %315 = vst [vmem:[%s149 + $0x290] sm:$0xff] %v314
                %v316 = vld [vmem:[%s148 + $0x520] sm:$0xff]
                %317 = vst [vmem:[%s149 + $0x298] sm:$0xff] %v316
                %v318 = vld [vmem:[%s148 + $0x528] sm:$0xff]
                %319 = vst [vmem:[%s149 + $0x2a0] sm:$0xff] %v318
                %v320 = vld [vmem:[%s148 + $0x530] sm:$0xff]
                %321 = vst [vmem:[%s149 + $0x2a8] sm:$0xff] %v320
                %v322 = vld [vmem:[%s148 + $0x538] sm:$0xff]
                %323 = vst [vmem:[%s149 + $0x2b0] sm:$0xff] %v322
                %v324 = vld [vmem:[%s148 + $0x540] sm:$0xff]
                %325 = vst [vmem:[%s149 + $0x2b8] sm:$0xff] %v324
                %v326 = vld [vmem:[%s148 + $0x548] sm:$0xff]
                %327 = vst [vmem:[%s149 + $0x2c0] sm:$0xff] %v326
                %v328 = vld [vmem:[%s148 + $0x550] sm:$0xff]
                %329 = vst [vmem:[%s149 + $0x2c8] sm:$0xff] %v328
                %v330 = vld [vmem:[%s148 + $0x5a0] sm:$0xff]
                %331 = vst [vmem:[%s149 + $0x2d0] sm:$0xff] %v330
                %v332 = vld [vmem:[%s148 + $0x5a8] sm:$0xff]
                %333 = vst [vmem:[%s149 + $0x2d8] sm:$0xff] %v332
                %v334 = vld [vmem:[%s148 + $0x5b0] sm:$0xff]
                %335 = vst [vmem:[%s149 + $0x2e0] sm:$0xff] %v334
                %v336 = vld [vmem:[%s148 + $0x5b8] sm:$0xff]
                %337 = vst [vmem:[%s149 + $0x2e8] sm:$0xff] %v336
                %v338 = vld [vmem:[%s148 + $0x5c0] sm:$0xff]
                %339 = vst [vmem:[%s149 + $0x2f0] sm:$0xff] %v338
                %v340 = vld [vmem:[%s148 + $0x5c8] sm:$0xff]
                %341 = vst [vmem:[%s149 + $0x2f8] sm:$0xff] %v340
                %v342 = vld [vmem:[%s148 + $0x5d0] sm:$0xff]
                %343 = vst [vmem:[%s149 + $0x300] sm:$0xff] %v342
                %v344 = vld [vmem:[%s148 + $0x5d8] sm:$0xff]
                %345 = vst [vmem:[%s149 + $0x308] sm:$0xff] %v344
                %v346 = vld [vmem:[%s148 + $0x5e0] sm:$0xff]
                %347 = vst [vmem:[%s149 + $0x310] sm:$0xff] %v346
                %v348 = vld [vmem:[%s148 + $0x630] sm:$0xff]
                %349 = vst [vmem:[%s149 + $0x318] sm:$0xff] %v348
                %v350 = vld [vmem:[%s148 + $0x638] sm:$0xff]
                %351 = vst [vmem:[%s149 + $0x320] sm:$0xff] %v350
                %v352 = vld [vmem:[%s148 + $0x640] sm:$0xff]
                %353 = vst [vmem:[%s149 + $0x328] sm:$0xff] %v352
                %v354 = vld [vmem:[%s148 + $0x648] sm:$0xff]
                %355 = vst [vmem:[%s149 + $0x330] sm:$0xff] %v354
                %v356 = vld [vmem:[%s148 + $0x650] sm:$0xff]
                %357 = vst [vmem:[%s149 + $0x338] sm:$0xff] %v356
                %v358 = vld [vmem:[%s148 + $0x658] sm:$0xff]
                %359 = vst [vmem:[%s149 + $0x340] sm:$0xff] %v358
                %v360 = vld [vmem:[%s148 + $0x660] sm:$0xff]
                %361 = vst [vmem:[%s149 + $0x348] sm:$0xff] %v360
                %v362 = vld [vmem:[%s148 + $0x668] sm:$0xff]
                %363 = vst [vmem:[%s149 + $0x350] sm:$0xff] %v362
                %v364 = vld [vmem:[%s148 + $0x670] sm:$0xff]
                %365 = vst [vmem:[%s149 + $0x358] sm:$0xff] %v364
                %v366 = vld [vmem:[%s148 + $0x6c0] sm:$0xff]
                %367 = vst [vmem:[%s149 + $0x360] sm:$0xff] %v366
                %v368 = vld [vmem:[%s148 + $0x6c8] sm:$0xff]
                %369 = vst [vmem:[%s149 + $0x368] sm:$0xff] %v368
                %v370 = vld [vmem:[%s148 + $0x6d0] sm:$0xff]
                %371 = vst [vmem:[%s149 + $0x370] sm:$0xff] %v370
                %v372 = vld [vmem:[%s148 + $0x6d8] sm:$0xff]
                %373 = vst [vmem:[%s149 + $0x378] sm:$0xff] %v372
                %v374 = vld [vmem:[%s148 + $0x6e0] sm:$0xff]
                %375 = vst [vmem:[%s149 + $0x380] sm:$0xff] %v374
                %v376 = vld [vmem:[%s148 + $0x6e8] sm:$0xff]
                %377 = vst [vmem:[%s149 + $0x388] sm:$0xff] %v376
                %v378 = vld [vmem:[%s148 + $0x6f0] sm:$0xff]
                %379 = vst [vmem:[%s149 + $0x390] sm:$0xff] %v378
                %v380 = vld [vmem:[%s148 + $0x6f8] sm:$0xff]
                %381 = vst [vmem:[%s149 + $0x398] sm:$0xff] %v380
                %v382 = vld [vmem:[%s148 + $0x700] sm:$0xff]
                %383 = vst [vmem:[%s149 + $0x3a0] sm:$0xff] %v382
                %v384 = vld [vmem:[%s148 + $0x750] sm:$0xff]
                %385 = vst [vmem:[%s149 + $0x3a8] sm:$0xff] %v384
                %v386 = vld [vmem:[%s148 + $0x758] sm:$0xff]
                %387 = vst [vmem:[%s149 + $0x3b0] sm:$0xff] %v386
                %v388 = vld [vmem:[%s148 + $0x760] sm:$0xff]
                %389 = vst [vmem:[%s149 + $0x3b8] sm:$0xff] %v388
                %v390 = vld [vmem:[%s148 + $0x768] sm:$0xff]
                %391 = vst [vmem:[%s149 + $0x3c0] sm:$0xff] %v390
                %v392 = vld [vmem:[%s148 + $0x770] sm:$0xff]
                %393 = vst [vmem:[%s149 + $0x3c8] sm:$0xff] %v392
                %v394 = vld [vmem:[%s148 + $0x778] sm:$0xff]
                %395 = vst [vmem:[%s149 + $0x3d0] sm:$0xff] %v394
                %v396 = vld [vmem:[%s148 + $0x780] sm:$0xff]
                %397 = vst [vmem:[%s149 + $0x3d8] sm:$0xff] %v396
                %v398 = vld [vmem:[%s148 + $0x788] sm:$0xff]
                %399 = vst [vmem:[%s149 + $0x3e0] sm:$0xff] %v398
                %v400 = vld [vmem:[%s148 + $0x790] sm:$0xff]
                %401 = vst [vmem:[%s149 + $0x3e8] sm:$0xff] %v400
                %v402 = vld [vmem:[%s148 + $0x7e0] sm:$0xff]
                %403 = vst [vmem:[%s149 + $0x3f0] sm:$0xff] %v402
                %v404 = vld [vmem:[%s148 + $0x7e8] sm:$0xff]
                %405 = vst [vmem:[%s149 + $0x3f8] sm:$0xff] %v404
                %v406 = vld [vmem:[%s148 + $0x7f0] sm:$0xff]
                %407 = vst [vmem:[%s149 + $0x400] sm:$0xff] %v406
                %v408 = vld [vmem:[%s148 + $0x7f8] sm:$0xff]
                %409 = vst [vmem:[%s149 + $0x408] sm:$0xff] %v408
                %v410 = vld [vmem:[%s148 + $0x800] sm:$0xff]
                %411 = vst [vmem:[%s149 + $0x410] sm:$0xff] %v410
                %v412 = vld [vmem:[%s148 + $0x808] sm:$0xff]
                %413 = vst [vmem:[%s149 + $0x418] sm:$0xff] %v412
                %v414 = vld [vmem:[%s148 + $0x810] sm:$0xff]
                %415 = vst [vmem:[%s149 + $0x420] sm:$0xff] %v414
                %v416 = vld [vmem:[%s148 + $0x818] sm:$0xff]
                %417 = vst [vmem:[%s149 + $0x428] sm:$0xff] %v416
                %v418 = vld [vmem:[%s148 + $0x820] sm:$0xff]
                %419 = vst [vmem:[%s149 + $0x430] sm:$0xff] %v418
                %v420 = vld [vmem:[%s148 + $0x870] sm:$0xff]
                %421 = vst [vmem:[%s149 + $0x438] sm:$0xff] %v420
                %v422 = vld [vmem:[%s148 + $0x878] sm:$0xff]
                %423 = vst [vmem:[%s149 + $0x440] sm:$0xff] %v422
                %v424 = vld [vmem:[%s148 + $0x880] sm:$0xff]
                %425 = vst [vmem:[%s149 + $0x448] sm:$0xff] %v424
                %v426 = vld [vmem:[%s148 + $0x888] sm:$0xff]
                %427 = vst [vmem:[%s149 + $0x450] sm:$0xff] %v426
                %v428 = vld [vmem:[%s148 + $0x890] sm:$0xff]
                %429 = vst [vmem:[%s149 + $0x458] sm:$0xff] %v428
                %v430 = vld [vmem:[%s148 + $0x898] sm:$0xff]
                %431 = vst [vmem:[%s149 + $0x460] sm:$0xff] %v430
                %v432 = vld [vmem:[%s148 + $0x8a0] sm:$0xff]
                %433 = vst [vmem:[%s149 + $0x468] sm:$0xff] %v432
                %v434 = vld [vmem:[%s148 + $0x8a8] sm:$0xff]
                %435 = vst [vmem:[%s149 + $0x470] sm:$0xff] %v434
                %v436 = vld [vmem:[%s148 + $0x8b0] sm:$0xff]
                %437 = vst [vmem:[%s149 + $0x478] sm:$0xff] %v436
                %v438 = vld [vmem:[%s148 + $0x900] sm:$0xff]
                %439 = vst [vmem:[%s149 + $0x480] sm:$0xff] %v438
                %v440 = vld [vmem:[%s148 + $0x908] sm:$0xff]
                %441 = vst [vmem:[%s149 + $0x488] sm:$0xff] %v440
                %v442 = vld [vmem:[%s148 + $0x910] sm:$0xff]
                %443 = vst [vmem:[%s149 + $0x490] sm:$0xff] %v442
                %v444 = vld [vmem:[%s148 + $0x918] sm:$0xff]
                %445 = vst [vmem:[%s149 + $0x498] sm:$0xff] %v444
                %v446 = vld [vmem:[%s148 + $0x920] sm:$0xff]
                %447 = vst [vmem:[%s149 + $0x4a0] sm:$0xff] %v446
                %v448 = vld [vmem:[%s148 + $0x928] sm:$0xff]
                %449 = vst [vmem:[%s149 + $0x4a8] sm:$0xff] %v448
                %v450 = vld [vmem:[%s148 + $0x930] sm:$0xff]
                %451 = vst [vmem:[%s149 + $0x4b0] sm:$0xff] %v450
                %v452 = vld [vmem:[%s148 + $0x938] sm:$0xff]
                %453 = vst [vmem:[%s149 + $0x4b8] sm:$0xff] %v452
                %v454 = vld [vmem:[%s148 + $0x940] sm:$0xff]
                %455 = vst [vmem:[%s149 + $0x4c0] sm:$0xff] %v454
                %v456 = vld [vmem:[%s148 + $0x990] sm:$0xff]
                %457 = vst [vmem:[%s149 + $0x4c8] sm:$0xff] %v456
                %v458 = vld [vmem:[%s148 + $0x998] sm:$0xff]
                %459 = vst [vmem:[%s149 + $0x4d0] sm:$0xff] %v458
                %v460 = vld [vmem:[%s148 + $0x9a0] sm:$0xff]
                %461 = vst [vmem:[%s149 + $0x4d8] sm:$0xff] %v460
                %v462 = vld [vmem:[%s148 + $0x9a8] sm:$0xff]
                %463 = vst [vmem:[%s149 + $0x4e0] sm:$0xff] %v462
                %v464 = vld [vmem:[%s148 + $0x9b0] sm:$0xff]
                %465 = vst [vmem:[%s149 + $0x4e8] sm:$0xff] %v464
                %v466 = vld [vmem:[%s148 + $0x9b8] sm:$0xff]
                %467 = vst [vmem:[%s149 + $0x4f0] sm:$0xff] %v466
                %v468 = vld [vmem:[%s148 + $0x9c0] sm:$0xff]
                %469 = vst [vmem:[%s149 + $0x4f8] sm:$0xff] %v468
                %v470 = vld [vmem:[%s148 + $0x9c8] sm:$0xff]
                %471 = vst [vmem:[%s149 + $0x500] sm:$0xff] %v470
                %v472 = vld [vmem:[%s148 + $0x9d0] sm:$0xff]
                %473 = vst [vmem:[%s149 + $0x508] sm:$0xff] %v472
                %v474 = vld [vmem:[%s148 + $0xa20] sm:$0xff]
                %475 = vst [vmem:[%s149 + $0x510] sm:$0xff] %v474
                %v476 = vld [vmem:[%s148 + $0xa28] sm:$0xff]
                %477 = vst [vmem:[%s149 + $0x518] sm:$0xff] %v476
                %v478 = vld [vmem:[%s148 + $0xa30] sm:$0xff]
                %479 = vst [vmem:[%s149 + $0x520] sm:$0xff] %v478
                %v480 = vld [vmem:[%s148 + $0xa38] sm:$0xff]
                %481 = vst [vmem:[%s149 + $0x528] sm:$0xff] %v480
                %v482 = vld [vmem:[%s148 + $0xa40] sm:$0xff]
                %483 = vst [vmem:[%s149 + $0x530] sm:$0xff] %v482
                %v484 = vld [vmem:[%s148 + $0xa48] sm:$0xff]
                %485 = vst [vmem:[%s149 + $0x538] sm:$0xff] %v484
                %v486 = vld [vmem:[%s148 + $0xa50] sm:$0xff]
                %487 = vst [vmem:[%s149 + $0x540] sm:$0xff] %v486
                %v488 = vld [vmem:[%s148 + $0xa58] sm:$0xff]
                %489 = vst [vmem:[%s149 + $0x548] sm:$0xff] %v488
                %v490 = vld [vmem:[%s148 + $0xa60] sm:$0xff]
                %491 = vst [vmem:[%s149 + $0x550] sm:$0xff] %v490
                %v492 = vld [vmem:[%s148 + $0xab0] sm:$0xff]
                %493 = vst [vmem:[%s149 + $0x558] sm:$0xff] %v492
                %v494 = vld [vmem:[%s148 + $0xab8] sm:$0xff]
                %495 = vst [vmem:[%s149 + $0x560] sm:$0xff] %v494
                %v496 = vld [vmem:[%s148 + $0xac0] sm:$0xff]
                %497 = vst [vmem:[%s149 + $0x568] sm:$0xff] %v496
                %v498 = vld [vmem:[%s148 + $0xac8] sm:$0xff]
                %499 = vst [vmem:[%s149 + $0x570] sm:$0xff] %v498
                %v500 = vld [vmem:[%s148 + $0xad0] sm:$0xff]
                %501 = vst [vmem:[%s149 + $0x578] sm:$0xff] %v500
                %v502 = vld [vmem:[%s148 + $0xad8] sm:$0xff]
                %503 = vst [vmem:[%s149 + $0x580] sm:$0xff] %v502
                %v504 = vld [vmem:[%s148 + $0xae0] sm:$0xff]
                %505 = vst [vmem:[%s149 + $0x588] sm:$0xff] %v504
                %v506 = vld [vmem:[%s148 + $0xae8] sm:$0xff]
                %507 = vst [vmem:[%s149 + $0x590] sm:$0xff] %v506
                %v508 = vld [vmem:[%s148 + $0xaf0] sm:$0xff]
                %509 = vst [vmem:[%s149 + $0x598] sm:$0xff] %v508
                %v510 = vld [vmem:[%s148 + $0xb40] sm:$0xff]
                %511 = vst [vmem:[%s149 + $0x5a0] sm:$0xff] %v510
                %v512 = vld [vmem:[%s148 + $0xb48] sm:$0xff]
                %513 = vst [vmem:[%s149 + $0x5a8] sm:$0xff] %v512
                %v514 = vld [vmem:[%s148 + $0xb50] sm:$0xff]
                %515 = vst [vmem:[%s149 + $0x5b0] sm:$0xff] %v514
                %v516 = vld [vmem:[%s148 + $0xb58] sm:$0xff]
                %517 = vst [vmem:[%s149 + $0x5b8] sm:$0xff] %v516
                %v518 = vld [vmem:[%s148 + $0xb60] sm:$0xff]
                %519 = vst [vmem:[%s149 + $0x5c0] sm:$0xff] %v518
                %v520 = vld [vmem:[%s148 + $0xb68] sm:$0xff]
                %521 = vst [vmem:[%s149 + $0x5c8] sm:$0xff] %v520
                %v522 = vld [vmem:[%s148 + $0xb70] sm:$0xff]
                %523 = vst [vmem:[%s149 + $0x5d0] sm:$0xff] %v522
                %v524 = vld [vmem:[%s148 + $0xb78] sm:$0xff]
                %525 = vst [vmem:[%s149 + $0x5d8] sm:$0xff] %v524
                %v526 = vld [vmem:[%s148 + $0xb80] sm:$0xff]
                %527 = vst [vmem:[%s149 + $0x5e0] sm:$0xff] %v526
                %v528 = vld [vmem:[%s148 + $0xbd0] sm:$0xff]
                %529 = vst [vmem:[%s149 + $0x5e8] sm:$0xff] %v528
                %v530 = vld [vmem:[%s148 + $0xbd8] sm:$0xff]
                %531 = vst [vmem:[%s149 + $0x5f0] sm:$0xff] %v530
                %v532 = vld [vmem:[%s148 + $0xbe0] sm:$0xff]
                %533 = vst [vmem:[%s149 + $0x5f8] sm:$0xff] %v532
                %v534 = vld [vmem:[%s148 + $0xbe8] sm:$0xff]
                %535 = vst [vmem:[%s149 + $0x600] sm:$0xff] %v534
                %v536 = vld [vmem:[%s148 + $0xbf0] sm:$0xff]
                %537 = vst [vmem:[%s149 + $0x608] sm:$0xff] %v536
                %v538 = vld [vmem:[%s148 + $0xbf8] sm:$0xff]
                %539 = vst [vmem:[%s149 + $0x610] sm:$0xff] %v538
                %v540 = vld [vmem:[%s148 + $0xc00] sm:$0xff]
                %541 = vst [vmem:[%s149 + $0x618] sm:$0xff] %v540
                %v542 = vld [vmem:[%s148 + $0xc08] sm:$0xff]
                %543 = vst [vmem:[%s149 + $0x620] sm:$0xff] %v542
                %v544 = vld [vmem:[%s148 + $0xc10] sm:$0xff]
                %545 = vst [vmem:[%s149 + $0x628] sm:$0xff] %v544
                %v546 = vld [vmem:[%s148 + $0xc60] sm:$0xff]
                %547 = vst [vmem:[%s149 + $0x630] sm:$0xff] %v546
                %v548 = vld [vmem:[%s148 + $0xc68] sm:$0xff]
                %549 = vst [vmem:[%s149 + $0x638] sm:$0xff] %v548
                %v550 = vld [vmem:[%s148 + $0xc70] sm:$0xff]
                %551 = vst [vmem:[%s149 + $0x640] sm:$0xff] %v550
                %v552 = vld [vmem:[%s148 + $0xc78] sm:$0xff]
                %553 = vst [vmem:[%s149 + $0x648] sm:$0xff] %v552
                %v554 = vld [vmem:[%s148 + $0xc80] sm:$0xff]
                %555 = vst [vmem:[%s149 + $0x650] sm:$0xff] %v554
                %v556 = vld [vmem:[%s148 + $0xc88] sm:$0xff]
                %557 = vst [vmem:[%s149 + $0x658] sm:$0xff] %v556
                %v558 = vld [vmem:[%s148 + $0xc90] sm:$0xff]
                %559 = vst [vmem:[%s149 + $0x660] sm:$0xff] %v558
                %v560 = vld [vmem:[%s148 + $0xc98] sm:$0xff]
                %561 = vst [vmem:[%s149 + $0x668] sm:$0xff] %v560
                %v562 = vld [vmem:[%s148 + $0xca0] sm:$0xff]
                %563 = vst [vmem:[%s149 + $0x670] sm:$0xff] %v562
                %v564 = vld [vmem:[%s148 + $0xcf0] sm:$0xff]
                %565 = vst [vmem:[%s149 + $0x678] sm:$0xff] %v564
                %v566 = vld [vmem:[%s148 + $0xcf8] sm:$0xff]
                %567 = vst [vmem:[%s149 + $0x680] sm:$0xff] %v566
                %v568 = vld [vmem:[%s148 + $0xd00] sm:$0xff]
                %569 = vst [vmem:[%s149 + $0x688] sm:$0xff] %v568
                %v570 = vld [vmem:[%s148 + $0xd08] sm:$0xff]
                %571 = vst [vmem:[%s149 + $0x690] sm:$0xff] %v570
                %v572 = vld [vmem:[%s148 + $0xd10] sm:$0xff]
                %573 = vst [vmem:[%s149 + $0x698] sm:$0xff] %v572
                %v574 = vld [vmem:[%s148 + $0xd18] sm:$0xff]
                %575 = vst [vmem:[%s149 + $0x6a0] sm:$0xff] %v574
                %v576 = vld [vmem:[%s148 + $0xd20] sm:$0xff]
                %577 = vst [vmem:[%s149 + $0x6a8] sm:$0xff] %v576
                %v578 = vld [vmem:[%s148 + $0xd28] sm:$0xff]
                %579 = vst [vmem:[%s149 + $0x6b0] sm:$0xff] %v578
                %v580 = vld [vmem:[%s148 + $0xd30] sm:$0xff]
                %581 = vst [vmem:[%s149 + $0x6b8] sm:$0xff] %v580
                %v582 = vld [vmem:[%s148 + $0xd80] sm:$0xff]
                %583 = vst [vmem:[%s149 + $0x6c0] sm:$0xff] %v582
                %v584 = vld [vmem:[%s148 + $0xd88] sm:$0xff]
                %585 = vst [vmem:[%s149 + $0x6c8] sm:$0xff] %v584
                %v586 = vld [vmem:[%s148 + $0xd90] sm:$0xff]
                %587 = vst [vmem:[%s149 + $0x6d0] sm:$0xff] %v586
                %v588 = vld [vmem:[%s148 + $0xd98] sm:$0xff]
                %589 = vst [vmem:[%s149 + $0x6d8] sm:$0xff] %v588
                %v590 = vld [vmem:[%s148 + $0xda0] sm:$0xff]
                %591 = vst [vmem:[%s149 + $0x6e0] sm:$0xff] %v590
                %v592 = vld [vmem:[%s148 + $0xda8] sm:$0xff]
                %593 = vst [vmem:[%s149 + $0x6e8] sm:$0xff] %v592
                %v594 = vld [vmem:[%s148 + $0xdb0] sm:$0xff]
                %595 = vst [vmem:[%s149 + $0x6f0] sm:$0xff] %v594
                %v596 = vld [vmem:[%s148 + $0xdb8] sm:$0xff]
                %597 = vst [vmem:[%s149 + $0x6f8] sm:$0xff] %v596
                %v598 = vld [vmem:[%s148 + $0xdc0] sm:$0xff]
                %599 = vst [vmem:[%s149 + $0x700] sm:$0xff] %v598
                %v600 = vld [vmem:[%s148 + $0xe10] sm:$0xff]
                %601 = vst [vmem:[%s149 + $0x708] sm:$0xff] %v600
                %v602 = vld [vmem:[%s148 + $0xe18] sm:$0xff]
                %603 = vst [vmem:[%s149 + $0x710] sm:$0xff] %v602
                %v604 = vld [vmem:[%s148 + $0xe20] sm:$0xff]
                %605 = vst [vmem:[%s149 + $0x718] sm:$0xff] %v604
                %v606 = vld [vmem:[%s148 + $0xe28] sm:$0xff]
                %607 = vst [vmem:[%s149 + $0x720] sm:$0xff] %v606
                %v608 = vld [vmem:[%s148 + $0xe30] sm:$0xff]
                %609 = vst [vmem:[%s149 + $0x728] sm:$0xff] %v608
                %v610 = vld [vmem:[%s148 + $0xe38] sm:$0xff]
                %611 = vst [vmem:[%s149 + $0x730] sm:$0xff] %v610
                %v612 = vld [vmem:[%s148 + $0xe40] sm:$0xff]
                %613 = vst [vmem:[%s149 + $0x738] sm:$0xff] %v612
                %v614 = vld [vmem:[%s148 + $0xe48] sm:$0xff]
                %615 = vst [vmem:[%s149 + $0x740] sm:$0xff] %v614
                %v616 = vld [vmem:[%s148 + $0xe50] sm:$0xff]
                %617 = vst [vmem:[%s149 + $0x748] sm:$0xff] %v616
                %v618 = vld [vmem:[%s148 + $0xea0] sm:$0xff]
                %619 = vst [vmem:[%s149 + $0x750] sm:$0xff] %v618
                %v620 = vld [vmem:[%s148 + $0xea8] sm:$0xff]
                %621 = vst [vmem:[%s149 + $0x758] sm:$0xff] %v620
                %v622 = vld [vmem:[%s148 + $0xeb0] sm:$0xff]
                %623 = vst [vmem:[%s149 + $0x760] sm:$0xff] %v622
                %v624 = vld [vmem:[%s148 + $0xeb8] sm:$0xff]
                %625 = vst [vmem:[%s149 + $0x768] sm:$0xff] %v624
                %v626 = vld [vmem:[%s148 + $0xec0] sm:$0xff]
                %627 = vst [vmem:[%s149 + $0x770] sm:$0xff] %v626
                %v628 = vld [vmem:[%s148 + $0xec8] sm:$0xff]
                %629 = vst [vmem:[%s149 + $0x778] sm:$0xff] %v628
                %v630 = vld [vmem:[%s148 + $0xed0] sm:$0xff]
                %631 = vst [vmem:[%s149 + $0x780] sm:$0xff] %v630
                %v632 = vld [vmem:[%s148 + $0xed8] sm:$0xff]
                %633 = vst [vmem:[%s149 + $0x788] sm:$0xff] %v632
                %v634 = vld [vmem:[%s148 + $0xee0] sm:$0xff]
                %635 = vst [vmem:[%s149 + $0x790] sm:$0xff] %v634
                %v636 = vld [vmem:[%s148 + $0xf30] sm:$0xff]
                %637 = vst [vmem:[%s149 + $0x798] sm:$0xff] %v636
                %v638 = vld [vmem:[%s148 + $0xf38] sm:$0xff]
                %639 = vst [vmem:[%s149 + $0x7a0] sm:$0xff] %v638
                %v640 = vld [vmem:[%s148 + $0xf40] sm:$0xff]
                %641 = vst [vmem:[%s149 + $0x7a8] sm:$0xff] %v640
                %v642 = vld [vmem:[%s148 + $0xf48] sm:$0xff]
                %643 = vst [vmem:[%s149 + $0x7b0] sm:$0xff] %v642
                %v644 = vld [vmem:[%s148 + $0xf50] sm:$0xff]
                %645 = vst [vmem:[%s149 + $0x7b8] sm:$0xff] %v644
                %v646 = vld [vmem:[%s148 + $0xf58] sm:$0xff]
                %647 = vst [vmem:[%s149 + $0x7c0] sm:$0xff] %v646
                %v648 = vld [vmem:[%s148 + $0xf60] sm:$0xff]
                %649 = vst [vmem:[%s149 + $0x7c8] sm:$0xff] %v648
                %v650 = vld [vmem:[%s148 + $0xf68] sm:$0xff]
                %651 = vst [vmem:[%s149 + $0x7d0] sm:$0xff] %v650
                %v652 = vld [vmem:[%s148 + $0xf70] sm:$0xff]
                %653 = vst [vmem:[%s149 + $0x7d8] sm:$0xff] %v652
                %v654 = vld [vmem:[%s148 + $0xfc0] sm:$0xff]
                %655 = vst [vmem:[%s149 + $0x7e0] sm:$0xff] %v654
                %v656 = vld [vmem:[%s148 + $0xfc8] sm:$0xff]
                %657 = vst [vmem:[%s149 + $0x7e8] sm:$0xff] %v656
                %v658 = vld [vmem:[%s148 + $0xfd0] sm:$0xff]
                %659 = vst [vmem:[%s149 + $0x7f0] sm:$0xff] %v658
                %v660 = vld [vmem:[%s148 + $0xfd8] sm:$0xff]
                %661 = vst [vmem:[%s149 + $0x7f8] sm:$0xff] %v660
                %v662 = vld [vmem:[%s148 + $0xfe0] sm:$0xff]
                %663 = vst [vmem:[%s149 + $0x800] sm:$0xff] %v662
                %v664 = vld [vmem:[%s148 + $0xfe8] sm:$0xff]
                %665 = vst [vmem:[%s149 + $0x808] sm:$0xff] %v664
                %v666 = vld [vmem:[%s148 + $0xff0] sm:$0xff]
                %667 = vst [vmem:[%s149 + $0x810] sm:$0xff] %v666
                %v668 = vld [vmem:[%s148 + $0xff8] sm:$0xff]
                %669 = vst [vmem:[%s149 + $0x818] sm:$0xff] %v668
                %v670 = vld [vmem:[%s148 + $0x1000] sm:$0xff]
                %671 = vst [vmem:[%s149 + $0x820] sm:$0xff] %v670
                %v672 = vld [vmem:[%s148 + $0x1050] sm:$0xff]
                %673 = vst [vmem:[%s149 + $0x828] sm:$0xff] %v672
                %v674 = vld [vmem:[%s148 + $0x1058] sm:$0xff]
                %675 = vst [vmem:[%s149 + $0x830] sm:$0xff] %v674
                %v676 = vld [vmem:[%s148 + $0x1060] sm:$0xff]
                %677 = vst [vmem:[%s149 + $0x838] sm:$0xff] %v676
                %v678 = vld [vmem:[%s148 + $0x1068] sm:$0xff]
                %679 = vst [vmem:[%s149 + $0x840] sm:$0xff] %v678
                %v680 = vld [vmem:[%s148 + $0x1070] sm:$0xff]
                %681 = vst [vmem:[%s149 + $0x848] sm:$0xff] %v680
                %v682 = vld [vmem:[%s148 + $0x1078] sm:$0xff]
                %683 = vst [vmem:[%s149 + $0x850] sm:$0xff] %v682
                %v684 = vld [vmem:[%s148 + $0x1080] sm:$0xff]
                %685 = vst [vmem:[%s149 + $0x858] sm:$0xff] %v684
                %v686 = vld [vmem:[%s148 + $0x1088] sm:$0xff]
                %687 = vst [vmem:[%s149 + $0x860] sm:$0xff] %v686
                %v688 = vld [vmem:[%s148 + $0x1090] sm:$0xff]
                %689 = vst [vmem:[%s149 + $0x868] sm:$0xff] %v688
                %v690 = vld [vmem:[%s148 + $0x10e0] sm:$0xff]
                %691 = vst [vmem:[%s149 + $0x870] sm:$0xff] %v690
                %v692 = vld [vmem:[%s148 + $0x10e8] sm:$0xff]
                %693 = vst [vmem:[%s149 + $0x878] sm:$0xff] %v692
                %v694 = vld [vmem:[%s148 + $0x10f0] sm:$0xff]
                %695 = vst [vmem:[%s149 + $0x880] sm:$0xff] %v694
                %v696 = vld [vmem:[%s148 + $0x10f8] sm:$0xff]
                %697 = vst [vmem:[%s149 + $0x888] sm:$0xff] %v696
                %v698 = vld [vmem:[%s148 + $0x1100] sm:$0xff]
                %699 = vst [vmem:[%s149 + $0x890] sm:$0xff] %v698
                %v700 = vld [vmem:[%s148 + $0x1108] sm:$0xff]
                %701 = vst [vmem:[%s149 + $0x898] sm:$0xff] %v700
                %v702 = vld [vmem:[%s148 + $0x1110] sm:$0xff]
                %703 = vst [vmem:[%s149 + $0x8a0] sm:$0xff] %v702
                %v704 = vld [vmem:[%s148 + $0x1118] sm:$0xff]
                %705 = vst [vmem:[%s149 + $0x8a8] sm:$0xff] %v704
                %v706 = vld [vmem:[%s148 + $0x1120] sm:$0xff]
                %707 = vst [vmem:[%s149 + $0x8b0] sm:$0xff] %v706
                %v708 = vld [vmem:[%s148 + $0x1170] sm:$0xff]
                %709 = vst [vmem:[%s149 + $0x8b8] sm:$0xff] %v708
                %v710 = vld [vmem:[%s148 + $0x1178] sm:$0xff]
                %711 = vst [vmem:[%s149 + $0x8c0] sm:$0xff] %v710
                %v712 = vld [vmem:[%s148 + $0x1180] sm:$0xff]
                %713 = vst [vmem:[%s149 + $0x8c8] sm:$0xff] %v712
                %v714 = vld [vmem:[%s148 + $0x1188] sm:$0xff]
                %715 = vst [vmem:[%s149 + $0x8d0] sm:$0xff] %v714
                %v716 = vld [vmem:[%s148 + $0x1190] sm:$0xff]
                %717 = vst [vmem:[%s149 + $0x8d8] sm:$0xff] %v716
                %v718 = vld [vmem:[%s148 + $0x1198] sm:$0xff]
                %719 = vst [vmem:[%s149 + $0x8e0] sm:$0xff] %v718
                %v720 = vld [vmem:[%s148 + $0x11a0] sm:$0xff]
                %721 = vst [vmem:[%s149 + $0x8e8] sm:$0xff] %v720
                %v722 = vld [vmem:[%s148 + $0x11a8] sm:$0xff]
                %723 = vst [vmem:[%s149 + $0x8f0] sm:$0xff] %v722
                %v724 = vld [vmem:[%s148 + $0x11b0] sm:$0xff]
                %725 = vst [vmem:[%s149 + $0x8f8] sm:$0xff] %v724
              $region41: #{model_forward.2} parent=35 // loop_footer
                %s147 = sadd.s32 1, %s143
              $region42: #{model_forward.2} parent=35 // loop_footer_branch
                %142 = sbr.rel target = $region38
              $region43: #{model_forward.2} parent=35 // loop_exit
                _
            $region36: #{model_forward.2} parent=31 // pred_fallthru
              _
            // Predicated region
            $region44: #{model_forward.2} parent=31 // pred_check
              _
            $region45: #{model_forward.2} parent=31 // pred_check_branch
              %727 = sbr.rel target = $region47
            $region46: #{model_forward.2} parent=31 // pred_region
              _
            $region47: #{model_forward.2} parent=31 // pred_fallthru
              _
          $region32: #{model_forward.2} parent=27 // pred_fallthru
            _
          %728 = vnop
        $region28: #{model_forward.2} parent=23 // pred_fallthru
          _
      $region24: #{model_forward.2} parent=5 // pred_fallthru
        _
      %p729 = scmp.le.s32.totalorder 1, %s9
      %p730 = scmp.lt.s32.totalorder %s9, 3
      %p731 = pnand %p729, %p730
      %p732 = pneg %p731
      // Predicated region
      $region48: #{model_forward.2} parent=5 // pred_check
        _
      $region49: #{model_forward.2} parent=5 // pred_check_branch
        %734 = sbr.rel (%p731) target = $region51
      $region50: #{model_forward.2} parent=5 // pred_region
        %s735 = ssub.s32 %s9, 1
        %s736 = sand.u32 %s22, 1
        %s737 = sand.u32 %s22, 1
        %s738 = smul.addr %s737, 2304
        %s739 = scalar_lea.vmem [#allocation2], %s738
        // Predicated region
        $region52: #{model_forward.2} parent=50 // pred_check
          %p740 = pneg %p35
        $region53: #{model_forward.2} parent=50 // pred_check_branch
          %742 = sbr.rel (%p740) target = $region55
        $region54: #{model_forward.2} parent=50 // pred_region
          _
        $region55: #{model_forward.2} parent=50 // pred_fallthru
          _
        %s743 = sand.u32 %s22, 1
        %s744 = sand.u32 %s22, 1
        %s745 = smul.addr %s744, 2304
        %s746 = scalar_lea.vmem [#allocation2], %s745
        %p747 = pneg %p35
        %p748 = pneg %p32
        %p749 = pneg %p56
        %p750 = pneg %p53
        %p751 = pneg %p77
        %p752 = pneg %p74
        %p753 = pneg %p103
        %p754 = pneg %p100
        %s755 = sand.u32 %s90, 1
        %s756 = sand.u32 %s90, 1
        %s757 = smul.addr %s756, 144
        %s758 = scalar_lea.vmem [#allocation3], %s757
        %s759 = smul.u32 18, %s14
        %s760 = smul.u32 18, %s14
        %v762 = vld [vmem:[%s1] sm:$0xf]
        %v763 = vld [vmem:[%s1 + $0x4] sm:$0x1]
        %v764 = vld [vmem:[%s1 + $0x8] sm:$0xf]
        %v765 = vld [vmem:[%s1 + $0xc] sm:$0x1]
        %v766 = vld [vmem:[%s1 + $0x10] sm:$0xf]
        %v767 = vld [vmem:[%s1 + $0x14] sm:$0x1]
        %v768 = vld [vmem:[%s1 + $0x18] sm:$0xf]
        %v769 = vld [vmem:[%s1 + $0x1c] sm:$0x1]
        %v770 = vld [vmem:[%s1 + $0x20] sm:$0xf]
        %v771 = vld [vmem:[%s1 + $0x24] sm:$0x1]
        %v772 = vld [vmem:[%s1 + $0x28] sm:$0xf]
        %v773 = vld [vmem:[%s1 + $0x2c] sm:$0x1]
        %v774 = vld [vmem:[%s1 + $0x30] sm:$0xf]
        %v775 = vld [vmem:[%s1 + $0x34] sm:$0x1]
        %v776 = vld [vmem:[%s1 + $0x38] sm:$0xf]
        %v777 = vld [vmem:[%s1 + $0x3c] sm:$0x1]
        %v778 = vld [vmem:[%s739] sm:$0xff]
        %v779 = vld [vmem:[%s739 + $0x8] sm:$0xff]
        %v780 = vld [vmem:[%s739 + $0x10] sm:$0xff]
        %v781 = vld [vmem:[%s739 + $0x18] sm:$0xff]
        %v782 = vld [vmem:[%s739 + $0x20] sm:$0xff]
        %v783 = vld [vmem:[%s739 + $0x28] sm:$0xff]
        %v784 = vld [vmem:[%s739 + $0x30] sm:$0xff]
        %v785 = vld [vmem:[%s739 + $0x38] sm:$0xff]
        %v786 = vld [vmem:[%s739 + $0x40] sm:$0xff]
        %v787 = vld [vmem:[%s739 + $0x48] sm:$0xff]
        %v788 = vld [vmem:[%s739 + $0x50] sm:$0xff]
        %v789 = vld [vmem:[%s739 + $0x58] sm:$0xff]
        %v790 = vld [vmem:[%s739 + $0x60] sm:$0xff]
        %v791 = vld [vmem:[%s739 + $0x68] sm:$0xff]
        %v792 = vld [vmem:[%s739 + $0x70] sm:$0xff]
        %v793 = vld [vmem:[%s739 + $0x78] sm:$0xff]
        %v794 = vld [vmem:[%s739 + $0x80] sm:$0xff]
        %v795 = vld [vmem:[%s739 + $0x88] sm:$0xff]
        %v796 = vld [vmem:[%s739 + $0x90] sm:$0xff]
        %v797 = vld [vmem:[%s739 + $0x98] sm:$0xff]
        %v798 = vld [vmem:[%s739 + $0xa0] sm:$0xff]
        %v799 = vld [vmem:[%s739 + $0xa8] sm:$0xff]
        %v800 = vld [vmem:[%s739 + $0xb0] sm:$0xff]
        %v801 = vld [vmem:[%s739 + $0xb8] sm:$0xff]
        %v802 = vld [vmem:[%s739 + $0xc0] sm:$0xff]
        %v803 = vld [vmem:[%s739 + $0xc8] sm:$0xff]
        %v804 = vld [vmem:[%s739 + $0xd0] sm:$0xff]
        %v805 = vld [vmem:[%s739 + $0xd8] sm:$0x11]
        %v806 = vld [vmem:[%s739 + $0xe0] sm:$0x11]
        %v807 = vld [vmem:[%s739 + $0xe8] sm:$0x11]
        %v808 = vld [vmem:[%s739 + $0xf0] sm:$0x11]
        %v809 = vld [vmem:[%s739 + $0xf8] sm:$0x11]
        %v810 = vld [vmem:[%s739 + $0x100] sm:$0x11]
        %v811 = vld [vmem:[%s739 + $0x108] sm:$0x11]
        %v812 = vld [vmem:[%s739 + $0x110] sm:$0x11]
        %v813 = vld [vmem:[%s739 + $0x118] sm:$0x11]
        %v814 = vld [vmem:[%s739 + $0x120] sm:$0xff]
        %v815 = vld [vmem:[%s739 + $0x128] sm:$0xff]
        %v816 = vld [vmem:[%s739 + $0x130] sm:$0xff]
        %v817 = vld [vmem:[%s739 + $0x138] sm:$0xff]
        %v818 = vld [vmem:[%s739 + $0x140] sm:$0xff]
        %v819 = vld [vmem:[%s739 + $0x148] sm:$0xff]
        %v820 = vld [vmem:[%s739 + $0x150] sm:$0xff]
        %v821 = vld [vmem:[%s739 + $0x158] sm:$0xff]
        %v822 = vld [vmem:[%s739 + $0x160] sm:$0xff]
        %v823 = vld [vmem:[%s739 + $0x168] sm:$0xff]
        %v824 = vld [vmem:[%s739 + $0x170] sm:$0xff]
        %v825 = vld [vmem:[%s739 + $0x178] sm:$0xff]
        %v826 = vld [vmem:[%s739 + $0x180] sm:$0xff]
        %v827 = vld [vmem:[%s739 + $0x188] sm:$0xff]
        %v828 = vld [vmem:[%s739 + $0x190] sm:$0xff]
        %v829 = vld [vmem:[%s739 + $0x198] sm:$0xff]
        %v830 = vld [vmem:[%s739 + $0x1a0] sm:$0xff]
        %v831 = vld [vmem:[%s739 + $0x1a8] sm:$0xff]
        %v832 = vld [vmem:[%s739 + $0x1b0] sm:$0xff]
        %v833 = vld [vmem:[%s739 + $0x1b8] sm:$0xff]
        %v834 = vld [vmem:[%s739 + $0x1c0] sm:$0xff]
        %v835 = vld [vmem:[%s739 + $0x1c8] sm:$0xff]
        %v836 = vld [vmem:[%s739 + $0x1d0] sm:$0xff]
        %v837 = vld [vmem:[%s739 + $0x1d8] sm:$0xff]
        %v838 = vld [vmem:[%s739 + $0x1e0] sm:$0xff]
        %v839 = vld [vmem:[%s739 + $0x1e8] sm:$0xff]
        %v840 = vld [vmem:[%s739 + $0x1f0] sm:$0xff]
        %v841 = vld [vmem:[%s739 + $0x1f8] sm:$0x11]
        %v842 = vld [vmem:[%s739 + $0x200] sm:$0x11]
        %v843 = vld [vmem:[%s739 + $0x208] sm:$0x11]
        %v844 = vld [vmem:[%s739 + $0x210] sm:$0x11]
        %v845 = vld [vmem:[%s739 + $0x218] sm:$0x11]
        %v846 = vld [vmem:[%s739 + $0x220] sm:$0x11]
        %v847 = vld [vmem:[%s739 + $0x228] sm:$0x11]
        %v848 = vld [vmem:[%s739 + $0x230] sm:$0x11]
        %v849 = vld [vmem:[%s739 + $0x238] sm:$0x11]
        %v850 = vld [vmem:[%s739 + $0x240] sm:$0xff]
        %v851 = vld [vmem:[%s739 + $0x248] sm:$0xff]
        %v852 = vld [vmem:[%s739 + $0x250] sm:$0xff]
        %v853 = vld [vmem:[%s739 + $0x258] sm:$0xff]
        %v854 = vld [vmem:[%s739 + $0x260] sm:$0xff]
        %v855 = vld [vmem:[%s739 + $0x268] sm:$0xff]
        %v856 = vld [vmem:[%s739 + $0x270] sm:$0xff]
        %v857 = vld [vmem:[%s739 + $0x278] sm:$0xff]
        %v858 = vld [vmem:[%s739 + $0x280] sm:$0xff]
        %v859 = vld [vmem:[%s739 + $0x288] sm:$0xff]
        %v860 = vld [vmem:[%s739 + $0x290] sm:$0xff]
        %v861 = vld [vmem:[%s739 + $0x298] sm:$0xff]
        %v862 = vld [vmem:[%s739 + $0x2a0] sm:$0xff]
        %v863 = vld [vmem:[%s739 + $0x2a8] sm:$0xff]
        %v864 = vld [vmem:[%s739 + $0x2b0] sm:$0xff]
        %v865 = vld [vmem:[%s739 + $0x2b8] sm:$0xff]
        %v866 = vld [vmem:[%s739 + $0x2c0] sm:$0xff]
        %v867 = vld [vmem:[%s739 + $0x2c8] sm:$0xff]
        %v868 = vld [vmem:[%s739 + $0x2d0] sm:$0xff]
        %v869 = vld [vmem:[%s739 + $0x2d8] sm:$0xff]
        %v870 = vld [vmem:[%s739 + $0x2e0] sm:$0xff]
        %v871 = vld [vmem:[%s739 + $0x2e8] sm:$0xff]
        %v872 = vld [vmem:[%s739 + $0x2f0] sm:$0xff]
        %v873 = vld [vmem:[%s739 + $0x2f8] sm:$0xff]
        %v874 = vld [vmem:[%s739 + $0x300] sm:$0xff]
        %v875 = vld [vmem:[%s739 + $0x308] sm:$0xff]
        %v876 = vld [vmem:[%s739 + $0x310] sm:$0xff]
        %v877 = vld [vmem:[%s739 + $0x318] sm:$0x11]
        %v878 = vld [vmem:[%s739 + $0x320] sm:$0x11]
        %v879 = vld [vmem:[%s739 + $0x328] sm:$0x11]
        %v880 = vld [vmem:[%s739 + $0x330] sm:$0x11]
        %v881 = vld [vmem:[%s739 + $0x338] sm:$0x11]
        %v882 = vld [vmem:[%s739 + $0x340] sm:$0x11]
        %v883 = vld [vmem:[%s739 + $0x348] sm:$0x11]
        %v884 = vld [vmem:[%s739 + $0x350] sm:$0x11]
        %v885 = vld [vmem:[%s739 + $0x358] sm:$0x11]
        %v886 = vld [vmem:[%s739 + $0x360] sm:$0xff]
        %v887 = vld [vmem:[%s739 + $0x368] sm:$0xff]
        %v888 = vld [vmem:[%s739 + $0x370] sm:$0xff]
        %v889 = vld [vmem:[%s739 + $0x378] sm:$0xff]
        %v890 = vld [vmem:[%s739 + $0x380] sm:$0xff]
        %v891 = vld [vmem:[%s739 + $0x388] sm:$0xff]
        %v892 = vld [vmem:[%s739 + $0x390] sm:$0xff]
        %v893 = vld [vmem:[%s739 + $0x398] sm:$0xff]
        %v894 = vld [vmem:[%s739 + $0x3a0] sm:$0xff]
        %v895 = vld [vmem:[%s739 + $0x3a8] sm:$0xff]
        %v896 = vld [vmem:[%s739 + $0x3b0] sm:$0xff]
        %v897 = vld [vmem:[%s739 + $0x3b8] sm:$0xff]
        %v898 = vld [vmem:[%s739 + $0x3c0] sm:$0xff]
        %v899 = vld [vmem:[%s739 + $0x3c8] sm:$0xff]
        %v900 = vld [vmem:[%s739 + $0x3d0] sm:$0xff]
        %v901 = vld [vmem:[%s739 + $0x3d8] sm:$0xff]
        %v902 = vld [vmem:[%s739 + $0x3e0] sm:$0xff]
        %v903 = vld [vmem:[%s739 + $0x3e8] sm:$0xff]
        %v904 = vld [vmem:[%s739 + $0x3f0] sm:$0xff]
        %v905 = vld [vmem:[%s739 + $0x3f8] sm:$0xff]
        %v906 = vld [vmem:[%s739 + $0x400] sm:$0xff]
        %v907 = vld [vmem:[%s739 + $0x408] sm:$0xff]
        %v908 = vld [vmem:[%s739 + $0x410] sm:$0xff]
        %v909 = vld [vmem:[%s739 + $0x418] sm:$0xff]
        %v910 = vld [vmem:[%s739 + $0x420] sm:$0xff]
        %v911 = vld [vmem:[%s739 + $0x428] sm:$0xff]
        %v912 = vld [vmem:[%s739 + $0x430] sm:$0xff]
        %v913 = vld [vmem:[%s739 + $0x438] sm:$0x11]
        %v914 = vld [vmem:[%s739 + $0x440] sm:$0x11]
        %v915 = vld [vmem:[%s739 + $0x448] sm:$0x11]
        %v916 = vld [vmem:[%s739 + $0x450] sm:$0x11]
        %v917 = vld [vmem:[%s739 + $0x458] sm:$0x11]
        %v918 = vld [vmem:[%s739 + $0x460] sm:$0x11]
        %v919 = vld [vmem:[%s739 + $0x468] sm:$0x11]
        %v920 = vld [vmem:[%s739 + $0x470] sm:$0x11]
        %v921 = vld [vmem:[%s739 + $0x478] sm:$0x11]
        %v922 = vld [vmem:[%s739 + $0x480] sm:$0xff]
        %v923 = vld [vmem:[%s739 + $0x488] sm:$0xff]
        %v924 = vld [vmem:[%s739 + $0x490] sm:$0xff]
        %v925 = vld [vmem:[%s739 + $0x498] sm:$0xff]
        %v926 = vld [vmem:[%s739 + $0x4a0] sm:$0xff]
        %v927 = vld [vmem:[%s739 + $0x4a8] sm:$0xff]
        %v928 = vld [vmem:[%s739 + $0x4b0] sm:$0xff]
        %v929 = vld [vmem:[%s739 + $0x4b8] sm:$0xff]
        %v930 = vld [vmem:[%s739 + $0x4c0] sm:$0xff]
        %v931 = vld [vmem:[%s739 + $0x4c8] sm:$0xff]
        %v932 = vld [vmem:[%s739 + $0x4d0] sm:$0xff]
        %v933 = vld [vmem:[%s739 + $0x4d8] sm:$0xff]
        %v934 = vld [vmem:[%s739 + $0x4e0] sm:$0xff]
        %v935 = vld [vmem:[%s739 + $0x4e8] sm:$0xff]
        %v936 = vld [vmem:[%s739 + $0x4f0] sm:$0xff]
        %v937 = vld [vmem:[%s739 + $0x4f8] sm:$0xff]
        %v938 = vld [vmem:[%s739 + $0x500] sm:$0xff]
        %v939 = vld [vmem:[%s739 + $0x508] sm:$0xff]
        %v940 = vld [vmem:[%s739 + $0x510] sm:$0xff]
        %v941 = vld [vmem:[%s739 + $0x518] sm:$0xff]
        %v942 = vld [vmem:[%s739 + $0x520] sm:$0xff]
        %v943 = vld [vmem:[%s739 + $0x528] sm:$0xff]
        %v944 = vld [vmem:[%s739 + $0x530] sm:$0xff]
        %v945 = vld [vmem:[%s739 + $0x538] sm:$0xff]
        %v946 = vld [vmem:[%s739 + $0x540] sm:$0xff]
        %v947 = vld [vmem:[%s739 + $0x548] sm:$0xff]
        %v948 = vld [vmem:[%s739 + $0x550] sm:$0xff]
        %v949 = vld [vmem:[%s739 + $0x558] sm:$0x11]
        %v950 = vld [vmem:[%s739 + $0x560] sm:$0x11]
        %v951 = vld [vmem:[%s739 + $0x568] sm:$0x11]
        %v952 = vld [vmem:[%s739 + $0x570] sm:$0x11]
        %v953 = vld [vmem:[%s739 + $0x578] sm:$0x11]
        %v954 = vld [vmem:[%s739 + $0x580] sm:$0x11]
        %v955 = vld [vmem:[%s739 + $0x588] sm:$0x11]
        %v956 = vld [vmem:[%s739 + $0x590] sm:$0x11]
        %v957 = vld [vmem:[%s739 + $0x598] sm:$0x11]
        %v958 = vld [vmem:[%s739 + $0x5a0] sm:$0xff]
        %v959 = vld [vmem:[%s739 + $0x5a8] sm:$0xff]
        %v960 = vld [vmem:[%s739 + $0x5b0] sm:$0xff]
        %v961 = vld [vmem:[%s739 + $0x5b8] sm:$0xff]
        %v962 = vld [vmem:[%s739 + $0x5c0] sm:$0xff]
        %v963 = vld [vmem:[%s739 + $0x5c8] sm:$0xff]
        %v964 = vld [vmem:[%s739 + $0x5d0] sm:$0xff]
        %v965 = vld [vmem:[%s739 + $0x5d8] sm:$0xff]
        %v966 = vld [vmem:[%s739 + $0x5e0] sm:$0xff]
        %v967 = vld [vmem:[%s739 + $0x5e8] sm:$0xff]
        %v968 = vld [vmem:[%s739 + $0x5f0] sm:$0xff]
        %v969 = vld [vmem:[%s739 + $0x5f8] sm:$0xff]
        %v970 = vld [vmem:[%s739 + $0x600] sm:$0xff]
        %v971 = vld [vmem:[%s739 + $0x608] sm:$0xff]
        %v972 = vld [vmem:[%s739 + $0x610] sm:$0xff]
        %v973 = vld [vmem:[%s739 + $0x618] sm:$0xff]
        %v974 = vld [vmem:[%s739 + $0x620] sm:$0xff]
        %v975 = vld [vmem:[%s739 + $0x628] sm:$0xff]
        %v976 = vld [vmem:[%s739 + $0x630] sm:$0xff]
        %v977 = vld [vmem:[%s739 + $0x638] sm:$0xff]
        %v978 = vld [vmem:[%s739 + $0x640] sm:$0xff]
        %v979 = vld [vmem:[%s739 + $0x648] sm:$0xff]
        %v980 = vld [vmem:[%s739 + $0x650] sm:$0xff]
        %v981 = vld [vmem:[%s739 + $0x658] sm:$0xff]
        %v982 = vld [vmem:[%s739 + $0x660] sm:$0xff]
        %v983 = vld [vmem:[%s739 + $0x668] sm:$0xff]
        %v984 = vld [vmem:[%s739 + $0x670] sm:$0xff]
        %v985 = vld [vmem:[%s739 + $0x678] sm:$0x11]
        %v986 = vld [vmem:[%s739 + $0x680] sm:$0x11]
        %v987 = vld [vmem:[%s739 + $0x688] sm:$0x11]
        %v988 = vld [vmem:[%s739 + $0x690] sm:$0x11]
        %v989 = vld [vmem:[%s739 + $0x698] sm:$0x11]
        %v990 = vld [vmem:[%s739 + $0x6a0] sm:$0x11]
        %v991 = vld [vmem:[%s739 + $0x6a8] sm:$0x11]
        %v992 = vld [vmem:[%s739 + $0x6b0] sm:$0x11]
        %v993 = vld [vmem:[%s739 + $0x6b8] sm:$0x11]
        %v994 = vld [vmem:[%s739 + $0x6c0] sm:$0xff]
        %v995 = vld [vmem:[%s739 + $0x6c8] sm:$0xff]
        %v996 = vld [vmem:[%s739 + $0x6d0] sm:$0xff]
        %v997 = vld [vmem:[%s739 + $0x6d8] sm:$0xff]
        %v998 = vld [vmem:[%s739 + $0x6e0] sm:$0xff]
        %v999 = vld [vmem:[%s739 + $0x6e8] sm:$0xff]
        %v1000 = vld [vmem:[%s739 + $0x6f0] sm:$0xff]
        %v1001 = vld [vmem:[%s739 + $0x6f8] sm:$0xff]
        %v1002 = vld [vmem:[%s739 + $0x700] sm:$0xff]
        %v1003 = vld [vmem:[%s739 + $0x708] sm:$0xff]
        %v1004 = vld [vmem:[%s739 + $0x710] sm:$0xff]
        %v1005 = vld [vmem:[%s739 + $0x718] sm:$0xff]
        %v1006 = vld [vmem:[%s739 + $0x720] sm:$0xff]
        %v1007 = vld [vmem:[%s739 + $0x728] sm:$0xff]
        %v1008 = vld [vmem:[%s739 + $0x730] sm:$0xff]
        %v1009 = vld [vmem:[%s739 + $0x738] sm:$0xff]
        %v1010 = vld [vmem:[%s739 + $0x740] sm:$0xff]
        %v1011 = vld [vmem:[%s739 + $0x748] sm:$0xff]
        %v1012 = vld [vmem:[%s739 + $0x750] sm:$0xff]
        %v1013 = vld [vmem:[%s739 + $0x758] sm:$0xff]
        %v1014 = vld [vmem:[%s739 + $0x760] sm:$0xff]
        %v1015 = vld [vmem:[%s739 + $0x768] sm:$0xff]
        %v1016 = vld [vmem:[%s739 + $0x770] sm:$0xff]
        %v1017 = vld [vmem:[%s739 + $0x778] sm:$0xff]
        %v1018 = vld [vmem:[%s739 + $0x780] sm:$0xff]
        %v1019 = vld [vmem:[%s739 + $0x788] sm:$0xff]
        %v1020 = vld [vmem:[%s739 + $0x790] sm:$0xff]
        %v1021 = vld [vmem:[%s739 + $0x798] sm:$0x11]
        %v1022 = vld [vmem:[%s739 + $0x7a0] sm:$0x11]
        %v1023 = vld [vmem:[%s739 + $0x7a8] sm:$0x11]
        %v1024 = vld [vmem:[%s739 + $0x7b0] sm:$0x11]
        %v1025 = vld [vmem:[%s739 + $0x7b8] sm:$0x11]
        %v1026 = vld [vmem:[%s739 + $0x7c0] sm:$0x11]
        %v1027 = vld [vmem:[%s739 + $0x7c8] sm:$0x11]
        %v1028 = vld [vmem:[%s739 + $0x7d0] sm:$0x11]
        %v1029 = vld [vmem:[%s739 + $0x7d8] sm:$0x11]
        %v1030 = vld [vmem:[%s739 + $0x7e0] sm:$0xff]
        %v1031 = vld [vmem:[%s739 + $0x7e8] sm:$0xff]
        %v1032 = vld [vmem:[%s739 + $0x7f0] sm:$0xff]
        %v1033 = vld [vmem:[%s739 + $0x7f8] sm:$0xff]
        %v1034 = vld [vmem:[%s739 + $0x800] sm:$0xff]
        %v1035 = vld [vmem:[%s739 + $0x808] sm:$0xff]
        %v1036 = vld [vmem:[%s739 + $0x810] sm:$0xff]
        %v1037 = vld [vmem:[%s739 + $0x818] sm:$0xff]
        %v1038 = vld [vmem:[%s739 + $0x820] sm:$0xff]
        %v1039 = vld [vmem:[%s739 + $0x828] sm:$0xff]
        %v1040 = vld [vmem:[%s739 + $0x830] sm:$0xff]
        %v1041 = vld [vmem:[%s739 + $0x838] sm:$0xff]
        %v1042 = vld [vmem:[%s739 + $0x840] sm:$0xff]
        %v1043 = vld [vmem:[%s739 + $0x848] sm:$0xff]
        %v1044 = vld [vmem:[%s739 + $0x850] sm:$0xff]
        %v1045 = vld [vmem:[%s739 + $0x858] sm:$0xff]
        %v1046 = vld [vmem:[%s739 + $0x860] sm:$0xff]
        %v1047 = vld [vmem:[%s739 + $0x868] sm:$0xff]
        %v1048 = vld [vmem:[%s739 + $0x870] sm:$0xff]
        %v1049 = vld [vmem:[%s739 + $0x878] sm:$0xff]
        %v1050 = vld [vmem:[%s739 + $0x880] sm:$0xff]
        %v1051 = vld [vmem:[%s739 + $0x888] sm:$0xff]
        %v1052 = vld [vmem:[%s739 + $0x890] sm:$0xff]
        %v1053 = vld [vmem:[%s739 + $0x898] sm:$0xff]
        %v1054 = vld [vmem:[%s739 + $0x8a0] sm:$0xff]
        %v1055 = vld [vmem:[%s739 + $0x8a8] sm:$0xff]
        %v1056 = vld [vmem:[%s739 + $0x8b0] sm:$0xff]
        %v1057 = vld [vmem:[%s739 + $0x8b8] sm:$0x11]
        %v1058 = vld [vmem:[%s739 + $0x8c0] sm:$0x11]
        %v1059 = vld [vmem:[%s739 + $0x8c8] sm:$0x11]
        %v1060 = vld [vmem:[%s739 + $0x8d0] sm:$0x11]
        %v1061 = vld [vmem:[%s739 + $0x8d8] sm:$0x11]
        %v1062 = vld [vmem:[%s739 + $0x8e0] sm:$0x11]
        %v1063 = vld [vmem:[%s739 + $0x8e8] sm:$0x11]
        %v1064 = vld [vmem:[%s739 + $0x8f0] sm:$0x11]
        %v1065 = vld [vmem:[%s739 + $0x8f8] sm:$0x11]
        %v1068 = vunpack.c.l.b16 %v762
        %v1069 = vunpack.c.l.b16 %v763
        %v1070 = vpack.c.b16 %v1069, %v1068
        %v1107 = vunpack.c.l.b16 %v778
        %v1108 = vunpack.c.h.b16 %v778
        %v1109 = vunpack.c.l.b16 %v779
        %v1110 = vunpack.c.h.b16 %v779
        %v1111 = vunpack.c.l.b16 %v780
        %v1112 = vunpack.c.h.b16 %v780
        %v1113 = vunpack.c.l.b16 %v781
        %v1114 = vunpack.c.h.b16 %v781
        %v1115 = vunpack.c.l.b16 %v782
        %v1116 = vunpack.c.h.b16 %v782
        %v1117 = vunpack.c.l.b16 %v783
        %v1118 = vunpack.c.h.b16 %v783
        %v1119 = vunpack.c.l.b16 %v784
        %v1120 = vunpack.c.h.b16 %v784
        %v1121 = vunpack.c.l.b16 %v785
        %v1122 = vunpack.c.h.b16 %v785
        %v1123 = vunpack.c.l.b16 %v786
        %v1124 = vunpack.c.h.b16 %v786
        %v1125 = vunpack.c.l.b16 %v787
        %v1126 = vunpack.c.h.b16 %v787
        %v1127 = vunpack.c.l.b16 %v788
        %v1128 = vunpack.c.h.b16 %v788
        %v1129 = vunpack.c.l.b16 %v789
        %v1130 = vunpack.c.h.b16 %v789
        %v1131 = vunpack.c.l.b16 %v790
        %v1132 = vunpack.c.h.b16 %v790
        %v1133 = vunpack.c.l.b16 %v791
        %v1134 = vunpack.c.h.b16 %v791
        %v1135 = vunpack.c.l.b16 %v792
        %v1136 = vunpack.c.h.b16 %v792
        %v1137 = vunpack.c.l.b16 %v793
        %v1138 = vunpack.c.h.b16 %v793
        %v1139 = vunpack.c.l.b16 %v794
        %v1140 = vunpack.c.h.b16 %v794
        %v1141 = vunpack.c.l.b16 %v795
        %v1142 = vunpack.c.h.b16 %v795
        %v1143 = vunpack.c.l.b16 %v796
        %v1144 = vunpack.c.h.b16 %v796
        %v1145 = vunpack.c.l.b16 %v797
        %v1146 = vunpack.c.h.b16 %v797
        %v1147 = vunpack.c.l.b16 %v798
        %v1148 = vunpack.c.h.b16 %v798
        %v1149 = vunpack.c.l.b16 %v799
        %v1150 = vunpack.c.h.b16 %v799
        %v1151 = vunpack.c.l.b16 %v800
        %v1152 = vunpack.c.h.b16 %v800
        %v1153 = vunpack.c.l.b16 %v801
        %v1154 = vunpack.c.h.b16 %v801
        %v1155 = vunpack.c.l.b16 %v802
        %v1156 = vunpack.c.h.b16 %v802
        %v1157 = vunpack.c.l.b16 %v803
        %v1158 = vunpack.c.h.b16 %v803
        %v1159 = vunpack.c.l.b16 %v804
        %v1160 = vunpack.c.h.b16 %v804
        %v1161 = vunpack.c.l.b16 %v805
        %v1162 = vunpack.c.h.b16 %v805
        %v1163 = vunpack.c.l.b16 %v806
        %v1164 = vunpack.c.h.b16 %v806
        %v1165 = vunpack.c.l.b16 %v807
        %v1166 = vunpack.c.h.b16 %v807
        %v1167 = vunpack.c.l.b16 %v808
        %v1168 = vunpack.c.h.b16 %v808
        %v1169 = vunpack.c.l.b16 %v809
        %v1170 = vunpack.c.h.b16 %v809
        %v1171 = vunpack.c.l.b16 %v810
        %v1172 = vunpack.c.h.b16 %v810
        %v1173 = vunpack.c.l.b16 %v811
        %v1174 = vunpack.c.h.b16 %v811
        %v1175 = vunpack.c.l.b16 %v812
        %v1176 = vunpack.c.h.b16 %v812
        %v1177 = vunpack.c.l.b16 %v813
        %v1178 = vunpack.c.h.b16 %v813
        %v1179 = vpack.c.b16 %v1125, %v1107
        %v1180 = vpack.c.b16 %v1126, %v1108
        %v1181 = vpack.c.b16 %v1127, %v1109
        %v1182 = vpack.c.b16 %v1128, %v1110
        %v1183 = vpack.c.b16 %v1129, %v1111
        %v1184 = vpack.c.b16 %v1130, %v1112
        %v1185 = vpack.c.b16 %v1131, %v1113
        %v1186 = vpack.c.b16 %v1132, %v1114
        %v1187 = vpack.c.b16 %v1133, %v1115
        %v1188 = vpack.c.b16 %v1134, %v1116
        %v1189 = vpack.c.b16 %v1135, %v1117
        %v1190 = vpack.c.b16 %v1136, %v1118
        %v1191 = vpack.c.b16 %v1137, %v1119
        %v1192 = vpack.c.b16 %v1138, %v1120
        %v1193 = vpack.c.b16 %v1139, %v1121
        %v1194 = vpack.c.b16 %v1140, %v1122
        %v1195 = vpack.c.b16 %v1141, %v1123
        %v1196 = vpack.c.b16 %v1142, %v1124
        %v1197 = vpack.c.b16 %v1161, %v1143
        %v1198 = vpack.c.b16 %v1162, %v1144
        %v1199 = vpack.c.b16 %v1163, %v1145
        %v1200 = vpack.c.b16 %v1164, %v1146
        %v1201 = vpack.c.b16 %v1165, %v1147
        %v1202 = vpack.c.b16 %v1166, %v1148
        %v1203 = vpack.c.b16 %v1167, %v1149
        %v1204 = vpack.c.b16 %v1168, %v1150
        %v1205 = vpack.c.b16 %v1169, %v1151
        %v1206 = vpack.c.b16 %v1170, %v1152
        %v1207 = vpack.c.b16 %v1171, %v1153
        %v1208 = vpack.c.b16 %v1172, %v1154
        %v1209 = vpack.c.b16 %v1173, %v1155
        %v1210 = vpack.c.b16 %v1174, %v1156
        %v1211 = vpack.c.b16 %v1175, %v1157
        %v1212 = vpack.c.b16 %v1176, %v1158
        %v1213 = vpack.c.b16 %v1177, %v1159
        %v1214 = vpack.c.b16 %v1178, %v1160
        %vm1233 = vcmask 203776
        %v1235 = vsel %vm1233, %v1070, 0
        %vm1237 = vcmask 1043456
        %vm1238 = vcmask 1044480
        %v1239 = vsel %vm1237, 4294967295, 65535
        %v1240 = vsel %vm1238, %v1239, 0
        %v1242 = vand.u32 %v1197, %v1240
        %v1245 = vand.u32 %v1198, %v1240
        %v1248 = vand.u32 %v1199, %v1240
        %v1251 = vand.u32 %v1200, %v1240
        %v1254 = vand.u32 %v1201, %v1240
        %v1257 = vand.u32 %v1202, %v1240
        %v1260 = vand.u32 %v1203, %v1240
        %v1263 = vand.u32 %v1204, %v1240
        %v1266 = vand.u32 %v1205, %v1240
        %v1269 = vand.u32 %v1206, %v1240
        %v1272 = vand.u32 %v1207, %v1240
        %v1275 = vand.u32 %v1208, %v1240
        %v1278 = vand.u32 %v1209, %v1240
        %v1281 = vand.u32 %v1210, %v1240
        %v1284 = vand.u32 %v1211, %v1240
        %v1287 = vand.u32 %v1212, %v1240
        %v1290 = vand.u32 %v1213, %v1240
        %v1293 = vand.u32 %v1214, %v1240
        %1295 = vmatprep.subr.bf16.mxu0 0
        %1296 = vmatpush1.bf16.msra.mxu0 0
        %1297 = vmatprep.subr.bf16.mxu0 0
        %1298 = vmatpush1.bf16.msra.mxu0 0
        %1299 = vmatprep.subr.bf16.mxu0 0
        %1300 = vmatpush1.bf16.msra.mxu0 0
        %1301 = vmatprep.subr.bf16.mxu0 0
        %1302 = vmatpush1.bf16.msra.mxu0 0
        %1303 = vmatprep.subr.bf16.mxu0 0
        %1304 = vmatpush1.bf16.msra.mxu0 0
        %1305 = vmatprep.subr.bf16.mxu0 0
        %1306 = vmatpush1.bf16.msra.mxu0 0
        %1307 = vmatprep.subr.bf16.mxu0 %v1245
        %1308 = vmatpush1.bf16.msra.mxu0 %v1242
        %1309 = vmatprep.subr.bf16.mxu0 %v1180
        %1310 = vmatpush1.bf16.msra.mxu0 %v1179
        %1311 = vmatprep.subr.bf16.mxu0 0
        %1312 = vmatpush2.bf16.msra.mxu0 0
        %1313 = vmatprep.subr.bf16.mxu0 0
        %1314 = vmatpush2.bf16.msra.mxu0 0
        %1315 = vmatprep.subr.bf16.mxu0 0
        %1316 = vmatpush2.bf16.msra.mxu0 0
        %1317 = vmatprep.subr.bf16.mxu0 0
        %1318 = vmatpush2.bf16.msra.mxu0 0
        %1319 = vmatprep.subr.bf16.mxu0 0
        %1320 = vmatpush2.bf16.msra.mxu0 0
        %1321 = vmatprep.subr.bf16.mxu0 0
        %1322 = vmatpush2.bf16.msra.mxu0 0
        %1323 = vmatprep.subr.bf16.mxu0 0
        %1324 = vmatpush2.bf16.msra.mxu0 0
        %1325 = vmatprep.subr.bf16.mxu0 0
        %1326 = vmatpush2.bf16.msra.mxu0 0
        %1327 = vmatprep.mubr.bf16.mxu0 0
        %1328 = vmatmul.mubr.bf16.gmra.mxu0 %v1235
        %v1329 = vpop.f32.mrf.mxu0
        %v1330 = vadd.f32 0.0, %v1329
        %v1331 = vpop.f32.mrf.mxu0
        %v1332 = vadd.f32 0.0, %v1331
        %v1333 = vpop.f32.mrf.mxu0
        %v1334 = vadd.f32 0.0, %v1333
        %v1335 = vpop.f32.mrf.mxu0
        %v1336 = vadd.f32 0.0, %v1335
        %1337 = vdwg.mxu0
        %1338 = vmatprep.subr.bf16.mxu0 0
        %1339 = vmatpush1.bf16.msra.mxu0 0
        %1340 = vmatprep.subr.bf16.mxu0 0
        %1341 = vmatpush1.bf16.msra.mxu0 0
        %1342 = vmatprep.subr.bf16.mxu0 0
        %1343 = vmatpush1.bf16.msra.mxu0 0
        %1344 = vmatprep.subr.bf16.mxu0 0
        %1345 = vmatpush1.bf16.msra.mxu0 0
        %1346 = vmatprep.subr.bf16.mxu0 0
        %1347 = vmatpush1.bf16.msra.mxu0 0
        %1348 = vmatprep.subr.bf16.mxu0 0
        %1349 = vmatpush1.bf16.msra.mxu0 0
        %1350 = vmatprep.subr.bf16.mxu0 %v1251
        %1351 = vmatpush1.bf16.msra.mxu0 %v1248
        %1352 = vmatprep.subr.bf16.mxu0 %v1182
        %1353 = vmatpush1.bf16.msra.mxu0 %v1181
        %1354 = vmatprep.subr.bf16.mxu0 0
        %1355 = vmatpush2.bf16.msra.mxu0 0
        %1356 = vmatprep.subr.bf16.mxu0 0
        %1357 = vmatpush2.bf16.msra.mxu0 0
        %1358 = vmatprep.subr.bf16.mxu0 0
        %1359 = vmatpush2.bf16.msra.mxu0 0
        %1360 = vmatprep.subr.bf16.mxu0 0
        %1361 = vmatpush2.bf16.msra.mxu0 0
        %1362 = vmatprep.subr.bf16.mxu0 0
        %1363 = vmatpush2.bf16.msra.mxu0 0
        %1364 = vmatprep.subr.bf16.mxu0 0
        %1365 = vmatpush2.bf16.msra.mxu0 0
        %1366 = vmatprep.subr.bf16.mxu0 0
        %1367 = vmatpush2.bf16.msra.mxu0 0
        %1368 = vmatprep.subr.bf16.mxu0 0
        %1369 = vmatpush2.bf16.msra.mxu0 0
        %1370 = vmatprep.mubr.bf16.mxu0 0
        %1371 = vmatmul.mubr.bf16.gmra.mxu0 %v1235
        %v1372 = vpop.f32.mrf.mxu0
        %v1373 = vadd.f32 0.0, %v1372
        %v1374 = vpop.f32.mrf.mxu0
        %v1375 = vadd.f32 0.0, %v1374
        %v1376 = vpop.f32.mrf.mxu0
        %v1377 = vadd.f32 0.0, %v1376
        %v1378 = vpop.f32.mrf.mxu0
        %v1379 = vadd.f32 0.0, %v1378
        %1380 = vdwg.mxu0
        %1381 = vmatprep.subr.bf16.mxu0 0
        %1382 = vmatpush1.bf16.msra.mxu0 0
        %1383 = vmatprep.subr.bf16.mxu0 0
        %1384 = vmatpush1.bf16.msra.mxu0 0
        %1385 = vmatprep.subr.bf16.mxu0 0
        %1386 = vmatpush1.bf16.msra.mxu0 0
        %1387 = vmatprep.subr.bf16.mxu0 0
        %1388 = vmatpush1.bf16.msra.mxu0 0
        %1389 = vmatprep.subr.bf16.mxu0 0
        %1390 = vmatpush1.bf16.msra.mxu0 0
        %1391 = vmatprep.subr.bf16.mxu0 0
        %1392 = vmatpush1.bf16.msra.mxu0 0
        %1393 = vmatprep.subr.bf16.mxu0 %v1257
        %1394 = vmatpush1.bf16.msra.mxu0 %v1254
        %1395 = vmatprep.subr.bf16.mxu0 %v1184
        %1396 = vmatpush1.bf16.msra.mxu0 %v1183
        %1397 = vmatprep.subr.bf16.mxu0 0
        %1398 = vmatpush2.bf16.msra.mxu0 0
        %1399 = vmatprep.subr.bf16.mxu0 0
        %1400 = vmatpush2.bf16.msra.mxu0 0
        %1401 = vmatprep.subr.bf16.mxu0 0
        %1402 = vmatpush2.bf16.msra.mxu0 0
        %1403 = vmatprep.subr.bf16.mxu0 0
        %1404 = vmatpush2.bf16.msra.mxu0 0
        %1405 = vmatprep.subr.bf16.mxu0 0
        %1406 = vmatpush2.bf16.msra.mxu0 0
        %1407 = vmatprep.subr.bf16.mxu0 0
        %1408 = vmatpush2.bf16.msra.mxu0 0
        %1409 = vmatprep.subr.bf16.mxu0 0
        %1410 = vmatpush2.bf16.msra.mxu0 0
        %1411 = vmatprep.subr.bf16.mxu0 0
        %1412 = vmatpush2.bf16.msra.mxu0 0
        %1413 = vmatprep.mubr.bf16.mxu0 0
        %1414 = vmatmul.mubr.bf16.gmra.mxu0 %v1235
        %v1415 = vpop.f32.mrf.mxu0
        %v1416 = vadd.f32 0.0, %v1415
        %v1417 = vpop.f32.mrf.mxu0
        %v1418 = vadd.f32 0.0, %v1417
        %v1419 = vpop.f32.mrf.mxu0
        %v1420 = vadd.f32 0.0, %v1419
        %v1421 = vpop.f32.mrf.mxu0
        %v1422 = vadd.f32 0.0, %v1421
        %1423 = vdwg.mxu0
        %1424 = vmatprep.subr.bf16.mxu0 0
        %1425 = vmatpush1.bf16.msra.mxu0 0
        %1426 = vmatprep.subr.bf16.mxu0 0
        %1427 = vmatpush1.bf16.msra.mxu0 0
        %1428 = vmatprep.subr.bf16.mxu0 0
        %1429 = vmatpush1.bf16.msra.mxu0 0
        %1430 = vmatprep.subr.bf16.mxu0 0
        %1431 = vmatpush1.bf16.msra.mxu0 0
        %1432 = vmatprep.subr.bf16.mxu0 0
        %1433 = vmatpush1.bf16.msra.mxu0 0
        %1434 = vmatprep.subr.bf16.mxu0 0
        %1435 = vmatpush1.bf16.msra.mxu0 0
        %1436 = vmatprep.subr.bf16.mxu0 %v1263
        %1437 = vmatpush1.bf16.msra.mxu0 %v1260
        %1438 = vmatprep.subr.bf16.mxu0 %v1186
        %1439 = vmatpush1.bf16.msra.mxu0 %v1185
        %1440 = vmatprep.subr.bf16.mxu0 0
        %1441 = vmatpush2.bf16.msra.mxu0 0
        %1442 = vmatprep.subr.bf16.mxu0 0
        %1443 = vmatpush2.bf16.msra.mxu0 0
        %1444 = vmatprep.subr.bf16.mxu0 0
        %1445 = vmatpush2.bf16.msra.mxu0 0
        %1446 = vmatprep.subr.bf16.mxu0 0
        %1447 = vmatpush2.bf16.msra.mxu0 0
        %1448 = vmatprep.subr.bf16.mxu0 0
        %1449 = vmatpush2.bf16.msra.mxu0 0
        %1450 = vmatprep.subr.bf16.mxu0 0
        %1451 = vmatpush2.bf16.msra.mxu0 0
        %1452 = vmatprep.subr.bf16.mxu0 0
        %1453 = vmatpush2.bf16.msra.mxu0 0
        %1454 = vmatprep.subr.bf16.mxu0 0
        %1455 = vmatpush2.bf16.msra.mxu0 0
        %1456 = vmatprep.mubr.bf16.mxu0 0
        %1457 = vmatmul.mubr.bf16.gmra.mxu0 %v1235
        %v1458 = vpop.f32.mrf.mxu0
        %v1459 = vadd.f32 0.0, %v1458
        %v1460 = vpop.f32.mrf.mxu0
        %v1461 = vadd.f32 0.0, %v1460
        %v1462 = vpop.f32.mrf.mxu0
        %v1463 = vadd.f32 0.0, %v1462
        %v1464 = vpop.f32.mrf.mxu0
        %v1465 = vadd.f32 0.0, %v1464
        %1466 = vdwg.mxu0
        %1467 = vmatprep.subr.bf16.mxu0 0
        %1468 = vmatpush1.bf16.msra.mxu0 0
        %1469 = vmatprep.subr.bf16.mxu0 0
        %1470 = vmatpush1.bf16.msra.mxu0 0
        %1471 = vmatprep.subr.bf16.mxu0 0
        %1472 = vmatpush1.bf16.msra.mxu0 0
        %1473 = vmatprep.subr.bf16.mxu0 0
        %1474 = vmatpush1.bf16.msra.mxu0 0
        %1475 = vmatprep.subr.bf16.mxu0 0
        %1476 = vmatpush1.bf16.msra.mxu0 0
        %1477 = vmatprep.subr.bf16.mxu0 0
        %1478 = vmatpush1.bf16.msra.mxu0 0
        %1479 = vmatprep.subr.bf16.mxu0 %v1269
        %1480 = vmatpush1.bf16.msra.mxu0 %v1266
        %1481 = vmatprep.subr.bf16.mxu0 %v1188
        %1482 = vmatpush1.bf16.msra.mxu0 %v1187
        %1483 = vmatprep.subr.bf16.mxu0 0
        %1484 = vmatpush2.bf16.msra.mxu0 0
        %1485 = vmatprep.subr.bf16.mxu0 0
        %1486 = vmatpush2.bf16.msra.mxu0 0
        %1487 = vmatprep.subr.bf16.mxu0 0
        %1488 = vmatpush2.bf16.msra.mxu0 0
        %1489 = vmatprep.subr.bf16.mxu0 0
        %1490 = vmatpush2.bf16.msra.mxu0 0
        %1491 = vmatprep.subr.bf16.mxu0 0
        %1492 = vmatpush2.bf16.msra.mxu0 0
        %1493 = vmatprep.subr.bf16.mxu0 0
        %1494 = vmatpush2.bf16.msra.mxu0 0
        %1495 = vmatprep.subr.bf16.mxu0 0
        %1496 = vmatpush2.bf16.msra.mxu0 0
        %1497 = vmatprep.subr.bf16.mxu0 0
        %1498 = vmatpush2.bf16.msra.mxu0 0
        %1499 = vmatprep.mubr.bf16.mxu0 0
        %1500 = vmatmul.mubr.bf16.gmra.mxu0 %v1235
        %v1501 = vpop.f32.mrf.mxu0
        %v1502 = vadd.f32 0.0, %v1501
        %v1503 = vpop.f32.mrf.mxu0
        %v1504 = vadd.f32 0.0, %v1503
        %v1505 = vpop.f32.mrf.mxu0
        %v1506 = vadd.f32 0.0, %v1505
        %v1507 = vpop.f32.mrf.mxu0
        %v1508 = vadd.f32 0.0, %v1507
        %1509 = vdwg.mxu0
        %1510 = vmatprep.subr.bf16.mxu0 0
        %1511 = vmatpush1.bf16.msra.mxu0 0
        %1512 = vmatprep.subr.bf16.mxu0 0
        %1513 = vmatpush1.bf16.msra.mxu0 0
        %1514 = vmatprep.subr.bf16.mxu0 0
        %1515 = vmatpush1.bf16.msra.mxu0 0
        %1516 = vmatprep.subr.bf16.mxu0 0
        %1517 = vmatpush1.bf16.msra.mxu0 0
        %1518 = vmatprep.subr.bf16.mxu0 0
        %1519 = vmatpush1.bf16.msra.mxu0 0
        %1520 = vmatprep.subr.bf16.mxu0 0
        %1521 = vmatpush1.bf16.msra.mxu0 0
        %1522 = vmatprep.subr.bf16.mxu0 %v1275
        %1523 = vmatpush1.bf16.msra.mxu0 %v1272
        %1524 = vmatprep.subr.bf16.mxu0 %v1190
        %1525 = vmatpush1.bf16.msra.mxu0 %v1189
        %1526 = vmatprep.subr.bf16.mxu0 0
        %1527 = vmatpush2.bf16.msra.mxu0 0
        %1528 = vmatprep.subr.bf16.mxu0 0
        %1529 = vmatpush2.bf16.msra.mxu0 0
        %1530 = vmatprep.subr.bf16.mxu0 0
        %1531 = vmatpush2.bf16.msra.mxu0 0
        %1532 = vmatprep.subr.bf16.mxu0 0
        %1533 = vmatpush2.bf16.msra.mxu0 0
        %1534 = vmatprep.subr.bf16.mxu0 0
        %1535 = vmatpush2.bf16.msra.mxu0 0
        %1536 = vmatprep.subr.bf16.mxu0 0
        %1537 = vmatpush2.bf16.msra.mxu0 0
        %1538 = vmatprep.subr.bf16.mxu0 0
        %1539 = vmatpush2.bf16.msra.mxu0 0
        %1540 = vmatprep.subr.bf16.mxu0 0
        %1541 = vmatpush2.bf16.msra.mxu0 0
        %1542 = vmatprep.mubr.bf16.mxu0 0
        %1543 = vmatmul.mubr.bf16.gmra.mxu0 %v1235
        %v1544 = vpop.f32.mrf.mxu0
        %v1545 = vadd.f32 0.0, %v1544
        %v1546 = vpop.f32.mrf.mxu0
        %v1547 = vadd.f32 0.0, %v1546
        %v1548 = vpop.f32.mrf.mxu0
        %v1549 = vadd.f32 0.0, %v1548
        %v1550 = vpop.f32.mrf.mxu0
        %v1551 = vadd.f32 0.0, %v1550
        %1552 = vdwg.mxu0
        %1553 = vmatprep.subr.bf16.mxu0 0
        %1554 = vmatpush1.bf16.msra.mxu0 0
        %1555 = vmatprep.subr.bf16.mxu0 0
        %1556 = vmatpush1.bf16.msra.mxu0 0
        %1557 = vmatprep.subr.bf16.mxu0 0
        %1558 = vmatpush1.bf16.msra.mxu0 0
        %1559 = vmatprep.subr.bf16.mxu0 0
        %1560 = vmatpush1.bf16.msra.mxu0 0
        %1561 = vmatprep.subr.bf16.mxu0 0
        %1562 = vmatpush1.bf16.msra.mxu0 0
        %1563 = vmatprep.subr.bf16.mxu0 0
        %1564 = vmatpush1.bf16.msra.mxu0 0
        %1565 = vmatprep.subr.bf16.mxu0 %v1281
        %1566 = vmatpush1.bf16.msra.mxu0 %v1278
        %1567 = vmatprep.subr.bf16.mxu0 %v1192
        %1568 = vmatpush1.bf16.msra.mxu0 %v1191
        %1569 = vmatprep.subr.bf16.mxu0 0
        %1570 = vmatpush2.bf16.msra.mxu0 0
        %1571 = vmatprep.subr.bf16.mxu0 0
        %1572 = vmatpush2.bf16.msra.mxu0 0
        %1573 = vmatprep.subr.bf16.mxu0 0
        %1574 = vmatpush2.bf16.msra.mxu0 0
        %1575 = vmatprep.subr.bf16.mxu0 0
        %1576 = vmatpush2.bf16.msra.mxu0 0
        %1577 = vmatprep.subr.bf16.mxu0 0
        %1578 = vmatpush2.bf16.msra.mxu0 0
        %1579 = vmatprep.subr.bf16.mxu0 0
        %1580 = vmatpush2.bf16.msra.mxu0 0
        %1581 = vmatprep.subr.bf16.mxu0 0
        %1582 = vmatpush2.bf16.msra.mxu0 0
        %1583 = vmatprep.subr.bf16.mxu0 0
        %1584 = vmatpush2.bf16.msra.mxu0 0
        %1585 = vmatprep.mubr.bf16.mxu0 0
        %1586 = vmatmul.mubr.bf16.gmra.mxu0 %v1235
        %v1587 = vpop.f32.mrf.mxu0
        %v1588 = vadd.f32 0.0, %v1587
        %v1589 = vpop.f32.mrf.mxu0
        %v1590 = vadd.f32 0.0, %v1589
        %v1591 = vpop.f32.mrf.mxu0
        %v1592 = vadd.f32 0.0, %v1591
        %v1593 = vpop.f32.mrf.mxu0
        %v1594 = vadd.f32 0.0, %v1593
        %1595 = vdwg.mxu0
        %1596 = vmatprep.subr.bf16.mxu0 0
        %1597 = vmatpush1.bf16.msra.mxu0 0
        %1598 = vmatprep.subr.bf16.mxu0 0
        %1599 = vmatpush1.bf16.msra.mxu0 0
        %1600 = vmatprep.subr.bf16.mxu0 0
        %1601 = vmatpush1.bf16.msra.mxu0 0
        %1602 = vmatprep.subr.bf16.mxu0 0
        %1603 = vmatpush1.bf16.msra.mxu0 0
        %1604 = vmatprep.subr.bf16.mxu0 0
        %1605 = vmatpush1.bf16.msra.mxu0 0
        %1606 = vmatprep.subr.bf16.mxu0 0
        %1607 = vmatpush1.bf16.msra.mxu0 0
        %1608 = vmatprep.subr.bf16.mxu0 %v1287
        %1609 = vmatpush1.bf16.msra.mxu0 %v1284
        %1610 = vmatprep.subr.bf16.mxu0 %v1194
        %1611 = vmatpush1.bf16.msra.mxu0 %v1193
        %1612 = vmatprep.subr.bf16.mxu0 0
        %1613 = vmatpush2.bf16.msra.mxu0 0
        %1614 = vmatprep.subr.bf16.mxu0 0
        %1615 = vmatpush2.bf16.msra.mxu0 0
        %1616 = vmatprep.subr.bf16.mxu0 0
        %1617 = vmatpush2.bf16.msra.mxu0 0
        %1618 = vmatprep.subr.bf16.mxu0 0
        %1619 = vmatpush2.bf16.msra.mxu0 0
        %1620 = vmatprep.subr.bf16.mxu0 0
        %1621 = vmatpush2.bf16.msra.mxu0 0
        %1622 = vmatprep.subr.bf16.mxu0 0
        %1623 = vmatpush2.bf16.msra.mxu0 0
        %1624 = vmatprep.subr.bf16.mxu0 0
        %1625 = vmatpush2.bf16.msra.mxu0 0
        %1626 = vmatprep.subr.bf16.mxu0 0
        %1627 = vmatpush2.bf16.msra.mxu0 0
        %1628 = vmatprep.mubr.bf16.mxu0 0
        %1629 = vmatmul.mubr.bf16.gmra.mxu0 %v1235
        %v1630 = vpop.f32.mrf.mxu0
        %v1631 = vadd.f32 0.0, %v1630
        %v1632 = vpop.f32.mrf.mxu0
        %v1633 = vadd.f32 0.0, %v1632
        %v1634 = vpop.f32.mrf.mxu0
        %v1635 = vadd.f32 0.0, %v1634
        %v1636 = vpop.f32.mrf.mxu0
        %v1637 = vadd.f32 0.0, %v1636
        %1638 = vdwg.mxu0
        %1639 = vmatprep.subr.bf16.mxu0 0
        %1640 = vmatpush1.bf16.msra.mxu0 0
        %1641 = vmatprep.subr.bf16.mxu0 0
        %1642 = vmatpush1.bf16.msra.mxu0 0
        %1643 = vmatprep.subr.bf16.mxu0 0
        %1644 = vmatpush1.bf16.msra.mxu0 0
        %1645 = vmatprep.subr.bf16.mxu0 0
        %1646 = vmatpush1.bf16.msra.mxu0 0
        %1647 = vmatprep.subr.bf16.mxu0 0
        %1648 = vmatpush1.bf16.msra.mxu0 0
        %1649 = vmatprep.subr.bf16.mxu0 0
        %1650 = vmatpush1.bf16.msra.mxu0 0
        %1651 = vmatprep.subr.bf16.mxu0 %v1293
        %1652 = vmatpush1.bf16.msra.mxu0 %v1290
        %1653 = vmatprep.subr.bf16.mxu0 %v1196
        %1654 = vmatpush1.bf16.msra.mxu0 %v1195
        %1655 = vmatprep.subr.bf16.mxu0 0
        %1656 = vmatpush2.bf16.msra.mxu0 0
        %1657 = vmatprep.subr.bf16.mxu0 0
        %1658 = vmatpush2.bf16.msra.mxu0 0
        %1659 = vmatprep.subr.bf16.mxu0 0
        %1660 = vmatpush2.bf16.msra.mxu0 0
        %1661 = vmatprep.subr.bf16.mxu0 0
        %1662 = vmatpush2.bf16.msra.mxu0 0
        %1663 = vmatprep.subr.bf16.mxu0 0
        %1664 = vmatpush2.bf16.msra.mxu0 0
        %1665 = vmatprep.subr.bf16.mxu0 0
        %1666 = vmatpush2.bf16.msra.mxu0 0
        %1667 = vmatprep.subr.bf16.mxu0 0
        %1668 = vmatpush2.bf16.msra.mxu0 0
        %1669 = vmatprep.subr.bf16.mxu0 0
        %1670 = vmatpush2.bf16.msra.mxu0 0
        %1671 = vmatprep.mubr.bf16.mxu0 0
        %1672 = vmatmul.mubr.bf16.gmra.mxu0 %v1235
        %v1673 = vpop.f32.mrf.mxu0
        %v1674 = vadd.f32 0.0, %v1673
        %v1675 = vpop.f32.mrf.mxu0
        %v1676 = vadd.f32 0.0, %v1675
        %v1677 = vpop.f32.mrf.mxu0
        %v1678 = vadd.f32 0.0, %v1677
        %v1679 = vpop.f32.mrf.mxu0
        %v1680 = vadd.f32 0.0, %v1679
        %1681 = vdwg.mxu0
        %v1684 = vunpack.c.l.b16 %v764
        %v1685 = vunpack.c.l.b16 %v765
        %v1686 = vpack.c.b16 %v1685, %v1684
        %v1723 = vunpack.c.l.b16 %v814
        %v1724 = vunpack.c.h.b16 %v814
        %v1725 = vunpack.c.l.b16 %v815
        %v1726 = vunpack.c.h.b16 %v815
        %v1727 = vunpack.c.l.b16 %v816
        %v1728 = vunpack.c.h.b16 %v816
        %v1729 = vunpack.c.l.b16 %v817
        %v1730 = vunpack.c.h.b16 %v817
        %v1731 = vunpack.c.l.b16 %v818
        %v1732 = vunpack.c.h.b16 %v818
        %v1733 = vunpack.c.l.b16 %v819
        %v1734 = vunpack.c.h.b16 %v819
        %v1735 = vunpack.c.l.b16 %v820
        %v1736 = vunpack.c.h.b16 %v820
        %v1737 = vunpack.c.l.b16 %v821
        %v1738 = vunpack.c.h.b16 %v821
        %v1739 = vunpack.c.l.b16 %v822
        %v1740 = vunpack.c.h.b16 %v822
        %v1741 = vunpack.c.l.b16 %v823
        %v1742 = vunpack.c.h.b16 %v823
        %v1743 = vunpack.c.l.b16 %v824
        %v1744 = vunpack.c.h.b16 %v824
        %v1745 = vunpack.c.l.b16 %v825
        %v1746 = vunpack.c.h.b16 %v825
        %v1747 = vunpack.c.l.b16 %v826
        %v1748 = vunpack.c.h.b16 %v826
        %v1749 = vunpack.c.l.b16 %v827
        %v1750 = vunpack.c.h.b16 %v827
        %v1751 = vunpack.c.l.b16 %v828
        %v1752 = vunpack.c.h.b16 %v828
        %v1753 = vunpack.c.l.b16 %v829
        %v1754 = vunpack.c.h.b16 %v829
        %v1755 = vunpack.c.l.b16 %v830
        %v1756 = vunpack.c.h.b16 %v830
        %v1757 = vunpack.c.l.b16 %v831
        %v1758 = vunpack.c.h.b16 %v831
        %v1759 = vunpack.c.l.b16 %v832
        %v1760 = vunpack.c.h.b16 %v832
        %v1761 = vunpack.c.l.b16 %v833
        %v1762 = vunpack.c.h.b16 %v833
        %v1763 = vunpack.c.l.b16 %v834
        %v1764 = vunpack.c.h.b16 %v834
        %v1765 = vunpack.c.l.b16 %v835
        %v1766 = vunpack.c.h.b16 %v835
        %v1767 = vunpack.c.l.b16 %v836
        %v1768 = vunpack.c.h.b16 %v836
        %v1769 = vunpack.c.l.b16 %v837
        %v1770 = vunpack.c.h.b16 %v837
        %v1771 = vunpack.c.l.b16 %v838
        %v1772 = vunpack.c.h.b16 %v838
        %v1773 = vunpack.c.l.b16 %v839
        %v1774 = vunpack.c.h.b16 %v839
        %v1775 = vunpack.c.l.b16 %v840
        %v1776 = vunpack.c.h.b16 %v840
        %v1777 = vunpack.c.l.b16 %v841
        %v1778 = vunpack.c.h.b16 %v841
        %v1779 = vunpack.c.l.b16 %v842
        %v1780 = vunpack.c.h.b16 %v842
        %v1781 = vunpack.c.l.b16 %v843
        %v1782 = vunpack.c.h.b16 %v843
        %v1783 = vunpack.c.l.b16 %v844
        %v1784 = vunpack.c.h.b16 %v844
        %v1785 = vunpack.c.l.b16 %v845
        %v1786 = vunpack.c.h.b16 %v845
        %v1787 = vunpack.c.l.b16 %v846
        %v1788 = vunpack.c.h.b16 %v846
        %v1789 = vunpack.c.l.b16 %v847
        %v1790 = vunpack.c.h.b16 %v847
        %v1791 = vunpack.c.l.b16 %v848
        %v1792 = vunpack.c.h.b16 %v848
        %v1793 = vunpack.c.l.b16 %v849
        %v1794 = vunpack.c.h.b16 %v849
        %v1795 = vpack.c.b16 %v1741, %v1723
        %v1796 = vpack.c.b16 %v1742, %v1724
        %v1797 = vpack.c.b16 %v1743, %v1725
        %v1798 = vpack.c.b16 %v1744, %v1726
        %v1799 = vpack.c.b16 %v1745, %v1727
        %v1800 = vpack.c.b16 %v1746, %v1728
        %v1801 = vpack.c.b16 %v1747, %v1729
        %v1802 = vpack.c.b16 %v1748, %v1730
        %v1803 = vpack.c.b16 %v1749, %v1731
        %v1804 = vpack.c.b16 %v1750, %v1732
        %v1805 = vpack.c.b16 %v1751, %v1733
        %v1806 = vpack.c.b16 %v1752, %v1734
        %v1807 = vpack.c.b16 %v1753, %v1735
        %v1808 = vpack.c.b16 %v1754, %v1736
        %v1809 = vpack.c.b16 %v1755, %v1737
        %v1810 = vpack.c.b16 %v1756, %v1738
        %v1811 = vpack.c.b16 %v1757, %v1739
        %v1812 = vpack.c.b16 %v1758, %v1740
        %v1813 = vpack.c.b16 %v1777, %v1759
        %v1814 = vpack.c.b16 %v1778, %v1760
        %v1815 = vpack.c.b16 %v1779, %v1761
        %v1816 = vpack.c.b16 %v1780, %v1762
        %v1817 = vpack.c.b16 %v1781, %v1763
        %v1818 = vpack.c.b16 %v1782, %v1764
        %v1819 = vpack.c.b16 %v1783, %v1765
        %v1820 = vpack.c.b16 %v1784, %v1766
        %v1821 = vpack.c.b16 %v1785, %v1767
        %v1822 = vpack.c.b16 %v1786, %v1768
        %v1823 = vpack.c.b16 %v1787, %v1769
        %v1824 = vpack.c.b16 %v1788, %v1770
        %v1825 = vpack.c.b16 %v1789, %v1771
        %v1826 = vpack.c.b16 %v1790, %v1772
        %v1827 = vpack.c.b16 %v1791, %v1773
        %v1828 = vpack.c.b16 %v1792, %v1774
        %v1829 = vpack.c.b16 %v1793, %v1775
        %v1830 = vpack.c.b16 %v1794, %v1776
        %v1850 = vsel %vm1233, %v1686, 0
        %v1853 = vand.u32 %v1813, %v1240
        %v1856 = vand.u32 %v1814, %v1240
        %v1859 = vand.u32 %v1815, %v1240
        %v1862 = vand.u32 %v1816, %v1240
        %v1865 = vand.u32 %v1817, %v1240
        %v1868 = vand.u32 %v1818, %v1240
        %v1871 = vand.u32 %v1819, %v1240
        %v1874 = vand.u32 %v1820, %v1240
        %v1877 = vand.u32 %v1821, %v1240
        %v1880 = vand.u32 %v1822, %v1240
        %v1883 = vand.u32 %v1823, %v1240
        %v1886 = vand.u32 %v1824, %v1240
        %v1889 = vand.u32 %v1825, %v1240
        %v1892 = vand.u32 %v1826, %v1240
        %v1895 = vand.u32 %v1827, %v1240
        %v1898 = vand.u32 %v1828, %v1240
        %v1901 = vand.u32 %v1829, %v1240
        %v1904 = vand.u32 %v1830, %v1240
        %1906 = vmatprep.subr.bf16.mxu0 0
        %1907 = vmatpush1.bf16.msra.mxu0 0
        %1908 = vmatprep.subr.bf16.mxu0 0
        %1909 = vmatpush1.bf16.msra.mxu0 0
        %1910 = vmatprep.subr.bf16.mxu0 0
        %1911 = vmatpush1.bf16.msra.mxu0 0
        %1912 = vmatprep.subr.bf16.mxu0 0
        %1913 = vmatpush1.bf16.msra.mxu0 0
        %1914 = vmatprep.subr.bf16.mxu0 0
        %1915 = vmatpush1.bf16.msra.mxu0 0
        %1916 = vmatprep.subr.bf16.mxu0 0
        %1917 = vmatpush1.bf16.msra.mxu0 0
        %1918 = vmatprep.subr.bf16.mxu0 %v1856
        %1919 = vmatpush1.bf16.msra.mxu0 %v1853
        %1920 = vmatprep.subr.bf16.mxu0 %v1796
        %1921 = vmatpush1.bf16.msra.mxu0 %v1795
        %1922 = vmatprep.subr.bf16.mxu0 0
        %1923 = vmatpush2.bf16.msra.mxu0 0
        %1924 = vmatprep.subr.bf16.mxu0 0
        %1925 = vmatpush2.bf16.msra.mxu0 0
        %1926 = vmatprep.subr.bf16.mxu0 0
        %1927 = vmatpush2.bf16.msra.mxu0 0
        %1928 = vmatprep.subr.bf16.mxu0 0
        %1929 = vmatpush2.bf16.msra.mxu0 0
        %1930 = vmatprep.subr.bf16.mxu0 0
        %1931 = vmatpush2.bf16.msra.mxu0 0
        %1932 = vmatprep.subr.bf16.mxu0 0
        %1933 = vmatpush2.bf16.msra.mxu0 0
        %1934 = vmatprep.subr.bf16.mxu0 0
        %1935 = vmatpush2.bf16.msra.mxu0 0
        %1936 = vmatprep.subr.bf16.mxu0 0
        %1937 = vmatpush2.bf16.msra.mxu0 0
        %1938 = vmatprep.mubr.bf16.mxu0 0
        %1939 = vmatmul.mubr.bf16.gmra.mxu0 %v1850
        %v1940 = vpop.f32.mrf.mxu0
        %v1941 = vadd.f32 0.0, %v1940
        %v1942 = vpop.f32.mrf.mxu0
        %v1943 = vadd.f32 0.0, %v1942
        %v1944 = vpop.f32.mrf.mxu0
        %v1945 = vadd.f32 0.0, %v1944
        %v1946 = vpop.f32.mrf.mxu0
        %v1947 = vadd.f32 0.0, %v1946
        %1948 = vdwg.mxu0
        %1949 = vmatprep.subr.bf16.mxu0 0
        %1950 = vmatpush1.bf16.msra.mxu0 0
        %1951 = vmatprep.subr.bf16.mxu0 0
        %1952 = vmatpush1.bf16.msra.mxu0 0
        %1953 = vmatprep.subr.bf16.mxu0 0
        %1954 = vmatpush1.bf16.msra.mxu0 0
        %1955 = vmatprep.subr.bf16.mxu0 0
        %1956 = vmatpush1.bf16.msra.mxu0 0
        %1957 = vmatprep.subr.bf16.mxu0 0
        %1958 = vmatpush1.bf16.msra.mxu0 0
        %1959 = vmatprep.subr.bf16.mxu0 0
        %1960 = vmatpush1.bf16.msra.mxu0 0
        %1961 = vmatprep.subr.bf16.mxu0 %v1862
        %1962 = vmatpush1.bf16.msra.mxu0 %v1859
        %1963 = vmatprep.subr.bf16.mxu0 %v1798
        %1964 = vmatpush1.bf16.msra.mxu0 %v1797
        %1965 = vmatprep.subr.bf16.mxu0 0
        %1966 = vmatpush2.bf16.msra.mxu0 0
        %1967 = vmatprep.subr.bf16.mxu0 0
        %1968 = vmatpush2.bf16.msra.mxu0 0
        %1969 = vmatprep.subr.bf16.mxu0 0
        %1970 = vmatpush2.bf16.msra.mxu0 0
        %1971 = vmatprep.subr.bf16.mxu0 0
        %1972 = vmatpush2.bf16.msra.mxu0 0
        %1973 = vmatprep.subr.bf16.mxu0 0
        %1974 = vmatpush2.bf16.msra.mxu0 0
        %1975 = vmatprep.subr.bf16.mxu0 0
        %1976 = vmatpush2.bf16.msra.mxu0 0
        %1977 = vmatprep.subr.bf16.mxu0 0
        %1978 = vmatpush2.bf16.msra.mxu0 0
        %1979 = vmatprep.subr.bf16.mxu0 0
        %1980 = vmatpush2.bf16.msra.mxu0 0
        %1981 = vmatprep.mubr.bf16.mxu0 0
        %1982 = vmatmul.mubr.bf16.gmra.mxu0 %v1850
        %v1983 = vpop.f32.mrf.mxu0
        %v1984 = vadd.f32 0.0, %v1983
        %v1985 = vpop.f32.mrf.mxu0
        %v1986 = vadd.f32 0.0, %v1985
        %v1987 = vpop.f32.mrf.mxu0
        %v1988 = vadd.f32 0.0, %v1987
        %v1989 = vpop.f32.mrf.mxu0
        %v1990 = vadd.f32 0.0, %v1989
        %1991 = vdwg.mxu0
        %1992 = vmatprep.subr.bf16.mxu0 0
        %1993 = vmatpush1.bf16.msra.mxu0 0
        %1994 = vmatprep.subr.bf16.mxu0 0
        %1995 = vmatpush1.bf16.msra.mxu0 0
        %1996 = vmatprep.subr.bf16.mxu0 0
        %1997 = vmatpush1.bf16.msra.mxu0 0
        %1998 = vmatprep.subr.bf16.mxu0 0
        %1999 = vmatpush1.bf16.msra.mxu0 0
        %2000 = vmatprep.subr.bf16.mxu0 0
        %2001 = vmatpush1.bf16.msra.mxu0 0
        %2002 = vmatprep.subr.bf16.mxu0 0
        %2003 = vmatpush1.bf16.msra.mxu0 0
        %2004 = vmatprep.subr.bf16.mxu0 %v1868
        %2005 = vmatpush1.bf16.msra.mxu0 %v1865
        %2006 = vmatprep.subr.bf16.mxu0 %v1800
        %2007 = vmatpush1.bf16.msra.mxu0 %v1799
        %2008 = vmatprep.subr.bf16.mxu0 0
        %2009 = vmatpush2.bf16.msra.mxu0 0
        %2010 = vmatprep.subr.bf16.mxu0 0
        %2011 = vmatpush2.bf16.msra.mxu0 0
        %2012 = vmatprep.subr.bf16.mxu0 0
        %2013 = vmatpush2.bf16.msra.mxu0 0
        %2014 = vmatprep.subr.bf16.mxu0 0
        %2015 = vmatpush2.bf16.msra.mxu0 0
        %2016 = vmatprep.subr.bf16.mxu0 0
        %2017 = vmatpush2.bf16.msra.mxu0 0
        %2018 = vmatprep.subr.bf16.mxu0 0
        %2019 = vmatpush2.bf16.msra.mxu0 0
        %2020 = vmatprep.subr.bf16.mxu0 0
        %2021 = vmatpush2.bf16.msra.mxu0 0
        %2022 = vmatprep.subr.bf16.mxu0 0
        %2023 = vmatpush2.bf16.msra.mxu0 0
        %2024 = vmatprep.mubr.bf16.mxu0 0
        %2025 = vmatmul.mubr.bf16.gmra.mxu0 %v1850
        %v2026 = vpop.f32.mrf.mxu0
        %v2027 = vadd.f32 0.0, %v2026
        %v2028 = vpop.f32.mrf.mxu0
        %v2029 = vadd.f32 0.0, %v2028
        %v2030 = vpop.f32.mrf.mxu0
        %v2031 = vadd.f32 0.0, %v2030
        %v2032 = vpop.f32.mrf.mxu0
        %v2033 = vadd.f32 0.0, %v2032
        %2034 = vdwg.mxu0
        %2035 = vmatprep.subr.bf16.mxu0 0
        %2036 = vmatpush1.bf16.msra.mxu0 0
        %2037 = vmatprep.subr.bf16.mxu0 0
        %2038 = vmatpush1.bf16.msra.mxu0 0
        %2039 = vmatprep.subr.bf16.mxu0 0
        %2040 = vmatpush1.bf16.msra.mxu0 0
        %2041 = vmatprep.subr.bf16.mxu0 0
        %2042 = vmatpush1.bf16.msra.mxu0 0
        %2043 = vmatprep.subr.bf16.mxu0 0
        %2044 = vmatpush1.bf16.msra.mxu0 0
        %2045 = vmatprep.subr.bf16.mxu0 0
        %2046 = vmatpush1.bf16.msra.mxu0 0
        %2047 = vmatprep.subr.bf16.mxu0 %v1874
        %2048 = vmatpush1.bf16.msra.mxu0 %v1871
        %2049 = vmatprep.subr.bf16.mxu0 %v1802
        %2050 = vmatpush1.bf16.msra.mxu0 %v1801
        %2051 = vmatprep.subr.bf16.mxu0 0
        %2052 = vmatpush2.bf16.msra.mxu0 0
        %2053 = vmatprep.subr.bf16.mxu0 0
        %2054 = vmatpush2.bf16.msra.mxu0 0
        %2055 = vmatprep.subr.bf16.mxu0 0
        %2056 = vmatpush2.bf16.msra.mxu0 0
        %2057 = vmatprep.subr.bf16.mxu0 0
        %2058 = vmatpush2.bf16.msra.mxu0 0
        %2059 = vmatprep.subr.bf16.mxu0 0
        %2060 = vmatpush2.bf16.msra.mxu0 0
        %2061 = vmatprep.subr.bf16.mxu0 0
        %2062 = vmatpush2.bf16.msra.mxu0 0
        %2063 = vmatprep.subr.bf16.mxu0 0
        %2064 = vmatpush2.bf16.msra.mxu0 0
        %2065 = vmatprep.subr.bf16.mxu0 0
        %2066 = vmatpush2.bf16.msra.mxu0 0
        %2067 = vmatprep.mubr.bf16.mxu0 0
        %2068 = vmatmul.mubr.bf16.gmra.mxu0 %v1850
        %v2069 = vpop.f32.mrf.mxu0
        %v2070 = vadd.f32 0.0, %v2069
        %v2071 = vpop.f32.mrf.mxu0
        %v2072 = vadd.f32 0.0, %v2071
        %v2073 = vpop.f32.mrf.mxu0
        %v2074 = vadd.f32 0.0, %v2073
        %v2075 = vpop.f32.mrf.mxu0
        %v2076 = vadd.f32 0.0, %v2075
        %2077 = vdwg.mxu0
        %2078 = vmatprep.subr.bf16.mxu0 0
        %2079 = vmatpush1.bf16.msra.mxu0 0
        %2080 = vmatprep.subr.bf16.mxu0 0
        %2081 = vmatpush1.bf16.msra.mxu0 0
        %2082 = vmatprep.subr.bf16.mxu0 0
        %2083 = vmatpush1.bf16.msra.mxu0 0
        %2084 = vmatprep.subr.bf16.mxu0 0
        %2085 = vmatpush1.bf16.msra.mxu0 0
        %2086 = vmatprep.subr.bf16.mxu0 0
        %2087 = vmatpush1.bf16.msra.mxu0 0
        %2088 = vmatprep.subr.bf16.mxu0 0
        %2089 = vmatpush1.bf16.msra.mxu0 0
        %2090 = vmatprep.subr.bf16.mxu0 %v1880
        %2091 = vmatpush1.bf16.msra.mxu0 %v1877
        %2092 = vmatprep.subr.bf16.mxu0 %v1804
        %2093 = vmatpush1.bf16.msra.mxu0 %v1803
        %2094 = vmatprep.subr.bf16.mxu0 0
        %2095 = vmatpush2.bf16.msra.mxu0 0
        %2096 = vmatprep.subr.bf16.mxu0 0
        %2097 = vmatpush2.bf16.msra.mxu0 0
        %2098 = vmatprep.subr.bf16.mxu0 0
        %2099 = vmatpush2.bf16.msra.mxu0 0
        %2100 = vmatprep.subr.bf16.mxu0 0
        %2101 = vmatpush2.bf16.msra.mxu0 0
        %2102 = vmatprep.subr.bf16.mxu0 0
        %2103 = vmatpush2.bf16.msra.mxu0 0
        %2104 = vmatprep.subr.bf16.mxu0 0
        %2105 = vmatpush2.bf16.msra.mxu0 0
        %2106 = vmatprep.subr.bf16.mxu0 0
        %2107 = vmatpush2.bf16.msra.mxu0 0
        %2108 = vmatprep.subr.bf16.mxu0 0
        %2109 = vmatpush2.bf16.msra.mxu0 0
        %2110 = vmatprep.mubr.bf16.mxu0 0
        %2111 = vmatmul.mubr.bf16.gmra.mxu0 %v1850
        %v2112 = vpop.f32.mrf.mxu0
        %v2113 = vadd.f32 0.0, %v2112
        %v2114 = vpop.f32.mrf.mxu0
        %v2115 = vadd.f32 0.0, %v2114
        %v2116 = vpop.f32.mrf.mxu0
        %v2117 = vadd.f32 0.0, %v2116
        %v2118 = vpop.f32.mrf.mxu0
        %v2119 = vadd.f32 0.0, %v2118
        %2120 = vdwg.mxu0
        %2121 = vmatprep.subr.bf16.mxu0 0
        %2122 = vmatpush1.bf16.msra.mxu0 0
        %2123 = vmatprep.subr.bf16.mxu0 0
        %2124 = vmatpush1.bf16.msra.mxu0 0
        %2125 = vmatprep.subr.bf16.mxu0 0
        %2126 = vmatpush1.bf16.msra.mxu0 0
        %2127 = vmatprep.subr.bf16.mxu0 0
        %2128 = vmatpush1.bf16.msra.mxu0 0
        %2129 = vmatprep.subr.bf16.mxu0 0
        %2130 = vmatpush1.bf16.msra.mxu0 0
        %2131 = vmatprep.subr.bf16.mxu0 0
        %2132 = vmatpush1.bf16.msra.mxu0 0
        %2133 = vmatprep.subr.bf16.mxu0 %v1886
        %2134 = vmatpush1.bf16.msra.mxu0 %v1883
        %2135 = vmatprep.subr.bf16.mxu0 %v1806
        %2136 = vmatpush1.bf16.msra.mxu0 %v1805
        %2137 = vmatprep.subr.bf16.mxu0 0
        %2138 = vmatpush2.bf16.msra.mxu0 0
        %2139 = vmatprep.subr.bf16.mxu0 0
        %2140 = vmatpush2.bf16.msra.mxu0 0
        %2141 = vmatprep.subr.bf16.mxu0 0
        %2142 = vmatpush2.bf16.msra.mxu0 0
        %2143 = vmatprep.subr.bf16.mxu0 0
        %2144 = vmatpush2.bf16.msra.mxu0 0
        %2145 = vmatprep.subr.bf16.mxu0 0
        %2146 = vmatpush2.bf16.msra.mxu0 0
        %2147 = vmatprep.subr.bf16.mxu0 0
        %2148 = vmatpush2.bf16.msra.mxu0 0
        %2149 = vmatprep.subr.bf16.mxu0 0
        %2150 = vmatpush2.bf16.msra.mxu0 0
        %2151 = vmatprep.subr.bf16.mxu0 0
        %2152 = vmatpush2.bf16.msra.mxu0 0
        %2153 = vmatprep.mubr.bf16.mxu0 0
        %2154 = vmatmul.mubr.bf16.gmra.mxu0 %v1850
        %v2155 = vpop.f32.mrf.mxu0
        %v2156 = vadd.f32 0.0, %v2155
        %v2157 = vpop.f32.mrf.mxu0
        %v2158 = vadd.f32 0.0, %v2157
        %v2159 = vpop.f32.mrf.mxu0
        %v2160 = vadd.f32 0.0, %v2159
        %v2161 = vpop.f32.mrf.mxu0
        %v2162 = vadd.f32 0.0, %v2161
        %2163 = vdwg.mxu0
        %2164 = vmatprep.subr.bf16.mxu0 0
        %2165 = vmatpush1.bf16.msra.mxu0 0
        %2166 = vmatprep.subr.bf16.mxu0 0
        %2167 = vmatpush1.bf16.msra.mxu0 0
        %2168 = vmatprep.subr.bf16.mxu0 0
        %2169 = vmatpush1.bf16.msra.mxu0 0
        %2170 = vmatprep.subr.bf16.mxu0 0
        %2171 = vmatpush1.bf16.msra.mxu0 0
        %2172 = vmatprep.subr.bf16.mxu0 0
        %2173 = vmatpush1.bf16.msra.mxu0 0
        %2174 = vmatprep.subr.bf16.mxu0 0
        %2175 = vmatpush1.bf16.msra.mxu0 0
        %2176 = vmatprep.subr.bf16.mxu0 %v1892
        %2177 = vmatpush1.bf16.msra.mxu0 %v1889
        %2178 = vmatprep.subr.bf16.mxu0 %v1808
        %2179 = vmatpush1.bf16.msra.mxu0 %v1807
        %2180 = vmatprep.subr.bf16.mxu0 0
        %2181 = vmatpush2.bf16.msra.mxu0 0
        %2182 = vmatprep.subr.bf16.mxu0 0
        %2183 = vmatpush2.bf16.msra.mxu0 0
        %2184 = vmatprep.subr.bf16.mxu0 0
        %2185 = vmatpush2.bf16.msra.mxu0 0
        %2186 = vmatprep.subr.bf16.mxu0 0
        %2187 = vmatpush2.bf16.msra.mxu0 0
        %2188 = vmatprep.subr.bf16.mxu0 0
        %2189 = vmatpush2.bf16.msra.mxu0 0
        %2190 = vmatprep.subr.bf16.mxu0 0
        %2191 = vmatpush2.bf16.msra.mxu0 0
        %2192 = vmatprep.subr.bf16.mxu0 0
        %2193 = vmatpush2.bf16.msra.mxu0 0
        %2194 = vmatprep.subr.bf16.mxu0 0
        %2195 = vmatpush2.bf16.msra.mxu0 0
        %2196 = vmatprep.mubr.bf16.mxu0 0
        %2197 = vmatmul.mubr.bf16.gmra.mxu0 %v1850
        %v2198 = vpop.f32.mrf.mxu0
        %v2199 = vadd.f32 0.0, %v2198
        %v2200 = vpop.f32.mrf.mxu0
        %v2201 = vadd.f32 0.0, %v2200
        %v2202 = vpop.f32.mrf.mxu0
        %v2203 = vadd.f32 0.0, %v2202
        %v2204 = vpop.f32.mrf.mxu0
        %v2205 = vadd.f32 0.0, %v2204
        %2206 = vdwg.mxu0
        %2207 = vmatprep.subr.bf16.mxu0 0
        %2208 = vmatpush1.bf16.msra.mxu0 0
        %2209 = vmatprep.subr.bf16.mxu0 0
        %2210 = vmatpush1.bf16.msra.mxu0 0
        %2211 = vmatprep.subr.bf16.mxu0 0
        %2212 = vmatpush1.bf16.msra.mxu0 0
        %2213 = vmatprep.subr.bf16.mxu0 0
        %2214 = vmatpush1.bf16.msra.mxu0 0
        %2215 = vmatprep.subr.bf16.mxu0 0
        %2216 = vmatpush1.bf16.msra.mxu0 0
        %2217 = vmatprep.subr.bf16.mxu0 0
        %2218 = vmatpush1.bf16.msra.mxu0 0
        %2219 = vmatprep.subr.bf16.mxu0 %v1898
        %2220 = vmatpush1.bf16.msra.mxu0 %v1895
        %2221 = vmatprep.subr.bf16.mxu0 %v1810
        %2222 = vmatpush1.bf16.msra.mxu0 %v1809
        %2223 = vmatprep.subr.bf16.mxu0 0
        %2224 = vmatpush2.bf16.msra.mxu0 0
        %2225 = vmatprep.subr.bf16.mxu0 0
        %2226 = vmatpush2.bf16.msra.mxu0 0
        %2227 = vmatprep.subr.bf16.mxu0 0
        %2228 = vmatpush2.bf16.msra.mxu0 0
        %2229 = vmatprep.subr.bf16.mxu0 0
        %2230 = vmatpush2.bf16.msra.mxu0 0
        %2231 = vmatprep.subr.bf16.mxu0 0
        %2232 = vmatpush2.bf16.msra.mxu0 0
        %2233 = vmatprep.subr.bf16.mxu0 0
        %2234 = vmatpush2.bf16.msra.mxu0 0
        %2235 = vmatprep.subr.bf16.mxu0 0
        %2236 = vmatpush2.bf16.msra.mxu0 0
        %2237 = vmatprep.subr.bf16.mxu0 0
        %2238 = vmatpush2.bf16.msra.mxu0 0
        %2239 = vmatprep.mubr.bf16.mxu0 0
        %2240 = vmatmul.mubr.bf16.gmra.mxu0 %v1850
        %v2241 = vpop.f32.mrf.mxu0
        %v2242 = vadd.f32 0.0, %v2241
        %v2243 = vpop.f32.mrf.mxu0
        %v2244 = vadd.f32 0.0, %v2243
        %v2245 = vpop.f32.mrf.mxu0
        %v2246 = vadd.f32 0.0, %v2245
        %v2247 = vpop.f32.mrf.mxu0
        %v2248 = vadd.f32 0.0, %v2247
        %2249 = vdwg.mxu0
        %2250 = vmatprep.subr.bf16.mxu0 0
        %2251 = vmatpush1.bf16.msra.mxu0 0
        %2252 = vmatprep.subr.bf16.mxu0 0
        %2253 = vmatpush1.bf16.msra.mxu0 0
        %2254 = vmatprep.subr.bf16.mxu0 0
        %2255 = vmatpush1.bf16.msra.mxu0 0
        %2256 = vmatprep.subr.bf16.mxu0 0
        %2257 = vmatpush1.bf16.msra.mxu0 0
        %2258 = vmatprep.subr.bf16.mxu0 0
        %2259 = vmatpush1.bf16.msra.mxu0 0
        %2260 = vmatprep.subr.bf16.mxu0 0
        %2261 = vmatpush1.bf16.msra.mxu0 0
        %2262 = vmatprep.subr.bf16.mxu0 %v1904
        %2263 = vmatpush1.bf16.msra.mxu0 %v1901
        %2264 = vmatprep.subr.bf16.mxu0 %v1812
        %2265 = vmatpush1.bf16.msra.mxu0 %v1811
        %2266 = vmatprep.subr.bf16.mxu0 0
        %2267 = vmatpush2.bf16.msra.mxu0 0
        %2268 = vmatprep.subr.bf16.mxu0 0
        %2269 = vmatpush2.bf16.msra.mxu0 0
        %2270 = vmatprep.subr.bf16.mxu0 0
        %2271 = vmatpush2.bf16.msra.mxu0 0
        %2272 = vmatprep.subr.bf16.mxu0 0
        %2273 = vmatpush2.bf16.msra.mxu0 0
        %2274 = vmatprep.subr.bf16.mxu0 0
        %2275 = vmatpush2.bf16.msra.mxu0 0
        %2276 = vmatprep.subr.bf16.mxu0 0
        %2277 = vmatpush2.bf16.msra.mxu0 0
        %2278 = vmatprep.subr.bf16.mxu0 0
        %2279 = vmatpush2.bf16.msra.mxu0 0
        %2280 = vmatprep.subr.bf16.mxu0 0
        %2281 = vmatpush2.bf16.msra.mxu0 0
        %2282 = vmatprep.mubr.bf16.mxu0 0
        %2283 = vmatmul.mubr.bf16.gmra.mxu0 %v1850
        %v2284 = vpop.f32.mrf.mxu0
        %v2285 = vadd.f32 0.0, %v2284
        %v2286 = vpop.f32.mrf.mxu0
        %v2287 = vadd.f32 0.0, %v2286
        %v2288 = vpop.f32.mrf.mxu0
        %v2289 = vadd.f32 0.0, %v2288
        %v2290 = vpop.f32.mrf.mxu0
        %v2291 = vadd.f32 0.0, %v2290
        %2292 = vdwg.mxu0
        %v2295 = vunpack.c.l.b16 %v766
        %v2296 = vunpack.c.l.b16 %v767
        %v2297 = vpack.c.b16 %v2296, %v2295
        %v2334 = vunpack.c.l.b16 %v850
        %v2335 = vunpack.c.h.b16 %v850
        %v2336 = vunpack.c.l.b16 %v851
        %v2337 = vunpack.c.h.b16 %v851
        %v2338 = vunpack.c.l.b16 %v852
        %v2339 = vunpack.c.h.b16 %v852
        %v2340 = vunpack.c.l.b16 %v853
        %v2341 = vunpack.c.h.b16 %v853
        %v2342 = vunpack.c.l.b16 %v854
        %v2343 = vunpack.c.h.b16 %v854
        %v2344 = vunpack.c.l.b16 %v855
        %v2345 = vunpack.c.h.b16 %v855
        %v2346 = vunpack.c.l.b16 %v856
        %v2347 = vunpack.c.h.b16 %v856
        %v2348 = vunpack.c.l.b16 %v857
        %v2349 = vunpack.c.h.b16 %v857
        %v2350 = vunpack.c.l.b16 %v858
        %v2351 = vunpack.c.h.b16 %v858
        %v2352 = vunpack.c.l.b16 %v859
        %v2353 = vunpack.c.h.b16 %v859
        %v2354 = vunpack.c.l.b16 %v860
        %v2355 = vunpack.c.h.b16 %v860
        %v2356 = vunpack.c.l.b16 %v861
        %v2357 = vunpack.c.h.b16 %v861
        %v2358 = vunpack.c.l.b16 %v862
        %v2359 = vunpack.c.h.b16 %v862
        %v2360 = vunpack.c.l.b16 %v863
        %v2361 = vunpack.c.h.b16 %v863
        %v2362 = vunpack.c.l.b16 %v864
        %v2363 = vunpack.c.h.b16 %v864
        %v2364 = vunpack.c.l.b16 %v865
        %v2365 = vunpack.c.h.b16 %v865
        %v2366 = vunpack.c.l.b16 %v866
        %v2367 = vunpack.c.h.b16 %v866
        %v2368 = vunpack.c.l.b16 %v867
        %v2369 = vunpack.c.h.b16 %v867
        %v2370 = vunpack.c.l.b16 %v868
        %v2371 = vunpack.c.h.b16 %v868
        %v2372 = vunpack.c.l.b16 %v869
        %v2373 = vunpack.c.h.b16 %v869
        %v2374 = vunpack.c.l.b16 %v870
        %v2375 = vunpack.c.h.b16 %v870
        %v2376 = vunpack.c.l.b16 %v871
        %v2377 = vunpack.c.h.b16 %v871
        %v2378 = vunpack.c.l.b16 %v872
        %v2379 = vunpack.c.h.b16 %v872
        %v2380 = vunpack.c.l.b16 %v873
        %v2381 = vunpack.c.h.b16 %v873
        %v2382 = vunpack.c.l.b16 %v874
        %v2383 = vunpack.c.h.b16 %v874
        %v2384 = vunpack.c.l.b16 %v875
        %v2385 = vunpack.c.h.b16 %v875
        %v2386 = vunpack.c.l.b16 %v876
        %v2387 = vunpack.c.h.b16 %v876
        %v2388 = vunpack.c.l.b16 %v877
        %v2389 = vunpack.c.h.b16 %v877
        %v2390 = vunpack.c.l.b16 %v878
        %v2391 = vunpack.c.h.b16 %v878
        %v2392 = vunpack.c.l.b16 %v879
        %v2393 = vunpack.c.h.b16 %v879
        %v2394 = vunpack.c.l.b16 %v880
        %v2395 = vunpack.c.h.b16 %v880
        %v2396 = vunpack.c.l.b16 %v881
        %v2397 = vunpack.c.h.b16 %v881
        %v2398 = vunpack.c.l.b16 %v882
        %v2399 = vunpack.c.h.b16 %v882
        %v2400 = vunpack.c.l.b16 %v883
        %v2401 = vunpack.c.h.b16 %v883
        %v2402 = vunpack.c.l.b16 %v884
        %v2403 = vunpack.c.h.b16 %v884
        %v2404 = vunpack.c.l.b16 %v885
        %v2405 = vunpack.c.h.b16 %v885
        %v2406 = vpack.c.b16 %v2352, %v2334
        %v2407 = vpack.c.b16 %v2353, %v2335
        %v2408 = vpack.c.b16 %v2354, %v2336
        %v2409 = vpack.c.b16 %v2355, %v2337
        %v2410 = vpack.c.b16 %v2356, %v2338
        %v2411 = vpack.c.b16 %v2357, %v2339
        %v2412 = vpack.c.b16 %v2358, %v2340
        %v2413 = vpack.c.b16 %v2359, %v2341
        %v2414 = vpack.c.b16 %v2360, %v2342
        %v2415 = vpack.c.b16 %v2361, %v2343
        %v2416 = vpack.c.b16 %v2362, %v2344
        %v2417 = vpack.c.b16 %v2363, %v2345
        %v2418 = vpack.c.b16 %v2364, %v2346
        %v2419 = vpack.c.b16 %v2365, %v2347
        %v2420 = vpack.c.b16 %v2366, %v2348
        %v2421 = vpack.c.b16 %v2367, %v2349
        %v2422 = vpack.c.b16 %v2368, %v2350
        %v2423 = vpack.c.b16 %v2369, %v2351
        %v2424 = vpack.c.b16 %v2388, %v2370
        %v2425 = vpack.c.b16 %v2389, %v2371
        %v2426 = vpack.c.b16 %v2390, %v2372
        %v2427 = vpack.c.b16 %v2391, %v2373
        %v2428 = vpack.c.b16 %v2392, %v2374
        %v2429 = vpack.c.b16 %v2393, %v2375
        %v2430 = vpack.c.b16 %v2394, %v2376
        %v2431 = vpack.c.b16 %v2395, %v2377
        %v2432 = vpack.c.b16 %v2396, %v2378
        %v2433 = vpack.c.b16 %v2397, %v2379
        %v2434 = vpack.c.b16 %v2398, %v2380
        %v2435 = vpack.c.b16 %v2399, %v2381
        %v2436 = vpack.c.b16 %v2400, %v2382
        %v2437 = vpack.c.b16 %v2401, %v2383
        %v2438 = vpack.c.b16 %v2402, %v2384
        %v2439 = vpack.c.b16 %v2403, %v2385
        %v2440 = vpack.c.b16 %v2404, %v2386
        %v2441 = vpack.c.b16 %v2405, %v2387
        %v2461 = vsel %vm1233, %v2297, 0
        %v2464 = vand.u32 %v2424, %v1240
        %v2467 = vand.u32 %v2425, %v1240
        %v2470 = vand.u32 %v2426, %v1240
        %v2473 = vand.u32 %v2427, %v1240
        %v2476 = vand.u32 %v2428, %v1240
        %v2479 = vand.u32 %v2429, %v1240
        %v2482 = vand.u32 %v2430, %v1240
        %v2485 = vand.u32 %v2431, %v1240
        %v2488 = vand.u32 %v2432, %v1240
        %v2491 = vand.u32 %v2433, %v1240
        %v2494 = vand.u32 %v2434, %v1240
        %v2497 = vand.u32 %v2435, %v1240
        %v2500 = vand.u32 %v2436, %v1240
        %v2503 = vand.u32 %v2437, %v1240
        %v2506 = vand.u32 %v2438, %v1240
        %v2509 = vand.u32 %v2439, %v1240
        %v2512 = vand.u32 %v2440, %v1240
        %v2515 = vand.u32 %v2441, %v1240
        %2517 = vmatprep.subr.bf16.mxu0 0
        %2518 = vmatpush1.bf16.msra.mxu0 0
        %2519 = vmatprep.subr.bf16.mxu0 0
        %2520 = vmatpush1.bf16.msra.mxu0 0
        %2521 = vmatprep.subr.bf16.mxu0 0
        %2522 = vmatpush1.bf16.msra.mxu0 0
        %2523 = vmatprep.subr.bf16.mxu0 0
        %2524 = vmatpush1.bf16.msra.mxu0 0
        %2525 = vmatprep.subr.bf16.mxu0 0
        %2526 = vmatpush1.bf16.msra.mxu0 0
        %2527 = vmatprep.subr.bf16.mxu0 0
        %2528 = vmatpush1.bf16.msra.mxu0 0
        %2529 = vmatprep.subr.bf16.mxu0 %v2467
        %2530 = vmatpush1.bf16.msra.mxu0 %v2464
        %2531 = vmatprep.subr.bf16.mxu0 %v2407
        %2532 = vmatpush1.bf16.msra.mxu0 %v2406
        %2533 = vmatprep.subr.bf16.mxu0 0
        %2534 = vmatpush2.bf16.msra.mxu0 0
        %2535 = vmatprep.subr.bf16.mxu0 0
        %2536 = vmatpush2.bf16.msra.mxu0 0
        %2537 = vmatprep.subr.bf16.mxu0 0
        %2538 = vmatpush2.bf16.msra.mxu0 0
        %2539 = vmatprep.subr.bf16.mxu0 0
        %2540 = vmatpush2.bf16.msra.mxu0 0
        %2541 = vmatprep.subr.bf16.mxu0 0
        %2542 = vmatpush2.bf16.msra.mxu0 0
        %2543 = vmatprep.subr.bf16.mxu0 0
        %2544 = vmatpush2.bf16.msra.mxu0 0
        %2545 = vmatprep.subr.bf16.mxu0 0
        %2546 = vmatpush2.bf16.msra.mxu0 0
        %2547 = vmatprep.subr.bf16.mxu0 0
        %2548 = vmatpush2.bf16.msra.mxu0 0
        %2549 = vmatprep.mubr.bf16.mxu0 0
        %2550 = vmatmul.mubr.bf16.gmra.mxu0 %v2461
        %v2551 = vpop.f32.mrf.mxu0
        %v2552 = vadd.f32 0.0, %v2551
        %v2553 = vpop.f32.mrf.mxu0
        %v2554 = vadd.f32 0.0, %v2553
        %v2555 = vpop.f32.mrf.mxu0
        %v2556 = vadd.f32 0.0, %v2555
        %v2557 = vpop.f32.mrf.mxu0
        %v2558 = vadd.f32 0.0, %v2557
        %2559 = vdwg.mxu0
        %2560 = vmatprep.subr.bf16.mxu0 0
        %2561 = vmatpush1.bf16.msra.mxu0 0
        %2562 = vmatprep.subr.bf16.mxu0 0
        %2563 = vmatpush1.bf16.msra.mxu0 0
        %2564 = vmatprep.subr.bf16.mxu0 0
        %2565 = vmatpush1.bf16.msra.mxu0 0
        %2566 = vmatprep.subr.bf16.mxu0 0
        %2567 = vmatpush1.bf16.msra.mxu0 0
        %2568 = vmatprep.subr.bf16.mxu0 0
        %2569 = vmatpush1.bf16.msra.mxu0 0
        %2570 = vmatprep.subr.bf16.mxu0 0
        %2571 = vmatpush1.bf16.msra.mxu0 0
        %2572 = vmatprep.subr.bf16.mxu0 %v2473
        %2573 = vmatpush1.bf16.msra.mxu0 %v2470
        %2574 = vmatprep.subr.bf16.mxu0 %v2409
        %2575 = vmatpush1.bf16.msra.mxu0 %v2408
        %2576 = vmatprep.subr.bf16.mxu0 0
        %2577 = vmatpush2.bf16.msra.mxu0 0
        %2578 = vmatprep.subr.bf16.mxu0 0
        %2579 = vmatpush2.bf16.msra.mxu0 0
        %2580 = vmatprep.subr.bf16.mxu0 0
        %2581 = vmatpush2.bf16.msra.mxu0 0
        %2582 = vmatprep.subr.bf16.mxu0 0
        %2583 = vmatpush2.bf16.msra.mxu0 0
        %2584 = vmatprep.subr.bf16.mxu0 0
        %2585 = vmatpush2.bf16.msra.mxu0 0
        %2586 = vmatprep.subr.bf16.mxu0 0
        %2587 = vmatpush2.bf16.msra.mxu0 0
        %2588 = vmatprep.subr.bf16.mxu0 0
        %2589 = vmatpush2.bf16.msra.mxu0 0
        %2590 = vmatprep.subr.bf16.mxu0 0
        %2591 = vmatpush2.bf16.msra.mxu0 0
        %2592 = vmatprep.mubr.bf16.mxu0 0
        %2593 = vmatmul.mubr.bf16.gmra.mxu0 %v2461
        %v2594 = vpop.f32.mrf.mxu0
        %v2595 = vadd.f32 0.0, %v2594
        %v2596 = vpop.f32.mrf.mxu0
        %v2597 = vadd.f32 0.0, %v2596
        %v2598 = vpop.f32.mrf.mxu0
        %v2599 = vadd.f32 0.0, %v2598
        %v2600 = vpop.f32.mrf.mxu0
        %v2601 = vadd.f32 0.0, %v2600
        %2602 = vdwg.mxu0
        %2603 = vmatprep.subr.bf16.mxu0 0
        %2604 = vmatpush1.bf16.msra.mxu0 0
        %2605 = vmatprep.subr.bf16.mxu0 0
        %2606 = vmatpush1.bf16.msra.mxu0 0
        %2607 = vmatprep.subr.bf16.mxu0 0
        %2608 = vmatpush1.bf16.msra.mxu0 0
        %2609 = vmatprep.subr.bf16.mxu0 0
        %2610 = vmatpush1.bf16.msra.mxu0 0
        %2611 = vmatprep.subr.bf16.mxu0 0
        %2612 = vmatpush1.bf16.msra.mxu0 0
        %2613 = vmatprep.subr.bf16.mxu0 0
        %2614 = vmatpush1.bf16.msra.mxu0 0
        %2615 = vmatprep.subr.bf16.mxu0 %v2479
        %2616 = vmatpush1.bf16.msra.mxu0 %v2476
        %2617 = vmatprep.subr.bf16.mxu0 %v2411
        %2618 = vmatpush1.bf16.msra.mxu0 %v2410
        %2619 = vmatprep.subr.bf16.mxu0 0
        %2620 = vmatpush2.bf16.msra.mxu0 0
        %2621 = vmatprep.subr.bf16.mxu0 0
        %2622 = vmatpush2.bf16.msra.mxu0 0
        %2623 = vmatprep.subr.bf16.mxu0 0
        %2624 = vmatpush2.bf16.msra.mxu0 0
        %2625 = vmatprep.subr.bf16.mxu0 0
        %2626 = vmatpush2.bf16.msra.mxu0 0
        %2627 = vmatprep.subr.bf16.mxu0 0
        %2628 = vmatpush2.bf16.msra.mxu0 0
        %2629 = vmatprep.subr.bf16.mxu0 0
        %2630 = vmatpush2.bf16.msra.mxu0 0
        %2631 = vmatprep.subr.bf16.mxu0 0
        %2632 = vmatpush2.bf16.msra.mxu0 0
        %2633 = vmatprep.subr.bf16.mxu0 0
        %2634 = vmatpush2.bf16.msra.mxu0 0
        %2635 = vmatprep.mubr.bf16.mxu0 0
        %2636 = vmatmul.mubr.bf16.gmra.mxu0 %v2461
        %v2637 = vpop.f32.mrf.mxu0
        %v2638 = vadd.f32 0.0, %v2637
        %v2639 = vpop.f32.mrf.mxu0
        %v2640 = vadd.f32 0.0, %v2639
        %v2641 = vpop.f32.mrf.mxu0
        %v2642 = vadd.f32 0.0, %v2641
        %v2643 = vpop.f32.mrf.mxu0
        %v2644 = vadd.f32 0.0, %v2643
        %2645 = vdwg.mxu0
        %2646 = vmatprep.subr.bf16.mxu0 0
        %2647 = vmatpush1.bf16.msra.mxu0 0
        %2648 = vmatprep.subr.bf16.mxu0 0
        %2649 = vmatpush1.bf16.msra.mxu0 0
        %2650 = vmatprep.subr.bf16.mxu0 0
        %2651 = vmatpush1.bf16.msra.mxu0 0
        %2652 = vmatprep.subr.bf16.mxu0 0
        %2653 = vmatpush1.bf16.msra.mxu0 0
        %2654 = vmatprep.subr.bf16.mxu0 0
        %2655 = vmatpush1.bf16.msra.mxu0 0
        %2656 = vmatprep.subr.bf16.mxu0 0
        %2657 = vmatpush1.bf16.msra.mxu0 0
        %2658 = vmatprep.subr.bf16.mxu0 %v2485
        %2659 = vmatpush1.bf16.msra.mxu0 %v2482
        %2660 = vmatprep.subr.bf16.mxu0 %v2413
        %2661 = vmatpush1.bf16.msra.mxu0 %v2412
        %2662 = vmatprep.subr.bf16.mxu0 0
        %2663 = vmatpush2.bf16.msra.mxu0 0
        %2664 = vmatprep.subr.bf16.mxu0 0
        %2665 = vmatpush2.bf16.msra.mxu0 0
        %2666 = vmatprep.subr.bf16.mxu0 0
        %2667 = vmatpush2.bf16.msra.mxu0 0
        %2668 = vmatprep.subr.bf16.mxu0 0
        %2669 = vmatpush2.bf16.msra.mxu0 0
        %2670 = vmatprep.subr.bf16.mxu0 0
        %2671 = vmatpush2.bf16.msra.mxu0 0
        %2672 = vmatprep.subr.bf16.mxu0 0
        %2673 = vmatpush2.bf16.msra.mxu0 0
        %2674 = vmatprep.subr.bf16.mxu0 0
        %2675 = vmatpush2.bf16.msra.mxu0 0
        %2676 = vmatprep.subr.bf16.mxu0 0
        %2677 = vmatpush2.bf16.msra.mxu0 0
        %2678 = vmatprep.mubr.bf16.mxu0 0
        %2679 = vmatmul.mubr.bf16.gmra.mxu0 %v2461
        %v2680 = vpop.f32.mrf.mxu0
        %v2681 = vadd.f32 0.0, %v2680
        %v2682 = vpop.f32.mrf.mxu0
        %v2683 = vadd.f32 0.0, %v2682
        %v2684 = vpop.f32.mrf.mxu0
        %v2685 = vadd.f32 0.0, %v2684
        %v2686 = vpop.f32.mrf.mxu0
        %v2687 = vadd.f32 0.0, %v2686
        %2688 = vdwg.mxu0
        %2689 = vmatprep.subr.bf16.mxu0 0
        %2690 = vmatpush1.bf16.msra.mxu0 0
        %2691 = vmatprep.subr.bf16.mxu0 0
        %2692 = vmatpush1.bf16.msra.mxu0 0
        %2693 = vmatprep.subr.bf16.mxu0 0
        %2694 = vmatpush1.bf16.msra.mxu0 0
        %2695 = vmatprep.subr.bf16.mxu0 0
        %2696 = vmatpush1.bf16.msra.mxu0 0
        %2697 = vmatprep.subr.bf16.mxu0 0
        %2698 = vmatpush1.bf16.msra.mxu0 0
        %2699 = vmatprep.subr.bf16.mxu0 0
        %2700 = vmatpush1.bf16.msra.mxu0 0
        %2701 = vmatprep.subr.bf16.mxu0 %v2491
        %2702 = vmatpush1.bf16.msra.mxu0 %v2488
        %2703 = vmatprep.subr.bf16.mxu0 %v2415
        %2704 = vmatpush1.bf16.msra.mxu0 %v2414
        %2705 = vmatprep.subr.bf16.mxu0 0
        %2706 = vmatpush2.bf16.msra.mxu0 0
        %2707 = vmatprep.subr.bf16.mxu0 0
        %2708 = vmatpush2.bf16.msra.mxu0 0
        %2709 = vmatprep.subr.bf16.mxu0 0
        %2710 = vmatpush2.bf16.msra.mxu0 0
        %2711 = vmatprep.subr.bf16.mxu0 0
        %2712 = vmatpush2.bf16.msra.mxu0 0
        %2713 = vmatprep.subr.bf16.mxu0 0
        %2714 = vmatpush2.bf16.msra.mxu0 0
        %2715 = vmatprep.subr.bf16.mxu0 0
        %2716 = vmatpush2.bf16.msra.mxu0 0
        %2717 = vmatprep.subr.bf16.mxu0 0
        %2718 = vmatpush2.bf16.msra.mxu0 0
        %2719 = vmatprep.subr.bf16.mxu0 0
        %2720 = vmatpush2.bf16.msra.mxu0 0
        %2721 = vmatprep.mubr.bf16.mxu0 0
        %2722 = vmatmul.mubr.bf16.gmra.mxu0 %v2461
        %v2723 = vpop.f32.mrf.mxu0
        %v2724 = vadd.f32 0.0, %v2723
        %v2725 = vpop.f32.mrf.mxu0
        %v2726 = vadd.f32 0.0, %v2725
        %v2727 = vpop.f32.mrf.mxu0
        %v2728 = vadd.f32 0.0, %v2727
        %v2729 = vpop.f32.mrf.mxu0
        %v2730 = vadd.f32 0.0, %v2729
        %2731 = vdwg.mxu0
        %2732 = vmatprep.subr.bf16.mxu0 0
        %2733 = vmatpush1.bf16.msra.mxu0 0
        %2734 = vmatprep.subr.bf16.mxu0 0
        %2735 = vmatpush1.bf16.msra.mxu0 0
        %2736 = vmatprep.subr.bf16.mxu0 0
        %2737 = vmatpush1.bf16.msra.mxu0 0
        %2738 = vmatprep.subr.bf16.mxu0 0
        %2739 = vmatpush1.bf16.msra.mxu0 0
        %2740 = vmatprep.subr.bf16.mxu0 0
        %2741 = vmatpush1.bf16.msra.mxu0 0
        %2742 = vmatprep.subr.bf16.mxu0 0
        %2743 = vmatpush1.bf16.msra.mxu0 0
        %2744 = vmatprep.subr.bf16.mxu0 %v2497
        %2745 = vmatpush1.bf16.msra.mxu0 %v2494
        %2746 = vmatprep.subr.bf16.mxu0 %v2417
        %2747 = vmatpush1.bf16.msra.mxu0 %v2416
        %2748 = vmatprep.subr.bf16.mxu0 0
        %2749 = vmatpush2.bf16.msra.mxu0 0
        %2750 = vmatprep.subr.bf16.mxu0 0
        %2751 = vmatpush2.bf16.msra.mxu0 0
        %2752 = vmatprep.subr.bf16.mxu0 0
        %2753 = vmatpush2.bf16.msra.mxu0 0
        %2754 = vmatprep.subr.bf16.mxu0 0
        %2755 = vmatpush2.bf16.msra.mxu0 0
        %2756 = vmatprep.subr.bf16.mxu0 0
        %2757 = vmatpush2.bf16.msra.mxu0 0
        %2758 = vmatprep.subr.bf16.mxu0 0
        %2759 = vmatpush2.bf16.msra.mxu0 0
        %2760 = vmatprep.subr.bf16.mxu0 0
        %2761 = vmatpush2.bf16.msra.mxu0 0
        %2762 = vmatprep.subr.bf16.mxu0 0
        %2763 = vmatpush2.bf16.msra.mxu0 0
        %2764 = vmatprep.mubr.bf16.mxu0 0
        %2765 = vmatmul.mubr.bf16.gmra.mxu0 %v2461
        %v2766 = vpop.f32.mrf.mxu0
        %v2767 = vadd.f32 0.0, %v2766
        %v2768 = vpop.f32.mrf.mxu0
        %v2769 = vadd.f32 0.0, %v2768
        %v2770 = vpop.f32.mrf.mxu0
        %v2771 = vadd.f32 0.0, %v2770
        %v2772 = vpop.f32.mrf.mxu0
        %v2773 = vadd.f32 0.0, %v2772
        %2774 = vdwg.mxu0
        %2775 = vmatprep.subr.bf16.mxu0 0
        %2776 = vmatpush1.bf16.msra.mxu0 0
        %2777 = vmatprep.subr.bf16.mxu0 0
        %2778 = vmatpush1.bf16.msra.mxu0 0
        %2779 = vmatprep.subr.bf16.mxu0 0
        %2780 = vmatpush1.bf16.msra.mxu0 0
        %2781 = vmatprep.subr.bf16.mxu0 0
        %2782 = vmatpush1.bf16.msra.mxu0 0
        %2783 = vmatprep.subr.bf16.mxu0 0
        %2784 = vmatpush1.bf16.msra.mxu0 0
        %2785 = vmatprep.subr.bf16.mxu0 0
        %2786 = vmatpush1.bf16.msra.mxu0 0
        %2787 = vmatprep.subr.bf16.mxu0 %v2503
        %2788 = vmatpush1.bf16.msra.mxu0 %v2500
        %2789 = vmatprep.subr.bf16.mxu0 %v2419
        %2790 = vmatpush1.bf16.msra.mxu0 %v2418
        %2791 = vmatprep.subr.bf16.mxu0 0
        %2792 = vmatpush2.bf16.msra.mxu0 0
        %2793 = vmatprep.subr.bf16.mxu0 0
        %2794 = vmatpush2.bf16.msra.mxu0 0
        %2795 = vmatprep.subr.bf16.mxu0 0
        %2796 = vmatpush2.bf16.msra.mxu0 0
        %2797 = vmatprep.subr.bf16.mxu0 0
        %2798 = vmatpush2.bf16.msra.mxu0 0
        %2799 = vmatprep.subr.bf16.mxu0 0
        %2800 = vmatpush2.bf16.msra.mxu0 0
        %2801 = vmatprep.subr.bf16.mxu0 0
        %2802 = vmatpush2.bf16.msra.mxu0 0
        %2803 = vmatprep.subr.bf16.mxu0 0
        %2804 = vmatpush2.bf16.msra.mxu0 0
        %2805 = vmatprep.subr.bf16.mxu0 0
        %2806 = vmatpush2.bf16.msra.mxu0 0
        %2807 = vmatprep.mubr.bf16.mxu0 0
        %2808 = vmatmul.mubr.bf16.gmra.mxu0 %v2461
        %v2809 = vpop.f32.mrf.mxu0
        %v2810 = vadd.f32 0.0, %v2809
        %v2811 = vpop.f32.mrf.mxu0
        %v2812 = vadd.f32 0.0, %v2811
        %v2813 = vpop.f32.mrf.mxu0
        %v2814 = vadd.f32 0.0, %v2813
        %v2815 = vpop.f32.mrf.mxu0
        %v2816 = vadd.f32 0.0, %v2815
        %2817 = vdwg.mxu0
        %2818 = vmatprep.subr.bf16.mxu0 0
        %2819 = vmatpush1.bf16.msra.mxu0 0
        %2820 = vmatprep.subr.bf16.mxu0 0
        %2821 = vmatpush1.bf16.msra.mxu0 0
        %2822 = vmatprep.subr.bf16.mxu0 0
        %2823 = vmatpush1.bf16.msra.mxu0 0
        %2824 = vmatprep.subr.bf16.mxu0 0
        %2825 = vmatpush1.bf16.msra.mxu0 0
        %2826 = vmatprep.subr.bf16.mxu0 0
        %2827 = vmatpush1.bf16.msra.mxu0 0
        %2828 = vmatprep.subr.bf16.mxu0 0
        %2829 = vmatpush1.bf16.msra.mxu0 0
        %2830 = vmatprep.subr.bf16.mxu0 %v2509
        %2831 = vmatpush1.bf16.msra.mxu0 %v2506
        %2832 = vmatprep.subr.bf16.mxu0 %v2421
        %2833 = vmatpush1.bf16.msra.mxu0 %v2420
        %2834 = vmatprep.subr.bf16.mxu0 0
        %2835 = vmatpush2.bf16.msra.mxu0 0
        %2836 = vmatprep.subr.bf16.mxu0 0
        %2837 = vmatpush2.bf16.msra.mxu0 0
        %2838 = vmatprep.subr.bf16.mxu0 0
        %2839 = vmatpush2.bf16.msra.mxu0 0
        %2840 = vmatprep.subr.bf16.mxu0 0
        %2841 = vmatpush2.bf16.msra.mxu0 0
        %2842 = vmatprep.subr.bf16.mxu0 0
        %2843 = vmatpush2.bf16.msra.mxu0 0
        %2844 = vmatprep.subr.bf16.mxu0 0
        %2845 = vmatpush2.bf16.msra.mxu0 0
        %2846 = vmatprep.subr.bf16.mxu0 0
        %2847 = vmatpush2.bf16.msra.mxu0 0
        %2848 = vmatprep.subr.bf16.mxu0 0
        %2849 = vmatpush2.bf16.msra.mxu0 0
        %2850 = vmatprep.mubr.bf16.mxu0 0
        %2851 = vmatmul.mubr.bf16.gmra.mxu0 %v2461
        %v2852 = vpop.f32.mrf.mxu0
        %v2853 = vadd.f32 0.0, %v2852
        %v2854 = vpop.f32.mrf.mxu0
        %v2855 = vadd.f32 0.0, %v2854
        %v2856 = vpop.f32.mrf.mxu0
        %v2857 = vadd.f32 0.0, %v2856
        %v2858 = vpop.f32.mrf.mxu0
        %v2859 = vadd.f32 0.0, %v2858
        %2860 = vdwg.mxu0
        %2861 = vmatprep.subr.bf16.mxu0 0
        %2862 = vmatpush1.bf16.msra.mxu0 0
        %2863 = vmatprep.subr.bf16.mxu0 0
        %2864 = vmatpush1.bf16.msra.mxu0 0
        %2865 = vmatprep.subr.bf16.mxu0 0
        %2866 = vmatpush1.bf16.msra.mxu0 0
        %2867 = vmatprep.subr.bf16.mxu0 0
        %2868 = vmatpush1.bf16.msra.mxu0 0
        %2869 = vmatprep.subr.bf16.mxu0 0
        %2870 = vmatpush1.bf16.msra.mxu0 0
        %2871 = vmatprep.subr.bf16.mxu0 0
        %2872 = vmatpush1.bf16.msra.mxu0 0
        %2873 = vmatprep.subr.bf16.mxu0 %v2515
        %2874 = vmatpush1.bf16.msra.mxu0 %v2512
        %2875 = vmatprep.subr.bf16.mxu0 %v2423
        %2876 = vmatpush1.bf16.msra.mxu0 %v2422
        %2877 = vmatprep.subr.bf16.mxu0 0
        %2878 = vmatpush2.bf16.msra.mxu0 0
        %2879 = vmatprep.subr.bf16.mxu0 0
        %2880 = vmatpush2.bf16.msra.mxu0 0
        %2881 = vmatprep.subr.bf16.mxu0 0
        %2882 = vmatpush2.bf16.msra.mxu0 0
        %2883 = vmatprep.subr.bf16.mxu0 0
        %2884 = vmatpush2.bf16.msra.mxu0 0
        %2885 = vmatprep.subr.bf16.mxu0 0
        %2886 = vmatpush2.bf16.msra.mxu0 0
        %2887 = vmatprep.subr.bf16.mxu0 0
        %2888 = vmatpush2.bf16.msra.mxu0 0
        %2889 = vmatprep.subr.bf16.mxu0 0
        %2890 = vmatpush2.bf16.msra.mxu0 0
        %2891 = vmatprep.subr.bf16.mxu0 0
        %2892 = vmatpush2.bf16.msra.mxu0 0
        %2893 = vmatprep.mubr.bf16.mxu0 0
        %2894 = vmatmul.mubr.bf16.gmra.mxu0 %v2461
        %v2895 = vpop.f32.mrf.mxu0
        %v2896 = vadd.f32 0.0, %v2895
        %v2897 = vpop.f32.mrf.mxu0
        %v2898 = vadd.f32 0.0, %v2897
        %v2899 = vpop.f32.mrf.mxu0
        %v2900 = vadd.f32 0.0, %v2899
        %v2901 = vpop.f32.mrf.mxu0
        %v2902 = vadd.f32 0.0, %v2901
        %2903 = vdwg.mxu0
        %v2906 = vunpack.c.l.b16 %v768
        %v2907 = vunpack.c.l.b16 %v769
        %v2908 = vpack.c.b16 %v2907, %v2906
        %v2945 = vunpack.c.l.b16 %v886
        %v2946 = vunpack.c.h.b16 %v886
        %v2947 = vunpack.c.l.b16 %v887
        %v2948 = vunpack.c.h.b16 %v887
        %v2949 = vunpack.c.l.b16 %v888
        %v2950 = vunpack.c.h.b16 %v888
        %v2951 = vunpack.c.l.b16 %v889
        %v2952 = vunpack.c.h.b16 %v889
        %v2953 = vunpack.c.l.b16 %v890
        %v2954 = vunpack.c.h.b16 %v890
        %v2955 = vunpack.c.l.b16 %v891
        %v2956 = vunpack.c.h.b16 %v891
        %v2957 = vunpack.c.l.b16 %v892
        %v2958 = vunpack.c.h.b16 %v892
        %v2959 = vunpack.c.l.b16 %v893
        %v2960 = vunpack.c.h.b16 %v893
        %v2961 = vunpack.c.l.b16 %v894
        %v2962 = vunpack.c.h.b16 %v894
        %v2963 = vunpack.c.l.b16 %v895
        %v2964 = vunpack.c.h.b16 %v895
        %v2965 = vunpack.c.l.b16 %v896
        %v2966 = vunpack.c.h.b16 %v896
        %v2967 = vunpack.c.l.b16 %v897
        %v2968 = vunpack.c.h.b16 %v897
        %v2969 = vunpack.c.l.b16 %v898
        %v2970 = vunpack.c.h.b16 %v898
        %v2971 = vunpack.c.l.b16 %v899
        %v2972 = vunpack.c.h.b16 %v899
        %v2973 = vunpack.c.l.b16 %v900
        %v2974 = vunpack.c.h.b16 %v900
        %v2975 = vunpack.c.l.b16 %v901
        %v2976 = vunpack.c.h.b16 %v901
        %v2977 = vunpack.c.l.b16 %v902
        %v2978 = vunpack.c.h.b16 %v902
        %v2979 = vunpack.c.l.b16 %v903
        %v2980 = vunpack.c.h.b16 %v903
        %v2981 = vunpack.c.l.b16 %v904
        %v2982 = vunpack.c.h.b16 %v904
        %v2983 = vunpack.c.l.b16 %v905
        %v2984 = vunpack.c.h.b16 %v905
        %v2985 = vunpack.c.l.b16 %v906
        %v2986 = vunpack.c.h.b16 %v906
        %v2987 = vunpack.c.l.b16 %v907
        %v2988 = vunpack.c.h.b16 %v907
        %v2989 = vunpack.c.l.b16 %v908
        %v2990 = vunpack.c.h.b16 %v908
        %v2991 = vunpack.c.l.b16 %v909
        %v2992 = vunpack.c.h.b16 %v909
        %v2993 = vunpack.c.l.b16 %v910
        %v2994 = vunpack.c.h.b16 %v910
        %v2995 = vunpack.c.l.b16 %v911
        %v2996 = vunpack.c.h.b16 %v911
        %v2997 = vunpack.c.l.b16 %v912
        %v2998 = vunpack.c.h.b16 %v912
        %v2999 = vunpack.c.l.b16 %v913
        %v3000 = vunpack.c.h.b16 %v913
        %v3001 = vunpack.c.l.b16 %v914
        %v3002 = vunpack.c.h.b16 %v914
        %v3003 = vunpack.c.l.b16 %v915
        %v3004 = vunpack.c.h.b16 %v915
        %v3005 = vunpack.c.l.b16 %v916
        %v3006 = vunpack.c.h.b16 %v916
        %v3007 = vunpack.c.l.b16 %v917
        %v3008 = vunpack.c.h.b16 %v917
        %v3009 = vunpack.c.l.b16 %v918
        %v3010 = vunpack.c.h.b16 %v918
        %v3011 = vunpack.c.l.b16 %v919
        %v3012 = vunpack.c.h.b16 %v919
        %v3013 = vunpack.c.l.b16 %v920
        %v3014 = vunpack.c.h.b16 %v920
        %v3015 = vunpack.c.l.b16 %v921
        %v3016 = vunpack.c.h.b16 %v921
        %v3017 = vpack.c.b16 %v2963, %v2945
        %v3018 = vpack.c.b16 %v2964, %v2946
        %v3019 = vpack.c.b16 %v2965, %v2947
        %v3020 = vpack.c.b16 %v2966, %v2948
        %v3021 = vpack.c.b16 %v2967, %v2949
        %v3022 = vpack.c.b16 %v2968, %v2950
        %v3023 = vpack.c.b16 %v2969, %v2951
        %v3024 = vpack.c.b16 %v2970, %v2952
        %v3025 = vpack.c.b16 %v2971, %v2953
        %v3026 = vpack.c.b16 %v2972, %v2954
        %v3027 = vpack.c.b16 %v2973, %v2955
        %v3028 = vpack.c.b16 %v2974, %v2956
        %v3029 = vpack.c.b16 %v2975, %v2957
        %v3030 = vpack.c.b16 %v2976, %v2958
        %v3031 = vpack.c.b16 %v2977, %v2959
        %v3032 = vpack.c.b16 %v2978, %v2960
        %v3033 = vpack.c.b16 %v2979, %v2961
        %v3034 = vpack.c.b16 %v2980, %v2962
        %v3035 = vpack.c.b16 %v2999, %v2981
        %v3036 = vpack.c.b16 %v3000, %v2982
        %v3037 = vpack.c.b16 %v3001, %v2983
        %v3038 = vpack.c.b16 %v3002, %v2984
        %v3039 = vpack.c.b16 %v3003, %v2985
        %v3040 = vpack.c.b16 %v3004, %v2986
        %v3041 = vpack.c.b16 %v3005, %v2987
        %v3042 = vpack.c.b16 %v3006, %v2988
        %v3043 = vpack.c.b16 %v3007, %v2989
        %v3044 = vpack.c.b16 %v3008, %v2990
        %v3045 = vpack.c.b16 %v3009, %v2991
        %v3046 = vpack.c.b16 %v3010, %v2992
        %v3047 = vpack.c.b16 %v3011, %v2993
        %v3048 = vpack.c.b16 %v3012, %v2994
        %v3049 = vpack.c.b16 %v3013, %v2995
        %v3050 = vpack.c.b16 %v3014, %v2996
        %v3051 = vpack.c.b16 %v3015, %v2997
        %v3052 = vpack.c.b16 %v3016, %v2998
        %v3072 = vsel %vm1233, %v2908, 0
        %v3075 = vand.u32 %v3035, %v1240
        %v3078 = vand.u32 %v3036, %v1240
        %v3081 = vand.u32 %v3037, %v1240
        %v3084 = vand.u32 %v3038, %v1240
        %v3087 = vand.u32 %v3039, %v1240
        %v3090 = vand.u32 %v3040, %v1240
        %v3093 = vand.u32 %v3041, %v1240
        %v3096 = vand.u32 %v3042, %v1240
        %v3099 = vand.u32 %v3043, %v1240
        %v3102 = vand.u32 %v3044, %v1240
        %v3105 = vand.u32 %v3045, %v1240
        %v3108 = vand.u32 %v3046, %v1240
        %v3111 = vand.u32 %v3047, %v1240
        %v3114 = vand.u32 %v3048, %v1240
        %v3117 = vand.u32 %v3049, %v1240
        %v3120 = vand.u32 %v3050, %v1240
        %v3123 = vand.u32 %v3051, %v1240
        %v3126 = vand.u32 %v3052, %v1240
        %3128 = vmatprep.subr.bf16.mxu0 0
        %3129 = vmatpush1.bf16.msra.mxu0 0
        %3130 = vmatprep.subr.bf16.mxu0 0
        %3131 = vmatpush1.bf16.msra.mxu0 0
        %3132 = vmatprep.subr.bf16.mxu0 0
        %3133 = vmatpush1.bf16.msra.mxu0 0
        %3134 = vmatprep.subr.bf16.mxu0 0
        %3135 = vmatpush1.bf16.msra.mxu0 0
        %3136 = vmatprep.subr.bf16.mxu0 0
        %3137 = vmatpush1.bf16.msra.mxu0 0
        %3138 = vmatprep.subr.bf16.mxu0 0
        %3139 = vmatpush1.bf16.msra.mxu0 0
        %3140 = vmatprep.subr.bf16.mxu0 %v3078
        %3141 = vmatpush1.bf16.msra.mxu0 %v3075
        %3142 = vmatprep.subr.bf16.mxu0 %v3018
        %3143 = vmatpush1.bf16.msra.mxu0 %v3017
        %3144 = vmatprep.subr.bf16.mxu0 0
        %3145 = vmatpush2.bf16.msra.mxu0 0
        %3146 = vmatprep.subr.bf16.mxu0 0
        %3147 = vmatpush2.bf16.msra.mxu0 0
        %3148 = vmatprep.subr.bf16.mxu0 0
        %3149 = vmatpush2.bf16.msra.mxu0 0
        %3150 = vmatprep.subr.bf16.mxu0 0
        %3151 = vmatpush2.bf16.msra.mxu0 0
        %3152 = vmatprep.subr.bf16.mxu0 0
        %3153 = vmatpush2.bf16.msra.mxu0 0
        %3154 = vmatprep.subr.bf16.mxu0 0
        %3155 = vmatpush2.bf16.msra.mxu0 0
        %3156 = vmatprep.subr.bf16.mxu0 0
        %3157 = vmatpush2.bf16.msra.mxu0 0
        %3158 = vmatprep.subr.bf16.mxu0 0
        %3159 = vmatpush2.bf16.msra.mxu0 0
        %3160 = vmatprep.mubr.bf16.mxu0 0
        %3161 = vmatmul.mubr.bf16.gmra.mxu0 %v3072
        %v3162 = vpop.f32.mrf.mxu0
        %v3163 = vadd.f32 0.0, %v3162
        %v3164 = vpop.f32.mrf.mxu0
        %v3165 = vadd.f32 0.0, %v3164
        %v3166 = vpop.f32.mrf.mxu0
        %v3167 = vadd.f32 0.0, %v3166
        %v3168 = vpop.f32.mrf.mxu0
        %v3169 = vadd.f32 0.0, %v3168
        %3170 = vdwg.mxu0
        %3171 = vmatprep.subr.bf16.mxu0 0
        %3172 = vmatpush1.bf16.msra.mxu0 0
        %3173 = vmatprep.subr.bf16.mxu0 0
        %3174 = vmatpush1.bf16.msra.mxu0 0
        %3175 = vmatprep.subr.bf16.mxu0 0
        %3176 = vmatpush1.bf16.msra.mxu0 0
        %3177 = vmatprep.subr.bf16.mxu0 0
        %3178 = vmatpush1.bf16.msra.mxu0 0
        %3179 = vmatprep.subr.bf16.mxu0 0
        %3180 = vmatpush1.bf16.msra.mxu0 0
        %3181 = vmatprep.subr.bf16.mxu0 0
        %3182 = vmatpush1.bf16.msra.mxu0 0
        %3183 = vmatprep.subr.bf16.mxu0 %v3084
        %3184 = vmatpush1.bf16.msra.mxu0 %v3081
        %3185 = vmatprep.subr.bf16.mxu0 %v3020
        %3186 = vmatpush1.bf16.msra.mxu0 %v3019
        %3187 = vmatprep.subr.bf16.mxu0 0
        %3188 = vmatpush2.bf16.msra.mxu0 0
        %3189 = vmatprep.subr.bf16.mxu0 0
        %3190 = vmatpush2.bf16.msra.mxu0 0
        %3191 = vmatprep.subr.bf16.mxu0 0
        %3192 = vmatpush2.bf16.msra.mxu0 0
        %3193 = vmatprep.subr.bf16.mxu0 0
        %3194 = vmatpush2.bf16.msra.mxu0 0
        %3195 = vmatprep.subr.bf16.mxu0 0
        %3196 = vmatpush2.bf16.msra.mxu0 0
        %3197 = vmatprep.subr.bf16.mxu0 0
        %3198 = vmatpush2.bf16.msra.mxu0 0
        %3199 = vmatprep.subr.bf16.mxu0 0
        %3200 = vmatpush2.bf16.msra.mxu0 0
        %3201 = vmatprep.subr.bf16.mxu0 0
        %3202 = vmatpush2.bf16.msra.mxu0 0
        %3203 = vmatprep.mubr.bf16.mxu0 0
        %3204 = vmatmul.mubr.bf16.gmra.mxu0 %v3072
        %v3205 = vpop.f32.mrf.mxu0
        %v3206 = vadd.f32 0.0, %v3205
        %v3207 = vpop.f32.mrf.mxu0
        %v3208 = vadd.f32 0.0, %v3207
        %v3209 = vpop.f32.mrf.mxu0
        %v3210 = vadd.f32 0.0, %v3209
        %v3211 = vpop.f32.mrf.mxu0
        %v3212 = vadd.f32 0.0, %v3211
        %3213 = vdwg.mxu0
        %3214 = vmatprep.subr.bf16.mxu0 0
        %3215 = vmatpush1.bf16.msra.mxu0 0
        %3216 = vmatprep.subr.bf16.mxu0 0
        %3217 = vmatpush1.bf16.msra.mxu0 0
        %3218 = vmatprep.subr.bf16.mxu0 0
        %3219 = vmatpush1.bf16.msra.mxu0 0
        %3220 = vmatprep.subr.bf16.mxu0 0
        %3221 = vmatpush1.bf16.msra.mxu0 0
        %3222 = vmatprep.subr.bf16.mxu0 0
        %3223 = vmatpush1.bf16.msra.mxu0 0
        %3224 = vmatprep.subr.bf16.mxu0 0
        %3225 = vmatpush1.bf16.msra.mxu0 0
        %3226 = vmatprep.subr.bf16.mxu0 %v3090
        %3227 = vmatpush1.bf16.msra.mxu0 %v3087
        %3228 = vmatprep.subr.bf16.mxu0 %v3022
        %3229 = vmatpush1.bf16.msra.mxu0 %v3021
        %3230 = vmatprep.subr.bf16.mxu0 0
        %3231 = vmatpush2.bf16.msra.mxu0 0
        %3232 = vmatprep.subr.bf16.mxu0 0
        %3233 = vmatpush2.bf16.msra.mxu0 0
        %3234 = vmatprep.subr.bf16.mxu0 0
        %3235 = vmatpush2.bf16.msra.mxu0 0
        %3236 = vmatprep.subr.bf16.mxu0 0
        %3237 = vmatpush2.bf16.msra.mxu0 0
        %3238 = vmatprep.subr.bf16.mxu0 0
        %3239 = vmatpush2.bf16.msra.mxu0 0
        %3240 = vmatprep.subr.bf16.mxu0 0
        %3241 = vmatpush2.bf16.msra.mxu0 0
        %3242 = vmatprep.subr.bf16.mxu0 0
        %3243 = vmatpush2.bf16.msra.mxu0 0
        %3244 = vmatprep.subr.bf16.mxu0 0
        %3245 = vmatpush2.bf16.msra.mxu0 0
        %3246 = vmatprep.mubr.bf16.mxu0 0
        %3247 = vmatmul.mubr.bf16.gmra.mxu0 %v3072
        %v3248 = vpop.f32.mrf.mxu0
        %v3249 = vadd.f32 0.0, %v3248
        %v3250 = vpop.f32.mrf.mxu0
        %v3251 = vadd.f32 0.0, %v3250
        %v3252 = vpop.f32.mrf.mxu0
        %v3253 = vadd.f32 0.0, %v3252
        %v3254 = vpop.f32.mrf.mxu0
        %v3255 = vadd.f32 0.0, %v3254
        %3256 = vdwg.mxu0
        %3257 = vmatprep.subr.bf16.mxu0 0
        %3258 = vmatpush1.bf16.msra.mxu0 0
        %3259 = vmatprep.subr.bf16.mxu0 0
        %3260 = vmatpush1.bf16.msra.mxu0 0
        %3261 = vmatprep.subr.bf16.mxu0 0
        %3262 = vmatpush1.bf16.msra.mxu0 0
        %3263 = vmatprep.subr.bf16.mxu0 0
        %3264 = vmatpush1.bf16.msra.mxu0 0
        %3265 = vmatprep.subr.bf16.mxu0 0
        %3266 = vmatpush1.bf16.msra.mxu0 0
        %3267 = vmatprep.subr.bf16.mxu0 0
        %3268 = vmatpush1.bf16.msra.mxu0 0
        %3269 = vmatprep.subr.bf16.mxu0 %v3096
        %3270 = vmatpush1.bf16.msra.mxu0 %v3093
        %3271 = vmatprep.subr.bf16.mxu0 %v3024
        %3272 = vmatpush1.bf16.msra.mxu0 %v3023
        %3273 = vmatprep.subr.bf16.mxu0 0
        %3274 = vmatpush2.bf16.msra.mxu0 0
        %3275 = vmatprep.subr.bf16.mxu0 0
        %3276 = vmatpush2.bf16.msra.mxu0 0
        %3277 = vmatprep.subr.bf16.mxu0 0
        %3278 = vmatpush2.bf16.msra.mxu0 0
        %3279 = vmatprep.subr.bf16.mxu0 0
        %3280 = vmatpush2.bf16.msra.mxu0 0
        %3281 = vmatprep.subr.bf16.mxu0 0
        %3282 = vmatpush2.bf16.msra.mxu0 0
        %3283 = vmatprep.subr.bf16.mxu0 0
        %3284 = vmatpush2.bf16.msra.mxu0 0
        %3285 = vmatprep.subr.bf16.mxu0 0
        %3286 = vmatpush2.bf16.msra.mxu0 0
        %3287 = vmatprep.subr.bf16.mxu0 0
        %3288 = vmatpush2.bf16.msra.mxu0 0
        %3289 = vmatprep.mubr.bf16.mxu0 0
        %3290 = vmatmul.mubr.bf16.gmra.mxu0 %v3072
        %v3291 = vpop.f32.mrf.mxu0
        %v3292 = vadd.f32 0.0, %v3291
        %v3293 = vpop.f32.mrf.mxu0
        %v3294 = vadd.f32 0.0, %v3293
        %v3295 = vpop.f32.mrf.mxu0
        %v3296 = vadd.f32 0.0, %v3295
        %v3297 = vpop.f32.mrf.mxu0
        %v3298 = vadd.f32 0.0, %v3297
        %3299 = vdwg.mxu0
        %3300 = vmatprep.subr.bf16.mxu0 0
        %3301 = vmatpush1.bf16.msra.mxu0 0
        %3302 = vmatprep.subr.bf16.mxu0 0
        %3303 = vmatpush1.bf16.msra.mxu0 0
        %3304 = vmatprep.subr.bf16.mxu0 0
        %3305 = vmatpush1.bf16.msra.mxu0 0
        %3306 = vmatprep.subr.bf16.mxu0 0
        %3307 = vmatpush1.bf16.msra.mxu0 0
        %3308 = vmatprep.subr.bf16.mxu0 0
        %3309 = vmatpush1.bf16.msra.mxu0 0
        %3310 = vmatprep.subr.bf16.mxu0 0
        %3311 = vmatpush1.bf16.msra.mxu0 0
        %3312 = vmatprep.subr.bf16.mxu0 %v3102
        %3313 = vmatpush1.bf16.msra.mxu0 %v3099
        %3314 = vmatprep.subr.bf16.mxu0 %v3026
        %3315 = vmatpush1.bf16.msra.mxu0 %v3025
        %3316 = vmatprep.subr.bf16.mxu0 0
        %3317 = vmatpush2.bf16.msra.mxu0 0
        %3318 = vmatprep.subr.bf16.mxu0 0
        %3319 = vmatpush2.bf16.msra.mxu0 0
        %3320 = vmatprep.subr.bf16.mxu0 0
        %3321 = vmatpush2.bf16.msra.mxu0 0
        %3322 = vmatprep.subr.bf16.mxu0 0
        %3323 = vmatpush2.bf16.msra.mxu0 0
        %3324 = vmatprep.subr.bf16.mxu0 0
        %3325 = vmatpush2.bf16.msra.mxu0 0
        %3326 = vmatprep.subr.bf16.mxu0 0
        %3327 = vmatpush2.bf16.msra.mxu0 0
        %3328 = vmatprep.subr.bf16.mxu0 0
        %3329 = vmatpush2.bf16.msra.mxu0 0
        %3330 = vmatprep.subr.bf16.mxu0 0
        %3331 = vmatpush2.bf16.msra.mxu0 0
        %3332 = vmatprep.mubr.bf16.mxu0 0
        %3333 = vmatmul.mubr.bf16.gmra.mxu0 %v3072
        %v3334 = vpop.f32.mrf.mxu0
        %v3335 = vadd.f32 0.0, %v3334
        %v3336 = vpop.f32.mrf.mxu0
        %v3337 = vadd.f32 0.0, %v3336
        %v3338 = vpop.f32.mrf.mxu0
        %v3339 = vadd.f32 0.0, %v3338
        %v3340 = vpop.f32.mrf.mxu0
        %v3341 = vadd.f32 0.0, %v3340
        %3342 = vdwg.mxu0
        %3343 = vmatprep.subr.bf16.mxu0 0
        %3344 = vmatpush1.bf16.msra.mxu0 0
        %3345 = vmatprep.subr.bf16.mxu0 0
        %3346 = vmatpush1.bf16.msra.mxu0 0
        %3347 = vmatprep.subr.bf16.mxu0 0
        %3348 = vmatpush1.bf16.msra.mxu0 0
        %3349 = vmatprep.subr.bf16.mxu0 0
        %3350 = vmatpush1.bf16.msra.mxu0 0
        %3351 = vmatprep.subr.bf16.mxu0 0
        %3352 = vmatpush1.bf16.msra.mxu0 0
        %3353 = vmatprep.subr.bf16.mxu0 0
        %3354 = vmatpush1.bf16.msra.mxu0 0
        %3355 = vmatprep.subr.bf16.mxu0 %v3108
        %3356 = vmatpush1.bf16.msra.mxu0 %v3105
        %3357 = vmatprep.subr.bf16.mxu0 %v3028
        %3358 = vmatpush1.bf16.msra.mxu0 %v3027
        %3359 = vmatprep.subr.bf16.mxu0 0
        %3360 = vmatpush2.bf16.msra.mxu0 0
        %3361 = vmatprep.subr.bf16.mxu0 0
        %3362 = vmatpush2.bf16.msra.mxu0 0
        %3363 = vmatprep.subr.bf16.mxu0 0
        %3364 = vmatpush2.bf16.msra.mxu0 0
        %3365 = vmatprep.subr.bf16.mxu0 0
        %3366 = vmatpush2.bf16.msra.mxu0 0
        %3367 = vmatprep.subr.bf16.mxu0 0
        %3368 = vmatpush2.bf16.msra.mxu0 0
        %3369 = vmatprep.subr.bf16.mxu0 0
        %3370 = vmatpush2.bf16.msra.mxu0 0
        %3371 = vmatprep.subr.bf16.mxu0 0
        %3372 = vmatpush2.bf16.msra.mxu0 0
        %3373 = vmatprep.subr.bf16.mxu0 0
        %3374 = vmatpush2.bf16.msra.mxu0 0
        %3375 = vmatprep.mubr.bf16.mxu0 0
        %3376 = vmatmul.mubr.bf16.gmra.mxu0 %v3072
        %v3377 = vpop.f32.mrf.mxu0
        %v3378 = vadd.f32 0.0, %v3377
        %v3379 = vpop.f32.mrf.mxu0
        %v3380 = vadd.f32 0.0, %v3379
        %v3381 = vpop.f32.mrf.mxu0
        %v3382 = vadd.f32 0.0, %v3381
        %v3383 = vpop.f32.mrf.mxu0
        %v3384 = vadd.f32 0.0, %v3383
        %3385 = vdwg.mxu0
        %3386 = vmatprep.subr.bf16.mxu0 0
        %3387 = vmatpush1.bf16.msra.mxu0 0
        %3388 = vmatprep.subr.bf16.mxu0 0
        %3389 = vmatpush1.bf16.msra.mxu0 0
        %3390 = vmatprep.subr.bf16.mxu0 0
        %3391 = vmatpush1.bf16.msra.mxu0 0
        %3392 = vmatprep.subr.bf16.mxu0 0
        %3393 = vmatpush1.bf16.msra.mxu0 0
        %3394 = vmatprep.subr.bf16.mxu0 0
        %3395 = vmatpush1.bf16.msra.mxu0 0
        %3396 = vmatprep.subr.bf16.mxu0 0
        %3397 = vmatpush1.bf16.msra.mxu0 0
        %3398 = vmatprep.subr.bf16.mxu0 %v3114
        %3399 = vmatpush1.bf16.msra.mxu0 %v3111
        %3400 = vmatprep.subr.bf16.mxu0 %v3030
        %3401 = vmatpush1.bf16.msra.mxu0 %v3029
        %3402 = vmatprep.subr.bf16.mxu0 0
        %3403 = vmatpush2.bf16.msra.mxu0 0
        %3404 = vmatprep.subr.bf16.mxu0 0
        %3405 = vmatpush2.bf16.msra.mxu0 0
        %3406 = vmatprep.subr.bf16.mxu0 0
        %3407 = vmatpush2.bf16.msra.mxu0 0
        %3408 = vmatprep.subr.bf16.mxu0 0
        %3409 = vmatpush2.bf16.msra.mxu0 0
        %3410 = vmatprep.subr.bf16.mxu0 0
        %3411 = vmatpush2.bf16.msra.mxu0 0
        %3412 = vmatprep.subr.bf16.mxu0 0
        %3413 = vmatpush2.bf16.msra.mxu0 0
        %3414 = vmatprep.subr.bf16.mxu0 0
        %3415 = vmatpush2.bf16.msra.mxu0 0
        %3416 = vmatprep.subr.bf16.mxu0 0
        %3417 = vmatpush2.bf16.msra.mxu0 0
        %3418 = vmatprep.mubr.bf16.mxu0 0
        %3419 = vmatmul.mubr.bf16.gmra.mxu0 %v3072
        %v3420 = vpop.f32.mrf.mxu0
        %v3421 = vadd.f32 0.0, %v3420
        %v3422 = vpop.f32.mrf.mxu0
        %v3423 = vadd.f32 0.0, %v3422
        %v3424 = vpop.f32.mrf.mxu0
        %v3425 = vadd.f32 0.0, %v3424
        %v3426 = vpop.f32.mrf.mxu0
        %v3427 = vadd.f32 0.0, %v3426
        %3428 = vdwg.mxu0
        %3429 = vmatprep.subr.bf16.mxu0 0
        %3430 = vmatpush1.bf16.msra.mxu0 0
        %3431 = vmatprep.subr.bf16.mxu0 0
        %3432 = vmatpush1.bf16.msra.mxu0 0
        %3433 = vmatprep.subr.bf16.mxu0 0
        %3434 = vmatpush1.bf16.msra.mxu0 0
        %3435 = vmatprep.subr.bf16.mxu0 0
        %3436 = vmatpush1.bf16.msra.mxu0 0
        %3437 = vmatprep.subr.bf16.mxu0 0
        %3438 = vmatpush1.bf16.msra.mxu0 0
        %3439 = vmatprep.subr.bf16.mxu0 0
        %3440 = vmatpush1.bf16.msra.mxu0 0
        %3441 = vmatprep.subr.bf16.mxu0 %v3120
        %3442 = vmatpush1.bf16.msra.mxu0 %v3117
        %3443 = vmatprep.subr.bf16.mxu0 %v3032
        %3444 = vmatpush1.bf16.msra.mxu0 %v3031
        %3445 = vmatprep.subr.bf16.mxu0 0
        %3446 = vmatpush2.bf16.msra.mxu0 0
        %3447 = vmatprep.subr.bf16.mxu0 0
        %3448 = vmatpush2.bf16.msra.mxu0 0
        %3449 = vmatprep.subr.bf16.mxu0 0
        %3450 = vmatpush2.bf16.msra.mxu0 0
        %3451 = vmatprep.subr.bf16.mxu0 0
        %3452 = vmatpush2.bf16.msra.mxu0 0
        %3453 = vmatprep.subr.bf16.mxu0 0
        %3454 = vmatpush2.bf16.msra.mxu0 0
        %3455 = vmatprep.subr.bf16.mxu0 0
        %3456 = vmatpush2.bf16.msra.mxu0 0
        %3457 = vmatprep.subr.bf16.mxu0 0
        %3458 = vmatpush2.bf16.msra.mxu0 0
        %3459 = vmatprep.subr.bf16.mxu0 0
        %3460 = vmatpush2.bf16.msra.mxu0 0
        %3461 = vmatprep.mubr.bf16.mxu0 0
        %3462 = vmatmul.mubr.bf16.gmra.mxu0 %v3072
        %v3463 = vpop.f32.mrf.mxu0
        %v3464 = vadd.f32 0.0, %v3463
        %v3465 = vpop.f32.mrf.mxu0
        %v3466 = vadd.f32 0.0, %v3465
        %v3467 = vpop.f32.mrf.mxu0
        %v3468 = vadd.f32 0.0, %v3467
        %v3469 = vpop.f32.mrf.mxu0
        %v3470 = vadd.f32 0.0, %v3469
        %3471 = vdwg.mxu0
        %3472 = vmatprep.subr.bf16.mxu0 0
        %3473 = vmatpush1.bf16.msra.mxu0 0
        %3474 = vmatprep.subr.bf16.mxu0 0
        %3475 = vmatpush1.bf16.msra.mxu0 0
        %3476 = vmatprep.subr.bf16.mxu0 0
        %3477 = vmatpush1.bf16.msra.mxu0 0
        %3478 = vmatprep.subr.bf16.mxu0 0
        %3479 = vmatpush1.bf16.msra.mxu0 0
        %3480 = vmatprep.subr.bf16.mxu0 0
        %3481 = vmatpush1.bf16.msra.mxu0 0
        %3482 = vmatprep.subr.bf16.mxu0 0
        %3483 = vmatpush1.bf16.msra.mxu0 0
        %3484 = vmatprep.subr.bf16.mxu0 %v3126
        %3485 = vmatpush1.bf16.msra.mxu0 %v3123
        %3486 = vmatprep.subr.bf16.mxu0 %v3034
        %3487 = vmatpush1.bf16.msra.mxu0 %v3033
        %3488 = vmatprep.subr.bf16.mxu0 0
        %3489 = vmatpush2.bf16.msra.mxu0 0
        %3490 = vmatprep.subr.bf16.mxu0 0
        %3491 = vmatpush2.bf16.msra.mxu0 0
        %3492 = vmatprep.subr.bf16.mxu0 0
        %3493 = vmatpush2.bf16.msra.mxu0 0
        %3494 = vmatprep.subr.bf16.mxu0 0
        %3495 = vmatpush2.bf16.msra.mxu0 0
        %3496 = vmatprep.subr.bf16.mxu0 0
        %3497 = vmatpush2.bf16.msra.mxu0 0
        %3498 = vmatprep.subr.bf16.mxu0 0
        %3499 = vmatpush2.bf16.msra.mxu0 0
        %3500 = vmatprep.subr.bf16.mxu0 0
        %3501 = vmatpush2.bf16.msra.mxu0 0
        %3502 = vmatprep.subr.bf16.mxu0 0
        %3503 = vmatpush2.bf16.msra.mxu0 0
        %3504 = vmatprep.mubr.bf16.mxu0 0
        %3505 = vmatmul.mubr.bf16.gmra.mxu0 %v3072
        %v3506 = vpop.f32.mrf.mxu0
        %v3507 = vadd.f32 0.0, %v3506
        %v3508 = vpop.f32.mrf.mxu0
        %v3509 = vadd.f32 0.0, %v3508
        %v3510 = vpop.f32.mrf.mxu0
        %v3511 = vadd.f32 0.0, %v3510
        %v3512 = vpop.f32.mrf.mxu0
        %v3513 = vadd.f32 0.0, %v3512
        %3514 = vdwg.mxu0
        %v3517 = vunpack.c.l.b16 %v770
        %v3518 = vunpack.c.l.b16 %v771
        %v3519 = vpack.c.b16 %v3518, %v3517
        %v3556 = vunpack.c.l.b16 %v922
        %v3557 = vunpack.c.h.b16 %v922
        %v3558 = vunpack.c.l.b16 %v923
        %v3559 = vunpack.c.h.b16 %v923
        %v3560 = vunpack.c.l.b16 %v924
        %v3561 = vunpack.c.h.b16 %v924
        %v3562 = vunpack.c.l.b16 %v925
        %v3563 = vunpack.c.h.b16 %v925
        %v3564 = vunpack.c.l.b16 %v926
        %v3565 = vunpack.c.h.b16 %v926
        %v3566 = vunpack.c.l.b16 %v927
        %v3567 = vunpack.c.h.b16 %v927
        %v3568 = vunpack.c.l.b16 %v928
        %v3569 = vunpack.c.h.b16 %v928
        %v3570 = vunpack.c.l.b16 %v929
        %v3571 = vunpack.c.h.b16 %v929
        %v3572 = vunpack.c.l.b16 %v930
        %v3573 = vunpack.c.h.b16 %v930
        %v3574 = vunpack.c.l.b16 %v931
        %v3575 = vunpack.c.h.b16 %v931
        %v3576 = vunpack.c.l.b16 %v932
        %v3577 = vunpack.c.h.b16 %v932
        %v3578 = vunpack.c.l.b16 %v933
        %v3579 = vunpack.c.h.b16 %v933
        %v3580 = vunpack.c.l.b16 %v934
        %v3581 = vunpack.c.h.b16 %v934
        %v3582 = vunpack.c.l.b16 %v935
        %v3583 = vunpack.c.h.b16 %v935
        %v3584 = vunpack.c.l.b16 %v936
        %v3585 = vunpack.c.h.b16 %v936
        %v3586 = vunpack.c.l.b16 %v937
        %v3587 = vunpack.c.h.b16 %v937
        %v3588 = vunpack.c.l.b16 %v938
        %v3589 = vunpack.c.h.b16 %v938
        %v3590 = vunpack.c.l.b16 %v939
        %v3591 = vunpack.c.h.b16 %v939
        %v3592 = vunpack.c.l.b16 %v940
        %v3593 = vunpack.c.h.b16 %v940
        %v3594 = vunpack.c.l.b16 %v941
        %v3595 = vunpack.c.h.b16 %v941
        %v3596 = vunpack.c.l.b16 %v942
        %v3597 = vunpack.c.h.b16 %v942
        %v3598 = vunpack.c.l.b16 %v943
        %v3599 = vunpack.c.h.b16 %v943
        %v3600 = vunpack.c.l.b16 %v944
        %v3601 = vunpack.c.h.b16 %v944
        %v3602 = vunpack.c.l.b16 %v945
        %v3603 = vunpack.c.h.b16 %v945
        %v3604 = vunpack.c.l.b16 %v946
        %v3605 = vunpack.c.h.b16 %v946
        %v3606 = vunpack.c.l.b16 %v947
        %v3607 = vunpack.c.h.b16 %v947
        %v3608 = vunpack.c.l.b16 %v948
        %v3609 = vunpack.c.h.b16 %v948
        %v3610 = vunpack.c.l.b16 %v949
        %v3611 = vunpack.c.h.b16 %v949
        %v3612 = vunpack.c.l.b16 %v950
        %v3613 = vunpack.c.h.b16 %v950
        %v3614 = vunpack.c.l.b16 %v951
        %v3615 = vunpack.c.h.b16 %v951
        %v3616 = vunpack.c.l.b16 %v952
        %v3617 = vunpack.c.h.b16 %v952
        %v3618 = vunpack.c.l.b16 %v953
        %v3619 = vunpack.c.h.b16 %v953
        %v3620 = vunpack.c.l.b16 %v954
        %v3621 = vunpack.c.h.b16 %v954
        %v3622 = vunpack.c.l.b16 %v955
        %v3623 = vunpack.c.h.b16 %v955
        %v3624 = vunpack.c.l.b16 %v956
        %v3625 = vunpack.c.h.b16 %v956
        %v3626 = vunpack.c.l.b16 %v957
        %v3627 = vunpack.c.h.b16 %v957
        %v3628 = vpack.c.b16 %v3574, %v3556
        %v3629 = vpack.c.b16 %v3575, %v3557
        %v3630 = vpack.c.b16 %v3576, %v3558
        %v3631 = vpack.c.b16 %v3577, %v3559
        %v3632 = vpack.c.b16 %v3578, %v3560
        %v3633 = vpack.c.b16 %v3579, %v3561
        %v3634 = vpack.c.b16 %v3580, %v3562
        %v3635 = vpack.c.b16 %v3581, %v3563
        %v3636 = vpack.c.b16 %v3582, %v3564
        %v3637 = vpack.c.b16 %v3583, %v3565
        %v3638 = vpack.c.b16 %v3584, %v3566
        %v3639 = vpack.c.b16 %v3585, %v3567
        %v3640 = vpack.c.b16 %v3586, %v3568
        %v3641 = vpack.c.b16 %v3587, %v3569
        %v3642 = vpack.c.b16 %v3588, %v3570
        %v3643 = vpack.c.b16 %v3589, %v3571
        %v3644 = vpack.c.b16 %v3590, %v3572
        %v3645 = vpack.c.b16 %v3591, %v3573
        %v3646 = vpack.c.b16 %v3610, %v3592
        %v3647 = vpack.c.b16 %v3611, %v3593
        %v3648 = vpack.c.b16 %v3612, %v3594
        %v3649 = vpack.c.b16 %v3613, %v3595
        %v3650 = vpack.c.b16 %v3614, %v3596
        %v3651 = vpack.c.b16 %v3615, %v3597
        %v3652 = vpack.c.b16 %v3616, %v3598
        %v3653 = vpack.c.b16 %v3617, %v3599
        %v3654 = vpack.c.b16 %v3618, %v3600
        %v3655 = vpack.c.b16 %v3619, %v3601
        %v3656 = vpack.c.b16 %v3620, %v3602
        %v3657 = vpack.c.b16 %v3621, %v3603
        %v3658 = vpack.c.b16 %v3622, %v3604
        %v3659 = vpack.c.b16 %v3623, %v3605
        %v3660 = vpack.c.b16 %v3624, %v3606
        %v3661 = vpack.c.b16 %v3625, %v3607
        %v3662 = vpack.c.b16 %v3626, %v3608
        %v3663 = vpack.c.b16 %v3627, %v3609
        %v3683 = vsel %vm1233, %v3519, 0
        %v3686 = vand.u32 %v3646, %v1240
        %v3689 = vand.u32 %v3647, %v1240
        %v3692 = vand.u32 %v3648, %v1240
        %v3695 = vand.u32 %v3649, %v1240
        %v3698 = vand.u32 %v3650, %v1240
        %v3701 = vand.u32 %v3651, %v1240
        %v3704 = vand.u32 %v3652, %v1240
        %v3707 = vand.u32 %v3653, %v1240
        %v3710 = vand.u32 %v3654, %v1240
        %v3713 = vand.u32 %v3655, %v1240
        %v3716 = vand.u32 %v3656, %v1240
        %v3719 = vand.u32 %v3657, %v1240
        %v3722 = vand.u32 %v3658, %v1240
        %v3725 = vand.u32 %v3659, %v1240
        %v3728 = vand.u32 %v3660, %v1240
        %v3731 = vand.u32 %v3661, %v1240
        %v3734 = vand.u32 %v3662, %v1240
        %v3737 = vand.u32 %v3663, %v1240
        %3739 = vmatprep.subr.bf16.mxu0 0
        %3740 = vmatpush1.bf16.msra.mxu0 0
        %3741 = vmatprep.subr.bf16.mxu0 0
        %3742 = vmatpush1.bf16.msra.mxu0 0
        %3743 = vmatprep.subr.bf16.mxu0 0
        %3744 = vmatpush1.bf16.msra.mxu0 0
        %3745 = vmatprep.subr.bf16.mxu0 0
        %3746 = vmatpush1.bf16.msra.mxu0 0
        %3747 = vmatprep.subr.bf16.mxu0 0
        %3748 = vmatpush1.bf16.msra.mxu0 0
        %3749 = vmatprep.subr.bf16.mxu0 0
        %3750 = vmatpush1.bf16.msra.mxu0 0
        %3751 = vmatprep.subr.bf16.mxu0 %v3689
        %3752 = vmatpush1.bf16.msra.mxu0 %v3686
        %3753 = vmatprep.subr.bf16.mxu0 %v3629
        %3754 = vmatpush1.bf16.msra.mxu0 %v3628
        %3755 = vmatprep.subr.bf16.mxu0 0
        %3756 = vmatpush2.bf16.msra.mxu0 0
        %3757 = vmatprep.subr.bf16.mxu0 0
        %3758 = vmatpush2.bf16.msra.mxu0 0
        %3759 = vmatprep.subr.bf16.mxu0 0
        %3760 = vmatpush2.bf16.msra.mxu0 0
        %3761 = vmatprep.subr.bf16.mxu0 0
        %3762 = vmatpush2.bf16.msra.mxu0 0
        %3763 = vmatprep.subr.bf16.mxu0 0
        %3764 = vmatpush2.bf16.msra.mxu0 0
        %3765 = vmatprep.subr.bf16.mxu0 0
        %3766 = vmatpush2.bf16.msra.mxu0 0
        %3767 = vmatprep.subr.bf16.mxu0 0
        %3768 = vmatpush2.bf16.msra.mxu0 0
        %3769 = vmatprep.subr.bf16.mxu0 0
        %3770 = vmatpush2.bf16.msra.mxu0 0
        %3771 = vmatprep.mubr.bf16.mxu0 0
        %3772 = vmatmul.mubr.bf16.gmra.mxu0 %v3683
        %v3773 = vpop.f32.mrf.mxu0
        %v3774 = vadd.f32 0.0, %v3773
        %v3775 = vpop.f32.mrf.mxu0
        %v3776 = vadd.f32 0.0, %v3775
        %v3777 = vpop.f32.mrf.mxu0
        %v3778 = vadd.f32 0.0, %v3777
        %v3779 = vpop.f32.mrf.mxu0
        %v3780 = vadd.f32 0.0, %v3779
        %3781 = vdwg.mxu0
        %3782 = vmatprep.subr.bf16.mxu0 0
        %3783 = vmatpush1.bf16.msra.mxu0 0
        %3784 = vmatprep.subr.bf16.mxu0 0
        %3785 = vmatpush1.bf16.msra.mxu0 0
        %3786 = vmatprep.subr.bf16.mxu0 0
        %3787 = vmatpush1.bf16.msra.mxu0 0
        %3788 = vmatprep.subr.bf16.mxu0 0
        %3789 = vmatpush1.bf16.msra.mxu0 0
        %3790 = vmatprep.subr.bf16.mxu0 0
        %3791 = vmatpush1.bf16.msra.mxu0 0
        %3792 = vmatprep.subr.bf16.mxu0 0
        %3793 = vmatpush1.bf16.msra.mxu0 0
        %3794 = vmatprep.subr.bf16.mxu0 %v3695
        %3795 = vmatpush1.bf16.msra.mxu0 %v3692
        %3796 = vmatprep.subr.bf16.mxu0 %v3631
        %3797 = vmatpush1.bf16.msra.mxu0 %v3630
        %3798 = vmatprep.subr.bf16.mxu0 0
        %3799 = vmatpush2.bf16.msra.mxu0 0
        %3800 = vmatprep.subr.bf16.mxu0 0
        %3801 = vmatpush2.bf16.msra.mxu0 0
        %3802 = vmatprep.subr.bf16.mxu0 0
        %3803 = vmatpush2.bf16.msra.mxu0 0
        %3804 = vmatprep.subr.bf16.mxu0 0
        %3805 = vmatpush2.bf16.msra.mxu0 0
        %3806 = vmatprep.subr.bf16.mxu0 0
        %3807 = vmatpush2.bf16.msra.mxu0 0
        %3808 = vmatprep.subr.bf16.mxu0 0
        %3809 = vmatpush2.bf16.msra.mxu0 0
        %3810 = vmatprep.subr.bf16.mxu0 0
        %3811 = vmatpush2.bf16.msra.mxu0 0
        %3812 = vmatprep.subr.bf16.mxu0 0
        %3813 = vmatpush2.bf16.msra.mxu0 0
        %3814 = vmatprep.mubr.bf16.mxu0 0
        %3815 = vmatmul.mubr.bf16.gmra.mxu0 %v3683
        %v3816 = vpop.f32.mrf.mxu0
        %v3817 = vadd.f32 0.0, %v3816
        %v3818 = vpop.f32.mrf.mxu0
        %v3819 = vadd.f32 0.0, %v3818
        %v3820 = vpop.f32.mrf.mxu0
        %v3821 = vadd.f32 0.0, %v3820
        %v3822 = vpop.f32.mrf.mxu0
        %v3823 = vadd.f32 0.0, %v3822
        %3824 = vdwg.mxu0
        %3825 = vmatprep.subr.bf16.mxu0 0
        %3826 = vmatpush1.bf16.msra.mxu0 0
        %3827 = vmatprep.subr.bf16.mxu0 0
        %3828 = vmatpush1.bf16.msra.mxu0 0
        %3829 = vmatprep.subr.bf16.mxu0 0
        %3830 = vmatpush1.bf16.msra.mxu0 0
        %3831 = vmatprep.subr.bf16.mxu0 0
        %3832 = vmatpush1.bf16.msra.mxu0 0
        %3833 = vmatprep.subr.bf16.mxu0 0
        %3834 = vmatpush1.bf16.msra.mxu0 0
        %3835 = vmatprep.subr.bf16.mxu0 0
        %3836 = vmatpush1.bf16.msra.mxu0 0
        %3837 = vmatprep.subr.bf16.mxu0 %v3701
        %3838 = vmatpush1.bf16.msra.mxu0 %v3698
        %3839 = vmatprep.subr.bf16.mxu0 %v3633
        %3840 = vmatpush1.bf16.msra.mxu0 %v3632
        %3841 = vmatprep.subr.bf16.mxu0 0
        %3842 = vmatpush2.bf16.msra.mxu0 0
        %3843 = vmatprep.subr.bf16.mxu0 0
        %3844 = vmatpush2.bf16.msra.mxu0 0
        %3845 = vmatprep.subr.bf16.mxu0 0
        %3846 = vmatpush2.bf16.msra.mxu0 0
        %3847 = vmatprep.subr.bf16.mxu0 0
        %3848 = vmatpush2.bf16.msra.mxu0 0
        %3849 = vmatprep.subr.bf16.mxu0 0
        %3850 = vmatpush2.bf16.msra.mxu0 0
        %3851 = vmatprep.subr.bf16.mxu0 0
        %3852 = vmatpush2.bf16.msra.mxu0 0
        %3853 = vmatprep.subr.bf16.mxu0 0
        %3854 = vmatpush2.bf16.msra.mxu0 0
        %3855 = vmatprep.subr.bf16.mxu0 0
        %3856 = vmatpush2.bf16.msra.mxu0 0
        %3857 = vmatprep.mubr.bf16.mxu0 0
        %3858 = vmatmul.mubr.bf16.gmra.mxu0 %v3683
        %v3859 = vpop.f32.mrf.mxu0
        %v3860 = vadd.f32 0.0, %v3859
        %v3861 = vpop.f32.mrf.mxu0
        %v3862 = vadd.f32 0.0, %v3861
        %v3863 = vpop.f32.mrf.mxu0
        %v3864 = vadd.f32 0.0, %v3863
        %v3865 = vpop.f32.mrf.mxu0
        %v3866 = vadd.f32 0.0, %v3865
        %3867 = vdwg.mxu0
        %3868 = vmatprep.subr.bf16.mxu0 0
        %3869 = vmatpush1.bf16.msra.mxu0 0
        %3870 = vmatprep.subr.bf16.mxu0 0
        %3871 = vmatpush1.bf16.msra.mxu0 0
        %3872 = vmatprep.subr.bf16.mxu0 0
        %3873 = vmatpush1.bf16.msra.mxu0 0
        %3874 = vmatprep.subr.bf16.mxu0 0
        %3875 = vmatpush1.bf16.msra.mxu0 0
        %3876 = vmatprep.subr.bf16.mxu0 0
        %3877 = vmatpush1.bf16.msra.mxu0 0
        %3878 = vmatprep.subr.bf16.mxu0 0
        %3879 = vmatpush1.bf16.msra.mxu0 0
        %3880 = vmatprep.subr.bf16.mxu0 %v3707
        %3881 = vmatpush1.bf16.msra.mxu0 %v3704
        %3882 = vmatprep.subr.bf16.mxu0 %v3635
        %3883 = vmatpush1.bf16.msra.mxu0 %v3634
        %3884 = vmatprep.subr.bf16.mxu0 0
        %3885 = vmatpush2.bf16.msra.mxu0 0
        %3886 = vmatprep.subr.bf16.mxu0 0
        %3887 = vmatpush2.bf16.msra.mxu0 0
        %3888 = vmatprep.subr.bf16.mxu0 0
        %3889 = vmatpush2.bf16.msra.mxu0 0
        %3890 = vmatprep.subr.bf16.mxu0 0
        %3891 = vmatpush2.bf16.msra.mxu0 0
        %3892 = vmatprep.subr.bf16.mxu0 0
        %3893 = vmatpush2.bf16.msra.mxu0 0
        %3894 = vmatprep.subr.bf16.mxu0 0
        %3895 = vmatpush2.bf16.msra.mxu0 0
        %3896 = vmatprep.subr.bf16.mxu0 0
        %3897 = vmatpush2.bf16.msra.mxu0 0
        %3898 = vmatprep.subr.bf16.mxu0 0
        %3899 = vmatpush2.bf16.msra.mxu0 0
        %3900 = vmatprep.mubr.bf16.mxu0 0
        %3901 = vmatmul.mubr.bf16.gmra.mxu0 %v3683
        %v3902 = vpop.f32.mrf.mxu0
        %v3903 = vadd.f32 0.0, %v3902
        %v3904 = vpop.f32.mrf.mxu0
        %v3905 = vadd.f32 0.0, %v3904
        %v3906 = vpop.f32.mrf.mxu0
        %v3907 = vadd.f32 0.0, %v3906
        %v3908 = vpop.f32.mrf.mxu0
        %v3909 = vadd.f32 0.0, %v3908
        %3910 = vdwg.mxu0
        %3911 = vmatprep.subr.bf16.mxu0 0
        %3912 = vmatpush1.bf16.msra.mxu0 0
        %3913 = vmatprep.subr.bf16.mxu0 0
        %3914 = vmatpush1.bf16.msra.mxu0 0
        %3915 = vmatprep.subr.bf16.mxu0 0
        %3916 = vmatpush1.bf16.msra.mxu0 0
        %3917 = vmatprep.subr.bf16.mxu0 0
        %3918 = vmatpush1.bf16.msra.mxu0 0
        %3919 = vmatprep.subr.bf16.mxu0 0
        %3920 = vmatpush1.bf16.msra.mxu0 0
        %3921 = vmatprep.subr.bf16.mxu0 0
        %3922 = vmatpush1.bf16.msra.mxu0 0
        %3923 = vmatprep.subr.bf16.mxu0 %v3713
        %3924 = vmatpush1.bf16.msra.mxu0 %v3710
        %3925 = vmatprep.subr.bf16.mxu0 %v3637
        %3926 = vmatpush1.bf16.msra.mxu0 %v3636
        %3927 = vmatprep.subr.bf16.mxu0 0
        %3928 = vmatpush2.bf16.msra.mxu0 0
        %3929 = vmatprep.subr.bf16.mxu0 0
        %3930 = vmatpush2.bf16.msra.mxu0 0
        %3931 = vmatprep.subr.bf16.mxu0 0
        %3932 = vmatpush2.bf16.msra.mxu0 0
        %3933 = vmatprep.subr.bf16.mxu0 0
        %3934 = vmatpush2.bf16.msra.mxu0 0
        %3935 = vmatprep.subr.bf16.mxu0 0
        %3936 = vmatpush2.bf16.msra.mxu0 0
        %3937 = vmatprep.subr.bf16.mxu0 0
        %3938 = vmatpush2.bf16.msra.mxu0 0
        %3939 = vmatprep.subr.bf16.mxu0 0
        %3940 = vmatpush2.bf16.msra.mxu0 0
        %3941 = vmatprep.subr.bf16.mxu0 0
        %3942 = vmatpush2.bf16.msra.mxu0 0
        %3943 = vmatprep.mubr.bf16.mxu0 0
        %3944 = vmatmul.mubr.bf16.gmra.mxu0 %v3683
        %v3945 = vpop.f32.mrf.mxu0
        %v3946 = vadd.f32 0.0, %v3945
        %v3947 = vpop.f32.mrf.mxu0
        %v3948 = vadd.f32 0.0, %v3947
        %v3949 = vpop.f32.mrf.mxu0
        %v3950 = vadd.f32 0.0, %v3949
        %v3951 = vpop.f32.mrf.mxu0
        %v3952 = vadd.f32 0.0, %v3951
        %3953 = vdwg.mxu0
        %3954 = vmatprep.subr.bf16.mxu0 0
        %3955 = vmatpush1.bf16.msra.mxu0 0
        %3956 = vmatprep.subr.bf16.mxu0 0
        %3957 = vmatpush1.bf16.msra.mxu0 0
        %3958 = vmatprep.subr.bf16.mxu0 0
        %3959 = vmatpush1.bf16.msra.mxu0 0
        %3960 = vmatprep.subr.bf16.mxu0 0
        %3961 = vmatpush1.bf16.msra.mxu0 0
        %3962 = vmatprep.subr.bf16.mxu0 0
        %3963 = vmatpush1.bf16.msra.mxu0 0
        %3964 = vmatprep.subr.bf16.mxu0 0
        %3965 = vmatpush1.bf16.msra.mxu0 0
        %3966 = vmatprep.subr.bf16.mxu0 %v3719
        %3967 = vmatpush1.bf16.msra.mxu0 %v3716
        %3968 = vmatprep.subr.bf16.mxu0 %v3639
        %3969 = vmatpush1.bf16.msra.mxu0 %v3638
        %3970 = vmatprep.subr.bf16.mxu0 0
        %3971 = vmatpush2.bf16.msra.mxu0 0
        %3972 = vmatprep.subr.bf16.mxu0 0
        %3973 = vmatpush2.bf16.msra.mxu0 0
        %3974 = vmatprep.subr.bf16.mxu0 0
        %3975 = vmatpush2.bf16.msra.mxu0 0
        %3976 = vmatprep.subr.bf16.mxu0 0
        %3977 = vmatpush2.bf16.msra.mxu0 0
        %3978 = vmatprep.subr.bf16.mxu0 0
        %3979 = vmatpush2.bf16.msra.mxu0 0
        %3980 = vmatprep.subr.bf16.mxu0 0
        %3981 = vmatpush2.bf16.msra.mxu0 0
        %3982 = vmatprep.subr.bf16.mxu0 0
        %3983 = vmatpush2.bf16.msra.mxu0 0
        %3984 = vmatprep.subr.bf16.mxu0 0
        %3985 = vmatpush2.bf16.msra.mxu0 0
        %3986 = vmatprep.mubr.bf16.mxu0 0
        %3987 = vmatmul.mubr.bf16.gmra.mxu0 %v3683
        %v3988 = vpop.f32.mrf.mxu0
        %v3989 = vadd.f32 0.0, %v3988
        %v3990 = vpop.f32.mrf.mxu0
        %v3991 = vadd.f32 0.0, %v3990
        %v3992 = vpop.f32.mrf.mxu0
        %v3993 = vadd.f32 0.0, %v3992
        %v3994 = vpop.f32.mrf.mxu0
        %v3995 = vadd.f32 0.0, %v3994
        %3996 = vdwg.mxu0
        %3997 = vmatprep.subr.bf16.mxu0 0
        %3998 = vmatpush1.bf16.msra.mxu0 0
        %3999 = vmatprep.subr.bf16.mxu0 0
        %4000 = vmatpush1.bf16.msra.mxu0 0
        %4001 = vmatprep.subr.bf16.mxu0 0
        %4002 = vmatpush1.bf16.msra.mxu0 0
        %4003 = vmatprep.subr.bf16.mxu0 0
        %4004 = vmatpush1.bf16.msra.mxu0 0
        %4005 = vmatprep.subr.bf16.mxu0 0
        %4006 = vmatpush1.bf16.msra.mxu0 0
        %4007 = vmatprep.subr.bf16.mxu0 0
        %4008 = vmatpush1.bf16.msra.mxu0 0
        %4009 = vmatprep.subr.bf16.mxu0 %v3725
        %4010 = vmatpush1.bf16.msra.mxu0 %v3722
        %4011 = vmatprep.subr.bf16.mxu0 %v3641
        %4012 = vmatpush1.bf16.msra.mxu0 %v3640
        %4013 = vmatprep.subr.bf16.mxu0 0
        %4014 = vmatpush2.bf16.msra.mxu0 0
        %4015 = vmatprep.subr.bf16.mxu0 0
        %4016 = vmatpush2.bf16.msra.mxu0 0
        %4017 = vmatprep.subr.bf16.mxu0 0
        %4018 = vmatpush2.bf16.msra.mxu0 0
        %4019 = vmatprep.subr.bf16.mxu0 0
        %4020 = vmatpush2.bf16.msra.mxu0 0
        %4021 = vmatprep.subr.bf16.mxu0 0
        %4022 = vmatpush2.bf16.msra.mxu0 0
        %4023 = vmatprep.subr.bf16.mxu0 0
        %4024 = vmatpush2.bf16.msra.mxu0 0
        %4025 = vmatprep.subr.bf16.mxu0 0
        %4026 = vmatpush2.bf16.msra.mxu0 0
        %4027 = vmatprep.subr.bf16.mxu0 0
        %4028 = vmatpush2.bf16.msra.mxu0 0
        %4029 = vmatprep.mubr.bf16.mxu0 0
        %4030 = vmatmul.mubr.bf16.gmra.mxu0 %v3683
        %v4031 = vpop.f32.mrf.mxu0
        %v4032 = vadd.f32 0.0, %v4031
        %v4033 = vpop.f32.mrf.mxu0
        %v4034 = vadd.f32 0.0, %v4033
        %v4035 = vpop.f32.mrf.mxu0
        %v4036 = vadd.f32 0.0, %v4035
        %v4037 = vpop.f32.mrf.mxu0
        %v4038 = vadd.f32 0.0, %v4037
        %4039 = vdwg.mxu0
        %4040 = vmatprep.subr.bf16.mxu0 0
        %4041 = vmatpush1.bf16.msra.mxu0 0
        %4042 = vmatprep.subr.bf16.mxu0 0
        %4043 = vmatpush1.bf16.msra.mxu0 0
        %4044 = vmatprep.subr.bf16.mxu0 0
        %4045 = vmatpush1.bf16.msra.mxu0 0
        %4046 = vmatprep.subr.bf16.mxu0 0
        %4047 = vmatpush1.bf16.msra.mxu0 0
        %4048 = vmatprep.subr.bf16.mxu0 0
        %4049 = vmatpush1.bf16.msra.mxu0 0
        %4050 = vmatprep.subr.bf16.mxu0 0
        %4051 = vmatpush1.bf16.msra.mxu0 0
        %4052 = vmatprep.subr.bf16.mxu0 %v3731
        %4053 = vmatpush1.bf16.msra.mxu0 %v3728
        %4054 = vmatprep.subr.bf16.mxu0 %v3643
        %4055 = vmatpush1.bf16.msra.mxu0 %v3642
        %4056 = vmatprep.subr.bf16.mxu0 0
        %4057 = vmatpush2.bf16.msra.mxu0 0
        %4058 = vmatprep.subr.bf16.mxu0 0
        %4059 = vmatpush2.bf16.msra.mxu0 0
        %4060 = vmatprep.subr.bf16.mxu0 0
        %4061 = vmatpush2.bf16.msra.mxu0 0
        %4062 = vmatprep.subr.bf16.mxu0 0
        %4063 = vmatpush2.bf16.msra.mxu0 0
        %4064 = vmatprep.subr.bf16.mxu0 0
        %4065 = vmatpush2.bf16.msra.mxu0 0
        %4066 = vmatprep.subr.bf16.mxu0 0
        %4067 = vmatpush2.bf16.msra.mxu0 0
        %4068 = vmatprep.subr.bf16.mxu0 0
        %4069 = vmatpush2.bf16.msra.mxu0 0
        %4070 = vmatprep.subr.bf16.mxu0 0
        %4071 = vmatpush2.bf16.msra.mxu0 0
        %4072 = vmatprep.mubr.bf16.mxu0 0
        %4073 = vmatmul.mubr.bf16.gmra.mxu0 %v3683
        %v4074 = vpop.f32.mrf.mxu0
        %v4075 = vadd.f32 0.0, %v4074
        %v4076 = vpop.f32.mrf.mxu0
        %v4077 = vadd.f32 0.0, %v4076
        %v4078 = vpop.f32.mrf.mxu0
        %v4079 = vadd.f32 0.0, %v4078
        %v4080 = vpop.f32.mrf.mxu0
        %v4081 = vadd.f32 0.0, %v4080
        %4082 = vdwg.mxu0
        %4083 = vmatprep.subr.bf16.mxu0 0
        %4084 = vmatpush1.bf16.msra.mxu0 0
        %4085 = vmatprep.subr.bf16.mxu0 0
        %4086 = vmatpush1.bf16.msra.mxu0 0
        %4087 = vmatprep.subr.bf16.mxu0 0
        %4088 = vmatpush1.bf16.msra.mxu0 0
        %4089 = vmatprep.subr.bf16.mxu0 0
        %4090 = vmatpush1.bf16.msra.mxu0 0
        %4091 = vmatprep.subr.bf16.mxu0 0
        %4092 = vmatpush1.bf16.msra.mxu0 0
        %4093 = vmatprep.subr.bf16.mxu0 0
        %4094 = vmatpush1.bf16.msra.mxu0 0
        %4095 = vmatprep.subr.bf16.mxu0 %v3737
        %4096 = vmatpush1.bf16.msra.mxu0 %v3734
        %4097 = vmatprep.subr.bf16.mxu0 %v3645
        %4098 = vmatpush1.bf16.msra.mxu0 %v3644
        %4099 = vmatprep.subr.bf16.mxu0 0
        %4100 = vmatpush2.bf16.msra.mxu0 0
        %4101 = vmatprep.subr.bf16.mxu0 0
        %4102 = vmatpush2.bf16.msra.mxu0 0
        %4103 = vmatprep.subr.bf16.mxu0 0
        %4104 = vmatpush2.bf16.msra.mxu0 0
        %4105 = vmatprep.subr.bf16.mxu0 0
        %4106 = vmatpush2.bf16.msra.mxu0 0
        %4107 = vmatprep.subr.bf16.mxu0 0
        %4108 = vmatpush2.bf16.msra.mxu0 0
        %4109 = vmatprep.subr.bf16.mxu0 0
        %4110 = vmatpush2.bf16.msra.mxu0 0
        %4111 = vmatprep.subr.bf16.mxu0 0
        %4112 = vmatpush2.bf16.msra.mxu0 0
        %4113 = vmatprep.subr.bf16.mxu0 0
        %4114 = vmatpush2.bf16.msra.mxu0 0
        %4115 = vmatprep.mubr.bf16.mxu0 0
        %4116 = vmatmul.mubr.bf16.gmra.mxu0 %v3683
        %v4117 = vpop.f32.mrf.mxu0
        %v4118 = vadd.f32 0.0, %v4117
        %v4119 = vpop.f32.mrf.mxu0
        %v4120 = vadd.f32 0.0, %v4119
        %v4121 = vpop.f32.mrf.mxu0
        %v4122 = vadd.f32 0.0, %v4121
        %v4123 = vpop.f32.mrf.mxu0
        %v4124 = vadd.f32 0.0, %v4123
        %4125 = vdwg.mxu0
        %v4128 = vunpack.c.l.b16 %v772
        %v4129 = vunpack.c.l.b16 %v773
        %v4130 = vpack.c.b16 %v4129, %v4128
        %v4167 = vunpack.c.l.b16 %v958
        %v4168 = vunpack.c.h.b16 %v958
        %v4169 = vunpack.c.l.b16 %v959
        %v4170 = vunpack.c.h.b16 %v959
        %v4171 = vunpack.c.l.b16 %v960
        %v4172 = vunpack.c.h.b16 %v960
        %v4173 = vunpack.c.l.b16 %v961
        %v4174 = vunpack.c.h.b16 %v961
        %v4175 = vunpack.c.l.b16 %v962
        %v4176 = vunpack.c.h.b16 %v962
        %v4177 = vunpack.c.l.b16 %v963
        %v4178 = vunpack.c.h.b16 %v963
        %v4179 = vunpack.c.l.b16 %v964
        %v4180 = vunpack.c.h.b16 %v964
        %v4181 = vunpack.c.l.b16 %v965
        %v4182 = vunpack.c.h.b16 %v965
        %v4183 = vunpack.c.l.b16 %v966
        %v4184 = vunpack.c.h.b16 %v966
        %v4185 = vunpack.c.l.b16 %v967
        %v4186 = vunpack.c.h.b16 %v967
        %v4187 = vunpack.c.l.b16 %v968
        %v4188 = vunpack.c.h.b16 %v968
        %v4189 = vunpack.c.l.b16 %v969
        %v4190 = vunpack.c.h.b16 %v969
        %v4191 = vunpack.c.l.b16 %v970
        %v4192 = vunpack.c.h.b16 %v970
        %v4193 = vunpack.c.l.b16 %v971
        %v4194 = vunpack.c.h.b16 %v971
        %v4195 = vunpack.c.l.b16 %v972
        %v4196 = vunpack.c.h.b16 %v972
        %v4197 = vunpack.c.l.b16 %v973
        %v4198 = vunpack.c.h.b16 %v973
        %v4199 = vunpack.c.l.b16 %v974
        %v4200 = vunpack.c.h.b16 %v974
        %v4201 = vunpack.c.l.b16 %v975
        %v4202 = vunpack.c.h.b16 %v975
        %v4203 = vunpack.c.l.b16 %v976
        %v4204 = vunpack.c.h.b16 %v976
        %v4205 = vunpack.c.l.b16 %v977
        %v4206 = vunpack.c.h.b16 %v977
        %v4207 = vunpack.c.l.b16 %v978
        %v4208 = vunpack.c.h.b16 %v978
        %v4209 = vunpack.c.l.b16 %v979
        %v4210 = vunpack.c.h.b16 %v979
        %v4211 = vunpack.c.l.b16 %v980
        %v4212 = vunpack.c.h.b16 %v980
        %v4213 = vunpack.c.l.b16 %v981
        %v4214 = vunpack.c.h.b16 %v981
        %v4215 = vunpack.c.l.b16 %v982
        %v4216 = vunpack.c.h.b16 %v982
        %v4217 = vunpack.c.l.b16 %v983
        %v4218 = vunpack.c.h.b16 %v983
        %v4219 = vunpack.c.l.b16 %v984
        %v4220 = vunpack.c.h.b16 %v984
        %v4221 = vunpack.c.l.b16 %v985
        %v4222 = vunpack.c.h.b16 %v985
        %v4223 = vunpack.c.l.b16 %v986
        %v4224 = vunpack.c.h.b16 %v986
        %v4225 = vunpack.c.l.b16 %v987
        %v4226 = vunpack.c.h.b16 %v987
        %v4227 = vunpack.c.l.b16 %v988
        %v4228 = vunpack.c.h.b16 %v988
        %v4229 = vunpack.c.l.b16 %v989
        %v4230 = vunpack.c.h.b16 %v989
        %v4231 = vunpack.c.l.b16 %v990
        %v4232 = vunpack.c.h.b16 %v990
        %v4233 = vunpack.c.l.b16 %v991
        %v4234 = vunpack.c.h.b16 %v991
        %v4235 = vunpack.c.l.b16 %v992
        %v4236 = vunpack.c.h.b16 %v992
        %v4237 = vunpack.c.l.b16 %v993
        %v4238 = vunpack.c.h.b16 %v993
        %v4239 = vpack.c.b16 %v4185, %v4167
        %v4240 = vpack.c.b16 %v4186, %v4168
        %v4241 = vpack.c.b16 %v4187, %v4169
        %v4242 = vpack.c.b16 %v4188, %v4170
        %v4243 = vpack.c.b16 %v4189, %v4171
        %v4244 = vpack.c.b16 %v4190, %v4172
        %v4245 = vpack.c.b16 %v4191, %v4173
        %v4246 = vpack.c.b16 %v4192, %v4174
        %v4247 = vpack.c.b16 %v4193, %v4175
        %v4248 = vpack.c.b16 %v4194, %v4176
        %v4249 = vpack.c.b16 %v4195, %v4177
        %v4250 = vpack.c.b16 %v4196, %v4178
        %v4251 = vpack.c.b16 %v4197, %v4179
        %v4252 = vpack.c.b16 %v4198, %v4180
        %v4253 = vpack.c.b16 %v4199, %v4181
        %v4254 = vpack.c.b16 %v4200, %v4182
        %v4255 = vpack.c.b16 %v4201, %v4183
        %v4256 = vpack.c.b16 %v4202, %v4184
        %v4257 = vpack.c.b16 %v4221, %v4203
        %v4258 = vpack.c.b16 %v4222, %v4204
        %v4259 = vpack.c.b16 %v4223, %v4205
        %v4260 = vpack.c.b16 %v4224, %v4206
        %v4261 = vpack.c.b16 %v4225, %v4207
        %v4262 = vpack.c.b16 %v4226, %v4208
        %v4263 = vpack.c.b16 %v4227, %v4209
        %v4264 = vpack.c.b16 %v4228, %v4210
        %v4265 = vpack.c.b16 %v4229, %v4211
        %v4266 = vpack.c.b16 %v4230, %v4212
        %v4267 = vpack.c.b16 %v4231, %v4213
        %v4268 = vpack.c.b16 %v4232, %v4214
        %v4269 = vpack.c.b16 %v4233, %v4215
        %v4270 = vpack.c.b16 %v4234, %v4216
        %v4271 = vpack.c.b16 %v4235, %v4217
        %v4272 = vpack.c.b16 %v4236, %v4218
        %v4273 = vpack.c.b16 %v4237, %v4219
        %v4274 = vpack.c.b16 %v4238, %v4220
        %v4294 = vsel %vm1233, %v4130, 0
        %v4297 = vand.u32 %v4257, %v1240
        %v4300 = vand.u32 %v4258, %v1240
        %v4303 = vand.u32 %v4259, %v1240
        %v4306 = vand.u32 %v4260, %v1240
        %v4309 = vand.u32 %v4261, %v1240
        %v4312 = vand.u32 %v4262, %v1240
        %v4315 = vand.u32 %v4263, %v1240
        %v4318 = vand.u32 %v4264, %v1240
        %v4321 = vand.u32 %v4265, %v1240
        %v4324 = vand.u32 %v4266, %v1240
        %v4327 = vand.u32 %v4267, %v1240
        %v4330 = vand.u32 %v4268, %v1240
        %v4333 = vand.u32 %v4269, %v1240
        %v4336 = vand.u32 %v4270, %v1240
        %v4339 = vand.u32 %v4271, %v1240
        %v4342 = vand.u32 %v4272, %v1240
        %v4345 = vand.u32 %v4273, %v1240
        %v4348 = vand.u32 %v4274, %v1240
        %4350 = vmatprep.subr.bf16.mxu0 0
        %4351 = vmatpush1.bf16.msra.mxu0 0
        %4352 = vmatprep.subr.bf16.mxu0 0
        %4353 = vmatpush1.bf16.msra.mxu0 0
        %4354 = vmatprep.subr.bf16.mxu0 0
        %4355 = vmatpush1.bf16.msra.mxu0 0
        %4356 = vmatprep.subr.bf16.mxu0 0
        %4357 = vmatpush1.bf16.msra.mxu0 0
        %4358 = vmatprep.subr.bf16.mxu0 0
        %4359 = vmatpush1.bf16.msra.mxu0 0
        %4360 = vmatprep.subr.bf16.mxu0 0
        %4361 = vmatpush1.bf16.msra.mxu0 0
        %4362 = vmatprep.subr.bf16.mxu0 %v4300
        %4363 = vmatpush1.bf16.msra.mxu0 %v4297
        %4364 = vmatprep.subr.bf16.mxu0 %v4240
        %4365 = vmatpush1.bf16.msra.mxu0 %v4239
        %4366 = vmatprep.subr.bf16.mxu0 0
        %4367 = vmatpush2.bf16.msra.mxu0 0
        %4368 = vmatprep.subr.bf16.mxu0 0
        %4369 = vmatpush2.bf16.msra.mxu0 0
        %4370 = vmatprep.subr.bf16.mxu0 0
        %4371 = vmatpush2.bf16.msra.mxu0 0
        %4372 = vmatprep.subr.bf16.mxu0 0
        %4373 = vmatpush2.bf16.msra.mxu0 0
        %4374 = vmatprep.subr.bf16.mxu0 0
        %4375 = vmatpush2.bf16.msra.mxu0 0
        %4376 = vmatprep.subr.bf16.mxu0 0
        %4377 = vmatpush2.bf16.msra.mxu0 0
        %4378 = vmatprep.subr.bf16.mxu0 0
        %4379 = vmatpush2.bf16.msra.mxu0 0
        %4380 = vmatprep.subr.bf16.mxu0 0
        %4381 = vmatpush2.bf16.msra.mxu0 0
        %4382 = vmatprep.mubr.bf16.mxu0 0
        %4383 = vmatmul.mubr.bf16.gmra.mxu0 %v4294
        %v4384 = vpop.f32.mrf.mxu0
        %v4385 = vadd.f32 0.0, %v4384
        %v4386 = vpop.f32.mrf.mxu0
        %v4387 = vadd.f32 0.0, %v4386
        %v4388 = vpop.f32.mrf.mxu0
        %v4389 = vadd.f32 0.0, %v4388
        %v4390 = vpop.f32.mrf.mxu0
        %v4391 = vadd.f32 0.0, %v4390
        %4392 = vdwg.mxu0
        %4393 = vmatprep.subr.bf16.mxu0 0
        %4394 = vmatpush1.bf16.msra.mxu0 0
        %4395 = vmatprep.subr.bf16.mxu0 0
        %4396 = vmatpush1.bf16.msra.mxu0 0
        %4397 = vmatprep.subr.bf16.mxu0 0
        %4398 = vmatpush1.bf16.msra.mxu0 0
        %4399 = vmatprep.subr.bf16.mxu0 0
        %4400 = vmatpush1.bf16.msra.mxu0 0
        %4401 = vmatprep.subr.bf16.mxu0 0
        %4402 = vmatpush1.bf16.msra.mxu0 0
        %4403 = vmatprep.subr.bf16.mxu0 0
        %4404 = vmatpush1.bf16.msra.mxu0 0
        %4405 = vmatprep.subr.bf16.mxu0 %v4306
        %4406 = vmatpush1.bf16.msra.mxu0 %v4303
        %4407 = vmatprep.subr.bf16.mxu0 %v4242
        %4408 = vmatpush1.bf16.msra.mxu0 %v4241
        %4409 = vmatprep.subr.bf16.mxu0 0
        %4410 = vmatpush2.bf16.msra.mxu0 0
        %4411 = vmatprep.subr.bf16.mxu0 0
        %4412 = vmatpush2.bf16.msra.mxu0 0
        %4413 = vmatprep.subr.bf16.mxu0 0
        %4414 = vmatpush2.bf16.msra.mxu0 0
        %4415 = vmatprep.subr.bf16.mxu0 0
        %4416 = vmatpush2.bf16.msra.mxu0 0
        %4417 = vmatprep.subr.bf16.mxu0 0
        %4418 = vmatpush2.bf16.msra.mxu0 0
        %4419 = vmatprep.subr.bf16.mxu0 0
        %4420 = vmatpush2.bf16.msra.mxu0 0
        %4421 = vmatprep.subr.bf16.mxu0 0
        %4422 = vmatpush2.bf16.msra.mxu0 0
        %4423 = vmatprep.subr.bf16.mxu0 0
        %4424 = vmatpush2.bf16.msra.mxu0 0
        %4425 = vmatprep.mubr.bf16.mxu0 0
        %4426 = vmatmul.mubr.bf16.gmra.mxu0 %v4294
        %v4427 = vpop.f32.mrf.mxu0
        %v4428 = vadd.f32 0.0, %v4427
        %v4429 = vpop.f32.mrf.mxu0
        %v4430 = vadd.f32 0.0, %v4429
        %v4431 = vpop.f32.mrf.mxu0
        %v4432 = vadd.f32 0.0, %v4431
        %v4433 = vpop.f32.mrf.mxu0
        %v4434 = vadd.f32 0.0, %v4433
        %4435 = vdwg.mxu0
        %4436 = vmatprep.subr.bf16.mxu0 0
        %4437 = vmatpush1.bf16.msra.mxu0 0
        %4438 = vmatprep.subr.bf16.mxu0 0
        %4439 = vmatpush1.bf16.msra.mxu0 0
        %4440 = vmatprep.subr.bf16.mxu0 0
        %4441 = vmatpush1.bf16.msra.mxu0 0
        %4442 = vmatprep.subr.bf16.mxu0 0
        %4443 = vmatpush1.bf16.msra.mxu0 0
        %4444 = vmatprep.subr.bf16.mxu0 0
        %4445 = vmatpush1.bf16.msra.mxu0 0
        %4446 = vmatprep.subr.bf16.mxu0 0
        %4447 = vmatpush1.bf16.msra.mxu0 0
        %4448 = vmatprep.subr.bf16.mxu0 %v4312
        %4449 = vmatpush1.bf16.msra.mxu0 %v4309
        %4450 = vmatprep.subr.bf16.mxu0 %v4244
        %4451 = vmatpush1.bf16.msra.mxu0 %v4243
        %4452 = vmatprep.subr.bf16.mxu0 0
        %4453 = vmatpush2.bf16.msra.mxu0 0
        %4454 = vmatprep.subr.bf16.mxu0 0
        %4455 = vmatpush2.bf16.msra.mxu0 0
        %4456 = vmatprep.subr.bf16.mxu0 0
        %4457 = vmatpush2.bf16.msra.mxu0 0
        %4458 = vmatprep.subr.bf16.mxu0 0
        %4459 = vmatpush2.bf16.msra.mxu0 0
        %4460 = vmatprep.subr.bf16.mxu0 0
        %4461 = vmatpush2.bf16.msra.mxu0 0
        %4462 = vmatprep.subr.bf16.mxu0 0
        %4463 = vmatpush2.bf16.msra.mxu0 0
        %4464 = vmatprep.subr.bf16.mxu0 0
        %4465 = vmatpush2.bf16.msra.mxu0 0
        %4466 = vmatprep.subr.bf16.mxu0 0
        %4467 = vmatpush2.bf16.msra.mxu0 0
        %4468 = vmatprep.mubr.bf16.mxu0 0
        %4469 = vmatmul.mubr.bf16.gmra.mxu0 %v4294
        %v4470 = vpop.f32.mrf.mxu0
        %v4471 = vadd.f32 0.0, %v4470
        %v4472 = vpop.f32.mrf.mxu0
        %v4473 = vadd.f32 0.0, %v4472
        %v4474 = vpop.f32.mrf.mxu0
        %v4475 = vadd.f32 0.0, %v4474
        %v4476 = vpop.f32.mrf.mxu0
        %v4477 = vadd.f32 0.0, %v4476
        %4478 = vdwg.mxu0
        %4479 = vmatprep.subr.bf16.mxu0 0
        %4480 = vmatpush1.bf16.msra.mxu0 0
        %4481 = vmatprep.subr.bf16.mxu0 0
        %4482 = vmatpush1.bf16.msra.mxu0 0
        %4483 = vmatprep.subr.bf16.mxu0 0
        %4484 = vmatpush1.bf16.msra.mxu0 0
        %4485 = vmatprep.subr.bf16.mxu0 0
        %4486 = vmatpush1.bf16.msra.mxu0 0
        %4487 = vmatprep.subr.bf16.mxu0 0
        %4488 = vmatpush1.bf16.msra.mxu0 0
        %4489 = vmatprep.subr.bf16.mxu0 0
        %4490 = vmatpush1.bf16.msra.mxu0 0
        %4491 = vmatprep.subr.bf16.mxu0 %v4318
        %4492 = vmatpush1.bf16.msra.mxu0 %v4315
        %4493 = vmatprep.subr.bf16.mxu0 %v4246
        %4494 = vmatpush1.bf16.msra.mxu0 %v4245
        %4495 = vmatprep.subr.bf16.mxu0 0
        %4496 = vmatpush2.bf16.msra.mxu0 0
        %4497 = vmatprep.subr.bf16.mxu0 0
        %4498 = vmatpush2.bf16.msra.mxu0 0
        %4499 = vmatprep.subr.bf16.mxu0 0
        %4500 = vmatpush2.bf16.msra.mxu0 0
        %4501 = vmatprep.subr.bf16.mxu0 0
        %4502 = vmatpush2.bf16.msra.mxu0 0
        %4503 = vmatprep.subr.bf16.mxu0 0
        %4504 = vmatpush2.bf16.msra.mxu0 0
        %4505 = vmatprep.subr.bf16.mxu0 0
        %4506 = vmatpush2.bf16.msra.mxu0 0
        %4507 = vmatprep.subr.bf16.mxu0 0
        %4508 = vmatpush2.bf16.msra.mxu0 0
        %4509 = vmatprep.subr.bf16.mxu0 0
        %4510 = vmatpush2.bf16.msra.mxu0 0
        %4511 = vmatprep.mubr.bf16.mxu0 0
        %4512 = vmatmul.mubr.bf16.gmra.mxu0 %v4294
        %v4513 = vpop.f32.mrf.mxu0
        %v4514 = vadd.f32 0.0, %v4513
        %v4515 = vpop.f32.mrf.mxu0
        %v4516 = vadd.f32 0.0, %v4515
        %v4517 = vpop.f32.mrf.mxu0
        %v4518 = vadd.f32 0.0, %v4517
        %v4519 = vpop.f32.mrf.mxu0
        %v4520 = vadd.f32 0.0, %v4519
        %4521 = vdwg.mxu0
        %4522 = vmatprep.subr.bf16.mxu0 0
        %4523 = vmatpush1.bf16.msra.mxu0 0
        %4524 = vmatprep.subr.bf16.mxu0 0
        %4525 = vmatpush1.bf16.msra.mxu0 0
        %4526 = vmatprep.subr.bf16.mxu0 0
        %4527 = vmatpush1.bf16.msra.mxu0 0
        %4528 = vmatprep.subr.bf16.mxu0 0
        %4529 = vmatpush1.bf16.msra.mxu0 0
        %4530 = vmatprep.subr.bf16.mxu0 0
        %4531 = vmatpush1.bf16.msra.mxu0 0
        %4532 = vmatprep.subr.bf16.mxu0 0
        %4533 = vmatpush1.bf16.msra.mxu0 0
        %4534 = vmatprep.subr.bf16.mxu0 %v4324
        %4535 = vmatpush1.bf16.msra.mxu0 %v4321
        %4536 = vmatprep.subr.bf16.mxu0 %v4248
        %4537 = vmatpush1.bf16.msra.mxu0 %v4247
        %4538 = vmatprep.subr.bf16.mxu0 0
        %4539 = vmatpush2.bf16.msra.mxu0 0
        %4540 = vmatprep.subr.bf16.mxu0 0
        %4541 = vmatpush2.bf16.msra.mxu0 0
        %4542 = vmatprep.subr.bf16.mxu0 0
        %4543 = vmatpush2.bf16.msra.mxu0 0
        %4544 = vmatprep.subr.bf16.mxu0 0
        %4545 = vmatpush2.bf16.msra.mxu0 0
        %4546 = vmatprep.subr.bf16.mxu0 0
        %4547 = vmatpush2.bf16.msra.mxu0 0
        %4548 = vmatprep.subr.bf16.mxu0 0
        %4549 = vmatpush2.bf16.msra.mxu0 0
        %4550 = vmatprep.subr.bf16.mxu0 0
        %4551 = vmatpush2.bf16.msra.mxu0 0
        %4552 = vmatprep.subr.bf16.mxu0 0
        %4553 = vmatpush2.bf16.msra.mxu0 0
        %4554 = vmatprep.mubr.bf16.mxu0 0
        %4555 = vmatmul.mubr.bf16.gmra.mxu0 %v4294
        %v4556 = vpop.f32.mrf.mxu0
        %v4557 = vadd.f32 0.0, %v4556
        %v4558 = vpop.f32.mrf.mxu0
        %v4559 = vadd.f32 0.0, %v4558
        %v4560 = vpop.f32.mrf.mxu0
        %v4561 = vadd.f32 0.0, %v4560
        %v4562 = vpop.f32.mrf.mxu0
        %v4563 = vadd.f32 0.0, %v4562
        %4564 = vdwg.mxu0
        %4565 = vmatprep.subr.bf16.mxu0 0
        %4566 = vmatpush1.bf16.msra.mxu0 0
        %4567 = vmatprep.subr.bf16.mxu0 0
        %4568 = vmatpush1.bf16.msra.mxu0 0
        %4569 = vmatprep.subr.bf16.mxu0 0
        %4570 = vmatpush1.bf16.msra.mxu0 0
        %4571 = vmatprep.subr.bf16.mxu0 0
        %4572 = vmatpush1.bf16.msra.mxu0 0
        %4573 = vmatprep.subr.bf16.mxu0 0
        %4574 = vmatpush1.bf16.msra.mxu0 0
        %4575 = vmatprep.subr.bf16.mxu0 0
        %4576 = vmatpush1.bf16.msra.mxu0 0
        %4577 = vmatprep.subr.bf16.mxu0 %v4330
        %4578 = vmatpush1.bf16.msra.mxu0 %v4327
        %4579 = vmatprep.subr.bf16.mxu0 %v4250
        %4580 = vmatpush1.bf16.msra.mxu0 %v4249
        %4581 = vmatprep.subr.bf16.mxu0 0
        %4582 = vmatpush2.bf16.msra.mxu0 0
        %4583 = vmatprep.subr.bf16.mxu0 0
        %4584 = vmatpush2.bf16.msra.mxu0 0
        %4585 = vmatprep.subr.bf16.mxu0 0
        %4586 = vmatpush2.bf16.msra.mxu0 0
        %4587 = vmatprep.subr.bf16.mxu0 0
        %4588 = vmatpush2.bf16.msra.mxu0 0
        %4589 = vmatprep.subr.bf16.mxu0 0
        %4590 = vmatpush2.bf16.msra.mxu0 0
        %4591 = vmatprep.subr.bf16.mxu0 0
        %4592 = vmatpush2.bf16.msra.mxu0 0
        %4593 = vmatprep.subr.bf16.mxu0 0
        %4594 = vmatpush2.bf16.msra.mxu0 0
        %4595 = vmatprep.subr.bf16.mxu0 0
        %4596 = vmatpush2.bf16.msra.mxu0 0
        %4597 = vmatprep.mubr.bf16.mxu0 0
        %4598 = vmatmul.mubr.bf16.gmra.mxu0 %v4294
        %v4599 = vpop.f32.mrf.mxu0
        %v4600 = vadd.f32 0.0, %v4599
        %v4601 = vpop.f32.mrf.mxu0
        %v4602 = vadd.f32 0.0, %v4601
        %v4603 = vpop.f32.mrf.mxu0
        %v4604 = vadd.f32 0.0, %v4603
        %v4605 = vpop.f32.mrf.mxu0
        %v4606 = vadd.f32 0.0, %v4605
        %4607 = vdwg.mxu0
        %4608 = vmatprep.subr.bf16.mxu0 0
        %4609 = vmatpush1.bf16.msra.mxu0 0
        %4610 = vmatprep.subr.bf16.mxu0 0
        %4611 = vmatpush1.bf16.msra.mxu0 0
        %4612 = vmatprep.subr.bf16.mxu0 0
        %4613 = vmatpush1.bf16.msra.mxu0 0
        %4614 = vmatprep.subr.bf16.mxu0 0
        %4615 = vmatpush1.bf16.msra.mxu0 0
        %4616 = vmatprep.subr.bf16.mxu0 0
        %4617 = vmatpush1.bf16.msra.mxu0 0
        %4618 = vmatprep.subr.bf16.mxu0 0
        %4619 = vmatpush1.bf16.msra.mxu0 0
        %4620 = vmatprep.subr.bf16.mxu0 %v4336
        %4621 = vmatpush1.bf16.msra.mxu0 %v4333
        %4622 = vmatprep.subr.bf16.mxu0 %v4252
        %4623 = vmatpush1.bf16.msra.mxu0 %v4251
        %4624 = vmatprep.subr.bf16.mxu0 0
        %4625 = vmatpush2.bf16.msra.mxu0 0
        %4626 = vmatprep.subr.bf16.mxu0 0
        %4627 = vmatpush2.bf16.msra.mxu0 0
        %4628 = vmatprep.subr.bf16.mxu0 0
        %4629 = vmatpush2.bf16.msra.mxu0 0
        %4630 = vmatprep.subr.bf16.mxu0 0
        %4631 = vmatpush2.bf16.msra.mxu0 0
        %4632 = vmatprep.subr.bf16.mxu0 0
        %4633 = vmatpush2.bf16.msra.mxu0 0
        %4634 = vmatprep.subr.bf16.mxu0 0
        %4635 = vmatpush2.bf16.msra.mxu0 0
        %4636 = vmatprep.subr.bf16.mxu0 0
        %4637 = vmatpush2.bf16.msra.mxu0 0
        %4638 = vmatprep.subr.bf16.mxu0 0
        %4639 = vmatpush2.bf16.msra.mxu0 0
        %4640 = vmatprep.mubr.bf16.mxu0 0
        %4641 = vmatmul.mubr.bf16.gmra.mxu0 %v4294
        %v4642 = vpop.f32.mrf.mxu0
        %v4643 = vadd.f32 0.0, %v4642
        %v4644 = vpop.f32.mrf.mxu0
        %v4645 = vadd.f32 0.0, %v4644
        %v4646 = vpop.f32.mrf.mxu0
        %v4647 = vadd.f32 0.0, %v4646
        %v4648 = vpop.f32.mrf.mxu0
        %v4649 = vadd.f32 0.0, %v4648
        %4650 = vdwg.mxu0
        %4651 = vmatprep.subr.bf16.mxu0 0
        %4652 = vmatpush1.bf16.msra.mxu0 0
        %4653 = vmatprep.subr.bf16.mxu0 0
        %4654 = vmatpush1.bf16.msra.mxu0 0
        %4655 = vmatprep.subr.bf16.mxu0 0
        %4656 = vmatpush1.bf16.msra.mxu0 0
        %4657 = vmatprep.subr.bf16.mxu0 0
        %4658 = vmatpush1.bf16.msra.mxu0 0
        %4659 = vmatprep.subr.bf16.mxu0 0
        %4660 = vmatpush1.bf16.msra.mxu0 0
        %4661 = vmatprep.subr.bf16.mxu0 0
        %4662 = vmatpush1.bf16.msra.mxu0 0
        %4663 = vmatprep.subr.bf16.mxu0 %v4342
        %4664 = vmatpush1.bf16.msra.mxu0 %v4339
        %4665 = vmatprep.subr.bf16.mxu0 %v4254
        %4666 = vmatpush1.bf16.msra.mxu0 %v4253
        %4667 = vmatprep.subr.bf16.mxu0 0
        %4668 = vmatpush2.bf16.msra.mxu0 0
        %4669 = vmatprep.subr.bf16.mxu0 0
        %4670 = vmatpush2.bf16.msra.mxu0 0
        %4671 = vmatprep.subr.bf16.mxu0 0
        %4672 = vmatpush2.bf16.msra.mxu0 0
        %4673 = vmatprep.subr.bf16.mxu0 0
        %4674 = vmatpush2.bf16.msra.mxu0 0
        %4675 = vmatprep.subr.bf16.mxu0 0
        %4676 = vmatpush2.bf16.msra.mxu0 0
        %4677 = vmatprep.subr.bf16.mxu0 0
        %4678 = vmatpush2.bf16.msra.mxu0 0
        %4679 = vmatprep.subr.bf16.mxu0 0
        %4680 = vmatpush2.bf16.msra.mxu0 0
        %4681 = vmatprep.subr.bf16.mxu0 0
        %4682 = vmatpush2.bf16.msra.mxu0 0
        %4683 = vmatprep.mubr.bf16.mxu0 0
        %4684 = vmatmul.mubr.bf16.gmra.mxu0 %v4294
        %v4685 = vpop.f32.mrf.mxu0
        %v4686 = vadd.f32 0.0, %v4685
        %v4687 = vpop.f32.mrf.mxu0
        %v4688 = vadd.f32 0.0, %v4687
        %v4689 = vpop.f32.mrf.mxu0
        %v4690 = vadd.f32 0.0, %v4689
        %v4691 = vpop.f32.mrf.mxu0
        %v4692 = vadd.f32 0.0, %v4691
        %4693 = vdwg.mxu0
        %4694 = vmatprep.subr.bf16.mxu0 0
        %4695 = vmatpush1.bf16.msra.mxu0 0
        %4696 = vmatprep.subr.bf16.mxu0 0
        %4697 = vmatpush1.bf16.msra.mxu0 0
        %4698 = vmatprep.subr.bf16.mxu0 0
        %4699 = vmatpush1.bf16.msra.mxu0 0
        %4700 = vmatprep.subr.bf16.mxu0 0
        %4701 = vmatpush1.bf16.msra.mxu0 0
        %4702 = vmatprep.subr.bf16.mxu0 0
        %4703 = vmatpush1.bf16.msra.mxu0 0
        %4704 = vmatprep.subr.bf16.mxu0 0
        %4705 = vmatpush1.bf16.msra.mxu0 0
        %4706 = vmatprep.subr.bf16.mxu0 %v4348
        %4707 = vmatpush1.bf16.msra.mxu0 %v4345
        %4708 = vmatprep.subr.bf16.mxu0 %v4256
        %4709 = vmatpush1.bf16.msra.mxu0 %v4255
        %4710 = vmatprep.subr.bf16.mxu0 0
        %4711 = vmatpush2.bf16.msra.mxu0 0
        %4712 = vmatprep.subr.bf16.mxu0 0
        %4713 = vmatpush2.bf16.msra.mxu0 0
        %4714 = vmatprep.subr.bf16.mxu0 0
        %4715 = vmatpush2.bf16.msra.mxu0 0
        %4716 = vmatprep.subr.bf16.mxu0 0
        %4717 = vmatpush2.bf16.msra.mxu0 0
        %4718 = vmatprep.subr.bf16.mxu0 0
        %4719 = vmatpush2.bf16.msra.mxu0 0
        %4720 = vmatprep.subr.bf16.mxu0 0
        %4721 = vmatpush2.bf16.msra.mxu0 0
        %4722 = vmatprep.subr.bf16.mxu0 0
        %4723 = vmatpush2.bf16.msra.mxu0 0
        %4724 = vmatprep.subr.bf16.mxu0 0
        %4725 = vmatpush2.bf16.msra.mxu0 0
        %4726 = vmatprep.mubr.bf16.mxu0 0
        %4727 = vmatmul.mubr.bf16.gmra.mxu0 %v4294
        %v4728 = vpop.f32.mrf.mxu0
        %v4729 = vadd.f32 0.0, %v4728
        %v4730 = vpop.f32.mrf.mxu0
        %v4731 = vadd.f32 0.0, %v4730
        %v4732 = vpop.f32.mrf.mxu0
        %v4733 = vadd.f32 0.0, %v4732
        %v4734 = vpop.f32.mrf.mxu0
        %v4735 = vadd.f32 0.0, %v4734
        %4736 = vdwg.mxu0
        %v4739 = vunpack.c.l.b16 %v774
        %v4740 = vunpack.c.l.b16 %v775
        %v4741 = vpack.c.b16 %v4740, %v4739
        %v4778 = vunpack.c.l.b16 %v994
        %v4779 = vunpack.c.h.b16 %v994
        %v4780 = vunpack.c.l.b16 %v995
        %v4781 = vunpack.c.h.b16 %v995
        %v4782 = vunpack.c.l.b16 %v996
        %v4783 = vunpack.c.h.b16 %v996
        %v4784 = vunpack.c.l.b16 %v997
        %v4785 = vunpack.c.h.b16 %v997
        %v4786 = vunpack.c.l.b16 %v998
        %v4787 = vunpack.c.h.b16 %v998
        %v4788 = vunpack.c.l.b16 %v999
        %v4789 = vunpack.c.h.b16 %v999
        %v4790 = vunpack.c.l.b16 %v1000
        %v4791 = vunpack.c.h.b16 %v1000
        %v4792 = vunpack.c.l.b16 %v1001
        %v4793 = vunpack.c.h.b16 %v1001
        %v4794 = vunpack.c.l.b16 %v1002
        %v4795 = vunpack.c.h.b16 %v1002
        %v4796 = vunpack.c.l.b16 %v1003
        %v4797 = vunpack.c.h.b16 %v1003
        %v4798 = vunpack.c.l.b16 %v1004
        %v4799 = vunpack.c.h.b16 %v1004
        %v4800 = vunpack.c.l.b16 %v1005
        %v4801 = vunpack.c.h.b16 %v1005
        %v4802 = vunpack.c.l.b16 %v1006
        %v4803 = vunpack.c.h.b16 %v1006
        %v4804 = vunpack.c.l.b16 %v1007
        %v4805 = vunpack.c.h.b16 %v1007
        %v4806 = vunpack.c.l.b16 %v1008
        %v4807 = vunpack.c.h.b16 %v1008
        %v4808 = vunpack.c.l.b16 %v1009
        %v4809 = vunpack.c.h.b16 %v1009
        %v4810 = vunpack.c.l.b16 %v1010
        %v4811 = vunpack.c.h.b16 %v1010
        %v4812 = vunpack.c.l.b16 %v1011
        %v4813 = vunpack.c.h.b16 %v1011
        %v4814 = vunpack.c.l.b16 %v1012
        %v4815 = vunpack.c.h.b16 %v1012
        %v4816 = vunpack.c.l.b16 %v1013
        %v4817 = vunpack.c.h.b16 %v1013
        %v4818 = vunpack.c.l.b16 %v1014
        %v4819 = vunpack.c.h.b16 %v1014
        %v4820 = vunpack.c.l.b16 %v1015
        %v4821 = vunpack.c.h.b16 %v1015
        %v4822 = vunpack.c.l.b16 %v1016
        %v4823 = vunpack.c.h.b16 %v1016
        %v4824 = vunpack.c.l.b16 %v1017
        %v4825 = vunpack.c.h.b16 %v1017
        %v4826 = vunpack.c.l.b16 %v1018
        %v4827 = vunpack.c.h.b16 %v1018
        %v4828 = vunpack.c.l.b16 %v1019
        %v4829 = vunpack.c.h.b16 %v1019
        %v4830 = vunpack.c.l.b16 %v1020
        %v4831 = vunpack.c.h.b16 %v1020
        %v4832 = vunpack.c.l.b16 %v1021
        %v4833 = vunpack.c.h.b16 %v1021
        %v4834 = vunpack.c.l.b16 %v1022
        %v4835 = vunpack.c.h.b16 %v1022
        %v4836 = vunpack.c.l.b16 %v1023
        %v4837 = vunpack.c.h.b16 %v1023
        %v4838 = vunpack.c.l.b16 %v1024
        %v4839 = vunpack.c.h.b16 %v1024
        %v4840 = vunpack.c.l.b16 %v1025
        %v4841 = vunpack.c.h.b16 %v1025
        %v4842 = vunpack.c.l.b16 %v1026
        %v4843 = vunpack.c.h.b16 %v1026
        %v4844 = vunpack.c.l.b16 %v1027
        %v4845 = vunpack.c.h.b16 %v1027
        %v4846 = vunpack.c.l.b16 %v1028
        %v4847 = vunpack.c.h.b16 %v1028
        %v4848 = vunpack.c.l.b16 %v1029
        %v4849 = vunpack.c.h.b16 %v1029
        %v4850 = vpack.c.b16 %v4796, %v4778
        %v4851 = vpack.c.b16 %v4797, %v4779
        %v4852 = vpack.c.b16 %v4798, %v4780
        %v4853 = vpack.c.b16 %v4799, %v4781
        %v4854 = vpack.c.b16 %v4800, %v4782
        %v4855 = vpack.c.b16 %v4801, %v4783
        %v4856 = vpack.c.b16 %v4802, %v4784
        %v4857 = vpack.c.b16 %v4803, %v4785
        %v4858 = vpack.c.b16 %v4804, %v4786
        %v4859 = vpack.c.b16 %v4805, %v4787
        %v4860 = vpack.c.b16 %v4806, %v4788
        %v4861 = vpack.c.b16 %v4807, %v4789
        %v4862 = vpack.c.b16 %v4808, %v4790
        %v4863 = vpack.c.b16 %v4809, %v4791
        %v4864 = vpack.c.b16 %v4810, %v4792
        %v4865 = vpack.c.b16 %v4811, %v4793
        %v4866 = vpack.c.b16 %v4812, %v4794
        %v4867 = vpack.c.b16 %v4813, %v4795
        %v4868 = vpack.c.b16 %v4832, %v4814
        %v4869 = vpack.c.b16 %v4833, %v4815
        %v4870 = vpack.c.b16 %v4834, %v4816
        %v4871 = vpack.c.b16 %v4835, %v4817
        %v4872 = vpack.c.b16 %v4836, %v4818
        %v4873 = vpack.c.b16 %v4837, %v4819
        %v4874 = vpack.c.b16 %v4838, %v4820
        %v4875 = vpack.c.b16 %v4839, %v4821
        %v4876 = vpack.c.b16 %v4840, %v4822
        %v4877 = vpack.c.b16 %v4841, %v4823
        %v4878 = vpack.c.b16 %v4842, %v4824
        %v4879 = vpack.c.b16 %v4843, %v4825
        %v4880 = vpack.c.b16 %v4844, %v4826
        %v4881 = vpack.c.b16 %v4845, %v4827
        %v4882 = vpack.c.b16 %v4846, %v4828
        %v4883 = vpack.c.b16 %v4847, %v4829
        %v4884 = vpack.c.b16 %v4848, %v4830
        %v4885 = vpack.c.b16 %v4849, %v4831
        %v4905 = vsel %vm1233, %v4741, 0
        %v4908 = vand.u32 %v4868, %v1240
        %v4911 = vand.u32 %v4869, %v1240
        %v4914 = vand.u32 %v4870, %v1240
        %v4917 = vand.u32 %v4871, %v1240
        %v4920 = vand.u32 %v4872, %v1240
        %v4923 = vand.u32 %v4873, %v1240
        %v4926 = vand.u32 %v4874, %v1240
        %v4929 = vand.u32 %v4875, %v1240
        %v4932 = vand.u32 %v4876, %v1240
        %v4935 = vand.u32 %v4877, %v1240
        %v4938 = vand.u32 %v4878, %v1240
        %v4941 = vand.u32 %v4879, %v1240
        %v4944 = vand.u32 %v4880, %v1240
        %v4947 = vand.u32 %v4881, %v1240
        %v4950 = vand.u32 %v4882, %v1240
        %v4953 = vand.u32 %v4883, %v1240
        %v4956 = vand.u32 %v4884, %v1240
        %v4959 = vand.u32 %v4885, %v1240
        %4961 = vmatprep.subr.bf16.mxu0 0
        %4962 = vmatpush1.bf16.msra.mxu0 0
        %4963 = vmatprep.subr.bf16.mxu0 0
        %4964 = vmatpush1.bf16.msra.mxu0 0
        %4965 = vmatprep.subr.bf16.mxu0 0
        %4966 = vmatpush1.bf16.msra.mxu0 0
        %4967 = vmatprep.subr.bf16.mxu0 0
        %4968 = vmatpush1.bf16.msra.mxu0 0
        %4969 = vmatprep.subr.bf16.mxu0 0
        %4970 = vmatpush1.bf16.msra.mxu0 0
        %4971 = vmatprep.subr.bf16.mxu0 0
        %4972 = vmatpush1.bf16.msra.mxu0 0
        %4973 = vmatprep.subr.bf16.mxu0 %v4911
        %4974 = vmatpush1.bf16.msra.mxu0 %v4908
        %4975 = vmatprep.subr.bf16.mxu0 %v4851
        %4976 = vmatpush1.bf16.msra.mxu0 %v4850
        %4977 = vmatprep.subr.bf16.mxu0 0
        %4978 = vmatpush2.bf16.msra.mxu0 0
        %4979 = vmatprep.subr.bf16.mxu0 0
        %4980 = vmatpush2.bf16.msra.mxu0 0
        %4981 = vmatprep.subr.bf16.mxu0 0
        %4982 = vmatpush2.bf16.msra.mxu0 0
        %4983 = vmatprep.subr.bf16.mxu0 0
        %4984 = vmatpush2.bf16.msra.mxu0 0
        %4985 = vmatprep.subr.bf16.mxu0 0
        %4986 = vmatpush2.bf16.msra.mxu0 0
        %4987 = vmatprep.subr.bf16.mxu0 0
        %4988 = vmatpush2.bf16.msra.mxu0 0
        %4989 = vmatprep.subr.bf16.mxu0 0
        %4990 = vmatpush2.bf16.msra.mxu0 0
        %4991 = vmatprep.subr.bf16.mxu0 0
        %4992 = vmatpush2.bf16.msra.mxu0 0
        %4993 = vmatprep.mubr.bf16.mxu0 0
        %4994 = vmatmul.mubr.bf16.gmra.mxu0 %v4905
        %v4995 = vpop.f32.mrf.mxu0
        %v4996 = vadd.f32 0.0, %v4995
        %v4997 = vpop.f32.mrf.mxu0
        %v4998 = vadd.f32 0.0, %v4997
        %v4999 = vpop.f32.mrf.mxu0
        %v5000 = vadd.f32 0.0, %v4999
        %v5001 = vpop.f32.mrf.mxu0
        %v5002 = vadd.f32 0.0, %v5001
        %5003 = vdwg.mxu0
        %5004 = vmatprep.subr.bf16.mxu0 0
        %5005 = vmatpush1.bf16.msra.mxu0 0
        %5006 = vmatprep.subr.bf16.mxu0 0
        %5007 = vmatpush1.bf16.msra.mxu0 0
        %5008 = vmatprep.subr.bf16.mxu0 0
        %5009 = vmatpush1.bf16.msra.mxu0 0
        %5010 = vmatprep.subr.bf16.mxu0 0
        %5011 = vmatpush1.bf16.msra.mxu0 0
        %5012 = vmatprep.subr.bf16.mxu0 0
        %5013 = vmatpush1.bf16.msra.mxu0 0
        %5014 = vmatprep.subr.bf16.mxu0 0
        %5015 = vmatpush1.bf16.msra.mxu0 0
        %5016 = vmatprep.subr.bf16.mxu0 %v4917
        %5017 = vmatpush1.bf16.msra.mxu0 %v4914
        %5018 = vmatprep.subr.bf16.mxu0 %v4853
        %5019 = vmatpush1.bf16.msra.mxu0 %v4852
        %5020 = vmatprep.subr.bf16.mxu0 0
        %5021 = vmatpush2.bf16.msra.mxu0 0
        %5022 = vmatprep.subr.bf16.mxu0 0
        %5023 = vmatpush2.bf16.msra.mxu0 0
        %5024 = vmatprep.subr.bf16.mxu0 0
        %5025 = vmatpush2.bf16.msra.mxu0 0
        %5026 = vmatprep.subr.bf16.mxu0 0
        %5027 = vmatpush2.bf16.msra.mxu0 0
        %5028 = vmatprep.subr.bf16.mxu0 0
        %5029 = vmatpush2.bf16.msra.mxu0 0
        %5030 = vmatprep.subr.bf16.mxu0 0
        %5031 = vmatpush2.bf16.msra.mxu0 0
        %5032 = vmatprep.subr.bf16.mxu0 0
        %5033 = vmatpush2.bf16.msra.mxu0 0
        %5034 = vmatprep.subr.bf16.mxu0 0
        %5035 = vmatpush2.bf16.msra.mxu0 0
        %5036 = vmatprep.mubr.bf16.mxu0 0
        %5037 = vmatmul.mubr.bf16.gmra.mxu0 %v4905
        %v5038 = vpop.f32.mrf.mxu0
        %v5039 = vadd.f32 0.0, %v5038
        %v5040 = vpop.f32.mrf.mxu0
        %v5041 = vadd.f32 0.0, %v5040
        %v5042 = vpop.f32.mrf.mxu0
        %v5043 = vadd.f32 0.0, %v5042
        %v5044 = vpop.f32.mrf.mxu0
        %v5045 = vadd.f32 0.0, %v5044
        %5046 = vdwg.mxu0
        %5047 = vmatprep.subr.bf16.mxu0 0
        %5048 = vmatpush1.bf16.msra.mxu0 0
        %5049 = vmatprep.subr.bf16.mxu0 0
        %5050 = vmatpush1.bf16.msra.mxu0 0
        %5051 = vmatprep.subr.bf16.mxu0 0
        %5052 = vmatpush1.bf16.msra.mxu0 0
        %5053 = vmatprep.subr.bf16.mxu0 0
        %5054 = vmatpush1.bf16.msra.mxu0 0
        %5055 = vmatprep.subr.bf16.mxu0 0
        %5056 = vmatpush1.bf16.msra.mxu0 0
        %5057 = vmatprep.subr.bf16.mxu0 0
        %5058 = vmatpush1.bf16.msra.mxu0 0
        %5059 = vmatprep.subr.bf16.mxu0 %v4923
        %5060 = vmatpush1.bf16.msra.mxu0 %v4920
        %5061 = vmatprep.subr.bf16.mxu0 %v4855
        %5062 = vmatpush1.bf16.msra.mxu0 %v4854
        %5063 = vmatprep.subr.bf16.mxu0 0
        %5064 = vmatpush2.bf16.msra.mxu0 0
        %5065 = vmatprep.subr.bf16.mxu0 0
        %5066 = vmatpush2.bf16.msra.mxu0 0
        %5067 = vmatprep.subr.bf16.mxu0 0
        %5068 = vmatpush2.bf16.msra.mxu0 0
        %5069 = vmatprep.subr.bf16.mxu0 0
        %5070 = vmatpush2.bf16.msra.mxu0 0
        %5071 = vmatprep.subr.bf16.mxu0 0
        %5072 = vmatpush2.bf16.msra.mxu0 0
        %5073 = vmatprep.subr.bf16.mxu0 0
        %5074 = vmatpush2.bf16.msra.mxu0 0
        %5075 = vmatprep.subr.bf16.mxu0 0
        %5076 = vmatpush2.bf16.msra.mxu0 0
        %5077 = vmatprep.subr.bf16.mxu0 0
        %5078 = vmatpush2.bf16.msra.mxu0 0
        %5079 = vmatprep.mubr.bf16.mxu0 0
        %5080 = vmatmul.mubr.bf16.gmra.mxu0 %v4905
        %v5081 = vpop.f32.mrf.mxu0
        %v5082 = vadd.f32 0.0, %v5081
        %v5083 = vpop.f32.mrf.mxu0
        %v5084 = vadd.f32 0.0, %v5083
        %v5085 = vpop.f32.mrf.mxu0
        %v5086 = vadd.f32 0.0, %v5085
        %v5087 = vpop.f32.mrf.mxu0
        %v5088 = vadd.f32 0.0, %v5087
        %5089 = vdwg.mxu0
        %5090 = vmatprep.subr.bf16.mxu0 0
        %5091 = vmatpush1.bf16.msra.mxu0 0
        %5092 = vmatprep.subr.bf16.mxu0 0
        %5093 = vmatpush1.bf16.msra.mxu0 0
        %5094 = vmatprep.subr.bf16.mxu0 0
        %5095 = vmatpush1.bf16.msra.mxu0 0
        %5096 = vmatprep.subr.bf16.mxu0 0
        %5097 = vmatpush1.bf16.msra.mxu0 0
        %5098 = vmatprep.subr.bf16.mxu0 0
        %5099 = vmatpush1.bf16.msra.mxu0 0
        %5100 = vmatprep.subr.bf16.mxu0 0
        %5101 = vmatpush1.bf16.msra.mxu0 0
        %5102 = vmatprep.subr.bf16.mxu0 %v4929
        %5103 = vmatpush1.bf16.msra.mxu0 %v4926
        %5104 = vmatprep.subr.bf16.mxu0 %v4857
        %5105 = vmatpush1.bf16.msra.mxu0 %v4856
        %5106 = vmatprep.subr.bf16.mxu0 0
        %5107 = vmatpush2.bf16.msra.mxu0 0
        %5108 = vmatprep.subr.bf16.mxu0 0
        %5109 = vmatpush2.bf16.msra.mxu0 0
        %5110 = vmatprep.subr.bf16.mxu0 0
        %5111 = vmatpush2.bf16.msra.mxu0 0
        %5112 = vmatprep.subr.bf16.mxu0 0
        %5113 = vmatpush2.bf16.msra.mxu0 0
        %5114 = vmatprep.subr.bf16.mxu0 0
        %5115 = vmatpush2.bf16.msra.mxu0 0
        %5116 = vmatprep.subr.bf16.mxu0 0
        %5117 = vmatpush2.bf16.msra.mxu0 0
        %5118 = vmatprep.subr.bf16.mxu0 0
        %5119 = vmatpush2.bf16.msra.mxu0 0
        %5120 = vmatprep.subr.bf16.mxu0 0
        %5121 = vmatpush2.bf16.msra.mxu0 0
        %5122 = vmatprep.mubr.bf16.mxu0 0
        %5123 = vmatmul.mubr.bf16.gmra.mxu0 %v4905
        %v5124 = vpop.f32.mrf.mxu0
        %v5125 = vadd.f32 0.0, %v5124
        %v5126 = vpop.f32.mrf.mxu0
        %v5127 = vadd.f32 0.0, %v5126
        %v5128 = vpop.f32.mrf.mxu0
        %v5129 = vadd.f32 0.0, %v5128
        %v5130 = vpop.f32.mrf.mxu0
        %v5131 = vadd.f32 0.0, %v5130
        %5132 = vdwg.mxu0
        %5133 = vmatprep.subr.bf16.mxu0 0
        %5134 = vmatpush1.bf16.msra.mxu0 0
        %5135 = vmatprep.subr.bf16.mxu0 0
        %5136 = vmatpush1.bf16.msra.mxu0 0
        %5137 = vmatprep.subr.bf16.mxu0 0
        %5138 = vmatpush1.bf16.msra.mxu0 0
        %5139 = vmatprep.subr.bf16.mxu0 0
        %5140 = vmatpush1.bf16.msra.mxu0 0
        %5141 = vmatprep.subr.bf16.mxu0 0
        %5142 = vmatpush1.bf16.msra.mxu0 0
        %5143 = vmatprep.subr.bf16.mxu0 0
        %5144 = vmatpush1.bf16.msra.mxu0 0
        %5145 = vmatprep.subr.bf16.mxu0 %v4935
        %5146 = vmatpush1.bf16.msra.mxu0 %v4932
        %5147 = vmatprep.subr.bf16.mxu0 %v4859
        %5148 = vmatpush1.bf16.msra.mxu0 %v4858
        %5149 = vmatprep.subr.bf16.mxu0 0
        %5150 = vmatpush2.bf16.msra.mxu0 0
        %5151 = vmatprep.subr.bf16.mxu0 0
        %5152 = vmatpush2.bf16.msra.mxu0 0
        %5153 = vmatprep.subr.bf16.mxu0 0
        %5154 = vmatpush2.bf16.msra.mxu0 0
        %5155 = vmatprep.subr.bf16.mxu0 0
        %5156 = vmatpush2.bf16.msra.mxu0 0
        %5157 = vmatprep.subr.bf16.mxu0 0
        %5158 = vmatpush2.bf16.msra.mxu0 0
        %5159 = vmatprep.subr.bf16.mxu0 0
        %5160 = vmatpush2.bf16.msra.mxu0 0
        %5161 = vmatprep.subr.bf16.mxu0 0
        %5162 = vmatpush2.bf16.msra.mxu0 0
        %5163 = vmatprep.subr.bf16.mxu0 0
        %5164 = vmatpush2.bf16.msra.mxu0 0
        %5165 = vmatprep.mubr.bf16.mxu0 0
        %5166 = vmatmul.mubr.bf16.gmra.mxu0 %v4905
        %v5167 = vpop.f32.mrf.mxu0
        %v5168 = vadd.f32 0.0, %v5167
        %v5169 = vpop.f32.mrf.mxu0
        %v5170 = vadd.f32 0.0, %v5169
        %v5171 = vpop.f32.mrf.mxu0
        %v5172 = vadd.f32 0.0, %v5171
        %v5173 = vpop.f32.mrf.mxu0
        %v5174 = vadd.f32 0.0, %v5173
        %5175 = vdwg.mxu0
        %5176 = vmatprep.subr.bf16.mxu0 0
        %5177 = vmatpush1.bf16.msra.mxu0 0
        %5178 = vmatprep.subr.bf16.mxu0 0
        %5179 = vmatpush1.bf16.msra.mxu0 0
        %5180 = vmatprep.subr.bf16.mxu0 0
        %5181 = vmatpush1.bf16.msra.mxu0 0
        %5182 = vmatprep.subr.bf16.mxu0 0
        %5183 = vmatpush1.bf16.msra.mxu0 0
        %5184 = vmatprep.subr.bf16.mxu0 0
        %5185 = vmatpush1.bf16.msra.mxu0 0
        %5186 = vmatprep.subr.bf16.mxu0 0
        %5187 = vmatpush1.bf16.msra.mxu0 0
        %5188 = vmatprep.subr.bf16.mxu0 %v4941
        %5189 = vmatpush1.bf16.msra.mxu0 %v4938
        %5190 = vmatprep.subr.bf16.mxu0 %v4861
        %5191 = vmatpush1.bf16.msra.mxu0 %v4860
        %5192 = vmatprep.subr.bf16.mxu0 0
        %5193 = vmatpush2.bf16.msra.mxu0 0
        %5194 = vmatprep.subr.bf16.mxu0 0
        %5195 = vmatpush2.bf16.msra.mxu0 0
        %5196 = vmatprep.subr.bf16.mxu0 0
        %5197 = vmatpush2.bf16.msra.mxu0 0
        %5198 = vmatprep.subr.bf16.mxu0 0
        %5199 = vmatpush2.bf16.msra.mxu0 0
        %5200 = vmatprep.subr.bf16.mxu0 0
        %5201 = vmatpush2.bf16.msra.mxu0 0
        %5202 = vmatprep.subr.bf16.mxu0 0
        %5203 = vmatpush2.bf16.msra.mxu0 0
        %5204 = vmatprep.subr.bf16.mxu0 0
        %5205 = vmatpush2.bf16.msra.mxu0 0
        %5206 = vmatprep.subr.bf16.mxu0 0
        %5207 = vmatpush2.bf16.msra.mxu0 0
        %5208 = vmatprep.mubr.bf16.mxu0 0
        %5209 = vmatmul.mubr.bf16.gmra.mxu0 %v4905
        %v5210 = vpop.f32.mrf.mxu0
        %v5211 = vadd.f32 0.0, %v5210
        %v5212 = vpop.f32.mrf.mxu0
        %v5213 = vadd.f32 0.0, %v5212
        %v5214 = vpop.f32.mrf.mxu0
        %v5215 = vadd.f32 0.0, %v5214
        %v5216 = vpop.f32.mrf.mxu0
        %v5217 = vadd.f32 0.0, %v5216
        %5218 = vdwg.mxu0
        %5219 = vmatprep.subr.bf16.mxu0 0
        %5220 = vmatpush1.bf16.msra.mxu0 0
        %5221 = vmatprep.subr.bf16.mxu0 0
        %5222 = vmatpush1.bf16.msra.mxu0 0
        %5223 = vmatprep.subr.bf16.mxu0 0
        %5224 = vmatpush1.bf16.msra.mxu0 0
        %5225 = vmatprep.subr.bf16.mxu0 0
        %5226 = vmatpush1.bf16.msra.mxu0 0
        %5227 = vmatprep.subr.bf16.mxu0 0
        %5228 = vmatpush1.bf16.msra.mxu0 0
        %5229 = vmatprep.subr.bf16.mxu0 0
        %5230 = vmatpush1.bf16.msra.mxu0 0
        %5231 = vmatprep.subr.bf16.mxu0 %v4947
        %5232 = vmatpush1.bf16.msra.mxu0 %v4944
        %5233 = vmatprep.subr.bf16.mxu0 %v4863
        %5234 = vmatpush1.bf16.msra.mxu0 %v4862
        %5235 = vmatprep.subr.bf16.mxu0 0
        %5236 = vmatpush2.bf16.msra.mxu0 0
        %5237 = vmatprep.subr.bf16.mxu0 0
        %5238 = vmatpush2.bf16.msra.mxu0 0
        %5239 = vmatprep.subr.bf16.mxu0 0
        %5240 = vmatpush2.bf16.msra.mxu0 0
        %5241 = vmatprep.subr.bf16.mxu0 0
        %5242 = vmatpush2.bf16.msra.mxu0 0
        %5243 = vmatprep.subr.bf16.mxu0 0
        %5244 = vmatpush2.bf16.msra.mxu0 0
        %5245 = vmatprep.subr.bf16.mxu0 0
        %5246 = vmatpush2.bf16.msra.mxu0 0
        %5247 = vmatprep.subr.bf16.mxu0 0
        %5248 = vmatpush2.bf16.msra.mxu0 0
        %5249 = vmatprep.subr.bf16.mxu0 0
        %5250 = vmatpush2.bf16.msra.mxu0 0
        %5251 = vmatprep.mubr.bf16.mxu0 0
        %5252 = vmatmul.mubr.bf16.gmra.mxu0 %v4905
        %v5253 = vpop.f32.mrf.mxu0
        %v5254 = vadd.f32 0.0, %v5253
        %v5255 = vpop.f32.mrf.mxu0
        %v5256 = vadd.f32 0.0, %v5255
        %v5257 = vpop.f32.mrf.mxu0
        %v5258 = vadd.f32 0.0, %v5257
        %v5259 = vpop.f32.mrf.mxu0
        %v5260 = vadd.f32 0.0, %v5259
        %5261 = vdwg.mxu0
        %5262 = vmatprep.subr.bf16.mxu0 0
        %5263 = vmatpush1.bf16.msra.mxu0 0
        %5264 = vmatprep.subr.bf16.mxu0 0
        %5265 = vmatpush1.bf16.msra.mxu0 0
        %5266 = vmatprep.subr.bf16.mxu0 0
        %5267 = vmatpush1.bf16.msra.mxu0 0
        %5268 = vmatprep.subr.bf16.mxu0 0
        %5269 = vmatpush1.bf16.msra.mxu0 0
        %5270 = vmatprep.subr.bf16.mxu0 0
        %5271 = vmatpush1.bf16.msra.mxu0 0
        %5272 = vmatprep.subr.bf16.mxu0 0
        %5273 = vmatpush1.bf16.msra.mxu0 0
        %5274 = vmatprep.subr.bf16.mxu0 %v4953
        %5275 = vmatpush1.bf16.msra.mxu0 %v4950
        %5276 = vmatprep.subr.bf16.mxu0 %v4865
        %5277 = vmatpush1.bf16.msra.mxu0 %v4864
        %5278 = vmatprep.subr.bf16.mxu0 0
        %5279 = vmatpush2.bf16.msra.mxu0 0
        %5280 = vmatprep.subr.bf16.mxu0 0
        %5281 = vmatpush2.bf16.msra.mxu0 0
        %5282 = vmatprep.subr.bf16.mxu0 0
        %5283 = vmatpush2.bf16.msra.mxu0 0
        %5284 = vmatprep.subr.bf16.mxu0 0
        %5285 = vmatpush2.bf16.msra.mxu0 0
        %5286 = vmatprep.subr.bf16.mxu0 0
        %5287 = vmatpush2.bf16.msra.mxu0 0
        %5288 = vmatprep.subr.bf16.mxu0 0
        %5289 = vmatpush2.bf16.msra.mxu0 0
        %5290 = vmatprep.subr.bf16.mxu0 0
        %5291 = vmatpush2.bf16.msra.mxu0 0
        %5292 = vmatprep.subr.bf16.mxu0 0
        %5293 = vmatpush2.bf16.msra.mxu0 0
        %5294 = vmatprep.mubr.bf16.mxu0 0
        %5295 = vmatmul.mubr.bf16.gmra.mxu0 %v4905
        %v5296 = vpop.f32.mrf.mxu0
        %v5297 = vadd.f32 0.0, %v5296
        %v5298 = vpop.f32.mrf.mxu0
        %v5299 = vadd.f32 0.0, %v5298
        %v5300 = vpop.f32.mrf.mxu0
        %v5301 = vadd.f32 0.0, %v5300
        %v5302 = vpop.f32.mrf.mxu0
        %v5303 = vadd.f32 0.0, %v5302
        %5304 = vdwg.mxu0
        %5305 = vmatprep.subr.bf16.mxu0 0
        %5306 = vmatpush1.bf16.msra.mxu0 0
        %5307 = vmatprep.subr.bf16.mxu0 0
        %5308 = vmatpush1.bf16.msra.mxu0 0
        %5309 = vmatprep.subr.bf16.mxu0 0
        %5310 = vmatpush1.bf16.msra.mxu0 0
        %5311 = vmatprep.subr.bf16.mxu0 0
        %5312 = vmatpush1.bf16.msra.mxu0 0
        %5313 = vmatprep.subr.bf16.mxu0 0
        %5314 = vmatpush1.bf16.msra.mxu0 0
        %5315 = vmatprep.subr.bf16.mxu0 0
        %5316 = vmatpush1.bf16.msra.mxu0 0
        %5317 = vmatprep.subr.bf16.mxu0 %v4959
        %5318 = vmatpush1.bf16.msra.mxu0 %v4956
        %5319 = vmatprep.subr.bf16.mxu0 %v4867
        %5320 = vmatpush1.bf16.msra.mxu0 %v4866
        %5321 = vmatprep.subr.bf16.mxu0 0
        %5322 = vmatpush2.bf16.msra.mxu0 0
        %5323 = vmatprep.subr.bf16.mxu0 0
        %5324 = vmatpush2.bf16.msra.mxu0 0
        %5325 = vmatprep.subr.bf16.mxu0 0
        %5326 = vmatpush2.bf16.msra.mxu0 0
        %5327 = vmatprep.subr.bf16.mxu0 0
        %5328 = vmatpush2.bf16.msra.mxu0 0
        %5329 = vmatprep.subr.bf16.mxu0 0
        %5330 = vmatpush2.bf16.msra.mxu0 0
        %5331 = vmatprep.subr.bf16.mxu0 0
        %5332 = vmatpush2.bf16.msra.mxu0 0
        %5333 = vmatprep.subr.bf16.mxu0 0
        %5334 = vmatpush2.bf16.msra.mxu0 0
        %5335 = vmatprep.subr.bf16.mxu0 0
        %5336 = vmatpush2.bf16.msra.mxu0 0
        %5337 = vmatprep.mubr.bf16.mxu0 0
        %5338 = vmatmul.mubr.bf16.gmra.mxu0 %v4905
        %v5339 = vpop.f32.mrf.mxu0
        %v5340 = vadd.f32 0.0, %v5339
        %v5341 = vpop.f32.mrf.mxu0
        %v5342 = vadd.f32 0.0, %v5341
        %v5343 = vpop.f32.mrf.mxu0
        %v5344 = vadd.f32 0.0, %v5343
        %v5345 = vpop.f32.mrf.mxu0
        %v5346 = vadd.f32 0.0, %v5345
        %5347 = vdwg.mxu0
        %v5350 = vunpack.c.l.b16 %v776
        %v5351 = vunpack.c.l.b16 %v777
        %v5352 = vpack.c.b16 %v5351, %v5350
        %v5389 = vunpack.c.l.b16 %v1030
        %v5390 = vunpack.c.h.b16 %v1030
        %v5391 = vunpack.c.l.b16 %v1031
        %v5392 = vunpack.c.h.b16 %v1031
        %v5393 = vunpack.c.l.b16 %v1032
        %v5394 = vunpack.c.h.b16 %v1032
        %v5395 = vunpack.c.l.b16 %v1033
        %v5396 = vunpack.c.h.b16 %v1033
        %v5397 = vunpack.c.l.b16 %v1034
        %v5398 = vunpack.c.h.b16 %v1034
        %v5399 = vunpack.c.l.b16 %v1035
        %v5400 = vunpack.c.h.b16 %v1035
        %v5401 = vunpack.c.l.b16 %v1036
        %v5402 = vunpack.c.h.b16 %v1036
        %v5403 = vunpack.c.l.b16 %v1037
        %v5404 = vunpack.c.h.b16 %v1037
        %v5405 = vunpack.c.l.b16 %v1038
        %v5406 = vunpack.c.h.b16 %v1038
        %v5407 = vunpack.c.l.b16 %v1039
        %v5408 = vunpack.c.h.b16 %v1039
        %v5409 = vunpack.c.l.b16 %v1040
        %v5410 = vunpack.c.h.b16 %v1040
        %v5411 = vunpack.c.l.b16 %v1041
        %v5412 = vunpack.c.h.b16 %v1041
        %v5413 = vunpack.c.l.b16 %v1042
        %v5414 = vunpack.c.h.b16 %v1042
        %v5415 = vunpack.c.l.b16 %v1043
        %v5416 = vunpack.c.h.b16 %v1043
        %v5417 = vunpack.c.l.b16 %v1044
        %v5418 = vunpack.c.h.b16 %v1044
        %v5419 = vunpack.c.l.b16 %v1045
        %v5420 = vunpack.c.h.b16 %v1045
        %v5421 = vunpack.c.l.b16 %v1046
        %v5422 = vunpack.c.h.b16 %v1046
        %v5423 = vunpack.c.l.b16 %v1047
        %v5424 = vunpack.c.h.b16 %v1047
        %v5425 = vunpack.c.l.b16 %v1048
        %v5426 = vunpack.c.h.b16 %v1048
        %v5427 = vunpack.c.l.b16 %v1049
        %v5428 = vunpack.c.h.b16 %v1049
        %v5429 = vunpack.c.l.b16 %v1050
        %v5430 = vunpack.c.h.b16 %v1050
        %v5431 = vunpack.c.l.b16 %v1051
        %v5432 = vunpack.c.h.b16 %v1051
        %v5433 = vunpack.c.l.b16 %v1052
        %v5434 = vunpack.c.h.b16 %v1052
        %v5435 = vunpack.c.l.b16 %v1053
        %v5436 = vunpack.c.h.b16 %v1053
        %v5437 = vunpack.c.l.b16 %v1054
        %v5438 = vunpack.c.h.b16 %v1054
        %v5439 = vunpack.c.l.b16 %v1055
        %v5440 = vunpack.c.h.b16 %v1055
        %v5441 = vunpack.c.l.b16 %v1056
        %v5442 = vunpack.c.h.b16 %v1056
        %v5443 = vunpack.c.l.b16 %v1057
        %v5444 = vunpack.c.h.b16 %v1057
        %v5445 = vunpack.c.l.b16 %v1058
        %v5446 = vunpack.c.h.b16 %v1058
        %v5447 = vunpack.c.l.b16 %v1059
        %v5448 = vunpack.c.h.b16 %v1059
        %v5449 = vunpack.c.l.b16 %v1060
        %v5450 = vunpack.c.h.b16 %v1060
        %v5451 = vunpack.c.l.b16 %v1061
        %v5452 = vunpack.c.h.b16 %v1061
        %v5453 = vunpack.c.l.b16 %v1062
        %v5454 = vunpack.c.h.b16 %v1062
        %v5455 = vunpack.c.l.b16 %v1063
        %v5456 = vunpack.c.h.b16 %v1063
        %v5457 = vunpack.c.l.b16 %v1064
        %v5458 = vunpack.c.h.b16 %v1064
        %v5459 = vunpack.c.l.b16 %v1065
        %v5460 = vunpack.c.h.b16 %v1065
        %v5461 = vpack.c.b16 %v5407, %v5389
        %v5462 = vpack.c.b16 %v5408, %v5390
        %v5463 = vpack.c.b16 %v5409, %v5391
        %v5464 = vpack.c.b16 %v5410, %v5392
        %v5465 = vpack.c.b16 %v5411, %v5393
        %v5466 = vpack.c.b16 %v5412, %v5394
        %v5467 = vpack.c.b16 %v5413, %v5395
        %v5468 = vpack.c.b16 %v5414, %v5396
        %v5469 = vpack.c.b16 %v5415, %v5397
        %v5470 = vpack.c.b16 %v5416, %v5398
        %v5471 = vpack.c.b16 %v5417, %v5399
        %v5472 = vpack.c.b16 %v5418, %v5400
        %v5473 = vpack.c.b16 %v5419, %v5401
        %v5474 = vpack.c.b16 %v5420, %v5402
        %v5475 = vpack.c.b16 %v5421, %v5403
        %v5476 = vpack.c.b16 %v5422, %v5404
        %v5477 = vpack.c.b16 %v5423, %v5405
        %v5478 = vpack.c.b16 %v5424, %v5406
        %v5479 = vpack.c.b16 %v5443, %v5425
        %v5480 = vpack.c.b16 %v5444, %v5426
        %v5481 = vpack.c.b16 %v5445, %v5427
        %v5482 = vpack.c.b16 %v5446, %v5428
        %v5483 = vpack.c.b16 %v5447, %v5429
        %v5484 = vpack.c.b16 %v5448, %v5430
        %v5485 = vpack.c.b16 %v5449, %v5431
        %v5486 = vpack.c.b16 %v5450, %v5432
        %v5487 = vpack.c.b16 %v5451, %v5433
        %v5488 = vpack.c.b16 %v5452, %v5434
        %v5489 = vpack.c.b16 %v5453, %v5435
        %v5490 = vpack.c.b16 %v5454, %v5436
        %v5491 = vpack.c.b16 %v5455, %v5437
        %v5492 = vpack.c.b16 %v5456, %v5438
        %v5493 = vpack.c.b16 %v5457, %v5439
        %v5494 = vpack.c.b16 %v5458, %v5440
        %v5495 = vpack.c.b16 %v5459, %v5441
        %v5496 = vpack.c.b16 %v5460, %v5442
        %v5516 = vsel %vm1233, %v5352, 0
        %v5519 = vand.u32 %v5479, %v1240
        %v5522 = vand.u32 %v5480, %v1240
        %v5525 = vand.u32 %v5481, %v1240
        %v5528 = vand.u32 %v5482, %v1240
        %v5531 = vand.u32 %v5483, %v1240
        %v5534 = vand.u32 %v5484, %v1240
        %v5537 = vand.u32 %v5485, %v1240
        %v5540 = vand.u32 %v5486, %v1240
        %v5543 = vand.u32 %v5487, %v1240
        %v5546 = vand.u32 %v5488, %v1240
        %v5549 = vand.u32 %v5489, %v1240
        %v5552 = vand.u32 %v5490, %v1240
        %v5555 = vand.u32 %v5491, %v1240
        %v5558 = vand.u32 %v5492, %v1240
        %v5561 = vand.u32 %v5493, %v1240
        %v5564 = vand.u32 %v5494, %v1240
        %v5567 = vand.u32 %v5495, %v1240
        %v5570 = vand.u32 %v5496, %v1240
        %5572 = vmatprep.subr.bf16.mxu0 0
        %5573 = vmatpush1.bf16.msra.mxu0 0
        %5574 = vmatprep.subr.bf16.mxu0 0
        %5575 = vmatpush1.bf16.msra.mxu0 0
        %5576 = vmatprep.subr.bf16.mxu0 0
        %5577 = vmatpush1.bf16.msra.mxu0 0
        %5578 = vmatprep.subr.bf16.mxu0 0
        %5579 = vmatpush1.bf16.msra.mxu0 0
        %5580 = vmatprep.subr.bf16.mxu0 0
        %5581 = vmatpush1.bf16.msra.mxu0 0
        %5582 = vmatprep.subr.bf16.mxu0 0
        %5583 = vmatpush1.bf16.msra.mxu0 0
        %5584 = vmatprep.subr.bf16.mxu0 %v5522
        %5585 = vmatpush1.bf16.msra.mxu0 %v5519
        %5586 = vmatprep.subr.bf16.mxu0 %v5462
        %5587 = vmatpush1.bf16.msra.mxu0 %v5461
        %5588 = vmatprep.subr.bf16.mxu0 0
        %5589 = vmatpush2.bf16.msra.mxu0 0
        %5590 = vmatprep.subr.bf16.mxu0 0
        %5591 = vmatpush2.bf16.msra.mxu0 0
        %5592 = vmatprep.subr.bf16.mxu0 0
        %5593 = vmatpush2.bf16.msra.mxu0 0
        %5594 = vmatprep.subr.bf16.mxu0 0
        %5595 = vmatpush2.bf16.msra.mxu0 0
        %5596 = vmatprep.subr.bf16.mxu0 0
        %5597 = vmatpush2.bf16.msra.mxu0 0
        %5598 = vmatprep.subr.bf16.mxu0 0
        %5599 = vmatpush2.bf16.msra.mxu0 0
        %5600 = vmatprep.subr.bf16.mxu0 0
        %5601 = vmatpush2.bf16.msra.mxu0 0
        %5602 = vmatprep.subr.bf16.mxu0 0
        %5603 = vmatpush2.bf16.msra.mxu0 0
        %5604 = vmatprep.mubr.bf16.mxu0 0
        %5605 = vmatmul.mubr.bf16.gmra.mxu0 %v5516
        %v5606 = vpop.f32.mrf.mxu0
        %v5607 = vadd.f32 0.0, %v5606
        %v5608 = vpop.f32.mrf.mxu0
        %v5609 = vadd.f32 0.0, %v5608
        %v5610 = vpop.f32.mrf.mxu0
        %v5611 = vadd.f32 0.0, %v5610
        %v5612 = vpop.f32.mrf.mxu0
        %v5613 = vadd.f32 0.0, %v5612
        %5614 = vdwg.mxu0
        %5615 = vmatprep.subr.bf16.mxu0 0
        %5616 = vmatpush1.bf16.msra.mxu0 0
        %5617 = vmatprep.subr.bf16.mxu0 0
        %5618 = vmatpush1.bf16.msra.mxu0 0
        %5619 = vmatprep.subr.bf16.mxu0 0
        %5620 = vmatpush1.bf16.msra.mxu0 0
        %5621 = vmatprep.subr.bf16.mxu0 0
        %5622 = vmatpush1.bf16.msra.mxu0 0
        %5623 = vmatprep.subr.bf16.mxu0 0
        %5624 = vmatpush1.bf16.msra.mxu0 0
        %5625 = vmatprep.subr.bf16.mxu0 0
        %5626 = vmatpush1.bf16.msra.mxu0 0
        %5627 = vmatprep.subr.bf16.mxu0 %v5528
        %5628 = vmatpush1.bf16.msra.mxu0 %v5525
        %5629 = vmatprep.subr.bf16.mxu0 %v5464
        %5630 = vmatpush1.bf16.msra.mxu0 %v5463
        %5631 = vmatprep.subr.bf16.mxu0 0
        %5632 = vmatpush2.bf16.msra.mxu0 0
        %5633 = vmatprep.subr.bf16.mxu0 0
        %5634 = vmatpush2.bf16.msra.mxu0 0
        %5635 = vmatprep.subr.bf16.mxu0 0
        %5636 = vmatpush2.bf16.msra.mxu0 0
        %5637 = vmatprep.subr.bf16.mxu0 0
        %5638 = vmatpush2.bf16.msra.mxu0 0
        %5639 = vmatprep.subr.bf16.mxu0 0
        %5640 = vmatpush2.bf16.msra.mxu0 0
        %5641 = vmatprep.subr.bf16.mxu0 0
        %5642 = vmatpush2.bf16.msra.mxu0 0
        %5643 = vmatprep.subr.bf16.mxu0 0
        %5644 = vmatpush2.bf16.msra.mxu0 0
        %5645 = vmatprep.subr.bf16.mxu0 0
        %5646 = vmatpush2.bf16.msra.mxu0 0
        %5647 = vmatprep.mubr.bf16.mxu0 0
        %5648 = vmatmul.mubr.bf16.gmra.mxu0 %v5516
        %v5649 = vpop.f32.mrf.mxu0
        %v5650 = vadd.f32 0.0, %v5649
        %v5651 = vpop.f32.mrf.mxu0
        %v5652 = vadd.f32 0.0, %v5651
        %v5653 = vpop.f32.mrf.mxu0
        %v5654 = vadd.f32 0.0, %v5653
        %v5655 = vpop.f32.mrf.mxu0
        %v5656 = vadd.f32 0.0, %v5655
        %5657 = vdwg.mxu0
        %5658 = vmatprep.subr.bf16.mxu0 0
        %5659 = vmatpush1.bf16.msra.mxu0 0
        %5660 = vmatprep.subr.bf16.mxu0 0
        %5661 = vmatpush1.bf16.msra.mxu0 0
        %5662 = vmatprep.subr.bf16.mxu0 0
        %5663 = vmatpush1.bf16.msra.mxu0 0
        %5664 = vmatprep.subr.bf16.mxu0 0
        %5665 = vmatpush1.bf16.msra.mxu0 0
        %5666 = vmatprep.subr.bf16.mxu0 0
        %5667 = vmatpush1.bf16.msra.mxu0 0
        %5668 = vmatprep.subr.bf16.mxu0 0
        %5669 = vmatpush1.bf16.msra.mxu0 0
        %5670 = vmatprep.subr.bf16.mxu0 %v5534
        %5671 = vmatpush1.bf16.msra.mxu0 %v5531
        %5672 = vmatprep.subr.bf16.mxu0 %v5466
        %5673 = vmatpush1.bf16.msra.mxu0 %v5465
        %5674 = vmatprep.subr.bf16.mxu0 0
        %5675 = vmatpush2.bf16.msra.mxu0 0
        %5676 = vmatprep.subr.bf16.mxu0 0
        %5677 = vmatpush2.bf16.msra.mxu0 0
        %5678 = vmatprep.subr.bf16.mxu0 0
        %5679 = vmatpush2.bf16.msra.mxu0 0
        %5680 = vmatprep.subr.bf16.mxu0 0
        %5681 = vmatpush2.bf16.msra.mxu0 0
        %5682 = vmatprep.subr.bf16.mxu0 0
        %5683 = vmatpush2.bf16.msra.mxu0 0
        %5684 = vmatprep.subr.bf16.mxu0 0
        %5685 = vmatpush2.bf16.msra.mxu0 0
        %5686 = vmatprep.subr.bf16.mxu0 0
        %5687 = vmatpush2.bf16.msra.mxu0 0
        %5688 = vmatprep.subr.bf16.mxu0 0
        %5689 = vmatpush2.bf16.msra.mxu0 0
        %5690 = vmatprep.mubr.bf16.mxu0 0
        %5691 = vmatmul.mubr.bf16.gmra.mxu0 %v5516
        %v5692 = vpop.f32.mrf.mxu0
        %v5693 = vadd.f32 0.0, %v5692
        %v5694 = vpop.f32.mrf.mxu0
        %v5695 = vadd.f32 0.0, %v5694
        %v5696 = vpop.f32.mrf.mxu0
        %v5697 = vadd.f32 0.0, %v5696
        %v5698 = vpop.f32.mrf.mxu0
        %v5699 = vadd.f32 0.0, %v5698
        %5700 = vdwg.mxu0
        %5701 = vmatprep.subr.bf16.mxu0 0
        %5702 = vmatpush1.bf16.msra.mxu0 0
        %5703 = vmatprep.subr.bf16.mxu0 0
        %5704 = vmatpush1.bf16.msra.mxu0 0
        %5705 = vmatprep.subr.bf16.mxu0 0
        %5706 = vmatpush1.bf16.msra.mxu0 0
        %5707 = vmatprep.subr.bf16.mxu0 0
        %5708 = vmatpush1.bf16.msra.mxu0 0
        %5709 = vmatprep.subr.bf16.mxu0 0
        %5710 = vmatpush1.bf16.msra.mxu0 0
        %5711 = vmatprep.subr.bf16.mxu0 0
        %5712 = vmatpush1.bf16.msra.mxu0 0
        %5713 = vmatprep.subr.bf16.mxu0 %v5540
        %5714 = vmatpush1.bf16.msra.mxu0 %v5537
        %5715 = vmatprep.subr.bf16.mxu0 %v5468
        %5716 = vmatpush1.bf16.msra.mxu0 %v5467
        %5717 = vmatprep.subr.bf16.mxu0 0
        %5718 = vmatpush2.bf16.msra.mxu0 0
        %5719 = vmatprep.subr.bf16.mxu0 0
        %5720 = vmatpush2.bf16.msra.mxu0 0
        %5721 = vmatprep.subr.bf16.mxu0 0
        %5722 = vmatpush2.bf16.msra.mxu0 0
        %5723 = vmatprep.subr.bf16.mxu0 0
        %5724 = vmatpush2.bf16.msra.mxu0 0
        %5725 = vmatprep.subr.bf16.mxu0 0
        %5726 = vmatpush2.bf16.msra.mxu0 0
        %5727 = vmatprep.subr.bf16.mxu0 0
        %5728 = vmatpush2.bf16.msra.mxu0 0
        %5729 = vmatprep.subr.bf16.mxu0 0
        %5730 = vmatpush2.bf16.msra.mxu0 0
        %5731 = vmatprep.subr.bf16.mxu0 0
        %5732 = vmatpush2.bf16.msra.mxu0 0
        %5733 = vmatprep.mubr.bf16.mxu0 0
        %5734 = vmatmul.mubr.bf16.gmra.mxu0 %v5516
        %v5735 = vpop.f32.mrf.mxu0
        %v5736 = vadd.f32 0.0, %v5735
        %v5737 = vpop.f32.mrf.mxu0
        %v5738 = vadd.f32 0.0, %v5737
        %v5739 = vpop.f32.mrf.mxu0
        %v5740 = vadd.f32 0.0, %v5739
        %v5741 = vpop.f32.mrf.mxu0
        %v5742 = vadd.f32 0.0, %v5741
        %5743 = vdwg.mxu0
        %5744 = vmatprep.subr.bf16.mxu0 0
        %5745 = vmatpush1.bf16.msra.mxu0 0
        %5746 = vmatprep.subr.bf16.mxu0 0
        %5747 = vmatpush1.bf16.msra.mxu0 0
        %5748 = vmatprep.subr.bf16.mxu0 0
        %5749 = vmatpush1.bf16.msra.mxu0 0
        %5750 = vmatprep.subr.bf16.mxu0 0
        %5751 = vmatpush1.bf16.msra.mxu0 0
        %5752 = vmatprep.subr.bf16.mxu0 0
        %5753 = vmatpush1.bf16.msra.mxu0 0
        %5754 = vmatprep.subr.bf16.mxu0 0
        %5755 = vmatpush1.bf16.msra.mxu0 0
        %5756 = vmatprep.subr.bf16.mxu0 %v5546
        %5757 = vmatpush1.bf16.msra.mxu0 %v5543
        %5758 = vmatprep.subr.bf16.mxu0 %v5470
        %5759 = vmatpush1.bf16.msra.mxu0 %v5469
        %5760 = vmatprep.subr.bf16.mxu0 0
        %5761 = vmatpush2.bf16.msra.mxu0 0
        %5762 = vmatprep.subr.bf16.mxu0 0
        %5763 = vmatpush2.bf16.msra.mxu0 0
        %5764 = vmatprep.subr.bf16.mxu0 0
        %5765 = vmatpush2.bf16.msra.mxu0 0
        %5766 = vmatprep.subr.bf16.mxu0 0
        %5767 = vmatpush2.bf16.msra.mxu0 0
        %5768 = vmatprep.subr.bf16.mxu0 0
        %5769 = vmatpush2.bf16.msra.mxu0 0
        %5770 = vmatprep.subr.bf16.mxu0 0
        %5771 = vmatpush2.bf16.msra.mxu0 0
        %5772 = vmatprep.subr.bf16.mxu0 0
        %5773 = vmatpush2.bf16.msra.mxu0 0
        %5774 = vmatprep.subr.bf16.mxu0 0
        %5775 = vmatpush2.bf16.msra.mxu0 0
        %5776 = vmatprep.mubr.bf16.mxu0 0
        %5777 = vmatmul.mubr.bf16.gmra.mxu0 %v5516
        %v5778 = vpop.f32.mrf.mxu0
        %v5779 = vadd.f32 0.0, %v5778
        %v5780 = vpop.f32.mrf.mxu0
        %v5781 = vadd.f32 0.0, %v5780
        %v5782 = vpop.f32.mrf.mxu0
        %v5783 = vadd.f32 0.0, %v5782
        %v5784 = vpop.f32.mrf.mxu0
        %v5785 = vadd.f32 0.0, %v5784
        %5786 = vdwg.mxu0
        %5787 = vmatprep.subr.bf16.mxu0 0
        %5788 = vmatpush1.bf16.msra.mxu0 0
        %5789 = vmatprep.subr.bf16.mxu0 0
        %5790 = vmatpush1.bf16.msra.mxu0 0
        %5791 = vmatprep.subr.bf16.mxu0 0
        %5792 = vmatpush1.bf16.msra.mxu0 0
        %5793 = vmatprep.subr.bf16.mxu0 0
        %5794 = vmatpush1.bf16.msra.mxu0 0
        %5795 = vmatprep.subr.bf16.mxu0 0
        %5796 = vmatpush1.bf16.msra.mxu0 0
        %5797 = vmatprep.subr.bf16.mxu0 0
        %5798 = vmatpush1.bf16.msra.mxu0 0
        %5799 = vmatprep.subr.bf16.mxu0 %v5552
        %5800 = vmatpush1.bf16.msra.mxu0 %v5549
        %5801 = vmatprep.subr.bf16.mxu0 %v5472
        %5802 = vmatpush1.bf16.msra.mxu0 %v5471
        %5803 = vmatprep.subr.bf16.mxu0 0
        %5804 = vmatpush2.bf16.msra.mxu0 0
        %5805 = vmatprep.subr.bf16.mxu0 0
        %5806 = vmatpush2.bf16.msra.mxu0 0
        %5807 = vmatprep.subr.bf16.mxu0 0
        %5808 = vmatpush2.bf16.msra.mxu0 0
        %5809 = vmatprep.subr.bf16.mxu0 0
        %5810 = vmatpush2.bf16.msra.mxu0 0
        %5811 = vmatprep.subr.bf16.mxu0 0
        %5812 = vmatpush2.bf16.msra.mxu0 0
        %5813 = vmatprep.subr.bf16.mxu0 0
        %5814 = vmatpush2.bf16.msra.mxu0 0
        %5815 = vmatprep.subr.bf16.mxu0 0
        %5816 = vmatpush2.bf16.msra.mxu0 0
        %5817 = vmatprep.subr.bf16.mxu0 0
        %5818 = vmatpush2.bf16.msra.mxu0 0
        %5819 = vmatprep.mubr.bf16.mxu0 0
        %5820 = vmatmul.mubr.bf16.gmra.mxu0 %v5516
        %v5821 = vpop.f32.mrf.mxu0
        %v5822 = vadd.f32 0.0, %v5821
        %v5823 = vpop.f32.mrf.mxu0
        %v5824 = vadd.f32 0.0, %v5823
        %v5825 = vpop.f32.mrf.mxu0
        %v5826 = vadd.f32 0.0, %v5825
        %v5827 = vpop.f32.mrf.mxu0
        %v5828 = vadd.f32 0.0, %v5827
        %5829 = vdwg.mxu0
        %5830 = vmatprep.subr.bf16.mxu0 0
        %5831 = vmatpush1.bf16.msra.mxu0 0
        %5832 = vmatprep.subr.bf16.mxu0 0
        %5833 = vmatpush1.bf16.msra.mxu0 0
        %5834 = vmatprep.subr.bf16.mxu0 0
        %5835 = vmatpush1.bf16.msra.mxu0 0
        %5836 = vmatprep.subr.bf16.mxu0 0
        %5837 = vmatpush1.bf16.msra.mxu0 0
        %5838 = vmatprep.subr.bf16.mxu0 0
        %5839 = vmatpush1.bf16.msra.mxu0 0
        %5840 = vmatprep.subr.bf16.mxu0 0
        %5841 = vmatpush1.bf16.msra.mxu0 0
        %5842 = vmatprep.subr.bf16.mxu0 %v5558
        %5843 = vmatpush1.bf16.msra.mxu0 %v5555
        %5844 = vmatprep.subr.bf16.mxu0 %v5474
        %5845 = vmatpush1.bf16.msra.mxu0 %v5473
        %5846 = vmatprep.subr.bf16.mxu0 0
        %5847 = vmatpush2.bf16.msra.mxu0 0
        %5848 = vmatprep.subr.bf16.mxu0 0
        %5849 = vmatpush2.bf16.msra.mxu0 0
        %5850 = vmatprep.subr.bf16.mxu0 0
        %5851 = vmatpush2.bf16.msra.mxu0 0
        %5852 = vmatprep.subr.bf16.mxu0 0
        %5853 = vmatpush2.bf16.msra.mxu0 0
        %5854 = vmatprep.subr.bf16.mxu0 0
        %5855 = vmatpush2.bf16.msra.mxu0 0
        %5856 = vmatprep.subr.bf16.mxu0 0
        %5857 = vmatpush2.bf16.msra.mxu0 0
        %5858 = vmatprep.subr.bf16.mxu0 0
        %5859 = vmatpush2.bf16.msra.mxu0 0
        %5860 = vmatprep.subr.bf16.mxu0 0
        %5861 = vmatpush2.bf16.msra.mxu0 0
        %5862 = vmatprep.mubr.bf16.mxu0 0
        %5863 = vmatmul.mubr.bf16.gmra.mxu0 %v5516
        %v5864 = vpop.f32.mrf.mxu0
        %v5865 = vadd.f32 0.0, %v5864
        %v5866 = vpop.f32.mrf.mxu0
        %v5867 = vadd.f32 0.0, %v5866
        %v5868 = vpop.f32.mrf.mxu0
        %v5869 = vadd.f32 0.0, %v5868
        %v5870 = vpop.f32.mrf.mxu0
        %v5871 = vadd.f32 0.0, %v5870
        %5872 = vdwg.mxu0
        %5873 = vmatprep.subr.bf16.mxu0 0
        %5874 = vmatpush1.bf16.msra.mxu0 0
        %5875 = vmatprep.subr.bf16.mxu0 0
        %5876 = vmatpush1.bf16.msra.mxu0 0
        %5877 = vmatprep.subr.bf16.mxu0 0
        %5878 = vmatpush1.bf16.msra.mxu0 0
        %5879 = vmatprep.subr.bf16.mxu0 0
        %5880 = vmatpush1.bf16.msra.mxu0 0
        %5881 = vmatprep.subr.bf16.mxu0 0
        %5882 = vmatpush1.bf16.msra.mxu0 0
        %5883 = vmatprep.subr.bf16.mxu0 0
        %5884 = vmatpush1.bf16.msra.mxu0 0
        %5885 = vmatprep.subr.bf16.mxu0 %v5564
        %5886 = vmatpush1.bf16.msra.mxu0 %v5561
        %5887 = vmatprep.subr.bf16.mxu0 %v5476
        %5888 = vmatpush1.bf16.msra.mxu0 %v5475
        %5889 = vmatprep.subr.bf16.mxu0 0
        %5890 = vmatpush2.bf16.msra.mxu0 0
        %5891 = vmatprep.subr.bf16.mxu0 0
        %5892 = vmatpush2.bf16.msra.mxu0 0
        %5893 = vmatprep.subr.bf16.mxu0 0
        %5894 = vmatpush2.bf16.msra.mxu0 0
        %5895 = vmatprep.subr.bf16.mxu0 0
        %5896 = vmatpush2.bf16.msra.mxu0 0
        %5897 = vmatprep.subr.bf16.mxu0 0
        %5898 = vmatpush2.bf16.msra.mxu0 0
        %5899 = vmatprep.subr.bf16.mxu0 0
        %5900 = vmatpush2.bf16.msra.mxu0 0
        %5901 = vmatprep.subr.bf16.mxu0 0
        %5902 = vmatpush2.bf16.msra.mxu0 0
        %5903 = vmatprep.subr.bf16.mxu0 0
        %5904 = vmatpush2.bf16.msra.mxu0 0
        %5905 = vmatprep.mubr.bf16.mxu0 0
        %5906 = vmatmul.mubr.bf16.gmra.mxu0 %v5516
        %v5907 = vpop.f32.mrf.mxu0
        %v5908 = vadd.f32 0.0, %v5907
        %v5909 = vpop.f32.mrf.mxu0
        %v5910 = vadd.f32 0.0, %v5909
        %v5911 = vpop.f32.mrf.mxu0
        %v5912 = vadd.f32 0.0, %v5911
        %v5913 = vpop.f32.mrf.mxu0
        %v5914 = vadd.f32 0.0, %v5913
        %5915 = vdwg.mxu0
        %5916 = vmatprep.subr.bf16.mxu0 0
        %5917 = vmatpush1.bf16.msra.mxu0 0
        %5918 = vmatprep.subr.bf16.mxu0 0
        %5919 = vmatpush1.bf16.msra.mxu0 0
        %5920 = vmatprep.subr.bf16.mxu0 0
        %5921 = vmatpush1.bf16.msra.mxu0 0
        %5922 = vmatprep.subr.bf16.mxu0 0
        %5923 = vmatpush1.bf16.msra.mxu0 0
        %5924 = vmatprep.subr.bf16.mxu0 0
        %5925 = vmatpush1.bf16.msra.mxu0 0
        %5926 = vmatprep.subr.bf16.mxu0 0
        %5927 = vmatpush1.bf16.msra.mxu0 0
        %5928 = vmatprep.subr.bf16.mxu0 %v5570
        %5929 = vmatpush1.bf16.msra.mxu0 %v5567
        %5930 = vmatprep.subr.bf16.mxu0 %v5478
        %5931 = vmatpush1.bf16.msra.mxu0 %v5477
        %5932 = vmatprep.subr.bf16.mxu0 0
        %5933 = vmatpush2.bf16.msra.mxu0 0
        %5934 = vmatprep.subr.bf16.mxu0 0
        %5935 = vmatpush2.bf16.msra.mxu0 0
        %5936 = vmatprep.subr.bf16.mxu0 0
        %5937 = vmatpush2.bf16.msra.mxu0 0
        %5938 = vmatprep.subr.bf16.mxu0 0
        %5939 = vmatpush2.bf16.msra.mxu0 0
        %5940 = vmatprep.subr.bf16.mxu0 0
        %5941 = vmatpush2.bf16.msra.mxu0 0
        %5942 = vmatprep.subr.bf16.mxu0 0
        %5943 = vmatpush2.bf16.msra.mxu0 0
        %5944 = vmatprep.subr.bf16.mxu0 0
        %5945 = vmatpush2.bf16.msra.mxu0 0
        %5946 = vmatprep.subr.bf16.mxu0 0
        %5947 = vmatpush2.bf16.msra.mxu0 0
        %5948 = vmatprep.mubr.bf16.mxu0 0
        %5949 = vmatmul.mubr.bf16.gmra.mxu0 %v5516
        %v5950 = vpop.f32.mrf.mxu0
        %v5951 = vadd.f32 0.0, %v5950
        %v5952 = vpop.f32.mrf.mxu0
        %v5953 = vadd.f32 0.0, %v5952
        %v5954 = vpop.f32.mrf.mxu0
        %v5955 = vadd.f32 0.0, %v5954
        %v5956 = vpop.f32.mrf.mxu0
        %v5957 = vadd.f32 0.0, %v5956
        %5958 = vdwg.mxu0
        %v5959 = vmax.f32 %v1330, %v1941
        %v5960 = vmax.f32 %v5959, %v2552
        %v5961 = vmax.f32 %v5960, %v3163
        %v5962 = vmax.f32 %v1332, %v1943
        %v5963 = vmax.f32 %v5962, %v2554
        %v5964 = vmax.f32 %v5963, %v3165
        %v5965 = vmax.f32 %v1373, %v1984
        %v5966 = vmax.f32 %v5965, %v2595
        %v5967 = vmax.f32 %v5966, %v3206
        %v5968 = vmax.f32 %v1375, %v1986
        %v5969 = vmax.f32 %v5968, %v2597
        %v5970 = vmax.f32 %v5969, %v3208
        %v5971 = vmax.f32 %v1416, %v2027
        %v5972 = vmax.f32 %v5971, %v2638
        %v5973 = vmax.f32 %v5972, %v3249
        %v5974 = vmax.f32 %v1418, %v2029
        %v5975 = vmax.f32 %v5974, %v2640
        %v5976 = vmax.f32 %v5975, %v3251
        %v5977 = vmax.f32 %v1459, %v2070
        %v5978 = vmax.f32 %v5977, %v2681
        %v5979 = vmax.f32 %v5978, %v3292
        %v5980 = vmax.f32 %v1461, %v2072
        %v5981 = vmax.f32 %v5980, %v2683
        %v5982 = vmax.f32 %v5981, %v3294
        %v5983 = vmax.f32 %v1502, %v2113
        %v5984 = vmax.f32 %v5983, %v2724
        %v5985 = vmax.f32 %v5984, %v3335
        %v5986 = vmax.f32 %v1504, %v2115
        %v5987 = vmax.f32 %v5986, %v2726
        %v5988 = vmax.f32 %v5987, %v3337
        %v5989 = vmax.f32 %v1545, %v2156
        %v5990 = vmax.f32 %v5989, %v2767
        %v5991 = vmax.f32 %v5990, %v3378
        %v5992 = vmax.f32 %v1547, %v2158
        %v5993 = vmax.f32 %v5992, %v2769
        %v5994 = vmax.f32 %v5993, %v3380
        %v5995 = vmax.f32 %v1588, %v2199
        %v5996 = vmax.f32 %v5995, %v2810
        %v5997 = vmax.f32 %v5996, %v3421
        %v5998 = vmax.f32 %v1590, %v2201
        %v5999 = vmax.f32 %v5998, %v2812
        %v6000 = vmax.f32 %v5999, %v3423
        %v6001 = vmax.f32 %v1631, %v2242
        %v6002 = vmax.f32 %v6001, %v2853
        %v6003 = vmax.f32 %v6002, %v3464
        %v6004 = vmax.f32 %v1633, %v2244
        %v6005 = vmax.f32 %v6004, %v2855
        %v6006 = vmax.f32 %v6005, %v3466
        %v6007 = vmax.f32 %v1674, %v2285
        %v6008 = vmax.f32 %v6007, %v2896
        %v6009 = vmax.f32 %v6008, %v3507
        %v6010 = vmax.f32 %v1676, %v2287
        %v6011 = vmax.f32 %v6010, %v2898
        %v6012 = vmax.f32 %v6011, %v3509
        %vm6013 = vcmask 1041408
        %v6014 = vsel %vm6013, %v1334, -inf
        %v6015 = vsel %vm6013, %v1945, -inf
        %v6016 = vmax.f32 %v6014, %v6015
        %v6017 = vsel %vm6013, %v2556, -inf
        %v6018 = vmax.f32 %v6016, %v6017
        %v6019 = vsel %vm6013, %v3167, -inf
        %v6020 = vmax.f32 %v6018, %v6019
        %v6021 = vsel %vm6013, %v1336, -inf
        %v6022 = vsel %vm6013, %v1947, -inf
        %v6023 = vmax.f32 %v6021, %v6022
        %v6024 = vsel %vm6013, %v2558, -inf
        %v6025 = vmax.f32 %v6023, %v6024
        %v6026 = vsel %vm6013, %v3169, -inf
        %v6027 = vmax.f32 %v6025, %v6026
        %v6028 = vsel %vm6013, %v1377, -inf
        %v6029 = vsel %vm6013, %v1988, -inf
        %v6030 = vmax.f32 %v6028, %v6029
        %v6031 = vsel %vm6013, %v2599, -inf
        %v6032 = vmax.f32 %v6030, %v6031
        %v6033 = vsel %vm6013, %v3210, -inf
        %v6034 = vmax.f32 %v6032, %v6033
        %v6035 = vsel %vm6013, %v1379, -inf
        %v6036 = vsel %vm6013, %v1990, -inf
        %v6037 = vmax.f32 %v6035, %v6036
        %v6038 = vsel %vm6013, %v2601, -inf
        %v6039 = vmax.f32 %v6037, %v6038
        %v6040 = vsel %vm6013, %v3212, -inf
        %v6041 = vmax.f32 %v6039, %v6040
        %v6042 = vsel %vm6013, %v1420, -inf
        %v6043 = vsel %vm6013, %v2031, -inf
        %v6044 = vmax.f32 %v6042, %v6043
        %v6045 = vsel %vm6013, %v2642, -inf
        %v6046 = vmax.f32 %v6044, %v6045
        %v6047 = vsel %vm6013, %v3253, -inf
        %v6048 = vmax.f32 %v6046, %v6047
        %v6049 = vsel %vm6013, %v1422, -inf
        %v6050 = vsel %vm6013, %v2033, -inf
        %v6051 = vmax.f32 %v6049, %v6050
        %v6052 = vsel %vm6013, %v2644, -inf
        %v6053 = vmax.f32 %v6051, %v6052
        %v6054 = vsel %vm6013, %v3255, -inf
        %v6055 = vmax.f32 %v6053, %v6054
        %v6056 = vsel %vm6013, %v1463, -inf
        %v6057 = vsel %vm6013, %v2074, -inf
        %v6058 = vmax.f32 %v6056, %v6057
        %v6059 = vsel %vm6013, %v2685, -inf
        %v6060 = vmax.f32 %v6058, %v6059
        %v6061 = vsel %vm6013, %v3296, -inf
        %v6062 = vmax.f32 %v6060, %v6061
        %v6063 = vsel %vm6013, %v1465, -inf
        %v6064 = vsel %vm6013, %v2076, -inf
        %v6065 = vmax.f32 %v6063, %v6064
        %v6066 = vsel %vm6013, %v2687, -inf
        %v6067 = vmax.f32 %v6065, %v6066
        %v6068 = vsel %vm6013, %v3298, -inf
        %v6069 = vmax.f32 %v6067, %v6068
        %v6070 = vsel %vm6013, %v1506, -inf
        %v6071 = vsel %vm6013, %v2117, -inf
        %v6072 = vmax.f32 %v6070, %v6071
        %v6073 = vsel %vm6013, %v2728, -inf
        %v6074 = vmax.f32 %v6072, %v6073
        %v6075 = vsel %vm6013, %v3339, -inf
        %v6076 = vmax.f32 %v6074, %v6075
        %v6077 = vsel %vm6013, %v1508, -inf
        %v6078 = vsel %vm6013, %v2119, -inf
        %v6079 = vmax.f32 %v6077, %v6078
        %v6080 = vsel %vm6013, %v2730, -inf
        %v6081 = vmax.f32 %v6079, %v6080
        %v6082 = vsel %vm6013, %v3341, -inf
        %v6083 = vmax.f32 %v6081, %v6082
        %v6084 = vsel %vm6013, %v1549, -inf
        %v6085 = vsel %vm6013, %v2160, -inf
        %v6086 = vmax.f32 %v6084, %v6085
        %v6087 = vsel %vm6013, %v2771, -inf
        %v6088 = vmax.f32 %v6086, %v6087
        %v6089 = vsel %vm6013, %v3382, -inf
        %v6090 = vmax.f32 %v6088, %v6089
        %v6091 = vsel %vm6013, %v1551, -inf
        %v6092 = vsel %vm6013, %v2162, -inf
        %v6093 = vmax.f32 %v6091, %v6092
        %v6094 = vsel %vm6013, %v2773, -inf
        %v6095 = vmax.f32 %v6093, %v6094
        %v6096 = vsel %vm6013, %v3384, -inf
        %v6097 = vmax.f32 %v6095, %v6096
        %v6098 = vsel %vm6013, %v1592, -inf
        %v6099 = vsel %vm6013, %v2203, -inf
        %v6100 = vmax.f32 %v6098, %v6099
        %v6101 = vsel %vm6013, %v2814, -inf
        %v6102 = vmax.f32 %v6100, %v6101
        %v6103 = vsel %vm6013, %v3425, -inf
        %v6104 = vmax.f32 %v6102, %v6103
        %v6105 = vsel %vm6013, %v1594, -inf
        %v6106 = vsel %vm6013, %v2205, -inf
        %v6107 = vmax.f32 %v6105, %v6106
        %v6108 = vsel %vm6013, %v2816, -inf
        %v6109 = vmax.f32 %v6107, %v6108
        %v6110 = vsel %vm6013, %v3427, -inf
        %v6111 = vmax.f32 %v6109, %v6110
        %v6112 = vsel %vm6013, %v1635, -inf
        %v6113 = vsel %vm6013, %v2246, -inf
        %v6114 = vmax.f32 %v6112, %v6113
        %v6115 = vsel %vm6013, %v2857, -inf
        %v6116 = vmax.f32 %v6114, %v6115
        %v6117 = vsel %vm6013, %v3468, -inf
        %v6118 = vmax.f32 %v6116, %v6117
        %v6119 = vsel %vm6013, %v1637, -inf
        %v6120 = vsel %vm6013, %v2248, -inf
        %v6121 = vmax.f32 %v6119, %v6120
        %v6122 = vsel %vm6013, %v2859, -inf
        %v6123 = vmax.f32 %v6121, %v6122
        %v6124 = vsel %vm6013, %v3470, -inf
        %v6125 = vmax.f32 %v6123, %v6124
        %v6126 = vsel %vm6013, %v1678, -inf
        %v6127 = vsel %vm6013, %v2289, -inf
        %v6128 = vmax.f32 %v6126, %v6127
        %v6129 = vsel %vm6013, %v2900, -inf
        %v6130 = vmax.f32 %v6128, %v6129
        %v6131 = vsel %vm6013, %v3511, -inf
        %v6132 = vmax.f32 %v6130, %v6131
        %v6133 = vsel %vm6013, %v1680, -inf
        %v6134 = vsel %vm6013, %v2291, -inf
        %v6135 = vmax.f32 %v6133, %v6134
        %v6136 = vsel %vm6013, %v2902, -inf
        %v6137 = vmax.f32 %v6135, %v6136
        %v6138 = vsel %vm6013, %v3513, -inf
        %v6139 = vmax.f32 %v6137, %v6138
        %v6140 = vmax.f32 %v3774, %v4385
        %v6141 = vmax.f32 %v6140, %v4996
        %v6142 = vmax.f32 %v6141, %v5607
        %v6143 = vmax.f32 %v3776, %v4387
        %v6144 = vmax.f32 %v6143, %v4998
        %v6145 = vmax.f32 %v6144, %v5609
        %v6146 = vmax.f32 %v3817, %v4428
        %v6147 = vmax.f32 %v6146, %v5039
        %v6148 = vmax.f32 %v6147, %v5650
        %v6149 = vmax.f32 %v3819, %v4430
        %v6150 = vmax.f32 %v6149, %v5041
        %v6151 = vmax.f32 %v6150, %v5652
        %v6152 = vmax.f32 %v3860, %v4471
        %v6153 = vmax.f32 %v6152, %v5082
        %v6154 = vmax.f32 %v6153, %v5693
        %v6155 = vmax.f32 %v3862, %v4473
        %v6156 = vmax.f32 %v6155, %v5084
        %v6157 = vmax.f32 %v6156, %v5695
        %v6158 = vmax.f32 %v3903, %v4514
        %v6159 = vmax.f32 %v6158, %v5125
        %v6160 = vmax.f32 %v6159, %v5736
        %v6161 = vmax.f32 %v3905, %v4516
        %v6162 = vmax.f32 %v6161, %v5127
        %v6163 = vmax.f32 %v6162, %v5738
        %v6164 = vmax.f32 %v3946, %v4557
        %v6165 = vmax.f32 %v6164, %v5168
        %v6166 = vmax.f32 %v6165, %v5779
        %v6167 = vmax.f32 %v3948, %v4559
        %v6168 = vmax.f32 %v6167, %v5170
        %v6169 = vmax.f32 %v6168, %v5781
        %v6170 = vmax.f32 %v3989, %v4600
        %v6171 = vmax.f32 %v6170, %v5211
        %v6172 = vmax.f32 %v6171, %v5822
        %v6173 = vmax.f32 %v3991, %v4602
        %v6174 = vmax.f32 %v6173, %v5213
        %v6175 = vmax.f32 %v6174, %v5824
        %v6176 = vmax.f32 %v4032, %v4643
        %v6177 = vmax.f32 %v6176, %v5254
        %v6178 = vmax.f32 %v6177, %v5865
        %v6179 = vmax.f32 %v4034, %v4645
        %v6180 = vmax.f32 %v6179, %v5256
        %v6181 = vmax.f32 %v6180, %v5867
        %v6182 = vmax.f32 %v4075, %v4686
        %v6183 = vmax.f32 %v6182, %v5297
        %v6184 = vmax.f32 %v6183, %v5908
        %v6185 = vmax.f32 %v4077, %v4688
        %v6186 = vmax.f32 %v6185, %v5299
        %v6187 = vmax.f32 %v6186, %v5910
        %v6188 = vmax.f32 %v4118, %v4729
        %v6189 = vmax.f32 %v6188, %v5340
        %v6190 = vmax.f32 %v6189, %v5951
        %v6191 = vmax.f32 %v4120, %v4731
        %v6192 = vmax.f32 %v6191, %v5342
        %v6193 = vmax.f32 %v6192, %v5953
        %v6194 = vsel %vm6013, %v3778, -inf
        %v6195 = vsel %vm6013, %v4389, -inf
        %v6196 = vmax.f32 %v6194, %v6195
        %v6197 = vsel %vm6013, %v5000, -inf
        %v6198 = vmax.f32 %v6196, %v6197
        %v6199 = vsel %vm6013, %v5611, -inf
        %v6200 = vmax.f32 %v6198, %v6199
        %v6201 = vsel %vm6013, %v3780, -inf
        %v6202 = vsel %vm6013, %v4391, -inf
        %v6203 = vmax.f32 %v6201, %v6202
        %v6204 = vsel %vm6013, %v5002, -inf
        %v6205 = vmax.f32 %v6203, %v6204
        %v6206 = vsel %vm6013, %v5613, -inf
        %v6207 = vmax.f32 %v6205, %v6206
        %v6208 = vsel %vm6013, %v3821, -inf
        %v6209 = vsel %vm6013, %v4432, -inf
        %v6210 = vmax.f32 %v6208, %v6209
        %v6211 = vsel %vm6013, %v5043, -inf
        %v6212 = vmax.f32 %v6210, %v6211
        %v6213 = vsel %vm6013, %v5654, -inf
        %v6214 = vmax.f32 %v6212, %v6213
        %v6215 = vsel %vm6013, %v3823, -inf
        %v6216 = vsel %vm6013, %v4434, -inf
        %v6217 = vmax.f32 %v6215, %v6216
        %v6218 = vsel %vm6013, %v5045, -inf
        %v6219 = vmax.f32 %v6217, %v6218
        %v6220 = vsel %vm6013, %v5656, -inf
        %v6221 = vmax.f32 %v6219, %v6220
        %v6222 = vsel %vm6013, %v3864, -inf
        %v6223 = vsel %vm6013, %v4475, -inf
        %v6224 = vmax.f32 %v6222, %v6223
        %v6225 = vsel %vm6013, %v5086, -inf
        %v6226 = vmax.f32 %v6224, %v6225
        %v6227 = vsel %vm6013, %v5697, -inf
        %v6228 = vmax.f32 %v6226, %v6227
        %v6229 = vsel %vm6013, %v3866, -inf
        %v6230 = vsel %vm6013, %v4477, -inf
        %v6231 = vmax.f32 %v6229, %v6230
        %v6232 = vsel %vm6013, %v5088, -inf
        %v6233 = vmax.f32 %v6231, %v6232
        %v6234 = vsel %vm6013, %v5699, -inf
        %v6235 = vmax.f32 %v6233, %v6234
        %v6236 = vsel %vm6013, %v3907, -inf
        %v6237 = vsel %vm6013, %v4518, -inf
        %v6238 = vmax.f32 %v6236, %v6237
        %v6239 = vsel %vm6013, %v5129, -inf
        %v6240 = vmax.f32 %v6238, %v6239
        %v6241 = vsel %vm6013, %v5740, -inf
        %v6242 = vmax.f32 %v6240, %v6241
        %v6243 = vsel %vm6013, %v3909, -inf
        %v6244 = vsel %vm6013, %v4520, -inf
        %v6245 = vmax.f32 %v6243, %v6244
        %v6246 = vsel %vm6013, %v5131, -inf
        %v6247 = vmax.f32 %v6245, %v6246
        %v6248 = vsel %vm6013, %v5742, -inf
        %v6249 = vmax.f32 %v6247, %v6248
        %v6250 = vsel %vm6013, %v3950, -inf
        %v6251 = vsel %vm6013, %v4561, -inf
        %v6252 = vmax.f32 %v6250, %v6251
        %v6253 = vsel %vm6013, %v5172, -inf
        %v6254 = vmax.f32 %v6252, %v6253
        %v6255 = vsel %vm6013, %v5783, -inf
        %v6256 = vmax.f32 %v6254, %v6255
        %v6257 = vsel %vm6013, %v3952, -inf
        %v6258 = vsel %vm6013, %v4563, -inf
        %v6259 = vmax.f32 %v6257, %v6258
        %v6260 = vsel %vm6013, %v5174, -inf
        %v6261 = vmax.f32 %v6259, %v6260
        %v6262 = vsel %vm6013, %v5785, -inf
        %v6263 = vmax.f32 %v6261, %v6262
        %v6264 = vsel %vm6013, %v3993, -inf
        %v6265 = vsel %vm6013, %v4604, -inf
        %v6266 = vmax.f32 %v6264, %v6265
        %v6267 = vsel %vm6013, %v5215, -inf
        %v6268 = vmax.f32 %v6266, %v6267
        %v6269 = vsel %vm6013, %v5826, -inf
        %v6270 = vmax.f32 %v6268, %v6269
        %v6271 = vsel %vm6013, %v3995, -inf
        %v6272 = vsel %vm6013, %v4606, -inf
        %v6273 = vmax.f32 %v6271, %v6272
        %v6274 = vsel %vm6013, %v5217, -inf
        %v6275 = vmax.f32 %v6273, %v6274
        %v6276 = vsel %vm6013, %v5828, -inf
        %v6277 = vmax.f32 %v6275, %v6276
        %v6278 = vsel %vm6013, %v4036, -inf
        %v6279 = vsel %vm6013, %v4647, -inf
        %v6280 = vmax.f32 %v6278, %v6279
        %v6281 = vsel %vm6013, %v5258, -inf
        %v6282 = vmax.f32 %v6280, %v6281
        %v6283 = vsel %vm6013, %v5869, -inf
        %v6284 = vmax.f32 %v6282, %v6283
        %v6285 = vsel %vm6013, %v4038, -inf
        %v6286 = vsel %vm6013, %v4649, -inf
        %v6287 = vmax.f32 %v6285, %v6286
        %v6288 = vsel %vm6013, %v5260, -inf
        %v6289 = vmax.f32 %v6287, %v6288
        %v6290 = vsel %vm6013, %v5871, -inf
        %v6291 = vmax.f32 %v6289, %v6290
        %v6292 = vsel %vm6013, %v4079, -inf
        %v6293 = vsel %vm6013, %v4690, -inf
        %v6294 = vmax.f32 %v6292, %v6293
        %v6295 = vsel %vm6013, %v5301, -inf
        %v6296 = vmax.f32 %v6294, %v6295
        %v6297 = vsel %vm6013, %v5912, -inf
        %v6298 = vmax.f32 %v6296, %v6297
        %v6299 = vsel %vm6013, %v4081, -inf
        %v6300 = vsel %vm6013, %v4692, -inf
        %v6301 = vmax.f32 %v6299, %v6300
        %v6302 = vsel %vm6013, %v5303, -inf
        %v6303 = vmax.f32 %v6301, %v6302
        %v6304 = vsel %vm6013, %v5914, -inf
        %v6305 = vmax.f32 %v6303, %v6304
        %v6306 = vsel %vm6013, %v4122, -inf
        %v6307 = vsel %vm6013, %v4733, -inf
        %v6308 = vmax.f32 %v6306, %v6307
        %v6309 = vsel %vm6013, %v5344, -inf
        %v6310 = vmax.f32 %v6308, %v6309
        %v6311 = vsel %vm6013, %v5955, -inf
        %v6312 = vmax.f32 %v6310, %v6311
        %v6313 = vsel %vm6013, %v4124, -inf
        %v6314 = vsel %vm6013, %v4735, -inf
        %v6315 = vmax.f32 %v6313, %v6314
        %v6316 = vsel %vm6013, %v5346, -inf
        %v6317 = vmax.f32 %v6315, %v6316
        %v6318 = vsel %vm6013, %v5957, -inf
        %v6319 = vmax.f32 %v6317, %v6318
        %v6320 = vld [vmem:[%s2] sm:$0xff]
        %v6321 = vld [vmem:[%s2 + $0x8] sm:$0x3]
        %v6322 = vld [vmem:[%s2 + $0x10] sm:$0xff]
        %v6323 = vld [vmem:[%s2 + $0x18] sm:$0x3]
        %6325 = vset.pattern.permute.xlu0 0
        %6326 = vperm.xlu0 %6325, %v6320
        %v6327 = vpop.permute.xlu0 %6326
        %6330 = vset.pattern.permute.xlu0 0
        %6331 = vperm.xlu0 %6330, %v6321
        %v6332 = vpop.permute.xlu0 %6331
        %6335 = vset.pattern.permute.xlu0 0
        %6336 = vperm.xlu0 %6335, %v6322
        %v6337 = vpop.permute.xlu0 %6336
        %6340 = vset.pattern.permute.xlu0 0
        %6341 = vperm.xlu0 %6340, %v6323
        %v6342 = vpop.permute.xlu0 %6341
        %v6344 = vadd.f32 %v5961, %v6327
        %v6345 = vadd.f32 %v5964, %v6327
        %v6346 = vadd.f32 %v5967, %v6327
        %v6347 = vadd.f32 %v5970, %v6327
        %v6348 = vadd.f32 %v5973, %v6327
        %v6349 = vadd.f32 %v5976, %v6327
        %v6350 = vadd.f32 %v5979, %v6327
        %v6351 = vadd.f32 %v5982, %v6327
        %v6352 = vadd.f32 %v5985, %v6327
        %v6353 = vadd.f32 %v5988, %v6327
        %v6354 = vadd.f32 %v5991, %v6327
        %v6355 = vadd.f32 %v5994, %v6327
        %v6356 = vadd.f32 %v5997, %v6327
        %v6357 = vadd.f32 %v6000, %v6327
        %v6358 = vadd.f32 %v6003, %v6327
        %v6359 = vadd.f32 %v6006, %v6327
        %v6360 = vadd.f32 %v6009, %v6327
        %v6361 = vadd.f32 %v6012, %v6327
        %v6362 = vadd.f32 %v6020, %v6332
        %v6363 = vadd.f32 %v6027, %v6332
        %v6364 = vadd.f32 %v6034, %v6332
        %v6365 = vadd.f32 %v6041, %v6332
        %v6366 = vadd.f32 %v6048, %v6332
        %v6367 = vadd.f32 %v6055, %v6332
        %v6368 = vadd.f32 %v6062, %v6332
        %v6369 = vadd.f32 %v6069, %v6332
        %v6370 = vadd.f32 %v6076, %v6332
        %v6371 = vadd.f32 %v6083, %v6332
        %v6372 = vadd.f32 %v6090, %v6332
        %v6373 = vadd.f32 %v6097, %v6332
        %v6374 = vadd.f32 %v6104, %v6332
        %v6375 = vadd.f32 %v6111, %v6332
        %v6376 = vadd.f32 %v6118, %v6332
        %v6377 = vadd.f32 %v6125, %v6332
        %v6378 = vadd.f32 %v6132, %v6332
        %v6379 = vadd.f32 %v6139, %v6332
        %v6380 = vadd.f32 %v6142, %v6337
        %v6381 = vadd.f32 %v6145, %v6337
        %v6382 = vadd.f32 %v6148, %v6337
        %v6383 = vadd.f32 %v6151, %v6337
        %v6384 = vadd.f32 %v6154, %v6337
        %v6385 = vadd.f32 %v6157, %v6337
        %v6386 = vadd.f32 %v6160, %v6337
        %v6387 = vadd.f32 %v6163, %v6337
        %v6388 = vadd.f32 %v6166, %v6337
        %v6389 = vadd.f32 %v6169, %v6337
        %v6390 = vadd.f32 %v6172, %v6337
        %v6391 = vadd.f32 %v6175, %v6337
        %v6392 = vadd.f32 %v6178, %v6337
        %v6393 = vadd.f32 %v6181, %v6337
        %v6394 = vadd.f32 %v6184, %v6337
        %v6395 = vadd.f32 %v6187, %v6337
        %v6396 = vadd.f32 %v6190, %v6337
        %v6397 = vadd.f32 %v6193, %v6337
        %v6398 = vadd.f32 %v6200, %v6342
        %v6399 = vadd.f32 %v6207, %v6342
        %v6400 = vadd.f32 %v6214, %v6342
        %v6401 = vadd.f32 %v6221, %v6342
        %v6402 = vadd.f32 %v6228, %v6342
        %v6403 = vadd.f32 %v6235, %v6342
        %v6404 = vadd.f32 %v6242, %v6342
        %v6405 = vadd.f32 %v6249, %v6342
        %v6406 = vadd.f32 %v6256, %v6342
        %v6407 = vadd.f32 %v6263, %v6342
        %v6408 = vadd.f32 %v6270, %v6342
        %v6409 = vadd.f32 %v6277, %v6342
        %v6410 = vadd.f32 %v6284, %v6342
        %v6411 = vadd.f32 %v6291, %v6342
        %v6412 = vadd.f32 %v6298, %v6342
        %v6413 = vadd.f32 %v6305, %v6342
        %v6414 = vadd.f32 %v6312, %v6342
        %v6415 = vadd.f32 %v6319, %v6342
        %v6416 = vmax.f32 %v6344, 0.0
        %v6417 = vmax.f32 %v6345, 0.0
        %v6418 = vmax.f32 %v6346, 0.0
        %v6419 = vmax.f32 %v6347, 0.0
        %v6420 = vmax.f32 %v6348, 0.0
        %v6421 = vmax.f32 %v6349, 0.0
        %v6422 = vmax.f32 %v6350, 0.0
        %v6423 = vmax.f32 %v6351, 0.0
        %v6424 = vmax.f32 %v6352, 0.0
        %v6425 = vmax.f32 %v6353, 0.0
        %v6426 = vmax.f32 %v6354, 0.0
        %v6427 = vmax.f32 %v6355, 0.0
        %v6428 = vmax.f32 %v6356, 0.0
        %v6429 = vmax.f32 %v6357, 0.0
        %v6430 = vmax.f32 %v6358, 0.0
        %v6431 = vmax.f32 %v6359, 0.0
        %v6432 = vmax.f32 %v6360, 0.0
        %v6433 = vmax.f32 %v6361, 0.0
        %v6434 = vmax.f32 %v6362, 0.0
        %v6435 = vmax.f32 %v6363, 0.0
        %v6436 = vmax.f32 %v6364, 0.0
        %v6437 = vmax.f32 %v6365, 0.0
        %v6438 = vmax.f32 %v6366, 0.0
        %v6439 = vmax.f32 %v6367, 0.0
        %v6440 = vmax.f32 %v6368, 0.0
        %v6441 = vmax.f32 %v6369, 0.0
        %v6442 = vmax.f32 %v6370, 0.0
        %v6443 = vmax.f32 %v6371, 0.0
        %v6444 = vmax.f32 %v6372, 0.0
        %v6445 = vmax.f32 %v6373, 0.0
        %v6446 = vmax.f32 %v6374, 0.0
        %v6447 = vmax.f32 %v6375, 0.0
        %v6448 = vmax.f32 %v6376, 0.0
        %v6449 = vmax.f32 %v6377, 0.0
        %v6450 = vmax.f32 %v6378, 0.0
        %v6451 = vmax.f32 %v6379, 0.0
        %v6452 = vmax.f32 %v6380, 0.0
        %v6453 = vmax.f32 %v6381, 0.0
        %v6454 = vmax.f32 %v6382, 0.0
        %v6455 = vmax.f32 %v6383, 0.0
        %v6456 = vmax.f32 %v6384, 0.0
        %v6457 = vmax.f32 %v6385, 0.0
        %v6458 = vmax.f32 %v6386, 0.0
        %v6459 = vmax.f32 %v6387, 0.0
        %v6460 = vmax.f32 %v6388, 0.0
        %v6461 = vmax.f32 %v6389, 0.0
        %v6462 = vmax.f32 %v6390, 0.0
        %v6463 = vmax.f32 %v6391, 0.0
        %v6464 = vmax.f32 %v6392, 0.0
        %v6465 = vmax.f32 %v6393, 0.0
        %v6466 = vmax.f32 %v6394, 0.0
        %v6467 = vmax.f32 %v6395, 0.0
        %v6468 = vmax.f32 %v6396, 0.0
        %v6469 = vmax.f32 %v6397, 0.0
        %v6470 = vmax.f32 %v6398, 0.0
        %v6471 = vmax.f32 %v6399, 0.0
        %v6472 = vmax.f32 %v6400, 0.0
        %v6473 = vmax.f32 %v6401, 0.0
        %v6474 = vmax.f32 %v6402, 0.0
        %v6475 = vmax.f32 %v6403, 0.0
        %v6476 = vmax.f32 %v6404, 0.0
        %v6477 = vmax.f32 %v6405, 0.0
        %v6478 = vmax.f32 %v6406, 0.0
        %v6479 = vmax.f32 %v6407, 0.0
        %v6480 = vmax.f32 %v6408, 0.0
        %v6481 = vmax.f32 %v6409, 0.0
        %v6482 = vmax.f32 %v6410, 0.0
        %v6483 = vmax.f32 %v6411, 0.0
        %v6484 = vmax.f32 %v6412, 0.0
        %v6485 = vmax.f32 %v6413, 0.0
        %v6486 = vmax.f32 %v6414, 0.0
        %v6487 = vmax.f32 %v6415, 0.0
        %v6488 = vadd.f32 %v6416, %v6452
        %v6489 = vadd.f32 %v6417, %v6453
        %v6490 = vadd.f32 %v6418, %v6454
        %v6491 = vadd.f32 %v6419, %v6455
        %v6492 = vadd.f32 %v6420, %v6456
        %v6493 = vadd.f32 %v6421, %v6457
        %v6494 = vadd.f32 %v6422, %v6458
        %v6495 = vadd.f32 %v6423, %v6459
        %v6496 = vadd.f32 %v6424, %v6460
        %v6497 = vadd.f32 %v6425, %v6461
        %v6498 = vadd.f32 %v6426, %v6462
        %v6499 = vadd.f32 %v6427, %v6463
        %v6500 = vadd.f32 %v6428, %v6464
        %v6501 = vadd.f32 %v6429, %v6465
        %v6502 = vadd.f32 %v6430, %v6466
        %v6503 = vadd.f32 %v6431, %v6467
        %v6504 = vadd.f32 %v6432, %v6468
        %v6505 = vadd.f32 %v6433, %v6469
        %v6506 = vadd.f32 %v6434, %v6470
        %v6507 = vadd.f32 %v6435, %v6471
        %v6508 = vadd.f32 %v6436, %v6472
        %v6509 = vadd.f32 %v6437, %v6473
        %v6510 = vadd.f32 %v6438, %v6474
        %v6511 = vadd.f32 %v6439, %v6475
        %v6512 = vadd.f32 %v6440, %v6476
        %v6513 = vadd.f32 %v6441, %v6477
        %v6514 = vadd.f32 %v6442, %v6478
        %v6515 = vadd.f32 %v6443, %v6479
        %v6516 = vadd.f32 %v6444, %v6480
        %v6517 = vadd.f32 %v6445, %v6481
        %v6518 = vadd.f32 %v6446, %v6482
        %v6519 = vadd.f32 %v6447, %v6483
        %v6520 = vadd.f32 %v6448, %v6484
        %v6521 = vadd.f32 %v6449, %v6485
        %v6522 = vadd.f32 %v6450, %v6486
        %v6523 = vadd.f32 %v6451, %v6487
        %v6524 = vpack.c.bf16 %v6506, %v6488
        %v6525 = vpack.c.bf16 %v6507, %v6489
        %v6526 = vpack.c.bf16 %v6508, %v6490
        %v6527 = vpack.c.bf16 %v6509, %v6491
        %v6528 = vpack.c.bf16 %v6510, %v6492
        %v6529 = vpack.c.bf16 %v6511, %v6493
        %v6530 = vpack.c.bf16 %v6512, %v6494
        %v6531 = vpack.c.bf16 %v6513, %v6495
        %v6532 = vpack.c.bf16 %v6514, %v6496
        %v6533 = vpack.c.bf16 %v6515, %v6497
        %v6534 = vpack.c.bf16 %v6516, %v6498
        %v6535 = vpack.c.bf16 %v6517, %v6499
        %v6536 = vpack.c.bf16 %v6518, %v6500
        %v6537 = vpack.c.bf16 %v6519, %v6501
        %v6538 = vpack.c.bf16 %v6520, %v6502
        %v6539 = vpack.c.bf16 %v6521, %v6503
        %v6540 = vpack.c.bf16 %v6522, %v6504
        %v6541 = vpack.c.bf16 %v6523, %v6505
        %v6560 = vunpack.c.l.b16 %v6524
        %v6561 = vunpack.c.l.b16 %v6525
        %v6562 = vunpack.c.l.b16 %v6526
        %v6563 = vunpack.c.l.b16 %v6527
        %v6564 = vunpack.c.l.b16 %v6528
        %v6565 = vunpack.c.l.b16 %v6529
        %v6566 = vunpack.c.l.b16 %v6530
        %v6567 = vunpack.c.l.b16 %v6531
        %v6568 = vunpack.c.l.b16 %v6532
        %v6569 = vunpack.c.l.b16 %v6533
        %v6570 = vunpack.c.l.b16 %v6534
        %v6571 = vunpack.c.l.b16 %v6535
        %v6572 = vunpack.c.l.b16 %v6536
        %v6573 = vunpack.c.l.b16 %v6537
        %v6574 = vunpack.c.l.b16 %v6538
        %v6575 = vunpack.c.l.b16 %v6539
        %v6576 = vunpack.c.l.b16 %v6540
        %v6577 = vunpack.c.l.b16 %v6541
        %v6578 = vunpack.c.h.b16 %v6524
        %v6579 = vunpack.c.h.b16 %v6525
        %v6580 = vunpack.c.h.b16 %v6526
        %v6581 = vunpack.c.h.b16 %v6527
        %v6582 = vunpack.c.h.b16 %v6528
        %v6583 = vunpack.c.h.b16 %v6529
        %v6584 = vunpack.c.h.b16 %v6530
        %v6585 = vunpack.c.h.b16 %v6531
        %v6586 = vunpack.c.h.b16 %v6532
        %v6587 = vunpack.c.h.b16 %v6533
        %v6588 = vunpack.c.h.b16 %v6534
        %v6589 = vunpack.c.h.b16 %v6535
        %v6590 = vunpack.c.h.b16 %v6536
        %v6591 = vunpack.c.h.b16 %v6537
        %v6592 = vunpack.c.h.b16 %v6538
        %v6593 = vunpack.c.h.b16 %v6539
        %v6594 = vunpack.c.h.b16 %v6540
        %v6595 = vunpack.c.h.b16 %v6541
        %v6596 = vpack.c.b16 %v6561, %v6560
        %v6597 = vpack.c.b16 %v6563, %v6562
        %v6598 = vpack.c.b16 %v6565, %v6564
        %v6599 = vpack.c.b16 %v6567, %v6566
        %v6600 = vpack.c.b16 %v6569, %v6568
        %v6601 = vpack.c.b16 %v6571, %v6570
        %v6602 = vpack.c.b16 %v6573, %v6572
        %v6603 = vpack.c.b16 %v6575, %v6574
        %v6604 = vpack.c.b16 %v6577, %v6576
        %v6605 = vpack.c.b16 %v6579, %v6578
        %v6606 = vpack.c.b16 %v6581, %v6580
        %v6607 = vpack.c.b16 %v6583, %v6582
        %v6608 = vpack.c.b16 %v6585, %v6584
        %v6609 = vpack.c.b16 %v6587, %v6586
        %v6610 = vpack.c.b16 %v6589, %v6588
        %v6611 = vpack.c.b16 %v6591, %v6590
        %v6612 = vpack.c.b16 %v6593, %v6592
        %v6613 = vpack.c.b16 %v6595, %v6594
        %6632 = vst [vmem:[%s758] sm:$0xff] %v6596
        %6633 = vst [vmem:[%s758 + $0x8] sm:$0xff] %v6597
        %6634 = vst [vmem:[%s758 + $0x10] sm:$0xff] %v6598
        %6635 = vst [vmem:[%s758 + $0x18] sm:$0xff] %v6599
        %6636 = vst [vmem:[%s758 + $0x20] sm:$0xff] %v6600
        %6637 = vst [vmem:[%s758 + $0x28] sm:$0xff] %v6601
        %6638 = vst [vmem:[%s758 + $0x30] sm:$0xff] %v6602
        %6639 = vst [vmem:[%s758 + $0x38] sm:$0xff] %v6603
        %6640 = vst [vmem:[%s758 + $0x40] sm:$0xff] %v6604
        %6641 = vst [vmem:[%s758 + $0x48] sm:$0x11] %v6605
        %6642 = vst [vmem:[%s758 + $0x50] sm:$0x11] %v6606
        %6643 = vst [vmem:[%s758 + $0x58] sm:$0x11] %v6607
        %6644 = vst [vmem:[%s758 + $0x60] sm:$0x11] %v6608
        %6645 = vst [vmem:[%s758 + $0x68] sm:$0x11] %v6609
        %6646 = vst [vmem:[%s758 + $0x70] sm:$0x11] %v6610
        %6647 = vst [vmem:[%s758 + $0x78] sm:$0x11] %v6611
        %6648 = vst [vmem:[%s758 + $0x80] sm:$0x11] %v6612
        %6649 = vst [vmem:[%s758 + $0x88] sm:$0x11] %v6613
        %s6650 = sand.u32 %s90, 1
        %s6651 = sand.u32 %s90, 1
        %s6652 = smul.addr %s6651, 144
        %s6653 = scalar_lea.vmem [#allocation3], %s6652
        // Predicated region
        $region56: #{model_forward.2} parent=50 // pred_check
          %p6654 = pneg %p100
        $region57: #{model_forward.2} parent=50 // pred_check_branch
          %6656 = sbr.rel (%p6654) target = $region59
        $region58: #{model_forward.2} parent=50 // pred_region
          %s6657 = smul.u32 18, %s14
          %s6658 = smul.addr %s6657, 4
          %s6659 = scalar_lea.vmem %s3, %s6658
          // Predicated region
          $region60: #{model_forward.2} parent=58 // pred_check
            _
          $region61: #{model_forward.2} parent=58 // pred_check_branch
            %6661 = sbr.rel (0) target = $region63
          $region62: #{model_forward.2} parent=58 // pred_region
            // Predicated region
            $region64: #{model_forward.2} parent=62 // pred_check
              _
            $region65: #{model_forward.2} parent=62 // pred_check_branch
              %6663 = sbr.rel (0) target = $region67
            $region66: #{model_forward.2} parent=62 // pred_region
              loop: start=0, step=1, limit=1
              $region68: #{model_forward.2} parent=66 // loop_pre_header
                _
              $region69: #{model_forward.2} parent=66 // loop_header
                %s6665 = sphi 0, %s6669
                %p6666 = scmp.ge.s32.totalorder %s6665, 1
                %s6670 = sphi %s6653, %s6653
                %s6671 = sphi %s6659, %s6659
              $region70: #{model_forward.2} parent=66 // loop_header_branch
                %6668 = sbr.rel (%p6666) target = $region74
              $region71: #{model_forward.2} parent=66 // loop_body
                %v6672 = vld [vmem:[%s6670] sm:$0xff]
                %6673 = vst [vmem:[%s6671] sm:$0xff] %v6672
                %v6674 = vld [vmem:[%s6670 + $0x8] sm:$0xff]
                %6675 = vst [vmem:[%s6671 + $0x8] sm:$0xff] %v6674
                %v6676 = vld [vmem:[%s6670 + $0x10] sm:$0xff]
                %6677 = vst [vmem:[%s6671 + $0x10] sm:$0xff] %v6676
                %v6678 = vld [vmem:[%s6670 + $0x18] sm:$0xff]
                %6679 = vst [vmem:[%s6671 + $0x18] sm:$0xff] %v6678
                %v6680 = vld [vmem:[%s6670 + $0x20] sm:$0xff]
                %6681 = vst [vmem:[%s6671 + $0x20] sm:$0xff] %v6680
                %v6682 = vld [vmem:[%s6670 + $0x28] sm:$0xff]
                %6683 = vst [vmem:[%s6671 + $0x28] sm:$0xff] %v6682
                %v6684 = vld [vmem:[%s6670 + $0x30] sm:$0xff]
                %6685 = vst [vmem:[%s6671 + $0x30] sm:$0xff] %v6684
                %v6686 = vld [vmem:[%s6670 + $0x38] sm:$0xff]
                %6687 = vst [vmem:[%s6671 + $0x38] sm:$0xff] %v6686
                %v6688 = vld [vmem:[%s6670 + $0x40] sm:$0xff]
                %6689 = vst [vmem:[%s6671 + $0x40] sm:$0xff] %v6688
                %v6690 = vld [vmem:[%s6670 + $0x48] sm:$0xff]
                %6691 = vst [vmem:[%s6671 + $0x90] sm:$0xff] %v6690
                %v6692 = vld [vmem:[%s6670 + $0x50] sm:$0xff]
                %6693 = vst [vmem:[%s6671 + $0x98] sm:$0xff] %v6692
                %v6694 = vld [vmem:[%s6670 + $0x58] sm:$0xff]
                %6695 = vst [vmem:[%s6671 + $0xa0] sm:$0xff] %v6694
                %v6696 = vld [vmem:[%s6670 + $0x60] sm:$0xff]
                %6697 = vst [vmem:[%s6671 + $0xa8] sm:$0xff] %v6696
                %v6698 = vld [vmem:[%s6670 + $0x68] sm:$0xff]
                %6699 = vst [vmem:[%s6671 + $0xb0] sm:$0xff] %v6698
                %v6700 = vld [vmem:[%s6670 + $0x70] sm:$0xff]
                %6701 = vst [vmem:[%s6671 + $0xb8] sm:$0xff] %v6700
                %v6702 = vld [vmem:[%s6670 + $0x78] sm:$0xff]
                %6703 = vst [vmem:[%s6671 + $0xc0] sm:$0xff] %v6702
                %v6704 = vld [vmem:[%s6670 + $0x80] sm:$0xff]
                %6705 = vst [vmem:[%s6671 + $0xc8] sm:$0xff] %v6704
                %v6706 = vld [vmem:[%s6670 + $0x88] sm:$0xff]
                %6707 = vst [vmem:[%s6671 + $0xd0] sm:$0xff] %v6706
              $region72: #{model_forward.2} parent=66 // loop_footer
                %s6669 = sadd.s32 1, %s6665
              $region73: #{model_forward.2} parent=66 // loop_footer_branch
                %6664 = sbr.rel target = $region69
              $region74: #{model_forward.2} parent=66 // loop_exit
                _
            $region67: #{model_forward.2} parent=62 // pred_fallthru
              _
            // Predicated region
            $region75: #{model_forward.2} parent=62 // pred_check
              _
            $region76: #{model_forward.2} parent=62 // pred_check_branch
              %6709 = sbr.rel target = $region78
            $region77: #{model_forward.2} parent=62 // pred_region
              _
            $region78: #{model_forward.2} parent=62 // pred_fallthru
              _
          $region63: #{model_forward.2} parent=58 // pred_fallthru
            _
          %6710 = vnop
        $region59: #{model_forward.2} parent=50 // pred_fallthru
          _
      $region51: #{model_forward.2} parent=5 // pred_fallthru
        _
      %p6711 = scmp.le.s32.totalorder 2, %s9
      // Predicated region
      $region79: #{model_forward.2} parent=5 // pred_check
        %p6712 = pneg %p6711
      $region80: #{model_forward.2} parent=5 // pred_check_branch
        %6714 = sbr.rel (%p6712) target = $region82
      $region81: #{model_forward.2} parent=5 // pred_region
        %s6715 = ssub.s32 %s9, 2
        // Predicated region
        $region83: #{model_forward.2} parent=81 // pred_check
          %p6716 = pneg %p106
        $region84: #{model_forward.2} parent=81 // pred_check_branch
          %6718 = sbr.rel (%p6716) target = $region86
        $region85: #{model_forward.2} parent=81 // pred_region
          %s6719 = sand.u32 %s91, 1
          %s6720 = sand.u32 %s91, 1
          %s6721 = smul.addr %s6720, 144
          %s6722 = scalar_lea.vmem [#allocation3], %s6721
        $region86: #{model_forward.2} parent=81 // pred_fallthru
          _
      $region82: #{model_forward.2} parent=5 // pred_fallthru
        _
    $region6: #{model_forward.2} parent=1 // loop_footer
      %s13 = sadd.s32 1, %s9
    $region7: #{model_forward.2} parent=1 // loop_footer_branch
      %8 = sbr.rel target = $region3
    $region8: #{model_forward.2} parent=1 // loop_exit
      _

// kernel: model_forward.3
$region0: #{model_forward.3}
  #allocation0 [shape = 'u32[]', space=smem, size = 0x4, offset = 0x4, fixed_abs, tag = 'smem constant byte address 0x4 - core index']
  #allocation1 [shape = 'u32[144,128]{1,0:T(1,128)}', space=vmem, size = 0x12000, scoped, tag = 'internal scratch']
  %s0 = inlined_call_operand.vmem [shape: bf16[4,16,32,250], index: 0, kind: input, shape index: {}]
  %s1 = inlined_call_operand.vmem [shape: bf16[250,20], index: 1, kind: input, shape index: {}]
  %s2 = inlined_call_operand.vmem [shape: f32[1,1,20], index: 2, kind: input, shape index: {}]
  %s3 = inlined_call_operand.vmem [shape: bf16[16,20,50], index: 3, kind: input, shape index: {}]
  %s4 = inlined_call_operand.vmem [shape: f32[1,50], index: 4, kind: input, shape index: {}]
  %s5 = inlined_call_operand.vmem [shape: bf16[50,10], index: 5, kind: input, shape index: {}]
  %s6 = inlined_call_operand.vmem [shape: f32[1,10], index: 6, kind: input, shape index: {}]
  %s7 = inlined_call_operand.vmem [shape: f32[32,10], index: 7, kind: output, shape index: {}]
  %s8 = sld [smem:[#allocation0]]
  $region99: #{model_forward.3} parent=0
    _
  %s10 = ssub.s32 1, %s8
  %s11 = scalar_select 0, %s10, %s8
  $region1: #{model_forward.3} parent=0
    #allocation2 [shape = 'u8[1048576]{0}', space=vmem, size = 0x100000, scoped, tag = 'input window, operand 0']
    loop: start=0, step=1, limit=4
    $region2: #{model_forward.3} parent=1 // loop_pre_header
      _
    $region3: #{model_forward.3} parent=1 // loop_header
      %s13 = sphi 0, %s17
      %p14 = scmp.ge.s32.totalorder %s13, 4
      %s23 = sphi 0, %s25
      %s26 = sphi 0, %s23
      %s27 = sphi 0, %s26
      %s43 = sphi 0, %s27
      %s47 = sphi 0, %s47
      %s49 = sphi 0, %s47
      %s50 = sphi 0, %s49
      %s64 = sphi 0, %s50
      %s68 = sphi 0, %s68
      %s70 = sphi 0, %s68
      %s71 = sphi 0, %s70
      %s85 = sphi 0, %s71
      %s89 = sphi 0, %s89
      %s91 = sphi 0, %s89
      %s92 = sphi 0, %s91
      %s106 = sphi 0, %s92
      %s110 = sphi 0, %s110
      %s112 = sphi 0, %s110
      %s113 = sphi 0, %s112
      %s127 = sphi 0, %s113
      %s131 = sphi 0, %s131
      %s133 = sphi 0, %s131
      %s134 = sphi 0, %s133
      %s148 = sphi 0, %s134
      %s152 = sphi 0, %s152
      %s154 = sphi 0, %s152
      %s155 = sphi 0, %s154
      %s169 = sphi 0, %s155
      %s175 = sphi 0, %s177
      %s178 = sphi 0, %s175
      %s179 = sphi 0, %s178
      %s195 = sphi 0, %s179
    $region4: #{model_forward.3} parent=1 // loop_header_branch
      %16 = sbr.rel (%p14) target = $region8
    $region5: #{model_forward.3} parent=1 // loop_body
      %s18 = ssub.s32 %s13, 1
      %s19 = ssub.s32 %s13, 2
      %s20 = sadd.s32 %s13, 1
      %s21 = ssub.s32 %s13, %s20
      %p22 = scmp.eq.s32.totalorder %s21, 0
      %s24 = sadd.s32 %s23, 1
      %s25 = scalar_select %p22, %s23, %s24
      %p28 = pneg %p22
      %p29 = scmp.eq.s32.totalorder %s13, 1
      %p30 = por %p28, %p29
      %p31 = scmp.ne.s32.totalorder %s23, %s26
      %p32 = scmp.eq.s32.totalorder %s13, 0
      %p33 = por %p31, %p32
      %p34 = scmp.ne.s32.totalorder %s23, %s26
      %p35 = scmp.eq.s32.totalorder %s18, 1
      %p36 = por %p34, %p35
      %p37 = scmp.ne.s32.totalorder %s26, %s27
      %p38 = scmp.eq.s32.totalorder %s18, 0
      %p39 = por %p37, %p38
      %p40 = scmp.ne.s32.totalorder %s26, %s27
      %p41 = scmp.eq.s32.totalorder %s19, 1
      %p42 = por %p40, %p41
      %p44 = scmp.ne.s32.totalorder %s27, %s43
      %p45 = scmp.eq.s32.totalorder %s19, 0
      %p46 = por %p44, %p45
      %s48 = sadd.s32 %s47, 1
      %p51 = scmp.eq.s32.totalorder %s13, 1
      %p52 = scmp.ne.s32.totalorder %s47, %s49
      %p53 = scmp.eq.s32.totalorder %s13, 0
      %p54 = por %p52, %p53
      %p55 = scmp.ne.s32.totalorder %s47, %s49
      %p56 = scmp.eq.s32.totalorder %s18, 1
      %p57 = por %p55, %p56
      %p58 = scmp.ne.s32.totalorder %s49, %s50
      %p59 = scmp.eq.s32.totalorder %s18, 0
      %p60 = por %p58, %p59
      %p61 = scmp.ne.s32.totalorder %s49, %s50
      %p62 = scmp.eq.s32.totalorder %s19, 1
      %p63 = por %p61, %p62
      %p65 = scmp.ne.s32.totalorder %s50, %s64
      %p66 = scmp.eq.s32.totalorder %s19, 0
      %p67 = por %p65, %p66
      %s69 = sadd.s32 %s68, 1
      %p72 = scmp.eq.s32.totalorder %s13, 1
      %p73 = scmp.ne.s32.totalorder %s68, %s70
      %p74 = scmp.eq.s32.totalorder %s13, 0
      %p75 = por %p73, %p74
      %p76 = scmp.ne.s32.totalorder %s68, %s70
      %p77 = scmp.eq.s32.totalorder %s18, 1
      %p78 = por %p76, %p77
      %p79 = scmp.ne.s32.totalorder %s70, %s71
      %p80 = scmp.eq.s32.totalorder %s18, 0
      %p81 = por %p79, %p80
      %p82 = scmp.ne.s32.totalorder %s70, %s71
      %p83 = scmp.eq.s32.totalorder %s19, 1
      %p84 = por %p82, %p83
      %p86 = scmp.ne.s32.totalorder %s71, %s85
      %p87 = scmp.eq.s32.totalorder %s19, 0
      %p88 = por %p86, %p87
      %s90 = sadd.s32 %s89, 1
      %p93 = scmp.eq.s32.totalorder %s13, 1
      %p94 = scmp.ne.s32.totalorder %s89, %s91
      %p95 = scmp.eq.s32.totalorder %s13, 0
      %p96 = por %p94, %p95
      %p97 = scmp.ne.s32.totalorder %s89, %s91
      %p98 = scmp.eq.s32.totalorder %s18, 1
      %p99 = por %p97, %p98
      %p100 = scmp.ne.s32.totalorder %s91, %s92
      %p101 = scmp.eq.s32.totalorder %s18, 0
      %p102 = por %p100, %p101
      %p103 = scmp.ne.s32.totalorder %s91, %s92
      %p104 = scmp.eq.s32.totalorder %s19, 1
      %p105 = por %p103, %p104
      %p107 = scmp.ne.s32.totalorder %s92, %s106
      %p108 = scmp.eq.s32.totalorder %s19, 0
      %p109 = por %p107, %p108
      %s111 = sadd.s32 %s110, 1
      %p114 = scmp.eq.s32.totalorder %s13, 1
      %p115 = scmp.ne.s32.totalorder %s110, %s112
      %p116 = scmp.eq.s32.totalorder %s13, 0
      %p117 = por %p115, %p116
      %p118 = scmp.ne.s32.totalorder %s110, %s112
      %p119 = scmp.eq.s32.totalorder %s18, 1
      %p120 = por %p118, %p119
      %p121 = scmp.ne.s32.totalorder %s112, %s113
      %p122 = scmp.eq.s32.totalorder %s18, 0
      %p123 = por %p121, %p122
      %p124 = scmp.ne.s32.totalorder %s112, %s113
      %p125 = scmp.eq.s32.totalorder %s19, 1
      %p126 = por %p124, %p125
      %p128 = scmp.ne.s32.totalorder %s113, %s127
      %p129 = scmp.eq.s32.totalorder %s19, 0
      %p130 = por %p128, %p129
      %s132 = sadd.s32 %s131, 1
      %p135 = scmp.eq.s32.totalorder %s13, 1
      %p136 = scmp.ne.s32.totalorder %s131, %s133
      %p137 = scmp.eq.s32.totalorder %s13, 0
      %p138 = por %p136, %p137
      %p139 = scmp.ne.s32.totalorder %s131, %s133
      %p140 = scmp.eq.s32.totalorder %s18, 1
      %p141 = por %p139, %p140
      %p142 = scmp.ne.s32.totalorder %s133, %s134
      %p143 = scmp.eq.s32.totalorder %s18, 0
      %p144 = por %p142, %p143
      %p145 = scmp.ne.s32.totalorder %s133, %s134
      %p146 = scmp.eq.s32.totalorder %s19, 1
      %p147 = por %p145, %p146
      %p149 = scmp.ne.s32.totalorder %s134, %s148
      %p150 = scmp.eq.s32.totalorder %s19, 0
      %p151 = por %p149, %p150
      %s153 = sadd.s32 %s152, 1
      %p156 = scmp.eq.s32.totalorder %s13, 1
      %p157 = scmp.ne.s32.totalorder %s152, %s154
      %p158 = scmp.eq.s32.totalorder %s13, 0
      %p159 = por %p157, %p158
      %p160 = scmp.ne.s32.totalorder %s152, %s154
      %p161 = scmp.eq.s32.totalorder %s18, 1
      %p162 = por %p160, %p161
      %p163 = scmp.ne.s32.totalorder %s154, %s155
      %p164 = scmp.eq.s32.totalorder %s18, 0
      %p165 = por %p163, %p164
      %p166 = scmp.ne.s32.totalorder %s154, %s155
      %p167 = scmp.eq.s32.totalorder %s19, 1
      %p168 = por %p166, %p167
      %p170 = scmp.ne.s32.totalorder %s155, %s169
      %p171 = scmp.eq.s32.totalorder %s19, 0
      %p172 = por %p170, %p171
      %s173 = ssub.s32 %s13, %s20
      %p174 = scmp.eq.s32.totalorder %s173, 0
      %s176 = sadd.s32 %s175, 1
      %s177 = scalar_select %p174, %s175, %s176
      %p180 = pneg %p174
      %p181 = scmp.eq.s32.totalorder %s13, 1
      %p182 = por %p180, %p181
      %p183 = scmp.ne.s32.totalorder %s175, %s178
      %p184 = scmp.eq.s32.totalorder %s13, 0
      %p185 = por %p183, %p184
      %p186 = scmp.ne.s32.totalorder %s175, %s178
      %p187 = scmp.eq.s32.totalorder %s18, 1
      %p188 = por %p186, %p187
      %p189 = scmp.ne.s32.totalorder %s178, %s179
      %p190 = scmp.eq.s32.totalorder %s18, 0
      %p191 = por %p189, %p190
      %p192 = scmp.ne.s32.totalorder %s178, %s179
      %p193 = scmp.eq.s32.totalorder %s19, 1
      %p194 = por %p192, %p193
      %p196 = scmp.ne.s32.totalorder %s179, %s195
      %p197 = scmp.eq.s32.totalorder %s19, 0
      %p198 = por %p196, %p197
      %p199 = scmp.le.s32.totalorder 1, %s13
      %p200 = scmp.lt.s32.totalorder %s13, 3
      %p201 = pnand %p199, %p200
      %p202 = pneg %p201
      // Predicated region
      $region9: #{model_forward.3} parent=5 // pred_check
        _
      $region10: #{model_forward.3} parent=5 // pred_check_branch
        %204 = sbr.rel (%p201) target = $region12
      $region11: #{model_forward.3} parent=5 // pred_region
        %s205 = ssub.s32 %s13, 1
        // Predicated region
        $region13: #{model_forward.3} parent=11 // pred_check
          %p206 = pneg %p60
        $region14: #{model_forward.3} parent=11 // pred_check_branch
          %208 = sbr.rel (%p206) target = $region16
        $region15: #{model_forward.3} parent=11 // pred_region
          _
        $region16: #{model_forward.3} parent=11 // pred_fallthru
          _
        // Predicated region
        $region17: #{model_forward.3} parent=11 // pred_check
          %p209 = pneg %p81
        $region18: #{model_forward.3} parent=11 // pred_check_branch
          %211 = sbr.rel (%p209) target = $region20
        $region19: #{model_forward.3} parent=11 // pred_region
          _
        $region20: #{model_forward.3} parent=11 // pred_fallthru
          _
        // Predicated region
        $region21: #{model_forward.3} parent=11 // pred_check
          %p212 = pneg %p102
        $region22: #{model_forward.3} parent=11 // pred_check_branch
          %214 = sbr.rel (%p212) target = $region24
        $region23: #{model_forward.3} parent=11 // pred_region
          _
        $region24: #{model_forward.3} parent=11 // pred_fallthru
          _
        // Predicated region
        $region25: #{model_forward.3} parent=11 // pred_check
          %p215 = pneg %p123
        $region26: #{model_forward.3} parent=11 // pred_check_branch
          %217 = sbr.rel (%p215) target = $region28
        $region27: #{model_forward.3} parent=11 // pred_region
          _
        $region28: #{model_forward.3} parent=11 // pred_fallthru
          _
        // Predicated region
        $region29: #{model_forward.3} parent=11 // pred_check
          %p218 = pneg %p144
        $region30: #{model_forward.3} parent=11 // pred_check_branch
          %220 = sbr.rel (%p218) target = $region32
        $region31: #{model_forward.3} parent=11 // pred_region
          _
        $region32: #{model_forward.3} parent=11 // pred_fallthru
          _
        // Predicated region
        $region33: #{model_forward.3} parent=11 // pred_check
          %p221 = pneg %p165
        $region34: #{model_forward.3} parent=11 // pred_check_branch
          %223 = sbr.rel (%p221) target = $region36
        $region35: #{model_forward.3} parent=11 // pred_region
          _
        $region36: #{model_forward.3} parent=11 // pred_fallthru
          _
      $region12: #{model_forward.3} parent=5 // pred_fallthru
        _
      %p224 = scmp.lt.s32.totalorder %s13, 2
      // Predicated region
      $region37: #{model_forward.3} parent=5 // pred_check
        %p225 = pneg %p224
      $region38: #{model_forward.3} parent=5 // pred_check_branch
        %227 = sbr.rel (%p225) target = $region40
      $region39: #{model_forward.3} parent=5 // pred_region
        // Predicated region
        $region41: #{model_forward.3} parent=39 // pred_check
          %p228 = pneg %p33
        $region42: #{model_forward.3} parent=39 // pred_check_branch
          %230 = sbr.rel (%p228) target = $region44
        $region43: #{model_forward.3} parent=39 // pred_region
          %s231 = sand.u32 %s23, 1
          %s232 = sand.u32 %s23, 1
          %s233 = smul.addr %s232, 1024
          %s234 = scalar_lea.vmem [#allocation2], %s233
          %s235 = smul.u32 2, %s13
          %s236 = smul.addr %s235, 2
          %s237 = smul.addr %s236, 4
          %s238 = scalar_lea.vmem %s0, %s237
          // Predicated region
          $region45: #{model_forward.3} parent=43 // pred_check
            _
          $region46: #{model_forward.3} parent=43 // pred_check_branch
            %240 = sbr.rel (0) target = $region48
          $region47: #{model_forward.3} parent=43 // pred_region
            // Predicated region
            $region49: #{model_forward.3} parent=47 // pred_check
              _
            $region50: #{model_forward.3} parent=47 // pred_check_branch
              %242 = sbr.rel (0) target = $region52
            $region51: #{model_forward.3} parent=47 // pred_region
              // Predicated region
              $region64: #{model_forward.3} parent=51 // pred_check
                _
              $region65: #{model_forward.3} parent=51 // pred_check_branch
                %512 = sbr.rel (0) target = $region67
              $region66: #{model_forward.3} parent=51 // pred_region
                loop: start=0, step=1, limit=1
                $region68: #{model_forward.3} parent=66 // loop_pre_header
                  _
                $region69: #{model_forward.3} parent=66 // loop_header
                  %s514 = sphi 0, %s518
                  %p515 = scmp.ge.s32.totalorder %s514, 1
                  %s519 = sphi %s238, %s238
                  %s520 = sphi %s234, %s234
                $region70: #{model_forward.3} parent=66 // loop_header_branch
                  %517 = sbr.rel (%p515) target = $region74
                $region71: #{model_forward.3} parent=66 // loop_body
                  %v521 = vld [vmem:[%s519] sm:$0xff]
                  %522 = vst [vmem:[%s520] sm:$0xff] %v521
                  %v523 = vld [vmem:[%s519 + $0x8] sm:$0xff]
                  %524 = vst [vmem:[%s520 + $0x8] sm:$0xff] %v523
                  %v525 = vld [vmem:[%s519 + $0x20] sm:$0xff]
                  %526 = vst [vmem:[%s520 + $0x10] sm:$0xff] %v525
                  %v527 = vld [vmem:[%s519 + $0x28] sm:$0xff]
                  %528 = vst [vmem:[%s520 + $0x18] sm:$0xff] %v527
                  %v529 = vld [vmem:[%s519 + $0x40] sm:$0xff]
                  %530 = vst [vmem:[%s520 + $0x20] sm:$0xff] %v529
                  %v531 = vld [vmem:[%s519 + $0x48] sm:$0xff]
                  %532 = vst [vmem:[%s520 + $0x28] sm:$0xff] %v531
                  %v533 = vld [vmem:[%s519 + $0x60] sm:$0xff]
                  %534 = vst [vmem:[%s520 + $0x30] sm:$0xff] %v533
                  %v535 = vld [vmem:[%s519 + $0x68] sm:$0xff]
                  %536 = vst [vmem:[%s520 + $0x38] sm:$0xff] %v535
                  %v537 = vld [vmem:[%s519 + $0x80] sm:$0xff]
                  %538 = vst [vmem:[%s520 + $0x40] sm:$0xff] %v537
                  %v539 = vld [vmem:[%s519 + $0x88] sm:$0xff]
                  %540 = vst [vmem:[%s520 + $0x48] sm:$0xff] %v539
                  %v541 = vld [vmem:[%s519 + $0xa0] sm:$0xff]
                  %542 = vst [vmem:[%s520 + $0x50] sm:$0xff] %v541
                  %v543 = vld [vmem:[%s519 + $0xa8] sm:$0xff]
                  %544 = vst [vmem:[%s520 + $0x58] sm:$0xff] %v543
                  %v545 = vld [vmem:[%s519 + $0xc0] sm:$0xff]
                  %546 = vst [vmem:[%s520 + $0x60] sm:$0xff] %v545
                  %v547 = vld [vmem:[%s519 + $0xc8] sm:$0xff]
                  %548 = vst [vmem:[%s520 + $0x68] sm:$0xff] %v547
                  %v549 = vld [vmem:[%s519 + $0xe0] sm:$0xff]
                  %550 = vst [vmem:[%s520 + $0x70] sm:$0xff] %v549
                  %v551 = vld [vmem:[%s519 + $0xe8] sm:$0xff]
                  %552 = vst [vmem:[%s520 + $0x78] sm:$0xff] %v551
                  %v553 = vld [vmem:[%s519 + $0x100] sm:$0xff]
                  %554 = vst [vmem:[%s520 + $0x80] sm:$0xff] %v553
                  %v555 = vld [vmem:[%s519 + $0x108] sm:$0xff]
                  %556 = vst [vmem:[%s520 + $0x88] sm:$0xff] %v555
                  %v557 = vld [vmem:[%s519 + $0x120] sm:$0xff]
                  %558 = vst [vmem:[%s520 + $0x90] sm:$0xff] %v557
                  %v559 = vld [vmem:[%s519 + $0x128] sm:$0xff]
                  %560 = vst [vmem:[%s520 + $0x98] sm:$0xff] %v559
                  %v561 = vld [vmem:[%s519 + $0x140] sm:$0xff]
                  %562 = vst [vmem:[%s520 + $0xa0] sm:$0xff] %v561
                  %v563 = vld [vmem:[%s519 + $0x148] sm:$0xff]
                  %564 = vst [vmem:[%s520 + $0xa8] sm:$0xff] %v563
                  %v565 = vld [vmem:[%s519 + $0x160] sm:$0xff]
                  %566 = vst [vmem:[%s520 + $0xb0] sm:$0xff] %v565
                  %v567 = vld [vmem:[%s519 + $0x168] sm:$0xff]
                  %568 = vst [vmem:[%s520 + $0xb8] sm:$0xff] %v567
                  %v569 = vld [vmem:[%s519 + $0x180] sm:$0xff]
                  %570 = vst [vmem:[%s520 + $0xc0] sm:$0xff] %v569
                  %v571 = vld [vmem:[%s519 + $0x188] sm:$0xff]
                  %572 = vst [vmem:[%s520 + $0xc8] sm:$0xff] %v571
                  %v573 = vld [vmem:[%s519 + $0x1a0] sm:$0xff]
                  %574 = vst [vmem:[%s520 + $0xd0] sm:$0xff] %v573
                  %v575 = vld [vmem:[%s519 + $0x1a8] sm:$0xff]
                  %576 = vst [vmem:[%s520 + $0xd8] sm:$0xff] %v575
                  %v577 = vld [vmem:[%s519 + $0x1c0] sm:$0xff]
                  %578 = vst [vmem:[%s520 + $0xe0] sm:$0xff] %v577
                  %v579 = vld [vmem:[%s519 + $0x1c8] sm:$0xff]
                  %580 = vst [vmem:[%s520 + $0xe8] sm:$0xff] %v579
                  %v581 = vld [vmem:[%s519 + $0x1e0] sm:$0xff]
                  %582 = vst [vmem:[%s520 + $0xf0] sm:$0xff] %v581
                  %v583 = vld [vmem:[%s519 + $0x1e8] sm:$0xff]
                  %584 = vst [vmem:[%s520 + $0xf8] sm:$0xff] %v583
                  %v585 = vld [vmem:[%s519 + $0x200] sm:$0xff]
                  %586 = vst [vmem:[%s520 + $0x100] sm:$0xff] %v585
                  %v587 = vld [vmem:[%s519 + $0x208] sm:$0xff]
                  %588 = vst [vmem:[%s520 + $0x108] sm:$0xff] %v587
                  %v589 = vld [vmem:[%s519 + $0x220] sm:$0xff]
                  %590 = vst [vmem:[%s520 + $0x110] sm:$0xff] %v589
                  %v591 = vld [vmem:[%s519 + $0x228] sm:$0xff]
                  %592 = vst [vmem:[%s520 + $0x118] sm:$0xff] %v591
                  %v593 = vld [vmem:[%s519 + $0x240] sm:$0xff]
                  %594 = vst [vmem:[%s520 + $0x120] sm:$0xff] %v593
                  %v595 = vld [vmem:[%s519 + $0x248] sm:$0xff]
                  %596 = vst [vmem:[%s520 + $0x128] sm:$0xff] %v595
                  %v597 = vld [vmem:[%s519 + $0x260] sm:$0xff]
                  %598 = vst [vmem:[%s520 + $0x130] sm:$0xff] %v597
                  %v599 = vld [vmem:[%s519 + $0x268] sm:$0xff]
                  %600 = vst [vmem:[%s520 + $0x138] sm:$0xff] %v599
                  %v601 = vld [vmem:[%s519 + $0x280] sm:$0xff]
                  %602 = vst [vmem:[%s520 + $0x140] sm:$0xff] %v601
                  %v603 = vld [vmem:[%s519 + $0x288] sm:$0xff]
                  %604 = vst [vmem:[%s520 + $0x148] sm:$0xff] %v603
                  %v605 = vld [vmem:[%s519 + $0x2a0] sm:$0xff]
                  %606 = vst [vmem:[%s520 + $0x150] sm:$0xff] %v605
                  %v607 = vld [vmem:[%s519 + $0x2a8] sm:$0xff]
                  %608 = vst [vmem:[%s520 + $0x158] sm:$0xff] %v607
                  %v609 = vld [vmem:[%s519 + $0x2c0] sm:$0xff]
                  %610 = vst [vmem:[%s520 + $0x160] sm:$0xff] %v609
                  %v611 = vld [vmem:[%s519 + $0x2c8] sm:$0xff]
                  %612 = vst [vmem:[%s520 + $0x168] sm:$0xff] %v611
                  %v613 = vld [vmem:[%s519 + $0x2e0] sm:$0xff]
                  %614 = vst [vmem:[%s520 + $0x170] sm:$0xff] %v613
                  %v615 = vld [vmem:[%s519 + $0x2e8] sm:$0xff]
                  %616 = vst [vmem:[%s520 + $0x178] sm:$0xff] %v615
                  %v617 = vld [vmem:[%s519 + $0x300] sm:$0xff]
                  %618 = vst [vmem:[%s520 + $0x180] sm:$0xff] %v617
                  %v619 = vld [vmem:[%s519 + $0x308] sm:$0xff]
                  %620 = vst [vmem:[%s520 + $0x188] sm:$0xff] %v619
                  %v621 = vld [vmem:[%s519 + $0x320] sm:$0xff]
                  %622 = vst [vmem:[%s520 + $0x190] sm:$0xff] %v621
                  %v623 = vld [vmem:[%s519 + $0x328] sm:$0xff]
                  %624 = vst [vmem:[%s520 + $0x198] sm:$0xff] %v623
                  %v625 = vld [vmem:[%s519 + $0x340] sm:$0xff]
                  %626 = vst [vmem:[%s520 + $0x1a0] sm:$0xff] %v625
                  %v627 = vld [vmem:[%s519 + $0x348] sm:$0xff]
                  %628 = vst [vmem:[%s520 + $0x1a8] sm:$0xff] %v627
                  %v629 = vld [vmem:[%s519 + $0x360] sm:$0xff]
                  %630 = vst [vmem:[%s520 + $0x1b0] sm:$0xff] %v629
                  %v631 = vld [vmem:[%s519 + $0x368] sm:$0xff]
                  %632 = vst [vmem:[%s520 + $0x1b8] sm:$0xff] %v631
                  %v633 = vld [vmem:[%s519 + $0x380] sm:$0xff]
                  %634 = vst [vmem:[%s520 + $0x1c0] sm:$0xff] %v633
                  %v635 = vld [vmem:[%s519 + $0x388] sm:$0xff]
                  %636 = vst [vmem:[%s520 + $0x1c8] sm:$0xff] %v635
                  %v637 = vld [vmem:[%s519 + $0x3a0] sm:$0xff]
                  %638 = vst [vmem:[%s520 + $0x1d0] sm:$0xff] %v637
                  %v639 = vld [vmem:[%s519 + $0x3a8] sm:$0xff]
                  %640 = vst [vmem:[%s520 + $0x1d8] sm:$0xff] %v639
                  %v641 = vld [vmem:[%s519 + $0x3c0] sm:$0xff]
                  %642 = vst [vmem:[%s520 + $0x1e0] sm:$0xff] %v641
                  %v643 = vld [vmem:[%s519 + $0x3c8] sm:$0xff]
                  %644 = vst [vmem:[%s520 + $0x1e8] sm:$0xff] %v643
                  %v645 = vld [vmem:[%s519 + $0x3e0] sm:$0xff]
                  %646 = vst [vmem:[%s520 + $0x1f0] sm:$0xff] %v645
                  %v647 = vld [vmem:[%s519 + $0x3e8] sm:$0xff]
                  %648 = vst [vmem:[%s520 + $0x1f8] sm:$0xff] %v647
                  %v649 = vld [vmem:[%s519 + $0x400] sm:$0xff]
                  %650 = vst [vmem:[%s520 + $0x200] sm:$0xff] %v649
                  %v651 = vld [vmem:[%s519 + $0x408] sm:$0xff]
                  %652 = vst [vmem:[%s520 + $0x208] sm:$0xff] %v651
                  %v653 = vld [vmem:[%s519 + $0x420] sm:$0xff]
                  %654 = vst [vmem:[%s520 + $0x210] sm:$0xff] %v653
                  %v655 = vld [vmem:[%s519 + $0x428] sm:$0xff]
                  %656 = vst [vmem:[%s520 + $0x218] sm:$0xff] %v655
                  %v657 = vld [vmem:[%s519 + $0x440] sm:$0xff]
                  %658 = vst [vmem:[%s520 + $0x220] sm:$0xff] %v657
                  %v659 = vld [vmem:[%s519 + $0x448] sm:$0xff]
                  %660 = vst [vmem:[%s520 + $0x228] sm:$0xff] %v659
                  %v661 = vld [vmem:[%s519 + $0x460] sm:$0xff]
                  %662 = vst [vmem:[%s520 + $0x230] sm:$0xff] %v661
                  %v663 = vld [vmem:[%s519 + $0x468] sm:$0xff]
                  %664 = vst [vmem:[%s520 + $0x238] sm:$0xff] %v663
                  %v665 = vld [vmem:[%s519 + $0x480] sm:$0xff]
                  %666 = vst [vmem:[%s520 + $0x240] sm:$0xff] %v665
                  %v667 = vld [vmem:[%s519 + $0x488] sm:$0xff]
                  %668 = vst [vmem:[%s520 + $0x248] sm:$0xff] %v667
                  %v669 = vld [vmem:[%s519 + $0x4a0] sm:$0xff]
                  %670 = vst [vmem:[%s520 + $0x250] sm:$0xff] %v669
                  %v671 = vld [vmem:[%s519 + $0x4a8] sm:$0xff]
                  %672 = vst [vmem:[%s520 + $0x258] sm:$0xff] %v671
                  %v673 = vld [vmem:[%s519 + $0x4c0] sm:$0xff]
                  %674 = vst [vmem:[%s520 + $0x260] sm:$0xff] %v673
                  %v675 = vld [vmem:[%s519 + $0x4c8] sm:$0xff]
                  %676 = vst [vmem:[%s520 + $0x268] sm:$0xff] %v675
                  %v677 = vld [vmem:[%s519 + $0x4e0] sm:$0xff]
                  %678 = vst [vmem:[%s520 + $0x270] sm:$0xff] %v677
                  %v679 = vld [vmem:[%s519 + $0x4e8] sm:$0xff]
                  %680 = vst [vmem:[%s520 + $0x278] sm:$0xff] %v679
                  %v681 = vld [vmem:[%s519 + $0x500] sm:$0xff]
                  %682 = vst [vmem:[%s520 + $0x280] sm:$0xff] %v681
                  %v683 = vld [vmem:[%s519 + $0x508] sm:$0xff]
                  %684 = vst [vmem:[%s520 + $0x288] sm:$0xff] %v683
                  %v685 = vld [vmem:[%s519 + $0x520] sm:$0xff]
                  %686 = vst [vmem:[%s520 + $0x290] sm:$0xff] %v685
                  %v687 = vld [vmem:[%s519 + $0x528] sm:$0xff]
                  %688 = vst [vmem:[%s520 + $0x298] sm:$0xff] %v687
                  %v689 = vld [vmem:[%s519 + $0x540] sm:$0xff]
                  %690 = vst [vmem:[%s520 + $0x2a0] sm:$0xff] %v689
                  %v691 = vld [vmem:[%s519 + $0x548] sm:$0xff]
                  %692 = vst [vmem:[%s520 + $0x2a8] sm:$0xff] %v691
                  %v693 = vld [vmem:[%s519 + $0x560] sm:$0xff]
                  %694 = vst [vmem:[%s520 + $0x2b0] sm:$0xff] %v693
                  %v695 = vld [vmem:[%s519 + $0x568] sm:$0xff]
                  %696 = vst [vmem:[%s520 + $0x2b8] sm:$0xff] %v695
                  %v697 = vld [vmem:[%s519 + $0x580] sm:$0xff]
                  %698 = vst [vmem:[%s520 + $0x2c0] sm:$0xff] %v697
                  %v699 = vld [vmem:[%s519 + $0x588] sm:$0xff]
                  %700 = vst [vmem:[%s520 + $0x2c8] sm:$0xff] %v699
                  %v701 = vld [vmem:[%s519 + $0x5a0] sm:$0xff]
                  %702 = vst [vmem:[%s520 + $0x2d0] sm:$0xff] %v701
                  %v703 = vld [vmem:[%s519 + $0x5a8] sm:$0xff]
                  %704 = vst [vmem:[%s520 + $0x2d8] sm:$0xff] %v703
                  %v705 = vld [vmem:[%s519 + $0x5c0] sm:$0xff]
                  %706 = vst [vmem:[%s520 + $0x2e0] sm:$0xff] %v705
                  %v707 = vld [vmem:[%s519 + $0x5c8] sm:$0xff]
                  %708 = vst [vmem:[%s520 + $0x2e8] sm:$0xff] %v707
                  %v709 = vld [vmem:[%s519 + $0x5e0] sm:$0xff]
                  %710 = vst [vmem:[%s520 + $0x2f0] sm:$0xff] %v709
                  %v711 = vld [vmem:[%s519 + $0x5e8] sm:$0xff]
                  %712 = vst [vmem:[%s520 + $0x2f8] sm:$0xff] %v711
                  %v713 = vld [vmem:[%s519 + $0x600] sm:$0xff]
                  %714 = vst [vmem:[%s520 + $0x300] sm:$0xff] %v713
                  %v715 = vld [vmem:[%s519 + $0x608] sm:$0xff]
                  %716 = vst [vmem:[%s520 + $0x308] sm:$0xff] %v715
                  %v717 = vld [vmem:[%s519 + $0x620] sm:$0xff]
                  %718 = vst [vmem:[%s520 + $0x310] sm:$0xff] %v717
                  %v719 = vld [vmem:[%s519 + $0x628] sm:$0xff]
                  %720 = vst [vmem:[%s520 + $0x318] sm:$0xff] %v719
                  %v721 = vld [vmem:[%s519 + $0x640] sm:$0xff]
                  %722 = vst [vmem:[%s520 + $0x320] sm:$0xff] %v721
                  %v723 = vld [vmem:[%s519 + $0x648] sm:$0xff]
                  %724 = vst [vmem:[%s520 + $0x328] sm:$0xff] %v723
                  %v725 = vld [vmem:[%s519 + $0x660] sm:$0xff]
                  %726 = vst [vmem:[%s520 + $0x330] sm:$0xff] %v725
                  %v727 = vld [vmem:[%s519 + $0x668] sm:$0xff]
                  %728 = vst [vmem:[%s520 + $0x338] sm:$0xff] %v727
                  %v729 = vld [vmem:[%s519 + $0x680] sm:$0xff]
                  %730 = vst [vmem:[%s520 + $0x340] sm:$0xff] %v729
                  %v731 = vld [vmem:[%s519 + $0x688] sm:$0xff]
                  %732 = vst [vmem:[%s520 + $0x348] sm:$0xff] %v731
                  %v733 = vld [vmem:[%s519 + $0x6a0] sm:$0xff]
                  %734 = vst [vmem:[%s520 + $0x350] sm:$0xff] %v733
                  %v735 = vld [vmem:[%s519 + $0x6a8] sm:$0xff]
                  %736 = vst [vmem:[%s520 + $0x358] sm:$0xff] %v735
                  %v737 = vld [vmem:[%s519 + $0x6c0] sm:$0xff]
                  %738 = vst [vmem:[%s520 + $0x360] sm:$0xff] %v737
                  %v739 = vld [vmem:[%s519 + $0x6c8] sm:$0xff]
                  %740 = vst [vmem:[%s520 + $0x368] sm:$0xff] %v739
                  %v741 = vld [vmem:[%s519 + $0x6e0] sm:$0xff]
                  %742 = vst [vmem:[%s520 + $0x370] sm:$0xff] %v741
                  %v743 = vld [vmem:[%s519 + $0x6e8] sm:$0xff]
                  %744 = vst [vmem:[%s520 + $0x378] sm:$0xff] %v743
                  %v745 = vld [vmem:[%s519 + $0x700] sm:$0xff]
                  %746 = vst [vmem:[%s520 + $0x380] sm:$0xff] %v745
                  %v747 = vld [vmem:[%s519 + $0x708] sm:$0xff]
                  %748 = vst [vmem:[%s520 + $0x388] sm:$0xff] %v747
                  %v749 = vld [vmem:[%s519 + $0x720] sm:$0xff]
                  %750 = vst [vmem:[%s520 + $0x390] sm:$0xff] %v749
                  %v751 = vld [vmem:[%s519 + $0x728] sm:$0xff]
                  %752 = vst [vmem:[%s520 + $0x398] sm:$0xff] %v751
                  %v753 = vld [vmem:[%s519 + $0x740] sm:$0xff]
                  %754 = vst [vmem:[%s520 + $0x3a0] sm:$0xff] %v753
                  %v755 = vld [vmem:[%s519 + $0x748] sm:$0xff]
                  %756 = vst [vmem:[%s520 + $0x3a8] sm:$0xff] %v755
                  %v757 = vld [vmem:[%s519 + $0x760] sm:$0xff]
                  %758 = vst [vmem:[%s520 + $0x3b0] sm:$0xff] %v757
                  %v759 = vld [vmem:[%s519 + $0x768] sm:$0xff]
                  %760 = vst [vmem:[%s520 + $0x3b8] sm:$0xff] %v759
                  %v761 = vld [vmem:[%s519 + $0x780] sm:$0xff]
                  %762 = vst [vmem:[%s520 + $0x3c0] sm:$0xff] %v761
                  %v763 = vld [vmem:[%s519 + $0x788] sm:$0xff]
                  %764 = vst [vmem:[%s520 + $0x3c8] sm:$0xff] %v763
                  %v765 = vld [vmem:[%s519 + $0x7a0] sm:$0xff]
                  %766 = vst [vmem:[%s520 + $0x3d0] sm:$0xff] %v765
                  %v767 = vld [vmem:[%s519 + $0x7a8] sm:$0xff]
                  %768 = vst [vmem:[%s520 + $0x3d8] sm:$0xff] %v767
                  %v769 = vld [vmem:[%s519 + $0x7c0] sm:$0xff]
                  %770 = vst [vmem:[%s520 + $0x3e0] sm:$0xff] %v769
                  %v771 = vld [vmem:[%s519 + $0x7c8] sm:$0xff]
                  %772 = vst [vmem:[%s520 + $0x3e8] sm:$0xff] %v771
                  %v773 = vld [vmem:[%s519 + $0x7e0] sm:$0xff]
                  %774 = vst [vmem:[%s520 + $0x3f0] sm:$0xff] %v773
                  %v775 = vld [vmem:[%s519 + $0x7e8] sm:$0xff]
                  %776 = vst [vmem:[%s520 + $0x3f8] sm:$0xff] %v775
                $region72: #{model_forward.3} parent=66 // loop_footer
                  %s518 = sadd.s32 1, %s514
                $region73: #{model_forward.3} parent=66 // loop_footer_branch
                  %513 = sbr.rel target = $region69
                $region74: #{model_forward.3} parent=66 // loop_exit
                  _
              $region67: #{model_forward.3} parent=51 // pred_fallthru
                _
              // Predicated region
              $region75: #{model_forward.3} parent=51 // pred_check
                _
              $region76: #{model_forward.3} parent=51 // pred_check_branch
                %778 = sbr.rel target = $region78
              $region77: #{model_forward.3} parent=51 // pred_region
                _
              $region78: #{model_forward.3} parent=51 // pred_fallthru
                _
            $region52: #{model_forward.3} parent=47 // pred_fallthru
              _
            // Predicated region
            $region53: #{model_forward.3} parent=47 // pred_check
              _
            $region54: #{model_forward.3} parent=47 // pred_check_branch
              %244 = sbr.rel target = $region56
            $region55: #{model_forward.3} parent=47 // pred_region
              %s246 = ssub.s32 256, 1
              loop: start=0, step=1, limit=1
              $region57: #{model_forward.3} parent=55 // loop_pre_header
                _
              $region58: #{model_forward.3} parent=55 // loop_header
                %s248 = sphi 0, %s252
                %p249 = scmp.ge.s32.totalorder %s248, 1
                %s253 = sphi %s238, %s238
                %s254 = sphi %s234, %s234
              $region59: #{model_forward.3} parent=55 // loop_header_branch
                %251 = sbr.rel (%p249) target = $region63
              $region60: #{model_forward.3} parent=55 // loop_body
                %v255 = vld [vmem:[%s253] sm:%s246]
                %256 = vst [vmem:[%s254] sm:%s246] %v255
                %v257 = vld [vmem:[%s253 + $0x8] sm:%s246]
                %258 = vst [vmem:[%s254 + $0x8] sm:%s246] %v257
                %v259 = vld [vmem:[%s253 + $0x20] sm:%s246]
                %260 = vst [vmem:[%s254 + $0x10] sm:%s246] %v259
                %v261 = vld [vmem:[%s253 + $0x28] sm:%s246]
                %262 = vst [vmem:[%s254 + $0x18] sm:%s246] %v261
                %v263 = vld [vmem:[%s253 + $0x40] sm:%s246]
                %264 = vst [vmem:[%s254 + $0x20] sm:%s246] %v263
                %v265 = vld [vmem:[%s253 + $0x48] sm:%s246]
                %266 = vst [vmem:[%s254 + $0x28] sm:%s246] %v265
                %v267 = vld [vmem:[%s253 + $0x60] sm:%s246]
                %268 = vst [vmem:[%s254 + $0x30] sm:%s246] %v267
                %v269 = vld [vmem:[%s253 + $0x68] sm:%s246]
                %270 = vst [vmem:[%s254 + $0x38] sm:%s246] %v269
                %v271 = vld [vmem:[%s253 + $0x80] sm:%s246]
                %272 = vst [vmem:[%s254 + $0x40] sm:%s246] %v271
                %v273 = vld [vmem:[%s253 + $0x88] sm:%s246]
                %274 = vst [vmem:[%s254 + $0x48] sm:%s246] %v273
                %v275 = vld [vmem:[%s253 + $0xa0] sm:%s246]
                %276 = vst [vmem:[%s254 + $0x50] sm:%s246] %v275
                %v277 = vld [vmem:[%s253 + $0xa8] sm:%s246]
                %278 = vst [vmem:[%s254 + $0x58] sm:%s246] %v277
                %v279 = vld [vmem:[%s253 + $0xc0] sm:%s246]
                %280 = vst [vmem:[%s254 + $0x60] sm:%s246] %v279
                %v281 = vld [vmem:[%s253 + $0xc8] sm:%s246]
                %282 = vst [vmem:[%s254 + $0x68] sm:%s246] %v281
                %v283 = vld [vmem:[%s253 + $0xe0] sm:%s246]
                %284 = vst [vmem:[%s254 + $0x70] sm:%s246] %v283
                %v285 = vld [vmem:[%s253 + $0xe8] sm:%s246]
                %286 = vst [vmem:[%s254 + $0x78] sm:%s246] %v285
                %v287 = vld [vmem:[%s253 + $0x100] sm:%s246]
                %288 = vst [vmem:[%s254 + $0x80] sm:%s246] %v287
                %v289 = vld [vmem:[%s253 + $0x108] sm:%s246]
                %290 = vst [vmem:[%s254 + $0x88] sm:%s246] %v289
                %v291 = vld [vmem:[%s253 + $0x120] sm:%s246]
                %292 = vst [vmem:[%s254 + $0x90] sm:%s246] %v291
                %v293 = vld [vmem:[%s253 + $0x128] sm:%s246]
                %294 = vst [vmem:[%s254 + $0x98] sm:%s246] %v293
                %v295 = vld [vmem:[%s253 + $0x140] sm:%s246]
                %296 = vst [vmem:[%s254 + $0xa0] sm:%s246] %v295
                %v297 = vld [vmem:[%s253 + $0x148] sm:%s246]
                %298 = vst [vmem:[%s254 + $0xa8] sm:%s246] %v297
                %v299 = vld [vmem:[%s253 + $0x160] sm:%s246]
                %300 = vst [vmem:[%s254 + $0xb0] sm:%s246] %v299
                %v301 = vld [vmem:[%s253 + $0x168] sm:%s246]
                %302 = vst [vmem:[%s254 + $0xb8] sm:%s246] %v301
                %v303 = vld [vmem:[%s253 + $0x180] sm:%s246]
                %304 = vst [vmem:[%s254 + $0xc0] sm:%s246] %v303
                %v305 = vld [vmem:[%s253 + $0x188] sm:%s246]
                %306 = vst [vmem:[%s254 + $0xc8] sm:%s246] %v305
                %v307 = vld [vmem:[%s253 + $0x1a0] sm:%s246]
                %308 = vst [vmem:[%s254 + $0xd0] sm:%s246] %v307
                %v309 = vld [vmem:[%s253 + $0x1a8] sm:%s246]
                %310 = vst [vmem:[%s254 + $0xd8] sm:%s246] %v309
                %v311 = vld [vmem:[%s253 + $0x1c0] sm:%s246]
                %312 = vst [vmem:[%s254 + $0xe0] sm:%s246] %v311
                %v313 = vld [vmem:[%s253 + $0x1c8] sm:%s246]
                %314 = vst [vmem:[%s254 + $0xe8] sm:%s246] %v313
                %v315 = vld [vmem:[%s253 + $0x1e0] sm:%s246]
                %316 = vst [vmem:[%s254 + $0xf0] sm:%s246] %v315
                %v317 = vld [vmem:[%s253 + $0x1e8] sm:%s246]
                %318 = vst [vmem:[%s254 + $0xf8] sm:%s246] %v317
                %v319 = vld [vmem:[%s253 + $0x200] sm:%s246]
                %320 = vst [vmem:[%s254 + $0x100] sm:%s246] %v319
                %v321 = vld [vmem:[%s253 + $0x208] sm:%s246]
                %322 = vst [vmem:[%s254 + $0x108] sm:%s246] %v321
                %v323 = vld [vmem:[%s253 + $0x220] sm:%s246]
                %324 = vst [vmem:[%s254 + $0x110] sm:%s246] %v323
                %v325 = vld [vmem:[%s253 + $0x228] sm:%s246]
                %326 = vst [vmem:[%s254 + $0x118] sm:%s246] %v325
                %v327 = vld [vmem:[%s253 + $0x240] sm:%s246]
                %328 = vst [vmem:[%s254 + $0x120] sm:%s246] %v327
                %v329 = vld [vmem:[%s253 + $0x248] sm:%s246]
                %330 = vst [vmem:[%s254 + $0x128] sm:%s246] %v329
                %v331 = vld [vmem:[%s253 + $0x260] sm:%s246]
                %332 = vst [vmem:[%s254 + $0x130] sm:%s246] %v331
                %v333 = vld [vmem:[%s253 + $0x268] sm:%s246]
                %334 = vst [vmem:[%s254 + $0x138] sm:%s246] %v333
                %v335 = vld [vmem:[%s253 + $0x280] sm:%s246]
                %336 = vst [vmem:[%s254 + $0x140] sm:%s246] %v335
                %v337 = vld [vmem:[%s253 + $0x288] sm:%s246]
                %338 = vst [vmem:[%s254 + $0x148] sm:%s246] %v337
                %v339 = vld [vmem:[%s253 + $0x2a0] sm:%s246]
                %340 = vst [vmem:[%s254 + $0x150] sm:%s246] %v339
                %v341 = vld [vmem:[%s253 + $0x2a8] sm:%s246]
                %342 = vst [vmem:[%s254 + $0x158] sm:%s246] %v341
                %v343 = vld [vmem:[%s253 + $0x2c0] sm:%s246]
                %344 = vst [vmem:[%s254 + $0x160] sm:%s246] %v343
                %v345 = vld [vmem:[%s253 + $0x2c8] sm:%s246]
                %346 = vst [vmem:[%s254 + $0x168] sm:%s246] %v345
                %v347 = vld [vmem:[%s253 + $0x2e0] sm:%s246]
                %348 = vst [vmem:[%s254 + $0x170] sm:%s246] %v347
                %v349 = vld [vmem:[%s253 + $0x2e8] sm:%s246]
                %350 = vst [vmem:[%s254 + $0x178] sm:%s246] %v349
                %v351 = vld [vmem:[%s253 + $0x300] sm:%s246]
                %352 = vst [vmem:[%s254 + $0x180] sm:%s246] %v351
                %v353 = vld [vmem:[%s253 + $0x308] sm:%s246]
                %354 = vst [vmem:[%s254 + $0x188] sm:%s246] %v353
                %v355 = vld [vmem:[%s253 + $0x320] sm:%s246]
                %356 = vst [vmem:[%s254 + $0x190] sm:%s246] %v355
                %v357 = vld [vmem:[%s253 + $0x328] sm:%s246]
                %358 = vst [vmem:[%s254 + $0x198] sm:%s246] %v357
                %v359 = vld [vmem:[%s253 + $0x340] sm:%s246]
                %360 = vst [vmem:[%s254 + $0x1a0] sm:%s246] %v359
                %v361 = vld [vmem:[%s253 + $0x348] sm:%s246]
                %362 = vst [vmem:[%s254 + $0x1a8] sm:%s246] %v361
                %v363 = vld [vmem:[%s253 + $0x360] sm:%s246]
                %364 = vst [vmem:[%s254 + $0x1b0] sm:%s246] %v363
                %v365 = vld [vmem:[%s253 + $0x368] sm:%s246]
                %366 = vst [vmem:[%s254 + $0x1b8] sm:%s246] %v365
                %v367 = vld [vmem:[%s253 + $0x380] sm:%s246]
                %368 = vst [vmem:[%s254 + $0x1c0] sm:%s246] %v367
                %v369 = vld [vmem:[%s253 + $0x388] sm:%s246]
                %370 = vst [vmem:[%s254 + $0x1c8] sm:%s246] %v369
                %v371 = vld [vmem:[%s253 + $0x3a0] sm:%s246]
                %372 = vst [vmem:[%s254 + $0x1d0] sm:%s246] %v371
                %v373 = vld [vmem:[%s253 + $0x3a8] sm:%s246]
                %374 = vst [vmem:[%s254 + $0x1d8] sm:%s246] %v373
                %v375 = vld [vmem:[%s253 + $0x3c0] sm:%s246]
                %376 = vst [vmem:[%s254 + $0x1e0] sm:%s246] %v375
                %v377 = vld [vmem:[%s253 + $0x3c8] sm:%s246]
                %378 = vst [vmem:[%s254 + $0x1e8] sm:%s246] %v377
                %v379 = vld [vmem:[%s253 + $0x3e0] sm:%s246]
                %380 = vst [vmem:[%s254 + $0x1f0] sm:%s246] %v379
                %v381 = vld [vmem:[%s253 + $0x3e8] sm:%s246]
                %382 = vst [vmem:[%s254 + $0x1f8] sm:%s246] %v381
                %v383 = vld [vmem:[%s253 + $0x400] sm:%s246]
                %384 = vst [vmem:[%s254 + $0x200] sm:%s246] %v383
                %v385 = vld [vmem:[%s253 + $0x408] sm:%s246]
                %386 = vst [vmem:[%s254 + $0x208] sm:%s246] %v385
                %v387 = vld [vmem:[%s253 + $0x420] sm:%s246]
                %388 = vst [vmem:[%s254 + $0x210] sm:%s246] %v387
                %v389 = vld [vmem:[%s253 + $0x428] sm:%s246]
                %390 = vst [vmem:[%s254 + $0x218] sm:%s246] %v389
                %v391 = vld [vmem:[%s253 + $0x440] sm:%s246]
                %392 = vst [vmem:[%s254 + $0x220] sm:%s246] %v391
                %v393 = vld [vmem:[%s253 + $0x448] sm:%s246]
                %394 = vst [vmem:[%s254 + $0x228] sm:%s246] %v393
                %v395 = vld [vmem:[%s253 + $0x460] sm:%s246]
                %396 = vst [vmem:[%s254 + $0x230] sm:%s246] %v395
                %v397 = vld [vmem:[%s253 + $0x468] sm:%s246]
                %398 = vst [vmem:[%s254 + $0x238] sm:%s246] %v397
                %v399 = vld [vmem:[%s253 + $0x480] sm:%s246]
                %400 = vst [vmem:[%s254 + $0x240] sm:%s246] %v399
                %v401 = vld [vmem:[%s253 + $0x488] sm:%s246]
                %402 = vst [vmem:[%s254 + $0x248] sm:%s246] %v401
                %v403 = vld [vmem:[%s253 + $0x4a0] sm:%s246]
                %404 = vst [vmem:[%s254 + $0x250] sm:%s246] %v403
                %v405 = vld [vmem:[%s253 + $0x4a8] sm:%s246]
                %406 = vst [vmem:[%s254 + $0x258] sm:%s246] %v405
                %v407 = vld [vmem:[%s253 + $0x4c0] sm:%s246]
                %408 = vst [vmem:[%s254 + $0x260] sm:%s246] %v407
                %v409 = vld [vmem:[%s253 + $0x4c8] sm:%s246]
                %410 = vst [vmem:[%s254 + $0x268] sm:%s246] %v409
                %v411 = vld [vmem:[%s253 + $0x4e0] sm:%s246]
                %412 = vst [vmem:[%s254 + $0x270] sm:%s246] %v411
                %v413 = vld [vmem:[%s253 + $0x4e8] sm:%s246]
                %414 = vst [vmem:[%s254 + $0x278] sm:%s246] %v413
                %v415 = vld [vmem:[%s253 + $0x500] sm:%s246]
                %416 = vst [vmem:[%s254 + $0x280] sm:%s246] %v415
                %v417 = vld [vmem:[%s253 + $0x508] sm:%s246]
                %418 = vst [vmem:[%s254 + $0x288] sm:%s246] %v417
                %v419 = vld [vmem:[%s253 + $0x520] sm:%s246]
                %420 = vst [vmem:[%s254 + $0x290] sm:%s246] %v419
                %v421 = vld [vmem:[%s253 + $0x528] sm:%s246]
                %422 = vst [vmem:[%s254 + $0x298] sm:%s246] %v421
                %v423 = vld [vmem:[%s253 + $0x540] sm:%s246]
                %424 = vst [vmem:[%s254 + $0x2a0] sm:%s246] %v423
                %v425 = vld [vmem:[%s253 + $0x548] sm:%s246]
                %426 = vst [vmem:[%s254 + $0x2a8] sm:%s246] %v425
                %v427 = vld [vmem:[%s253 + $0x560] sm:%s246]
                %428 = vst [vmem:[%s254 + $0x2b0] sm:%s246] %v427
                %v429 = vld [vmem:[%s253 + $0x568] sm:%s246]
                %430 = vst [vmem:[%s254 + $0x2b8] sm:%s246] %v429
                %v431 = vld [vmem:[%s253 + $0x580] sm:%s246]
                %432 = vst [vmem:[%s254 + $0x2c0] sm:%s246] %v431
                %v433 = vld [vmem:[%s253 + $0x588] sm:%s246]
                %434 = vst [vmem:[%s254 + $0x2c8] sm:%s246] %v433
                %v435 = vld [vmem:[%s253 + $0x5a0] sm:%s246]
                %436 = vst [vmem:[%s254 + $0x2d0] sm:%s246] %v435
                %v437 = vld [vmem:[%s253 + $0x5a8] sm:%s246]
                %438 = vst [vmem:[%s254 + $0x2d8] sm:%s246] %v437
                %v439 = vld [vmem:[%s253 + $0x5c0] sm:%s246]
                %440 = vst [vmem:[%s254 + $0x2e0] sm:%s246] %v439
                %v441 = vld [vmem:[%s253 + $0x5c8] sm:%s246]
                %442 = vst [vmem:[%s254 + $0x2e8] sm:%s246] %v441
                %v443 = vld [vmem:[%s253 + $0x5e0] sm:%s246]
                %444 = vst [vmem:[%s254 + $0x2f0] sm:%s246] %v443
                %v445 = vld [vmem:[%s253 + $0x5e8] sm:%s246]
                %446 = vst [vmem:[%s254 + $0x2f8] sm:%s246] %v445
                %v447 = vld [vmem:[%s253 + $0x600] sm:%s246]
                %448 = vst [vmem:[%s254 + $0x300] sm:%s246] %v447
                %v449 = vld [vmem:[%s253 + $0x608] sm:%s246]
                %450 = vst [vmem:[%s254 + $0x308] sm:%s246] %v449
                %v451 = vld [vmem:[%s253 + $0x620] sm:%s246]
                %452 = vst [vmem:[%s254 + $0x310] sm:%s246] %v451
                %v453 = vld [vmem:[%s253 + $0x628] sm:%s246]
                %454 = vst [vmem:[%s254 + $0x318] sm:%s246] %v453
                %v455 = vld [vmem:[%s253 + $0x640] sm:%s246]
                %456 = vst [vmem:[%s254 + $0x320] sm:%s246] %v455
                %v457 = vld [vmem:[%s253 + $0x648] sm:%s246]
                %458 = vst [vmem:[%s254 + $0x328] sm:%s246] %v457
                %v459 = vld [vmem:[%s253 + $0x660] sm:%s246]
                %460 = vst [vmem:[%s254 + $0x330] sm:%s246] %v459
                %v461 = vld [vmem:[%s253 + $0x668] sm:%s246]
                %462 = vst [vmem:[%s254 + $0x338] sm:%s246] %v461
                %v463 = vld [vmem:[%s253 + $0x680] sm:%s246]
                %464 = vst [vmem:[%s254 + $0x340] sm:%s246] %v463
                %v465 = vld [vmem:[%s253 + $0x688] sm:%s246]
                %466 = vst [vmem:[%s254 + $0x348] sm:%s246] %v465
                %v467 = vld [vmem:[%s253 + $0x6a0] sm:%s246]
                %468 = vst [vmem:[%s254 + $0x350] sm:%s246] %v467
                %v469 = vld [vmem:[%s253 + $0x6a8] sm:%s246]
                %470 = vst [vmem:[%s254 + $0x358] sm:%s246] %v469
                %v471 = vld [vmem:[%s253 + $0x6c0] sm:%s246]
                %472 = vst [vmem:[%s254 + $0x360] sm:%s246] %v471
                %v473 = vld [vmem:[%s253 + $0x6c8] sm:%s246]
                %474 = vst [vmem:[%s254 + $0x368] sm:%s246] %v473
                %v475 = vld [vmem:[%s253 + $0x6e0] sm:%s246]
                %476 = vst [vmem:[%s254 + $0x370] sm:%s246] %v475
                %v477 = vld [vmem:[%s253 + $0x6e8] sm:%s246]
                %478 = vst [vmem:[%s254 + $0x378] sm:%s246] %v477
                %v479 = vld [vmem:[%s253 + $0x700] sm:%s246]
                %480 = vst [vmem:[%s254 + $0x380] sm:%s246] %v479
                %v481 = vld [vmem:[%s253 + $0x708] sm:%s246]
                %482 = vst [vmem:[%s254 + $0x388] sm:%s246] %v481
                %v483 = vld [vmem:[%s253 + $0x720] sm:%s246]
                %484 = vst [vmem:[%s254 + $0x390] sm:%s246] %v483
                %v485 = vld [vmem:[%s253 + $0x728] sm:%s246]
                %486 = vst [vmem:[%s254 + $0x398] sm:%s246] %v485
                %v487 = vld [vmem:[%s253 + $0x740] sm:%s246]
                %488 = vst [vmem:[%s254 + $0x3a0] sm:%s246] %v487
                %v489 = vld [vmem:[%s253 + $0x748] sm:%s246]
                %490 = vst [vmem:[%s254 + $0x3a8] sm:%s246] %v489
                %v491 = vld [vmem:[%s253 + $0x760] sm:%s246]
                %492 = vst [vmem:[%s254 + $0x3b0] sm:%s246] %v491
                %v493 = vld [vmem:[%s253 + $0x768] sm:%s246]
                %494 = vst [vmem:[%s254 + $0x3b8] sm:%s246] %v493
                %v495 = vld [vmem:[%s253 + $0x780] sm:%s246]
                %496 = vst [vmem:[%s254 + $0x3c0] sm:%s246] %v495
                %v497 = vld [vmem:[%s253 + $0x788] sm:%s246]
                %498 = vst [vmem:[%s254 + $0x3c8] sm:%s246] %v497
                %v499 = vld [vmem:[%s253 + $0x7a0] sm:%s246]
                %500 = vst [vmem:[%s254 + $0x3d0] sm:%s246] %v499
                %v501 = vld [vmem:[%s253 + $0x7a8] sm:%s246]
                %502 = vst [vmem:[%s254 + $0x3d8] sm:%s246] %v501
                %v503 = vld [vmem:[%s253 + $0x7c0] sm:%s246]
                %504 = vst [vmem:[%s254 + $0x3e0] sm:%s246] %v503
                %v505 = vld [vmem:[%s253 + $0x7c8] sm:%s246]
                %506 = vst [vmem:[%s254 + $0x3e8] sm:%s246] %v505
                %v507 = vld [vmem:[%s253 + $0x7e0] sm:%s246]
                %508 = vst [vmem:[%s254 + $0x3f0] sm:%s246] %v507
                %v509 = vld [vmem:[%s253 + $0x7e8] sm:%s246]
                %510 = vst [vmem:[%s254 + $0x3f8] sm:%s246] %v509
              $region61: #{model_forward.3} parent=55 // loop_footer
                %s252 = sadd.s32 1, %s248
              $region62: #{model_forward.3} parent=55 // loop_footer_branch
                %247 = sbr.rel target = $region58
              $region63: #{model_forward.3} parent=55 // loop_exit
                _
            $region56: #{model_forward.3} parent=47 // pred_fallthru
              _
          $region48: #{model_forward.3} parent=43 // pred_fallthru
            _
          %779 = vnop
        $region44: #{model_forward.3} parent=39 // pred_fallthru
          _
      $region40: #{model_forward.3} parent=5 // pred_fallthru
        _
      %p780 = scmp.le.s32.totalorder 1, %s13
      %p781 = scmp.lt.s32.totalorder %s13, 3
      %p782 = pnand %p780, %p781
      %p783 = pneg %p782
      // Predicated region
      $region79: #{model_forward.3} parent=5 // pred_check
        _
      $region80: #{model_forward.3} parent=5 // pred_check_branch
        %785 = sbr.rel (%p782) target = $region82
      $region81: #{model_forward.3} parent=5 // pred_region
        %s786 = ssub.s32 %s13, 1
        %s787 = sand.u32 %s26, 1
        %s788 = sand.u32 %s26, 1
        %s789 = smul.addr %s788, 1024
        %s790 = scalar_lea.vmem [#allocation2], %s789
        // Predicated region
        $region83: #{model_forward.3} parent=81 // pred_check
          %p791 = pneg %p39
        $region84: #{model_forward.3} parent=81 // pred_check_branch
          %793 = sbr.rel (%p791) target = $region86
        $region85: #{model_forward.3} parent=81 // pred_region
          _
        $region86: #{model_forward.3} parent=81 // pred_fallthru
          _
        %s794 = sand.u32 %s26, 1
        %s795 = sand.u32 %s26, 1
        %s796 = smul.addr %s795, 1024
        %s797 = scalar_lea.vmem [#allocation2], %s796
        %p798 = pneg %p39
        %p799 = pneg %p36
        %p800 = pneg %p60
        %p801 = pneg %p57
        %p802 = pneg %p81
        %p803 = pneg %p78
        %p804 = pneg %p102
        %p805 = pneg %p99
        %p806 = pneg %p123
        %p807 = pneg %p120
        %p808 = pneg %p144
        %p809 = pneg %p141
        %p810 = pneg %p165
        %p811 = pneg %p162
        %p812 = pneg %p191
        %p813 = pneg %p188
        %s814 = smul.u32 2, %s18
        %p815 = scmp.lt.s32.totalorder %s814, 3
        %s816 = scalar_select %p815, %s814, 3
        %s817 = smul.addr %s816, 8
        %s818 = scalar_lea.vmem %s7, %s817
        %s819 = smul.u32 2, %s18
        %s820 = smul.u32 2, %s18
        %p821 = scmp.lt.s32.totalorder %s820, 3
        %s822 = scalar_select %p821, %s820, 3
        %s823 = smul.addr %s822, 8
        %s824 = scalar_lea.vmem %s7, %s823
        %s825 = smul.u32 2, %s18
        %v827 = vld [vmem:[%s790] sm:$0xff]
        %v828 = vld [vmem:[%s790 + $0x8] sm:$0xff]
        %v829 = vld [vmem:[%s790 + $0x10] sm:$0xff]
        %v830 = vld [vmem:[%s790 + $0x18] sm:$0xff]
        %v831 = vld [vmem:[%s790 + $0x20] sm:$0xff]
        %v832 = vld [vmem:[%s790 + $0x28] sm:$0xff]
        %v833 = vld [vmem:[%s790 + $0x30] sm:$0xff]
        %v834 = vld [vmem:[%s790 + $0x38] sm:$0xff]
        %v835 = vld [vmem:[%s790 + $0x40] sm:$0xff]
        %v836 = vld [vmem:[%s790 + $0x48] sm:$0xff]
        %v837 = vld [vmem:[%s790 + $0x50] sm:$0xff]
        %v838 = vld [vmem:[%s790 + $0x58] sm:$0xff]
        %v839 = vld [vmem:[%s790 + $0x60] sm:$0xff]
        %v840 = vld [vmem:[%s790 + $0x68] sm:$0xff]
        %v841 = vld [vmem:[%s790 + $0x70] sm:$0xff]
        %v842 = vld [vmem:[%s790 + $0x78] sm:$0xff]
        %v843 = vld [vmem:[%s790 + $0x80] sm:$0xff]
        %v844 = vld [vmem:[%s790 + $0x88] sm:$0xff]
        %v845 = vld [vmem:[%s790 + $0x90] sm:$0xff]
        %v846 = vld [vmem:[%s790 + $0x98] sm:$0xff]
        %v847 = vld [vmem:[%s790 + $0xa0] sm:$0xff]
        %v848 = vld [vmem:[%s790 + $0xa8] sm:$0xff]
        %v849 = vld [vmem:[%s790 + $0xb0] sm:$0xff]
        %v850 = vld [vmem:[%s790 + $0xb8] sm:$0xff]
        %v851 = vld [vmem:[%s790 + $0xc0] sm:$0xff]
        %v852 = vld [vmem:[%s790 + $0xc8] sm:$0xff]
        %v853 = vld [vmem:[%s790 + $0xd0] sm:$0xff]
        %v854 = vld [vmem:[%s790 + $0xd8] sm:$0xff]
        %v855 = vld [vmem:[%s790 + $0xe0] sm:$0xff]
        %v856 = vld [vmem:[%s790 + $0xe8] sm:$0xff]
        %v857 = vld [vmem:[%s790 + $0xf0] sm:$0xff]
        %v858 = vld [vmem:[%s790 + $0xf8] sm:$0xff]
        %v859 = vld [vmem:[%s790 + $0x100] sm:$0xff]
        %v860 = vld [vmem:[%s790 + $0x108] sm:$0xff]
        %v861 = vld [vmem:[%s790 + $0x110] sm:$0xff]
        %v862 = vld [vmem:[%s790 + $0x118] sm:$0xff]
        %v863 = vld [vmem:[%s790 + $0x120] sm:$0xff]
        %v864 = vld [vmem:[%s790 + $0x128] sm:$0xff]
        %v865 = vld [vmem:[%s790 + $0x130] sm:$0xff]
        %v866 = vld [vmem:[%s790 + $0x138] sm:$0xff]
        %v867 = vld [vmem:[%s790 + $0x140] sm:$0xff]
        %v868 = vld [vmem:[%s790 + $0x148] sm:$0xff]
        %v869 = vld [vmem:[%s790 + $0x150] sm:$0xff]
        %v870 = vld [vmem:[%s790 + $0x158] sm:$0xff]
        %v871 = vld [vmem:[%s790 + $0x160] sm:$0xff]
        %v872 = vld [vmem:[%s790 + $0x168] sm:$0xff]
        %v873 = vld [vmem:[%s790 + $0x170] sm:$0xff]
        %v874 = vld [vmem:[%s790 + $0x178] sm:$0xff]
        %v875 = vld [vmem:[%s790 + $0x180] sm:$0xff]
        %v876 = vld [vmem:[%s790 + $0x188] sm:$0xff]
        %v877 = vld [vmem:[%s790 + $0x190] sm:$0xff]
        %v878 = vld [vmem:[%s790 + $0x198] sm:$0xff]
        %v879 = vld [vmem:[%s790 + $0x1a0] sm:$0xff]
        %v880 = vld [vmem:[%s790 + $0x1a8] sm:$0xff]
        %v881 = vld [vmem:[%s790 + $0x1b0] sm:$0xff]
        %v882 = vld [vmem:[%s790 + $0x1b8] sm:$0xff]
        %v883 = vld [vmem:[%s790 + $0x1c0] sm:$0xff]
        %v884 = vld [vmem:[%s790 + $0x1c8] sm:$0xff]
        %v885 = vld [vmem:[%s790 + $0x1d0] sm:$0xff]
        %v886 = vld [vmem:[%s790 + $0x1d8] sm:$0xff]
        %v887 = vld [vmem:[%s790 + $0x1e0] sm:$0xff]
        %v888 = vld [vmem:[%s790 + $0x1e8] sm:$0xff]
        %v889 = vld [vmem:[%s790 + $0x1f0] sm:$0xff]
        %v890 = vld [vmem:[%s790 + $0x1f8] sm:$0xff]
        %v891 = vld [vmem:[%s790 + $0x200] sm:$0xff]
        %v892 = vld [vmem:[%s790 + $0x208] sm:$0xff]
        %v893 = vld [vmem:[%s790 + $0x210] sm:$0xff]
        %v894 = vld [vmem:[%s790 + $0x218] sm:$0xff]
        %v895 = vld [vmem:[%s790 + $0x220] sm:$0xff]
        %v896 = vld [vmem:[%s790 + $0x228] sm:$0xff]
        %v897 = vld [vmem:[%s790 + $0x230] sm:$0xff]
        %v898 = vld [vmem:[%s790 + $0x238] sm:$0xff]
        %v899 = vld [vmem:[%s790 + $0x240] sm:$0xff]
        %v900 = vld [vmem:[%s790 + $0x248] sm:$0xff]
        %v901 = vld [vmem:[%s790 + $0x250] sm:$0xff]
        %v902 = vld [vmem:[%s790 + $0x258] sm:$0xff]
        %v903 = vld [vmem:[%s790 + $0x260] sm:$0xff]
        %v904 = vld [vmem:[%s790 + $0x268] sm:$0xff]
        %v905 = vld [vmem:[%s790 + $0x270] sm:$0xff]
        %v906 = vld [vmem:[%s790 + $0x278] sm:$0xff]
        %v907 = vld [vmem:[%s790 + $0x280] sm:$0xff]
        %v908 = vld [vmem:[%s790 + $0x288] sm:$0xff]
        %v909 = vld [vmem:[%s790 + $0x290] sm:$0xff]
        %v910 = vld [vmem:[%s790 + $0x298] sm:$0xff]
        %v911 = vld [vmem:[%s790 + $0x2a0] sm:$0xff]
        %v912 = vld [vmem:[%s790 + $0x2a8] sm:$0xff]
        %v913 = vld [vmem:[%s790 + $0x2b0] sm:$0xff]
        %v914 = vld [vmem:[%s790 + $0x2b8] sm:$0xff]
        %v915 = vld [vmem:[%s790 + $0x2c0] sm:$0xff]
        %v916 = vld [vmem:[%s790 + $0x2c8] sm:$0xff]
        %v917 = vld [vmem:[%s790 + $0x2d0] sm:$0xff]
        %v918 = vld [vmem:[%s790 + $0x2d8] sm:$0xff]
        %v919 = vld [vmem:[%s790 + $0x2e0] sm:$0xff]
        %v920 = vld [vmem:[%s790 + $0x2e8] sm:$0xff]
        %v921 = vld [vmem:[%s790 + $0x2f0] sm:$0xff]
        %v922 = vld [vmem:[%s790 + $0x2f8] sm:$0xff]
        %v923 = vld [vmem:[%s790 + $0x300] sm:$0xff]
        %v924 = vld [vmem:[%s790 + $0x308] sm:$0xff]
        %v925 = vld [vmem:[%s790 + $0x310] sm:$0xff]
        %v926 = vld [vmem:[%s790 + $0x318] sm:$0xff]
        %v927 = vld [vmem:[%s790 + $0x320] sm:$0xff]
        %v928 = vld [vmem:[%s790 + $0x328] sm:$0xff]
        %v929 = vld [vmem:[%s790 + $0x330] sm:$0xff]
        %v930 = vld [vmem:[%s790 + $0x338] sm:$0xff]
        %v931 = vld [vmem:[%s790 + $0x340] sm:$0xff]
        %v932 = vld [vmem:[%s790 + $0x348] sm:$0xff]
        %v933 = vld [vmem:[%s790 + $0x350] sm:$0xff]
        %v934 = vld [vmem:[%s790 + $0x358] sm:$0xff]
        %v935 = vld [vmem:[%s790 + $0x360] sm:$0xff]
        %v936 = vld [vmem:[%s790 + $0x368] sm:$0xff]
        %v937 = vld [vmem:[%s790 + $0x370] sm:$0xff]
        %v938 = vld [vmem:[%s790 + $0x378] sm:$0xff]
        %v939 = vld [vmem:[%s790 + $0x380] sm:$0xff]
        %v940 = vld [vmem:[%s790 + $0x388] sm:$0xff]
        %v941 = vld [vmem:[%s790 + $0x390] sm:$0xff]
        %v942 = vld [vmem:[%s790 + $0x398] sm:$0xff]
        %v943 = vld [vmem:[%s790 + $0x3a0] sm:$0xff]
        %v944 = vld [vmem:[%s790 + $0x3a8] sm:$0xff]
        %v945 = vld [vmem:[%s790 + $0x3b0] sm:$0xff]
        %v946 = vld [vmem:[%s790 + $0x3b8] sm:$0xff]
        %v947 = vld [vmem:[%s790 + $0x3c0] sm:$0xff]
        %v948 = vld [vmem:[%s790 + $0x3c8] sm:$0xff]
        %v949 = vld [vmem:[%s790 + $0x3d0] sm:$0xff]
        %v950 = vld [vmem:[%s790 + $0x3d8] sm:$0xff]
        %v951 = vld [vmem:[%s790 + $0x3e0] sm:$0xff]
        %v952 = vld [vmem:[%s790 + $0x3e8] sm:$0xff]
        %v953 = vld [vmem:[%s790 + $0x3f0] sm:$0xff]
        %v954 = vld [vmem:[%s790 + $0x3f8] sm:$0xff]
        %v955 = vld [vmem:[%s1] sm:$0xf]
        %v956 = vld [vmem:[%s1 + $0x4] sm:$0xf]
        %v957 = vld [vmem:[%s1 + $0x8] sm:$0xf]
        %v958 = vld [vmem:[%s1 + $0xc] sm:$0xf]
        %v959 = vld [vmem:[%s1 + $0x10] sm:$0xf]
        %v960 = vld [vmem:[%s1 + $0x14] sm:$0xf]
        %v961 = vld [vmem:[%s1 + $0x18] sm:$0xf]
        %v962 = vld [vmem:[%s1 + $0x1c] sm:$0xf]
        %v963 = vld [vmem:[%s1 + $0x20] sm:$0xf]
        %v964 = vld [vmem:[%s1 + $0x24] sm:$0xf]
        %v965 = vld [vmem:[%s1 + $0x28] sm:$0xf]
        %v966 = vld [vmem:[%s1 + $0x2c] sm:$0xf]
        %v967 = vld [vmem:[%s1 + $0x30] sm:$0xf]
        %v968 = vld [vmem:[%s1 + $0x34] sm:$0xf]
        %v969 = vld [vmem:[%s1 + $0x38] sm:$0xf]
        %v970 = vld [vmem:[%s1 + $0x3c] sm:$0xf]
        %v971 = vld [vmem:[%s1 + $0x40] sm:$0xf]
        %v972 = vld [vmem:[%s1 + $0x44] sm:$0xf]
        %v973 = vld [vmem:[%s1 + $0x48] sm:$0xf]
        %v974 = vld [vmem:[%s1 + $0x4c] sm:$0xf]
        %v975 = vld [vmem:[%s1 + $0x50] sm:$0xf]
        %v976 = vld [vmem:[%s1 + $0x54] sm:$0xf]
        %v977 = vld [vmem:[%s1 + $0x58] sm:$0xf]
        %v978 = vld [vmem:[%s1 + $0x5c] sm:$0xf]
        %v979 = vld [vmem:[%s1 + $0x60] sm:$0xf]
        %v980 = vld [vmem:[%s1 + $0x64] sm:$0xf]
        %v981 = vld [vmem:[%s1 + $0x68] sm:$0xf]
        %v982 = vld [vmem:[%s1 + $0x6c] sm:$0xf]
        %v983 = vld [vmem:[%s1 + $0x70] sm:$0xf]
        %v984 = vld [vmem:[%s1 + $0x74] sm:$0xf]
        %v985 = vld [vmem:[%s1 + $0x78] sm:$0xf]
        %v986 = vld [vmem:[%s1 + $0x7c] sm:$0x1]
        %v1115 = vunpack.c.l.b16 %v827
        %v1116 = vunpack.c.h.b16 %v827
        %v1117 = vunpack.c.l.b16 %v828
        %v1118 = vunpack.c.h.b16 %v828
        %v1119 = vunpack.c.l.b16 %v829
        %v1120 = vunpack.c.h.b16 %v829
        %v1121 = vunpack.c.l.b16 %v830
        %v1122 = vunpack.c.h.b16 %v830
        %v1123 = vunpack.c.l.b16 %v831
        %v1124 = vunpack.c.h.b16 %v831
        %v1125 = vunpack.c.l.b16 %v832
        %v1126 = vunpack.c.h.b16 %v832
        %v1127 = vunpack.c.l.b16 %v833
        %v1128 = vunpack.c.h.b16 %v833
        %v1129 = vunpack.c.l.b16 %v834
        %v1130 = vunpack.c.h.b16 %v834
        %v1131 = vunpack.c.l.b16 %v835
        %v1132 = vunpack.c.h.b16 %v835
        %v1133 = vunpack.c.l.b16 %v836
        %v1134 = vunpack.c.h.b16 %v836
        %v1135 = vunpack.c.l.b16 %v837
        %v1136 = vunpack.c.h.b16 %v837
        %v1137 = vunpack.c.l.b16 %v838
        %v1138 = vunpack.c.h.b16 %v838
        %v1139 = vunpack.c.l.b16 %v839
        %v1140 = vunpack.c.h.b16 %v839
        %v1141 = vunpack.c.l.b16 %v840
        %v1142 = vunpack.c.h.b16 %v840
        %v1143 = vunpack.c.l.b16 %v841
        %v1144 = vunpack.c.h.b16 %v841
        %v1145 = vunpack.c.l.b16 %v842
        %v1146 = vunpack.c.h.b16 %v842
        %v1147 = vunpack.c.l.b16 %v843
        %v1148 = vunpack.c.h.b16 %v843
        %v1149 = vunpack.c.l.b16 %v844
        %v1150 = vunpack.c.h.b16 %v844
        %v1151 = vunpack.c.l.b16 %v845
        %v1152 = vunpack.c.h.b16 %v845
        %v1153 = vunpack.c.l.b16 %v846
        %v1154 = vunpack.c.h.b16 %v846
        %v1155 = vunpack.c.l.b16 %v847
        %v1156 = vunpack.c.h.b16 %v847
        %v1157 = vunpack.c.l.b16 %v848
        %v1158 = vunpack.c.h.b16 %v848
        %v1159 = vunpack.c.l.b16 %v849
        %v1160 = vunpack.c.h.b16 %v849
        %v1161 = vunpack.c.l.b16 %v850
        %v1162 = vunpack.c.h.b16 %v850
        %v1163 = vunpack.c.l.b16 %v851
        %v1164 = vunpack.c.h.b16 %v851
        %v1165 = vunpack.c.l.b16 %v852
        %v1166 = vunpack.c.h.b16 %v852
        %v1167 = vunpack.c.l.b16 %v853
        %v1168 = vunpack.c.h.b16 %v853
        %v1169 = vunpack.c.l.b16 %v854
        %v1170 = vunpack.c.h.b16 %v854
        %v1171 = vunpack.c.l.b16 %v855
        %v1172 = vunpack.c.h.b16 %v855
        %v1173 = vunpack.c.l.b16 %v856
        %v1174 = vunpack.c.h.b16 %v856
        %v1175 = vunpack.c.l.b16 %v857
        %v1176 = vunpack.c.h.b16 %v857
        %v1177 = vunpack.c.l.b16 %v858
        %v1178 = vunpack.c.h.b16 %v858
        %v1179 = vunpack.c.l.b16 %v859
        %v1180 = vunpack.c.h.b16 %v859
        %v1181 = vunpack.c.l.b16 %v860
        %v1182 = vunpack.c.h.b16 %v860
        %v1183 = vunpack.c.l.b16 %v861
        %v1184 = vunpack.c.h.b16 %v861
        %v1185 = vunpack.c.l.b16 %v862
        %v1186 = vunpack.c.h.b16 %v862
        %v1187 = vunpack.c.l.b16 %v863
        %v1188 = vunpack.c.h.b16 %v863
        %v1189 = vunpack.c.l.b16 %v864
        %v1190 = vunpack.c.h.b16 %v864
        %v1191 = vunpack.c.l.b16 %v865
        %v1192 = vunpack.c.h.b16 %v865
        %v1193 = vunpack.c.l.b16 %v866
        %v1194 = vunpack.c.h.b16 %v866
        %v1195 = vunpack.c.l.b16 %v867
        %v1196 = vunpack.c.h.b16 %v867
        %v1197 = vunpack.c.l.b16 %v868
        %v1198 = vunpack.c.h.b16 %v868
        %v1199 = vunpack.c.l.b16 %v869
        %v1200 = vunpack.c.h.b16 %v869
        %v1201 = vunpack.c.l.b16 %v870
        %v1202 = vunpack.c.h.b16 %v870
        %v1203 = vunpack.c.l.b16 %v871
        %v1204 = vunpack.c.h.b16 %v871
        %v1205 = vunpack.c.l.b16 %v872
        %v1206 = vunpack.c.h.b16 %v872
        %v1207 = vunpack.c.l.b16 %v873
        %v1208 = vunpack.c.h.b16 %v873
        %v1209 = vunpack.c.l.b16 %v874
        %v1210 = vunpack.c.h.b16 %v874
        %v1211 = vunpack.c.l.b16 %v875
        %v1212 = vunpack.c.h.b16 %v875
        %v1213 = vunpack.c.l.b16 %v876
        %v1214 = vunpack.c.h.b16 %v876
        %v1215 = vunpack.c.l.b16 %v877
        %v1216 = vunpack.c.h.b16 %v877
        %v1217 = vunpack.c.l.b16 %v878
        %v1218 = vunpack.c.h.b16 %v878
        %v1219 = vunpack.c.l.b16 %v879
        %v1220 = vunpack.c.h.b16 %v879
        %v1221 = vunpack.c.l.b16 %v880
        %v1222 = vunpack.c.h.b16 %v880
        %v1223 = vunpack.c.l.b16 %v881
        %v1224 = vunpack.c.h.b16 %v881
        %v1225 = vunpack.c.l.b16 %v882
        %v1226 = vunpack.c.h.b16 %v882
        %v1227 = vunpack.c.l.b16 %v883
        %v1228 = vunpack.c.h.b16 %v883
        %v1229 = vunpack.c.l.b16 %v884
        %v1230 = vunpack.c.h.b16 %v884
        %v1231 = vunpack.c.l.b16 %v885
        %v1232 = vunpack.c.h.b16 %v885
        %v1233 = vunpack.c.l.b16 %v886
        %v1234 = vunpack.c.h.b16 %v886
        %v1235 = vunpack.c.l.b16 %v887
        %v1236 = vunpack.c.h.b16 %v887
        %v1237 = vunpack.c.l.b16 %v888
        %v1238 = vunpack.c.h.b16 %v888
        %v1239 = vunpack.c.l.b16 %v889
        %v1240 = vunpack.c.h.b16 %v889
        %v1241 = vunpack.c.l.b16 %v890
        %v1242 = vunpack.c.h.b16 %v890
        %v1243 = vunpack.c.l.b16 %v891
        %v1244 = vunpack.c.h.b16 %v891
        %v1245 = vunpack.c.l.b16 %v892
        %v1246 = vunpack.c.h.b16 %v892
        %v1247 = vunpack.c.l.b16 %v893
        %v1248 = vunpack.c.h.b16 %v893
        %v1249 = vunpack.c.l.b16 %v894
        %v1250 = vunpack.c.h.b16 %v894
        %v1251 = vunpack.c.l.b16 %v895
        %v1252 = vunpack.c.h.b16 %v895
        %v1253 = vunpack.c.l.b16 %v896
        %v1254 = vunpack.c.h.b16 %v896
        %v1255 = vunpack.c.l.b16 %v897
        %v1256 = vunpack.c.h.b16 %v897
        %v1257 = vunpack.c.l.b16 %v898
        %v1258 = vunpack.c.h.b16 %v898
        %v1259 = vunpack.c.l.b16 %v899
        %v1260 = vunpack.c.h.b16 %v899
        %v1261 = vunpack.c.l.b16 %v900
        %v1262 = vunpack.c.h.b16 %v900
        %v1263 = vunpack.c.l.b16 %v901
        %v1264 = vunpack.c.h.b16 %v901
        %v1265 = vunpack.c.l.b16 %v902
        %v1266 = vunpack.c.h.b16 %v902
        %v1267 = vunpack.c.l.b16 %v903
        %v1268 = vunpack.c.h.b16 %v903
        %v1269 = vunpack.c.l.b16 %v904
        %v1270 = vunpack.c.h.b16 %v904
        %v1271 = vunpack.c.l.b16 %v905
        %v1272 = vunpack.c.h.b16 %v905
        %v1273 = vunpack.c.l.b16 %v906
        %v1274 = vunpack.c.h.b16 %v906
        %v1275 = vunpack.c.l.b16 %v907
        %v1276 = vunpack.c.h.b16 %v907
        %v1277 = vunpack.c.l.b16 %v908
        %v1278 = vunpack.c.h.b16 %v908
        %v1279 = vunpack.c.l.b16 %v909
        %v1280 = vunpack.c.h.b16 %v909
        %v1281 = vunpack.c.l.b16 %v910
        %v1282 = vunpack.c.h.b16 %v910
        %v1283 = vunpack.c.l.b16 %v911
        %v1284 = vunpack.c.h.b16 %v911
        %v1285 = vunpack.c.l.b16 %v912
        %v1286 = vunpack.c.h.b16 %v912
        %v1287 = vunpack.c.l.b16 %v913
        %v1288 = vunpack.c.h.b16 %v913
        %v1289 = vunpack.c.l.b16 %v914
        %v1290 = vunpack.c.h.b16 %v914
        %v1291 = vunpack.c.l.b16 %v915
        %v1292 = vunpack.c.h.b16 %v915
        %v1293 = vunpack.c.l.b16 %v916
        %v1294 = vunpack.c.h.b16 %v916
        %v1295 = vunpack.c.l.b16 %v917
        %v1296 = vunpack.c.h.b16 %v917
        %v1297 = vunpack.c.l.b16 %v918
        %v1298 = vunpack.c.h.b16 %v918
        %v1299 = vunpack.c.l.b16 %v919
        %v1300 = vunpack.c.h.b16 %v919
        %v1301 = vunpack.c.l.b16 %v920
        %v1302 = vunpack.c.h.b16 %v920
        %v1303 = vunpack.c.l.b16 %v921
        %v1304 = vunpack.c.h.b16 %v921
        %v1305 = vunpack.c.l.b16 %v922
        %v1306 = vunpack.c.h.b16 %v922
        %v1307 = vunpack.c.l.b16 %v923
        %v1308 = vunpack.c.h.b16 %v923
        %v1309 = vunpack.c.l.b16 %v924
        %v1310 = vunpack.c.h.b16 %v924
        %v1311 = vunpack.c.l.b16 %v925
        %v1312 = vunpack.c.h.b16 %v925
        %v1313 = vunpack.c.l.b16 %v926
        %v1314 = vunpack.c.h.b16 %v926
        %v1315 = vunpack.c.l.b16 %v927
        %v1316 = vunpack.c.h.b16 %v927
        %v1317 = vunpack.c.l.b16 %v928
        %v1318 = vunpack.c.h.b16 %v928
        %v1319 = vunpack.c.l.b16 %v929
        %v1320 = vunpack.c.h.b16 %v929
        %v1321 = vunpack.c.l.b16 %v930
        %v1322 = vunpack.c.h.b16 %v930
        %v1323 = vunpack.c.l.b16 %v931
        %v1324 = vunpack.c.h.b16 %v931
        %v1325 = vunpack.c.l.b16 %v932
        %v1326 = vunpack.c.h.b16 %v932
        %v1327 = vunpack.c.l.b16 %v933
        %v1328 = vunpack.c.h.b16 %v933
        %v1329 = vunpack.c.l.b16 %v934
        %v1330 = vunpack.c.h.b16 %v934
        %v1331 = vunpack.c.l.b16 %v935
        %v1332 = vunpack.c.h.b16 %v935
        %v1333 = vunpack.c.l.b16 %v936
        %v1334 = vunpack.c.h.b16 %v936
        %v1335 = vunpack.c.l.b16 %v937
        %v1336 = vunpack.c.h.b16 %v937
        %v1337 = vunpack.c.l.b16 %v938
        %v1338 = vunpack.c.h.b16 %v938
        %v1339 = vunpack.c.l.b16 %v939
        %v1340 = vunpack.c.h.b16 %v939
        %v1341 = vunpack.c.l.b16 %v940
        %v1342 = vunpack.c.h.b16 %v940
        %v1343 = vunpack.c.l.b16 %v941
        %v1344 = vunpack.c.h.b16 %v941
        %v1345 = vunpack.c.l.b16 %v942
        %v1346 = vunpack.c.h.b16 %v942
        %v1347 = vunpack.c.l.b16 %v943
        %v1348 = vunpack.c.h.b16 %v943
        %v1349 = vunpack.c.l.b16 %v944
        %v1350 = vunpack.c.h.b16 %v944
        %v1351 = vunpack.c.l.b16 %v945
        %v1352 = vunpack.c.h.b16 %v945
        %v1353 = vunpack.c.l.b16 %v946
        %v1354 = vunpack.c.h.b16 %v946
        %v1355 = vunpack.c.l.b16 %v947
        %v1356 = vunpack.c.h.b16 %v947
        %v1357 = vunpack.c.l.b16 %v948
        %v1358 = vunpack.c.h.b16 %v948
        %v1359 = vunpack.c.l.b16 %v949
        %v1360 = vunpack.c.h.b16 %v949
        %v1361 = vunpack.c.l.b16 %v950
        %v1362 = vunpack.c.h.b16 %v950
        %v1363 = vunpack.c.l.b16 %v951
        %v1364 = vunpack.c.h.b16 %v951
        %v1365 = vunpack.c.l.b16 %v952
        %v1366 = vunpack.c.h.b16 %v952
        %v1367 = vunpack.c.l.b16 %v953
        %v1368 = vunpack.c.h.b16 %v953
        %v1369 = vunpack.c.l.b16 %v954
        %v1370 = vunpack.c.h.b16 %v954
        %v1371 = vpack.c.b16 %v1117, %v1115
        %v1372 = vpack.c.b16 %v1118, %v1116
        %v1373 = vpack.c.b16 %v1121, %v1119
        %v1374 = vpack.c.b16 %v1122, %v1120
        %v1375 = vpack.c.b16 %v1125, %v1123
        %v1376 = vpack.c.b16 %v1126, %v1124
        %v1377 = vpack.c.b16 %v1129, %v1127
        %v1378 = vpack.c.b16 %v1130, %v1128
        %v1379 = vpack.c.b16 %v1133, %v1131
        %v1380 = vpack.c.b16 %v1134, %v1132
        %v1381 = vpack.c.b16 %v1137, %v1135
        %v1382 = vpack.c.b16 %v1138, %v1136
        %v1383 = vpack.c.b16 %v1141, %v1139
        %v1384 = vpack.c.b16 %v1142, %v1140
        %v1385 = vpack.c.b16 %v1145, %v1143
        %v1386 = vpack.c.b16 %v1146, %v1144
        %v1387 = vpack.c.b16 %v1149, %v1147
        %v1388 = vpack.c.b16 %v1150, %v1148
        %v1389 = vpack.c.b16 %v1153, %v1151
        %v1390 = vpack.c.b16 %v1154, %v1152
        %v1391 = vpack.c.b16 %v1157, %v1155
        %v1392 = vpack.c.b16 %v1158, %v1156
        %v1393 = vpack.c.b16 %v1161, %v1159
        %v1394 = vpack.c.b16 %v1162, %v1160
        %v1395 = vpack.c.b16 %v1165, %v1163
        %v1396 = vpack.c.b16 %v1166, %v1164
        %v1397 = vpack.c.b16 %v1169, %v1167
        %v1398 = vpack.c.b16 %v1170, %v1168
        %v1399 = vpack.c.b16 %v1173, %v1171
        %v1400 = vpack.c.b16 %v1174, %v1172
        %v1401 = vpack.c.b16 %v1177, %v1175
        %v1402 = vpack.c.b16 %v1178, %v1176
        %v1403 = vpack.c.b16 %v1181, %v1179
        %v1404 = vpack.c.b16 %v1182, %v1180
        %v1405 = vpack.c.b16 %v1185, %v1183
        %v1406 = vpack.c.b16 %v1186, %v1184
        %v1407 = vpack.c.b16 %v1189, %v1187
        %v1408 = vpack.c.b16 %v1190, %v1188
        %v1409 = vpack.c.b16 %v1193, %v1191
        %v1410 = vpack.c.b16 %v1194, %v1192
        %v1411 = vpack.c.b16 %v1197, %v1195
        %v1412 = vpack.c.b16 %v1198, %v1196
        %v1413 = vpack.c.b16 %v1201, %v1199
        %v1414 = vpack.c.b16 %v1202, %v1200
        %v1415 = vpack.c.b16 %v1205, %v1203
        %v1416 = vpack.c.b16 %v1206, %v1204
        %v1417 = vpack.c.b16 %v1209, %v1207
        %v1418 = vpack.c.b16 %v1210, %v1208
        %v1419 = vpack.c.b16 %v1213, %v1211
        %v1420 = vpack.c.b16 %v1214, %v1212
        %v1421 = vpack.c.b16 %v1217, %v1215
        %v1422 = vpack.c.b16 %v1218, %v1216
        %v1423 = vpack.c.b16 %v1221, %v1219
        %v1424 = vpack.c.b16 %v1222, %v1220
        %v1425 = vpack.c.b16 %v1225, %v1223
        %v1426 = vpack.c.b16 %v1226, %v1224
        %v1427 = vpack.c.b16 %v1229, %v1227
        %v1428 = vpack.c.b16 %v1230, %v1228
        %v1429 = vpack.c.b16 %v1233, %v1231
        %v1430 = vpack.c.b16 %v1234, %v1232
        %v1431 = vpack.c.b16 %v1237, %v1235
        %v1432 = vpack.c.b16 %v1238, %v1236
        %v1433 = vpack.c.b16 %v1241, %v1239
        %v1434 = vpack.c.b16 %v1242, %v1240
        %v1435 = vpack.c.b16 %v1245, %v1243
        %v1436 = vpack.c.b16 %v1246, %v1244
        %v1437 = vpack.c.b16 %v1249, %v1247
        %v1438 = vpack.c.b16 %v1250, %v1248
        %v1439 = vpack.c.b16 %v1253, %v1251
        %v1440 = vpack.c.b16 %v1254, %v1252
        %v1441 = vpack.c.b16 %v1257, %v1255
        %v1442 = vpack.c.b16 %v1258, %v1256
        %v1443 = vpack.c.b16 %v1261, %v1259
        %v1444 = vpack.c.b16 %v1262, %v1260
        %v1445 = vpack.c.b16 %v1265, %v1263
        %v1446 = vpack.c.b16 %v1266, %v1264
        %v1447 = vpack.c.b16 %v1269, %v1267
        %v1448 = vpack.c.b16 %v1270, %v1268
        %v1449 = vpack.c.b16 %v1273, %v1271
        %v1450 = vpack.c.b16 %v1274, %v1272
        %v1451 = vpack.c.b16 %v1277, %v1275
        %v1452 = vpack.c.b16 %v1278, %v1276
        %v1453 = vpack.c.b16 %v1281, %v1279
        %v1454 = vpack.c.b16 %v1282, %v1280
        %v1455 = vpack.c.b16 %v1285, %v1283
        %v1456 = vpack.c.b16 %v1286, %v1284
        %v1457 = vpack.c.b16 %v1289, %v1287
        %v1458 = vpack.c.b16 %v1290, %v1288
        %v1459 = vpack.c.b16 %v1293, %v1291
        %v1460 = vpack.c.b16 %v1294, %v1292
        %v1461 = vpack.c.b16 %v1297, %v1295
        %v1462 = vpack.c.b16 %v1298, %v1296
        %v1463 = vpack.c.b16 %v1301, %v1299
        %v1464 = vpack.c.b16 %v1302, %v1300
        %v1465 = vpack.c.b16 %v1305, %v1303
        %v1466 = vpack.c.b16 %v1306, %v1304
        %v1467 = vpack.c.b16 %v1309, %v1307
        %v1468 = vpack.c.b16 %v1310, %v1308
        %v1469 = vpack.c.b16 %v1313, %v1311
        %v1470 = vpack.c.b16 %v1314, %v1312
        %v1471 = vpack.c.b16 %v1317, %v1315
        %v1472 = vpack.c.b16 %v1318, %v1316
        %v1473 = vpack.c.b16 %v1321, %v1319
        %v1474 = vpack.c.b16 %v1322, %v1320
        %v1475 = vpack.c.b16 %v1325, %v1323
        %v1476 = vpack.c.b16 %v1326, %v1324
        %v1477 = vpack.c.b16 %v1329, %v1327
        %v1478 = vpack.c.b16 %v1330, %v1328
        %v1479 = vpack.c.b16 %v1333, %v1331
        %v1480 = vpack.c.b16 %v1334, %v1332
        %v1481 = vpack.c.b16 %v1337, %v1335
        %v1482 = vpack.c.b16 %v1338, %v1336
        %v1483 = vpack.c.b16 %v1341, %v1339
        %v1484 = vpack.c.b16 %v1342, %v1340
        %v1485 = vpack.c.b16 %v1345, %v1343
        %v1486 = vpack.c.b16 %v1346, %v1344
        %v1487 = vpack.c.b16 %v1349, %v1347
        %v1488 = vpack.c.b16 %v1350, %v1348
        %v1489 = vpack.c.b16 %v1353, %v1351
        %v1490 = vpack.c.b16 %v1354, %v1352
        %v1491 = vpack.c.b16 %v1357, %v1355
        %v1492 = vpack.c.b16 %v1358, %v1356
        %v1493 = vpack.c.b16 %v1361, %v1359
        %v1494 = vpack.c.b16 %v1362, %v1360
        %v1495 = vpack.c.b16 %v1365, %v1363
        %v1496 = vpack.c.b16 %v1366, %v1364
        %v1497 = vpack.c.b16 %v1369, %v1367
        %v1498 = vpack.c.b16 %v1370, %v1368
        %v1595 = vunpack.c.l.b16 %v955
        %v1596 = vunpack.c.l.b16 %v956
        %v1597 = vunpack.c.l.b16 %v957
        %v1598 = vunpack.c.l.b16 %v958
        %v1599 = vunpack.c.l.b16 %v959
        %v1600 = vunpack.c.l.b16 %v960
        %v1601 = vunpack.c.l.b16 %v961
        %v1602 = vunpack.c.l.b16 %v962
        %v1603 = vunpack.c.l.b16 %v963
        %v1604 = vunpack.c.l.b16 %v964
        %v1605 = vunpack.c.l.b16 %v965
        %v1606 = vunpack.c.l.b16 %v966
        %v1607 = vunpack.c.l.b16 %v967
        %v1608 = vunpack.c.l.b16 %v968
        %v1609 = vunpack.c.l.b16 %v969
        %v1610 = vunpack.c.l.b16 %v970
        %v1611 = vunpack.c.l.b16 %v971
        %v1612 = vunpack.c.l.b16 %v972
        %v1613 = vunpack.c.l.b16 %v973
        %v1614 = vunpack.c.l.b16 %v974
        %v1615 = vunpack.c.l.b16 %v975
        %v1616 = vunpack.c.l.b16 %v976
        %v1617 = vunpack.c.l.b16 %v977
        %v1618 = vunpack.c.l.b16 %v978
        %v1619 = vunpack.c.l.b16 %v979
        %v1620 = vunpack.c.l.b16 %v980
        %v1621 = vunpack.c.l.b16 %v981
        %v1622 = vunpack.c.l.b16 %v982
        %v1623 = vunpack.c.l.b16 %v983
        %v1624 = vunpack.c.l.b16 %v984
        %v1625 = vunpack.c.l.b16 %v985
        %v1626 = vunpack.c.l.b16 %v986
        %v1627 = vpack.c.b16 %v1596, %v1595
        %v1628 = vpack.c.b16 %v1598, %v1597
        %v1629 = vpack.c.b16 %v1600, %v1599
        %v1630 = vpack.c.b16 %v1602, %v1601
        %v1631 = vpack.c.b16 %v1604, %v1603
        %v1632 = vpack.c.b16 %v1606, %v1605
        %v1633 = vpack.c.b16 %v1608, %v1607
        %v1634 = vpack.c.b16 %v1610, %v1609
        %v1635 = vpack.c.b16 %v1612, %v1611
        %v1636 = vpack.c.b16 %v1614, %v1613
        %v1637 = vpack.c.b16 %v1616, %v1615
        %v1638 = vpack.c.b16 %v1618, %v1617
        %v1639 = vpack.c.b16 %v1620, %v1619
        %v1640 = vpack.c.b16 %v1622, %v1621
        %v1641 = vpack.c.b16 %v1624, %v1623
        %v1642 = vpack.c.b16 %v1626, %v1625
        %vm1658 = vcmask 998400
        %v1660 = vsel %vm1658, %v1372, 0
        %v1663 = vsel %vm1658, %v1374, 0
        %v1666 = vsel %vm1658, %v1376, 0
        %v1669 = vsel %vm1658, %v1378, 0
        %v1672 = vsel %vm1658, %v1380, 0
        %v1675 = vsel %vm1658, %v1382, 0
        %v1678 = vsel %vm1658, %v1384, 0
        %v1681 = vsel %vm1658, %v1386, 0
        %v1684 = vsel %vm1658, %v1388, 0
        %v1687 = vsel %vm1658, %v1390, 0
        %v1690 = vsel %vm1658, %v1392, 0
        %v1693 = vsel %vm1658, %v1394, 0
        %v1696 = vsel %vm1658, %v1396, 0
        %v1699 = vsel %vm1658, %v1398, 0
        %v1702 = vsel %vm1658, %v1400, 0
        %v1705 = vsel %vm1658, %v1402, 0
        %v1708 = vsel %vm1658, %v1404, 0
        %v1711 = vsel %vm1658, %v1406, 0
        %v1714 = vsel %vm1658, %v1408, 0
        %v1717 = vsel %vm1658, %v1410, 0
        %v1720 = vsel %vm1658, %v1412, 0
        %v1723 = vsel %vm1658, %v1414, 0
        %v1726 = vsel %vm1658, %v1416, 0
        %v1729 = vsel %vm1658, %v1418, 0
        %v1732 = vsel %vm1658, %v1420, 0
        %v1735 = vsel %vm1658, %v1422, 0
        %v1738 = vsel %vm1658, %v1424, 0
        %v1741 = vsel %vm1658, %v1426, 0
        %v1744 = vsel %vm1658, %v1428, 0
        %v1747 = vsel %vm1658, %v1430, 0
        %v1750 = vsel %vm1658, %v1432, 0
        %v1753 = vsel %vm1658, %v1434, 0
        %v1756 = vsel %vm1658, %v1436, 0
        %v1759 = vsel %vm1658, %v1438, 0
        %v1762 = vsel %vm1658, %v1440, 0
        %v1765 = vsel %vm1658, %v1442, 0
        %v1768 = vsel %vm1658, %v1444, 0
        %v1771 = vsel %vm1658, %v1446, 0
        %v1774 = vsel %vm1658, %v1448, 0
        %v1777 = vsel %vm1658, %v1450, 0
        %v1780 = vsel %vm1658, %v1452, 0
        %v1783 = vsel %vm1658, %v1454, 0
        %v1786 = vsel %vm1658, %v1456, 0
        %v1789 = vsel %vm1658, %v1458, 0
        %v1792 = vsel %vm1658, %v1460, 0
        %v1795 = vsel %vm1658, %v1462, 0
        %v1798 = vsel %vm1658, %v1464, 0
        %v1801 = vsel %vm1658, %v1466, 0
        %v1804 = vsel %vm1658, %v1468, 0
        %v1807 = vsel %vm1658, %v1470, 0
        %v1810 = vsel %vm1658, %v1472, 0
        %v1813 = vsel %vm1658, %v1474, 0
        %v1816 = vsel %vm1658, %v1476, 0
        %v1819 = vsel %vm1658, %v1478, 0
        %v1822 = vsel %vm1658, %v1480, 0
        %v1825 = vsel %vm1658, %v1482, 0
        %v1828 = vsel %vm1658, %v1484, 0
        %v1831 = vsel %vm1658, %v1486, 0
        %v1834 = vsel %vm1658, %v1488, 0
        %v1837 = vsel %vm1658, %v1490, 0
        %v1840 = vsel %vm1658, %v1492, 0
        %v1843 = vsel %vm1658, %v1494, 0
        %v1846 = vsel %vm1658, %v1496, 0
        %v1849 = vsel %vm1658, %v1498, 0
        %vm1851 = vcmask 1044480
        %v1853 = vsel %vm1851, %v1642, 0
        %1855 = vmatprep.subr.bf16.mxu0 0
        %1856 = vmatpush1.bf16.msra.mxu0 %v1634
        %1857 = vmatprep.subr.bf16.mxu0 0
        %1858 = vmatpush1.bf16.msra.mxu0 %v1633
        %1859 = vmatprep.subr.bf16.mxu0 0
        %1860 = vmatpush1.bf16.msra.mxu0 %v1632
        %1861 = vmatprep.subr.bf16.mxu0 0
        %1862 = vmatpush1.bf16.msra.mxu0 %v1631
        %1863 = vmatprep.subr.bf16.mxu0 0
        %1864 = vmatpush1.bf16.msra.mxu0 %v1630
        %1865 = vmatprep.subr.bf16.mxu0 0
        %1866 = vmatpush1.bf16.msra.mxu0 %v1629
        %1867 = vmatprep.subr.bf16.mxu0 0
        %1868 = vmatpush1.bf16.msra.mxu0 %v1628
        %1869 = vmatprep.subr.bf16.mxu0 0
        %1870 = vmatpush1.bf16.msra.mxu0 %v1627
        %1871 = vmatprep.subr.bf16.mxu0 0
        %1872 = vmatpush2.bf16.msra.mxu0 %v1853
        %1873 = vmatprep.subr.bf16.mxu0 0
        %1874 = vmatpush2.bf16.msra.mxu0 %v1641
        %1875 = vmatprep.subr.bf16.mxu0 0
        %1876 = vmatpush2.bf16.msra.mxu0 %v1640
        %1877 = vmatprep.subr.bf16.mxu0 0
        %1878 = vmatpush2.bf16.msra.mxu0 %v1639
        %1879 = vmatprep.subr.bf16.mxu0 0
        %1880 = vmatpush2.bf16.msra.mxu0 %v1638
        %1881 = vmatprep.subr.bf16.mxu0 0
        %1882 = vmatpush2.bf16.msra.mxu0 %v1637
        %1883 = vmatprep.subr.bf16.mxu0 0
        %1884 = vmatpush2.bf16.msra.mxu0 %v1636
        %1885 = vmatprep.subr.bf16.mxu0 0
        %1886 = vmatpush2.bf16.msra.mxu0 %v1635
        %1887 = vmatprep.mubr.bf16.mxu0 %v1660
        %1888 = vmatmul.mubr.bf16.gmra.mxu0 %v1371
        %v1889 = vpop.f32.mrf.mxu0
        %v1890 = vadd.f32 0.0, %v1889
        %v1891 = vpop.f32.mrf.mxu0
        %v1892 = vpop.f32.mrf.mxu0
        %v1893 = vadd.f32 0.0, %v1892
        %v1894 = vpop.f32.mrf.mxu0
        %1895 = vmatprep.mubr.bf16.mxu0 %v1663
        %1896 = vmatmul.mubr.bf16.gmra.mxu0 %v1373
        %v1897 = vpop.f32.mrf.mxu0
        %v1898 = vadd.f32 0.0, %v1897
        %v1899 = vpop.f32.mrf.mxu0
        %v1900 = vpop.f32.mrf.mxu0
        %v1901 = vadd.f32 0.0, %v1900
        %v1902 = vpop.f32.mrf.mxu0
        %1903 = vmatprep.mubr.bf16.mxu0 %v1666
        %1904 = vmatmul.mubr.bf16.gmra.mxu0 %v1375
        %v1905 = vpop.f32.mrf.mxu0
        %v1906 = vadd.f32 0.0, %v1905
        %v1907 = vpop.f32.mrf.mxu0
        %v1908 = vpop.f32.mrf.mxu0
        %v1909 = vadd.f32 0.0, %v1908
        %v1910 = vpop.f32.mrf.mxu0
        %1911 = vmatprep.mubr.bf16.mxu0 %v1669
        %1912 = vmatmul.mubr.bf16.gmra.mxu0 %v1377
        %v1913 = vpop.f32.mrf.mxu0
        %v1914 = vadd.f32 0.0, %v1913
        %v1915 = vpop.f32.mrf.mxu0
        %v1916 = vpop.f32.mrf.mxu0
        %v1917 = vadd.f32 0.0, %v1916
        %v1918 = vpop.f32.mrf.mxu0
        %1919 = vmatprep.mubr.bf16.mxu0 %v1672
        %1920 = vmatmul.mubr.bf16.gmra.mxu0 %v1379
        %v1921 = vpop.f32.mrf.mxu0
        %v1922 = vadd.f32 0.0, %v1921
        %v1923 = vpop.f32.mrf.mxu0
        %v1924 = vpop.f32.mrf.mxu0
        %v1925 = vadd.f32 0.0, %v1924
        %v1926 = vpop.f32.mrf.mxu0
        %1927 = vmatprep.mubr.bf16.mxu0 %v1675
        %1928 = vmatmul.mubr.bf16.gmra.mxu0 %v1381
        %v1929 = vpop.f32.mrf.mxu0
        %v1930 = vadd.f32 0.0, %v1929
        %v1931 = vpop.f32.mrf.mxu0
        %v1932 = vpop.f32.mrf.mxu0
        %v1933 = vadd.f32 0.0, %v1932
        %v1934 = vpop.f32.mrf.mxu0
        %1935 = vmatprep.mubr.bf16.mxu0 %v1678
        %1936 = vmatmul.mubr.bf16.gmra.mxu0 %v1383
        %v1937 = vpop.f32.mrf.mxu0
        %v1938 = vadd.f32 0.0, %v1937
        %v1939 = vpop.f32.mrf.mxu0
        %v1940 = vpop.f32.mrf.mxu0
        %v1941 = vadd.f32 0.0, %v1940
        %v1942 = vpop.f32.mrf.mxu0
        %1943 = vmatprep.mubr.bf16.mxu0 %v1681
        %1944 = vmatmul.mubr.bf16.gmra.mxu0 %v1385
        %v1945 = vpop.f32.mrf.mxu0
        %v1946 = vadd.f32 0.0, %v1945
        %v1947 = vpop.f32.mrf.mxu0
        %v1948 = vpop.f32.mrf.mxu0
        %v1949 = vadd.f32 0.0, %v1948
        %v1950 = vpop.f32.mrf.mxu0
        %1951 = vmatprep.mubr.bf16.mxu0 %v1684
        %1952 = vmatmul.mubr.bf16.gmra.mxu0 %v1387
        %v1953 = vpop.f32.mrf.mxu0
        %v1954 = vadd.f32 0.0, %v1953
        %v1955 = vpop.f32.mrf.mxu0
        %v1956 = vpop.f32.mrf.mxu0
        %v1957 = vadd.f32 0.0, %v1956
        %v1958 = vpop.f32.mrf.mxu0
        %1959 = vmatprep.mubr.bf16.mxu0 %v1687
        %1960 = vmatmul.mubr.bf16.gmra.mxu0 %v1389
        %v1961 = vpop.f32.mrf.mxu0
        %v1962 = vadd.f32 0.0, %v1961
        %v1963 = vpop.f32.mrf.mxu0
        %v1964 = vpop.f32.mrf.mxu0
        %v1965 = vadd.f32 0.0, %v1964
        %v1966 = vpop.f32.mrf.mxu0
        %1967 = vmatprep.mubr.bf16.mxu0 %v1690
        %1968 = vmatmul.mubr.bf16.gmra.mxu0 %v1391
        %v1969 = vpop.f32.mrf.mxu0
        %v1970 = vadd.f32 0.0, %v1969
        %v1971 = vpop.f32.mrf.mxu0
        %v1972 = vpop.f32.mrf.mxu0
        %v1973 = vadd.f32 0.0, %v1972
        %v1974 = vpop.f32.mrf.mxu0
        %1975 = vmatprep.mubr.bf16.mxu0 %v1693
        %1976 = vmatmul.mubr.bf16.gmra.mxu0 %v1393
        %v1977 = vpop.f32.mrf.mxu0
        %v1978 = vadd.f32 0.0, %v1977
        %v1979 = vpop.f32.mrf.mxu0
        %v1980 = vpop.f32.mrf.mxu0
        %v1981 = vadd.f32 0.0, %v1980
        %v1982 = vpop.f32.mrf.mxu0
        %1983 = vmatprep.mubr.bf16.mxu0 %v1696
        %1984 = vmatmul.mubr.bf16.gmra.mxu0 %v1395
        %v1985 = vpop.f32.mrf.mxu0
        %v1986 = vadd.f32 0.0, %v1985
        %v1987 = vpop.f32.mrf.mxu0
        %v1988 = vpop.f32.mrf.mxu0
        %v1989 = vadd.f32 0.0, %v1988
        %v1990 = vpop.f32.mrf.mxu0
        %1991 = vmatprep.mubr.bf16.mxu0 %v1699
        %1992 = vmatmul.mubr.bf16.gmra.mxu0 %v1397
        %v1993 = vpop.f32.mrf.mxu0
        %v1994 = vadd.f32 0.0, %v1993
        %v1995 = vpop.f32.mrf.mxu0
        %v1996 = vpop.f32.mrf.mxu0
        %v1997 = vadd.f32 0.0, %v1996
        %v1998 = vpop.f32.mrf.mxu0
        %1999 = vmatprep.mubr.bf16.mxu0 %v1702
        %2000 = vmatmul.mubr.bf16.gmra.mxu0 %v1399
        %v2001 = vpop.f32.mrf.mxu0
        %v2002 = vadd.f32 0.0, %v2001
        %v2003 = vpop.f32.mrf.mxu0
        %v2004 = vpop.f32.mrf.mxu0
        %v2005 = vadd.f32 0.0, %v2004
        %v2006 = vpop.f32.mrf.mxu0
        %2007 = vmatprep.mubr.bf16.mxu0 %v1705
        %2008 = vmatmul.mubr.bf16.gmra.mxu0 %v1401
        %v2009 = vpop.f32.mrf.mxu0
        %v2010 = vadd.f32 0.0, %v2009
        %v2011 = vpop.f32.mrf.mxu0
        %v2012 = vpop.f32.mrf.mxu0
        %v2013 = vadd.f32 0.0, %v2012
        %v2014 = vpop.f32.mrf.mxu0
        %2015 = vmatprep.mubr.bf16.mxu0 %v1708
        %2016 = vmatmul.mubr.bf16.gmra.mxu0 %v1403
        %v2017 = vpop.f32.mrf.mxu0
        %v2018 = vadd.f32 0.0, %v2017
        %v2019 = vpop.f32.mrf.mxu0
        %v2020 = vpop.f32.mrf.mxu0
        %v2021 = vadd.f32 0.0, %v2020
        %v2022 = vpop.f32.mrf.mxu0
        %2023 = vmatprep.mubr.bf16.mxu0 %v1711
        %2024 = vmatmul.mubr.bf16.gmra.mxu0 %v1405
        %v2025 = vpop.f32.mrf.mxu0
        %v2026 = vadd.f32 0.0, %v2025
        %v2027 = vpop.f32.mrf.mxu0
        %v2028 = vpop.f32.mrf.mxu0
        %v2029 = vadd.f32 0.0, %v2028
        %v2030 = vpop.f32.mrf.mxu0
        %2031 = vmatprep.mubr.bf16.mxu0 %v1714
        %2032 = vmatmul.mubr.bf16.gmra.mxu0 %v1407
        %v2033 = vpop.f32.mrf.mxu0
        %v2034 = vadd.f32 0.0, %v2033
        %v2035 = vpop.f32.mrf.mxu0
        %v2036 = vpop.f32.mrf.mxu0
        %v2037 = vadd.f32 0.0, %v2036
        %v2038 = vpop.f32.mrf.mxu0
        %2039 = vmatprep.mubr.bf16.mxu0 %v1717
        %2040 = vmatmul.mubr.bf16.gmra.mxu0 %v1409
        %v2041 = vpop.f32.mrf.mxu0
        %v2042 = vadd.f32 0.0, %v2041
        %v2043 = vpop.f32.mrf.mxu0
        %v2044 = vpop.f32.mrf.mxu0
        %v2045 = vadd.f32 0.0, %v2044
        %v2046 = vpop.f32.mrf.mxu0
        %2047 = vmatprep.mubr.bf16.mxu0 %v1720
        %2048 = vmatmul.mubr.bf16.gmra.mxu0 %v1411
        %v2049 = vpop.f32.mrf.mxu0
        %v2050 = vadd.f32 0.0, %v2049
        %v2051 = vpop.f32.mrf.mxu0
        %v2052 = vpop.f32.mrf.mxu0
        %v2053 = vadd.f32 0.0, %v2052
        %v2054 = vpop.f32.mrf.mxu0
        %2055 = vmatprep.mubr.bf16.mxu0 %v1723
        %2056 = vmatmul.mubr.bf16.gmra.mxu0 %v1413
        %v2057 = vpop.f32.mrf.mxu0
        %v2058 = vadd.f32 0.0, %v2057
        %v2059 = vpop.f32.mrf.mxu0
        %v2060 = vpop.f32.mrf.mxu0
        %v2061 = vadd.f32 0.0, %v2060
        %v2062 = vpop.f32.mrf.mxu0
        %2063 = vmatprep.mubr.bf16.mxu0 %v1726
        %2064 = vmatmul.mubr.bf16.gmra.mxu0 %v1415
        %v2065 = vpop.f32.mrf.mxu0
        %v2066 = vadd.f32 0.0, %v2065
        %v2067 = vpop.f32.mrf.mxu0
        %v2068 = vpop.f32.mrf.mxu0
        %v2069 = vadd.f32 0.0, %v2068
        %v2070 = vpop.f32.mrf.mxu0
        %2071 = vmatprep.mubr.bf16.mxu0 %v1729
        %2072 = vmatmul.mubr.bf16.gmra.mxu0 %v1417
        %v2073 = vpop.f32.mrf.mxu0
        %v2074 = vadd.f32 0.0, %v2073
        %v2075 = vpop.f32.mrf.mxu0
        %v2076 = vpop.f32.mrf.mxu0
        %v2077 = vadd.f32 0.0, %v2076
        %v2078 = vpop.f32.mrf.mxu0
        %2079 = vmatprep.mubr.bf16.mxu0 %v1732
        %2080 = vmatmul.mubr.bf16.gmra.mxu0 %v1419
        %v2081 = vpop.f32.mrf.mxu0
        %v2082 = vadd.f32 0.0, %v2081
        %v2083 = vpop.f32.mrf.mxu0
        %v2084 = vpop.f32.mrf.mxu0
        %v2085 = vadd.f32 0.0, %v2084
        %v2086 = vpop.f32.mrf.mxu0
        %2087 = vmatprep.mubr.bf16.mxu0 %v1735
        %2088 = vmatmul.mubr.bf16.gmra.mxu0 %v1421
        %v2089 = vpop.f32.mrf.mxu0
        %v2090 = vadd.f32 0.0, %v2089
        %v2091 = vpop.f32.mrf.mxu0
        %v2092 = vpop.f32.mrf.mxu0
        %v2093 = vadd.f32 0.0, %v2092
        %v2094 = vpop.f32.mrf.mxu0
        %2095 = vmatprep.mubr.bf16.mxu0 %v1738
        %2096 = vmatmul.mubr.bf16.gmra.mxu0 %v1423
        %v2097 = vpop.f32.mrf.mxu0
        %v2098 = vadd.f32 0.0, %v2097
        %v2099 = vpop.f32.mrf.mxu0
        %v2100 = vpop.f32.mrf.mxu0
        %v2101 = vadd.f32 0.0, %v2100
        %v2102 = vpop.f32.mrf.mxu0
        %2103 = vmatprep.mubr.bf16.mxu0 %v1741
        %2104 = vmatmul.mubr.bf16.gmra.mxu0 %v1425
        %v2105 = vpop.f32.mrf.mxu0
        %v2106 = vadd.f32 0.0, %v2105
        %v2107 = vpop.f32.mrf.mxu0
        %v2108 = vpop.f32.mrf.mxu0
        %v2109 = vadd.f32 0.0, %v2108
        %v2110 = vpop.f32.mrf.mxu0
        %2111 = vmatprep.mubr.bf16.mxu0 %v1744
        %2112 = vmatmul.mubr.bf16.gmra.mxu0 %v1427
        %v2113 = vpop.f32.mrf.mxu0
        %v2114 = vadd.f32 0.0, %v2113
        %v2115 = vpop.f32.mrf.mxu0
        %v2116 = vpop.f32.mrf.mxu0
        %v2117 = vadd.f32 0.0, %v2116
        %v2118 = vpop.f32.mrf.mxu0
        %2119 = vmatprep.mubr.bf16.mxu0 %v1747
        %2120 = vmatmul.mubr.bf16.gmra.mxu0 %v1429
        %v2121 = vpop.f32.mrf.mxu0
        %v2122 = vadd.f32 0.0, %v2121
        %v2123 = vpop.f32.mrf.mxu0
        %v2124 = vpop.f32.mrf.mxu0
        %v2125 = vadd.f32 0.0, %v2124
        %v2126 = vpop.f32.mrf.mxu0
        %2127 = vmatprep.mubr.bf16.mxu0 %v1750
        %2128 = vmatmul.mubr.bf16.gmra.mxu0 %v1431
        %v2129 = vpop.f32.mrf.mxu0
        %v2130 = vadd.f32 0.0, %v2129
        %v2131 = vpop.f32.mrf.mxu0
        %v2132 = vpop.f32.mrf.mxu0
        %v2133 = vadd.f32 0.0, %v2132
        %v2134 = vpop.f32.mrf.mxu0
        %2135 = vmatprep.mubr.bf16.mxu0 %v1753
        %2136 = vmatmul.mubr.bf16.gmra.mxu0 %v1433
        %v2137 = vpop.f32.mrf.mxu0
        %v2138 = vadd.f32 0.0, %v2137
        %v2139 = vpop.f32.mrf.mxu0
        %v2140 = vpop.f32.mrf.mxu0
        %v2141 = vadd.f32 0.0, %v2140
        %v2142 = vpop.f32.mrf.mxu0
        %2143 = vmatprep.mubr.bf16.mxu0 %v1756
        %2144 = vmatmul.mubr.bf16.gmra.mxu0 %v1435
        %v2145 = vpop.f32.mrf.mxu0
        %v2146 = vadd.f32 0.0, %v2145
        %v2147 = vpop.f32.mrf.mxu0
        %v2148 = vpop.f32.mrf.mxu0
        %v2149 = vadd.f32 0.0, %v2148
        %v2150 = vpop.f32.mrf.mxu0
        %2151 = vmatprep.mubr.bf16.mxu0 %v1759
        %2152 = vmatmul.mubr.bf16.gmra.mxu0 %v1437
        %v2153 = vpop.f32.mrf.mxu0
        %v2154 = vadd.f32 0.0, %v2153
        %v2155 = vpop.f32.mrf.mxu0
        %v2156 = vpop.f32.mrf.mxu0
        %v2157 = vadd.f32 0.0, %v2156
        %v2158 = vpop.f32.mrf.mxu0
        %2159 = vmatprep.mubr.bf16.mxu0 %v1762
        %2160 = vmatmul.mubr.bf16.gmra.mxu0 %v1439
        %v2161 = vpop.f32.mrf.mxu0
        %v2162 = vadd.f32 0.0, %v2161
        %v2163 = vpop.f32.mrf.mxu0
        %v2164 = vpop.f32.mrf.mxu0
        %v2165 = vadd.f32 0.0, %v2164
        %v2166 = vpop.f32.mrf.mxu0
        %2167 = vmatprep.mubr.bf16.mxu0 %v1765
        %2168 = vmatmul.mubr.bf16.gmra.mxu0 %v1441
        %v2169 = vpop.f32.mrf.mxu0
        %v2170 = vadd.f32 0.0, %v2169
        %v2171 = vpop.f32.mrf.mxu0
        %v2172 = vpop.f32.mrf.mxu0
        %v2173 = vadd.f32 0.0, %v2172
        %v2174 = vpop.f32.mrf.mxu0
        %2175 = vmatprep.mubr.bf16.mxu0 %v1768
        %2176 = vmatmul.mubr.bf16.gmra.mxu0 %v1443
        %v2177 = vpop.f32.mrf.mxu0
        %v2178 = vadd.f32 0.0, %v2177
        %v2179 = vpop.f32.mrf.mxu0
        %v2180 = vpop.f32.mrf.mxu0
        %v2181 = vadd.f32 0.0, %v2180
        %v2182 = vpop.f32.mrf.mxu0
        %2183 = vmatprep.mubr.bf16.mxu0 %v1771
        %2184 = vmatmul.mubr.bf16.gmra.mxu0 %v1445
        %v2185 = vpop.f32.mrf.mxu0
        %v2186 = vadd.f32 0.0, %v2185
        %v2187 = vpop.f32.mrf.mxu0
        %v2188 = vpop.f32.mrf.mxu0
        %v2189 = vadd.f32 0.0, %v2188
        %v2190 = vpop.f32.mrf.mxu0
        %2191 = vmatprep.mubr.bf16.mxu0 %v1774
        %2192 = vmatmul.mubr.bf16.gmra.mxu0 %v1447
        %v2193 = vpop.f32.mrf.mxu0
        %v2194 = vadd.f32 0.0, %v2193
        %v2195 = vpop.f32.mrf.mxu0
        %v2196 = vpop.f32.mrf.mxu0
        %v2197 = vadd.f32 0.0, %v2196
        %v2198 = vpop.f32.mrf.mxu0
        %2199 = vmatprep.mubr.bf16.mxu0 %v1777
        %2200 = vmatmul.mubr.bf16.gmra.mxu0 %v1449
        %v2201 = vpop.f32.mrf.mxu0
        %v2202 = vadd.f32 0.0, %v2201
        %v2203 = vpop.f32.mrf.mxu0
        %v2204 = vpop.f32.mrf.mxu0
        %v2205 = vadd.f32 0.0, %v2204
        %v2206 = vpop.f32.mrf.mxu0
        %2207 = vmatprep.mubr.bf16.mxu0 %v1780
        %2208 = vmatmul.mubr.bf16.gmra.mxu0 %v1451
        %v2209 = vpop.f32.mrf.mxu0
        %v2210 = vadd.f32 0.0, %v2209
        %v2211 = vpop.f32.mrf.mxu0
        %v2212 = vpop.f32.mrf.mxu0
        %v2213 = vadd.f32 0.0, %v2212
        %v2214 = vpop.f32.mrf.mxu0
        %2215 = vmatprep.mubr.bf16.mxu0 %v1783
        %2216 = vmatmul.mubr.bf16.gmra.mxu0 %v1453
        %v2217 = vpop.f32.mrf.mxu0
        %v2218 = vadd.f32 0.0, %v2217
        %v2219 = vpop.f32.mrf.mxu0
        %v2220 = vpop.f32.mrf.mxu0
        %v2221 = vadd.f32 0.0, %v2220
        %v2222 = vpop.f32.mrf.mxu0
        %2223 = vmatprep.mubr.bf16.mxu0 %v1786
        %2224 = vmatmul.mubr.bf16.gmra.mxu0 %v1455
        %v2225 = vpop.f32.mrf.mxu0
        %v2226 = vadd.f32 0.0, %v2225
        %v2227 = vpop.f32.mrf.mxu0
        %v2228 = vpop.f32.mrf.mxu0
        %v2229 = vadd.f32 0.0, %v2228
        %v2230 = vpop.f32.mrf.mxu0
        %2231 = vmatprep.mubr.bf16.mxu0 %v1789
        %2232 = vmatmul.mubr.bf16.gmra.mxu0 %v1457
        %v2233 = vpop.f32.mrf.mxu0
        %v2234 = vadd.f32 0.0, %v2233
        %v2235 = vpop.f32.mrf.mxu0
        %v2236 = vpop.f32.mrf.mxu0
        %v2237 = vadd.f32 0.0, %v2236
        %v2238 = vpop.f32.mrf.mxu0
        %2239 = vmatprep.mubr.bf16.mxu0 %v1792
        %2240 = vmatmul.mubr.bf16.gmra.mxu0 %v1459
        %v2241 = vpop.f32.mrf.mxu0
        %v2242 = vadd.f32 0.0, %v2241
        %v2243 = vpop.f32.mrf.mxu0
        %v2244 = vpop.f32.mrf.mxu0
        %v2245 = vadd.f32 0.0, %v2244
        %v2246 = vpop.f32.mrf.mxu0
        %2247 = vmatprep.mubr.bf16.mxu0 %v1795
        %2248 = vmatmul.mubr.bf16.gmra.mxu0 %v1461
        %v2249 = vpop.f32.mrf.mxu0
        %v2250 = vadd.f32 0.0, %v2249
        %v2251 = vpop.f32.mrf.mxu0
        %v2252 = vpop.f32.mrf.mxu0
        %v2253 = vadd.f32 0.0, %v2252
        %v2254 = vpop.f32.mrf.mxu0
        %2255 = vmatprep.mubr.bf16.mxu0 %v1798
        %2256 = vmatmul.mubr.bf16.gmra.mxu0 %v1463
        %v2257 = vpop.f32.mrf.mxu0
        %v2258 = vadd.f32 0.0, %v2257
        %v2259 = vpop.f32.mrf.mxu0
        %v2260 = vpop.f32.mrf.mxu0
        %v2261 = vadd.f32 0.0, %v2260
        %v2262 = vpop.f32.mrf.mxu0
        %2263 = vmatprep.mubr.bf16.mxu0 %v1801
        %2264 = vmatmul.mubr.bf16.gmra.mxu0 %v1465
        %v2265 = vpop.f32.mrf.mxu0
        %v2266 = vadd.f32 0.0, %v2265
        %v2267 = vpop.f32.mrf.mxu0
        %v2268 = vpop.f32.mrf.mxu0
        %v2269 = vadd.f32 0.0, %v2268
        %v2270 = vpop.f32.mrf.mxu0
        %2271 = vmatprep.mubr.bf16.mxu0 %v1804
        %2272 = vmatmul.mubr.bf16.gmra.mxu0 %v1467
        %v2273 = vpop.f32.mrf.mxu0
        %v2274 = vadd.f32 0.0, %v2273
        %v2275 = vpop.f32.mrf.mxu0
        %v2276 = vpop.f32.mrf.mxu0
        %v2277 = vadd.f32 0.0, %v2276
        %v2278 = vpop.f32.mrf.mxu0
        %2279 = vmatprep.mubr.bf16.mxu0 %v1807
        %2280 = vmatmul.mubr.bf16.gmra.mxu0 %v1469
        %v2281 = vpop.f32.mrf.mxu0
        %v2282 = vadd.f32 0.0, %v2281
        %v2283 = vpop.f32.mrf.mxu0
        %v2284 = vpop.f32.mrf.mxu0
        %v2285 = vadd.f32 0.0, %v2284
        %v2286 = vpop.f32.mrf.mxu0
        %2287 = vmatprep.mubr.bf16.mxu0 %v1810
        %2288 = vmatmul.mubr.bf16.gmra.mxu0 %v1471
        %v2289 = vpop.f32.mrf.mxu0
        %v2290 = vadd.f32 0.0, %v2289
        %v2291 = vpop.f32.mrf.mxu0
        %v2292 = vpop.f32.mrf.mxu0
        %v2293 = vadd.f32 0.0, %v2292
        %v2294 = vpop.f32.mrf.mxu0
        %2295 = vmatprep.mubr.bf16.mxu0 %v1813
        %2296 = vmatmul.mubr.bf16.gmra.mxu0 %v1473
        %v2297 = vpop.f32.mrf.mxu0
        %v2298 = vadd.f32 0.0, %v2297
        %v2299 = vpop.f32.mrf.mxu0
        %v2300 = vpop.f32.mrf.mxu0
        %v2301 = vadd.f32 0.0, %v2300
        %v2302 = vpop.f32.mrf.mxu0
        %2303 = vmatprep.mubr.bf16.mxu0 %v1816
        %2304 = vmatmul.mubr.bf16.gmra.mxu0 %v1475
        %v2305 = vpop.f32.mrf.mxu0
        %v2306 = vadd.f32 0.0, %v2305
        %v2307 = vpop.f32.mrf.mxu0
        %v2308 = vpop.f32.mrf.mxu0
        %v2309 = vadd.f32 0.0, %v2308
        %v2310 = vpop.f32.mrf.mxu0
        %2311 = vmatprep.mubr.bf16.mxu0 %v1819
        %2312 = vmatmul.mubr.bf16.gmra.mxu0 %v1477
        %v2313 = vpop.f32.mrf.mxu0
        %v2314 = vadd.f32 0.0, %v2313
        %v2315 = vpop.f32.mrf.mxu0
        %v2316 = vpop.f32.mrf.mxu0
        %v2317 = vadd.f32 0.0, %v2316
        %v2318 = vpop.f32.mrf.mxu0
        %2319 = vmatprep.mubr.bf16.mxu0 %v1822
        %2320 = vmatmul.mubr.bf16.gmra.mxu0 %v1479
        %v2321 = vpop.f32.mrf.mxu0
        %v2322 = vadd.f32 0.0, %v2321
        %v2323 = vpop.f32.mrf.mxu0
        %v2324 = vpop.f32.mrf.mxu0
        %v2325 = vadd.f32 0.0, %v2324
        %v2326 = vpop.f32.mrf.mxu0
        %2327 = vmatprep.mubr.bf16.mxu0 %v1825
        %2328 = vmatmul.mubr.bf16.gmra.mxu0 %v1481
        %v2329 = vpop.f32.mrf.mxu0
        %v2330 = vadd.f32 0.0, %v2329
        %v2331 = vpop.f32.mrf.mxu0
        %v2332 = vpop.f32.mrf.mxu0
        %v2333 = vadd.f32 0.0, %v2332
        %v2334 = vpop.f32.mrf.mxu0
        %2335 = vmatprep.mubr.bf16.mxu0 %v1828
        %2336 = vmatmul.mubr.bf16.gmra.mxu0 %v1483
        %v2337 = vpop.f32.mrf.mxu0
        %v2338 = vadd.f32 0.0, %v2337
        %v2339 = vpop.f32.mrf.mxu0
        %v2340 = vpop.f32.mrf.mxu0
        %v2341 = vadd.f32 0.0, %v2340
        %v2342 = vpop.f32.mrf.mxu0
        %2343 = vmatprep.mubr.bf16.mxu0 %v1831
        %2344 = vmatmul.mubr.bf16.gmra.mxu0 %v1485
        %v2345 = vpop.f32.mrf.mxu0
        %v2346 = vadd.f32 0.0, %v2345
        %v2347 = vpop.f32.mrf.mxu0
        %v2348 = vpop.f32.mrf.mxu0
        %v2349 = vadd.f32 0.0, %v2348
        %v2350 = vpop.f32.mrf.mxu0
        %2351 = vmatprep.mubr.bf16.mxu0 %v1834
        %2352 = vmatmul.mubr.bf16.gmra.mxu0 %v1487
        %v2353 = vpop.f32.mrf.mxu0
        %v2354 = vadd.f32 0.0, %v2353
        %v2355 = vpop.f32.mrf.mxu0
        %v2356 = vpop.f32.mrf.mxu0
        %v2357 = vadd.f32 0.0, %v2356
        %v2358 = vpop.f32.mrf.mxu0
        %2359 = vmatprep.mubr.bf16.mxu0 %v1837
        %2360 = vmatmul.mubr.bf16.gmra.mxu0 %v1489
        %v2361 = vpop.f32.mrf.mxu0
        %v2362 = vadd.f32 0.0, %v2361
        %v2363 = vpop.f32.mrf.mxu0
        %v2364 = vpop.f32.mrf.mxu0
        %v2365 = vadd.f32 0.0, %v2364
        %v2366 = vpop.f32.mrf.mxu0
        %2367 = vmatprep.mubr.bf16.mxu0 %v1840
        %2368 = vmatmul.mubr.bf16.gmra.mxu0 %v1491
        %v2369 = vpop.f32.mrf.mxu0
        %v2370 = vadd.f32 0.0, %v2369
        %v2371 = vpop.f32.mrf.mxu0
        %v2372 = vpop.f32.mrf.mxu0
        %v2373 = vadd.f32 0.0, %v2372
        %v2374 = vpop.f32.mrf.mxu0
        %2375 = vmatprep.mubr.bf16.mxu0 %v1843
        %2376 = vmatmul.mubr.bf16.gmra.mxu0 %v1493
        %v2377 = vpop.f32.mrf.mxu0
        %v2378 = vadd.f32 0.0, %v2377
        %v2379 = vpop.f32.mrf.mxu0
        %v2380 = vpop.f32.mrf.mxu0
        %v2381 = vadd.f32 0.0, %v2380
        %v2382 = vpop.f32.mrf.mxu0
        %2383 = vmatprep.mubr.bf16.mxu0 %v1846
        %2384 = vmatmul.mubr.bf16.gmra.mxu0 %v1495
        %v2385 = vpop.f32.mrf.mxu0
        %v2386 = vadd.f32 0.0, %v2385
        %v2387 = vpop.f32.mrf.mxu0
        %v2388 = vpop.f32.mrf.mxu0
        %v2389 = vadd.f32 0.0, %v2388
        %v2390 = vpop.f32.mrf.mxu0
        %2391 = vmatprep.mubr.bf16.mxu0 %v1849
        %2392 = vmatmul.mubr.bf16.gmra.mxu0 %v1497
        %v2393 = vpop.f32.mrf.mxu0
        %v2394 = vadd.f32 0.0, %v2393
        %v2395 = vpop.f32.mrf.mxu0
        %v2396 = vpop.f32.mrf.mxu0
        %v2397 = vadd.f32 0.0, %v2396
        %v2398 = vpop.f32.mrf.mxu0
        %2399 = vdwg.mxu0
        %vm2400 = vcmask 162816
        %v2401 = vsel %vm2400, %v1890, -inf
        %v2402 = vsel %vm2400, %v2018, -inf
        %v2403 = vmax.f32 %v2401, %v2402
        %v2404 = vsel %vm2400, %v2146, -inf
        %v2405 = vmax.f32 %v2403, %v2404
        %v2406 = vsel %vm2400, %v2274, -inf
        %v2407 = vmax.f32 %v2405, %v2406
        %v2408 = vsel %vm2400, %v1893, -inf
        %v2409 = vsel %vm2400, %v2021, -inf
        %v2410 = vmax.f32 %v2408, %v2409
        %v2411 = vsel %vm2400, %v2149, -inf
        %v2412 = vmax.f32 %v2410, %v2411
        %v2413 = vsel %vm2400, %v2277, -inf
        %v2414 = vmax.f32 %v2412, %v2413
        %v2415 = vsel %vm2400, %v1898, -inf
        %v2416 = vsel %vm2400, %v2026, -inf
        %v2417 = vmax.f32 %v2415, %v2416
        %v2418 = vsel %vm2400, %v2154, -inf
        %v2419 = vmax.f32 %v2417, %v2418
        %v2420 = vsel %vm2400, %v2282, -inf
        %v2421 = vmax.f32 %v2419, %v2420
        %v2422 = vsel %vm2400, %v1901, -inf
        %v2423 = vsel %vm2400, %v2029, -inf
        %v2424 = vmax.f32 %v2422, %v2423
        %v2425 = vsel %vm2400, %v2157, -inf
        %v2426 = vmax.f32 %v2424, %v2425
        %v2427 = vsel %vm2400, %v2285, -inf
        %v2428 = vmax.f32 %v2426, %v2427
        %v2429 = vsel %vm2400, %v1906, -inf
        %v2430 = vsel %vm2400, %v2034, -inf
        %v2431 = vmax.f32 %v2429, %v2430
        %v2432 = vsel %vm2400, %v2162, -inf
        %v2433 = vmax.f32 %v2431, %v2432
        %v2434 = vsel %vm2400, %v2290, -inf
        %v2435 = vmax.f32 %v2433, %v2434
        %v2436 = vsel %vm2400, %v1909, -inf
        %v2437 = vsel %vm2400, %v2037, -inf
        %v2438 = vmax.f32 %v2436, %v2437
        %v2439 = vsel %vm2400, %v2165, -inf
        %v2440 = vmax.f32 %v2438, %v2439
        %v2441 = vsel %vm2400, %v2293, -inf
        %v2442 = vmax.f32 %v2440, %v2441
        %v2443 = vsel %vm2400, %v1914, -inf
        %v2444 = vsel %vm2400, %v2042, -inf
        %v2445 = vmax.f32 %v2443, %v2444
        %v2446 = vsel %vm2400, %v2170, -inf
        %v2447 = vmax.f32 %v2445, %v2446
        %v2448 = vsel %vm2400, %v2298, -inf
        %v2449 = vmax.f32 %v2447, %v2448
        %v2450 = vsel %vm2400, %v1917, -inf
        %v2451 = vsel %vm2400, %v2045, -inf
        %v2452 = vmax.f32 %v2450, %v2451
        %v2453 = vsel %vm2400, %v2173, -inf
        %v2454 = vmax.f32 %v2452, %v2453
        %v2455 = vsel %vm2400, %v2301, -inf
        %v2456 = vmax.f32 %v2454, %v2455
        %v2457 = vsel %vm2400, %v1922, -inf
        %v2458 = vsel %vm2400, %v2050, -inf
        %v2459 = vmax.f32 %v2457, %v2458
        %v2460 = vsel %vm2400, %v2178, -inf
        %v2461 = vmax.f32 %v2459, %v2460
        %v2462 = vsel %vm2400, %v2306, -inf
        %v2463 = vmax.f32 %v2461, %v2462
        %v2464 = vsel %vm2400, %v1925, -inf
        %v2465 = vsel %vm2400, %v2053, -inf
        %v2466 = vmax.f32 %v2464, %v2465
        %v2467 = vsel %vm2400, %v2181, -inf
        %v2468 = vmax.f32 %v2466, %v2467
        %v2469 = vsel %vm2400, %v2309, -inf
        %v2470 = vmax.f32 %v2468, %v2469
        %v2471 = vsel %vm2400, %v1930, -inf
        %v2472 = vsel %vm2400, %v2058, -inf
        %v2473 = vmax.f32 %v2471, %v2472
        %v2474 = vsel %vm2400, %v2186, -inf
        %v2475 = vmax.f32 %v2473, %v2474
        %v2476 = vsel %vm2400, %v2314, -inf
        %v2477 = vmax.f32 %v2475, %v2476
        %v2478 = vsel %vm2400, %v1933, -inf
        %v2479 = vsel %vm2400, %v2061, -inf
        %v2480 = vmax.f32 %v2478, %v2479
        %v2481 = vsel %vm2400, %v2189, -inf
        %v2482 = vmax.f32 %v2480, %v2481
        %v2483 = vsel %vm2400, %v2317, -inf
        %v2484 = vmax.f32 %v2482, %v2483
        %v2485 = vsel %vm2400, %v1938, -inf
        %v2486 = vsel %vm2400, %v2066, -inf
        %v2487 = vmax.f32 %v2485, %v2486
        %v2488 = vsel %vm2400, %v2194, -inf
        %v2489 = vmax.f32 %v2487, %v2488
        %v2490 = vsel %vm2400, %v2322, -inf
        %v2491 = vmax.f32 %v2489, %v2490
        %v2492 = vsel %vm2400, %v1941, -inf
        %v2493 = vsel %vm2400, %v2069, -inf
        %v2494 = vmax.f32 %v2492, %v2493
        %v2495 = vsel %vm2400, %v2197, -inf
        %v2496 = vmax.f32 %v2494, %v2495
        %v2497 = vsel %vm2400, %v2325, -inf
        %v2498 = vmax.f32 %v2496, %v2497
        %v2499 = vsel %vm2400, %v1946, -inf
        %v2500 = vsel %vm2400, %v2074, -inf
        %v2501 = vmax.f32 %v2499, %v2500
        %v2502 = vsel %vm2400, %v2202, -inf
        %v2503 = vmax.f32 %v2501, %v2502
        %v2504 = vsel %vm2400, %v2330, -inf
        %v2505 = vmax.f32 %v2503, %v2504
        %v2506 = vsel %vm2400, %v1949, -inf
        %v2507 = vsel %vm2400, %v2077, -inf
        %v2508 = vmax.f32 %v2506, %v2507
        %v2509 = vsel %vm2400, %v2205, -inf
        %v2510 = vmax.f32 %v2508, %v2509
        %v2511 = vsel %vm2400, %v2333, -inf
        %v2512 = vmax.f32 %v2510, %v2511
        %v2513 = vsel %vm2400, %v1954, -inf
        %v2514 = vsel %vm2400, %v2082, -inf
        %v2515 = vmax.f32 %v2513, %v2514
        %v2516 = vsel %vm2400, %v2210, -inf
        %v2517 = vmax.f32 %v2515, %v2516
        %v2518 = vsel %vm2400, %v2338, -inf
        %v2519 = vmax.f32 %v2517, %v2518
        %v2520 = vsel %vm2400, %v1957, -inf
        %v2521 = vsel %vm2400, %v2085, -inf
        %v2522 = vmax.f32 %v2520, %v2521
        %v2523 = vsel %vm2400, %v2213, -inf
        %v2524 = vmax.f32 %v2522, %v2523
        %v2525 = vsel %vm2400, %v2341, -inf
        %v2526 = vmax.f32 %v2524, %v2525
        %v2527 = vsel %vm2400, %v1962, -inf
        %v2528 = vsel %vm2400, %v2090, -inf
        %v2529 = vmax.f32 %v2527, %v2528
        %v2530 = vsel %vm2400, %v2218, -inf
        %v2531 = vmax.f32 %v2529, %v2530
        %v2532 = vsel %vm2400, %v2346, -inf
        %v2533 = vmax.f32 %v2531, %v2532
        %v2534 = vsel %vm2400, %v1965, -inf
        %v2535 = vsel %vm2400, %v2093, -inf
        %v2536 = vmax.f32 %v2534, %v2535
        %v2537 = vsel %vm2400, %v2221, -inf
        %v2538 = vmax.f32 %v2536, %v2537
        %v2539 = vsel %vm2400, %v2349, -inf
        %v2540 = vmax.f32 %v2538, %v2539
        %v2541 = vsel %vm2400, %v1970, -inf
        %v2542 = vsel %vm2400, %v2098, -inf
        %v2543 = vmax.f32 %v2541, %v2542
        %v2544 = vsel %vm2400, %v2226, -inf
        %v2545 = vmax.f32 %v2543, %v2544
        %v2546 = vsel %vm2400, %v2354, -inf
        %v2547 = vmax.f32 %v2545, %v2546
        %v2548 = vsel %vm2400, %v1973, -inf
        %v2549 = vsel %vm2400, %v2101, -inf
        %v2550 = vmax.f32 %v2548, %v2549
        %v2551 = vsel %vm2400, %v2229, -inf
        %v2552 = vmax.f32 %v2550, %v2551
        %v2553 = vsel %vm2400, %v2357, -inf
        %v2554 = vmax.f32 %v2552, %v2553
        %v2555 = vsel %vm2400, %v1978, -inf
        %v2556 = vsel %vm2400, %v2106, -inf
        %v2557 = vmax.f32 %v2555, %v2556
        %v2558 = vsel %vm2400, %v2234, -inf
        %v2559 = vmax.f32 %v2557, %v2558
        %v2560 = vsel %vm2400, %v2362, -inf
        %v2561 = vmax.f32 %v2559, %v2560
        %v2562 = vsel %vm2400, %v1981, -inf
        %v2563 = vsel %vm2400, %v2109, -inf
        %v2564 = vmax.f32 %v2562, %v2563
        %v2565 = vsel %vm2400, %v2237, -inf
        %v2566 = vmax.f32 %v2564, %v2565
        %v2567 = vsel %vm2400, %v2365, -inf
        %v2568 = vmax.f32 %v2566, %v2567
        %v2569 = vsel %vm2400, %v1986, -inf
        %v2570 = vsel %vm2400, %v2114, -inf
        %v2571 = vmax.f32 %v2569, %v2570
        %v2572 = vsel %vm2400, %v2242, -inf
        %v2573 = vmax.f32 %v2571, %v2572
        %v2574 = vsel %vm2400, %v2370, -inf
        %v2575 = vmax.f32 %v2573, %v2574
        %v2576 = vsel %vm2400, %v1989, -inf
        %v2577 = vsel %vm2400, %v2117, -inf
        %v2578 = vmax.f32 %v2576, %v2577
        %v2579 = vsel %vm2400, %v2245, -inf
        %v2580 = vmax.f32 %v2578, %v2579
        %v2581 = vsel %vm2400, %v2373, -inf
        %v2582 = vmax.f32 %v2580, %v2581
        %v2583 = vsel %vm2400, %v1994, -inf
        %v2584 = vsel %vm2400, %v2122, -inf
        %v2585 = vmax.f32 %v2583, %v2584
        %v2586 = vsel %vm2400, %v2250, -inf
        %v2587 = vmax.f32 %v2585, %v2586
        %v2588 = vsel %vm2400, %v2378, -inf
        %v2589 = vmax.f32 %v2587, %v2588
        %v2590 = vsel %vm2400, %v1997, -inf
        %v2591 = vsel %vm2400, %v2125, -inf
        %v2592 = vmax.f32 %v2590, %v2591
        %v2593 = vsel %vm2400, %v2253, -inf
        %v2594 = vmax.f32 %v2592, %v2593
        %v2595 = vsel %vm2400, %v2381, -inf
        %v2596 = vmax.f32 %v2594, %v2595
        %v2597 = vsel %vm2400, %v2002, -inf
        %v2598 = vsel %vm2400, %v2130, -inf
        %v2599 = vmax.f32 %v2597, %v2598
        %v2600 = vsel %vm2400, %v2258, -inf
        %v2601 = vmax.f32 %v2599, %v2600
        %v2602 = vsel %vm2400, %v2386, -inf
        %v2603 = vmax.f32 %v2601, %v2602
        %v2604 = vsel %vm2400, %v2005, -inf
        %v2605 = vsel %vm2400, %v2133, -inf
        %v2606 = vmax.f32 %v2604, %v2605
        %v2607 = vsel %vm2400, %v2261, -inf
        %v2608 = vmax.f32 %v2606, %v2607
        %v2609 = vsel %vm2400, %v2389, -inf
        %v2610 = vmax.f32 %v2608, %v2609
        %v2611 = vsel %vm2400, %v2010, -inf
        %v2612 = vsel %vm2400, %v2138, -inf
        %v2613 = vmax.f32 %v2611, %v2612
        %v2614 = vsel %vm2400, %v2266, -inf
        %v2615 = vmax.f32 %v2613, %v2614
        %v2616 = vsel %vm2400, %v2394, -inf
        %v2617 = vmax.f32 %v2615, %v2616
        %v2618 = vsel %vm2400, %v2013, -inf
        %v2619 = vsel %vm2400, %v2141, -inf
        %v2620 = vmax.f32 %v2618, %v2619
        %v2621 = vsel %vm2400, %v2269, -inf
        %v2622 = vmax.f32 %v2620, %v2621
        %v2623 = vsel %vm2400, %v2397, -inf
        %v2624 = vmax.f32 %v2622, %v2623
        %v2625 = vld [vmem:[%s2] sm:$0x1]
        %v2627 = vlaneseq
        %v2628 = vshrl.u32 %v2627, 7
        %v2629 = vsub.s32 0, %v2628
        %v2630 = vrot.slane %v2625, %v2629
        %v2632 = vadd.f32 %v2407, %v2630
        %v2633 = vadd.f32 %v2414, %v2630
        %v2634 = vadd.f32 %v2421, %v2630
        %v2635 = vadd.f32 %v2428, %v2630
        %v2636 = vadd.f32 %v2435, %v2630
        %v2637 = vadd.f32 %v2442, %v2630
        %v2638 = vadd.f32 %v2449, %v2630
        %v2639 = vadd.f32 %v2456, %v2630
        %v2640 = vadd.f32 %v2463, %v2630
        %v2641 = vadd.f32 %v2470, %v2630
        %v2642 = vadd.f32 %v2477, %v2630
        %v2643 = vadd.f32 %v2484, %v2630
        %v2644 = vadd.f32 %v2491, %v2630
        %v2645 = vadd.f32 %v2498, %v2630
        %v2646 = vadd.f32 %v2505, %v2630
        %v2647 = vadd.f32 %v2512, %v2630
        %v2648 = vadd.f32 %v2519, %v2630
        %v2649 = vadd.f32 %v2526, %v2630
        %v2650 = vadd.f32 %v2533, %v2630
        %v2651 = vadd.f32 %v2540, %v2630
        %v2652 = vadd.f32 %v2547, %v2630
        %v2653 = vadd.f32 %v2554, %v2630
        %v2654 = vadd.f32 %v2561, %v2630
        %v2655 = vadd.f32 %v2568, %v2630
        %v2656 = vadd.f32 %v2575, %v2630
        %v2657 = vadd.f32 %v2582, %v2630
        %v2658 = vadd.f32 %v2589, %v2630
        %v2659 = vadd.f32 %v2596, %v2630
        %v2660 = vadd.f32 %v2603, %v2630
        %v2661 = vadd.f32 %v2610, %v2630
        %v2662 = vadd.f32 %v2617, %v2630
        %v2663 = vadd.f32 %v2624, %v2630
        %vm2664 = vcmp.ge.f32.partialorder %v2632, 0.0
        %vm2665 = vcmp.ge.f32.partialorder %v2633, 0.0
        %vm2666 = vcmp.ge.f32.partialorder %v2634, 0.0
        %vm2667 = vcmp.ge.f32.partialorder %v2635, 0.0
        %vm2668 = vcmp.ge.f32.partialorder %v2636, 0.0
        %vm2669 = vcmp.ge.f32.partialorder %v2637, 0.0
        %vm2670 = vcmp.ge.f32.partialorder %v2638, 0.0
        %vm2671 = vcmp.ge.f32.partialorder %v2639, 0.0
        %vm2672 = vcmp.ge.f32.partialorder %v2640, 0.0
        %vm2673 = vcmp.ge.f32.partialorder %v2641, 0.0
        %vm2674 = vcmp.ge.f32.partialorder %v2642, 0.0
        %vm2675 = vcmp.ge.f32.partialorder %v2643, 0.0
        %vm2676 = vcmp.ge.f32.partialorder %v2644, 0.0
        %vm2677 = vcmp.ge.f32.partialorder %v2645, 0.0
        %vm2678 = vcmp.ge.f32.partialorder %v2646, 0.0
        %vm2679 = vcmp.ge.f32.partialorder %v2647, 0.0
        %vm2680 = vcmp.ge.f32.partialorder %v2648, 0.0
        %vm2681 = vcmp.ge.f32.partialorder %v2649, 0.0
        %vm2682 = vcmp.ge.f32.partialorder %v2650, 0.0
        %vm2683 = vcmp.ge.f32.partialorder %v2651, 0.0
        %vm2684 = vcmp.ge.f32.partialorder %v2652, 0.0
        %vm2685 = vcmp.ge.f32.partialorder %v2653, 0.0
        %vm2686 = vcmp.ge.f32.partialorder %v2654, 0.0
        %vm2687 = vcmp.ge.f32.partialorder %v2655, 0.0
        %vm2688 = vcmp.ge.f32.partialorder %v2656, 0.0
        %vm2689 = vcmp.ge.f32.partialorder %v2657, 0.0
        %vm2690 = vcmp.ge.f32.partialorder %v2658, 0.0
        %vm2691 = vcmp.ge.f32.partialorder %v2659, 0.0
        %vm2692 = vcmp.ge.f32.partialorder %v2660, 0.0
        %vm2693 = vcmp.ge.f32.partialorder %v2661, 0.0
        %vm2694 = vcmp.ge.f32.partialorder %v2662, 0.0
        %vm2695 = vcmp.ge.f32.partialorder %v2663, 0.0
        %v2696 = vmul.f32 %v2632, 0.01
        %v2697 = vmul.f32 %v2633, 0.01
        %v2698 = vmul.f32 %v2634, 0.01
        %v2699 = vmul.f32 %v2635, 0.01
        %v2700 = vmul.f32 %v2636, 0.01
        %v2701 = vmul.f32 %v2637, 0.01
        %v2702 = vmul.f32 %v2638, 0.01
        %v2703 = vmul.f32 %v2639, 0.01
        %v2704 = vmul.f32 %v2640, 0.01
        %v2705 = vmul.f32 %v2641, 0.01
        %v2706 = vmul.f32 %v2642, 0.01
        %v2707 = vmul.f32 %v2643, 0.01
        %v2708 = vmul.f32 %v2644, 0.01
        %v2709 = vmul.f32 %v2645, 0.01
        %v2710 = vmul.f32 %v2646, 0.01
        %v2711 = vmul.f32 %v2647, 0.01
        %v2712 = vmul.f32 %v2648, 0.01
        %v2713 = vmul.f32 %v2649, 0.01
        %v2714 = vmul.f32 %v2650, 0.01
        %v2715 = vmul.f32 %v2651, 0.01
        %v2716 = vmul.f32 %v2652, 0.01
        %v2717 = vmul.f32 %v2653, 0.01
        %v2718 = vmul.f32 %v2654, 0.01
        %v2719 = vmul.f32 %v2655, 0.01
        %v2720 = vmul.f32 %v2656, 0.01
        %v2721 = vmul.f32 %v2657, 0.01
        %v2722 = vmul.f32 %v2658, 0.01
        %v2723 = vmul.f32 %v2659, 0.01
        %v2724 = vmul.f32 %v2660, 0.01
        %v2725 = vmul.f32 %v2661, 0.01
        %v2726 = vmul.f32 %v2662, 0.01
        %v2727 = vmul.f32 %v2663, 0.01
        %v2728 = vsel %vm2664, %v2632, %v2696
        %v2729 = vsel %vm2665, %v2633, %v2697
        %v2730 = vsel %vm2666, %v2634, %v2698
        %v2731 = vsel %vm2667, %v2635, %v2699
        %v2732 = vsel %vm2668, %v2636, %v2700
        %v2733 = vsel %vm2669, %v2637, %v2701
        %v2734 = vsel %vm2670, %v2638, %v2702
        %v2735 = vsel %vm2671, %v2639, %v2703
        %v2736 = vsel %vm2672, %v2640, %v2704
        %v2737 = vsel %vm2673, %v2641, %v2705
        %v2738 = vsel %vm2674, %v2642, %v2706
        %v2739 = vsel %vm2675, %v2643, %v2707
        %v2740 = vsel %vm2676, %v2644, %v2708
        %v2741 = vsel %vm2677, %v2645, %v2709
        %v2742 = vsel %vm2678, %v2646, %v2710
        %v2743 = vsel %vm2679, %v2647, %v2711
        %v2744 = vsel %vm2680, %v2648, %v2712
        %v2745 = vsel %vm2681, %v2649, %v2713
        %v2746 = vsel %vm2682, %v2650, %v2714
        %v2747 = vsel %vm2683, %v2651, %v2715
        %v2748 = vsel %vm2684, %v2652, %v2716
        %v2749 = vsel %vm2685, %v2653, %v2717
        %v2750 = vsel %vm2686, %v2654, %v2718
        %v2751 = vsel %vm2687, %v2655, %v2719
        %v2752 = vsel %vm2688, %v2656, %v2720
        %v2753 = vsel %vm2689, %v2657, %v2721
        %v2754 = vsel %vm2690, %v2658, %v2722
        %v2755 = vsel %vm2691, %v2659, %v2723
        %v2756 = vsel %vm2692, %v2660, %v2724
        %v2757 = vsel %vm2693, %v2661, %v2725
        %v2758 = vsel %vm2694, %v2662, %v2726
        %v2759 = vsel %vm2695, %v2663, %v2727
        %v2760 = vpack.c.bf16 %v2729, %v2728
        %v2761 = vpack.c.bf16 %v2731, %v2730
        %v2762 = vpack.c.bf16 %v2733, %v2732
        %v2763 = vpack.c.bf16 %v2735, %v2734
        %v2764 = vpack.c.bf16 %v2737, %v2736
        %v2765 = vpack.c.bf16 %v2739, %v2738
        %v2766 = vpack.c.bf16 %v2741, %v2740
        %v2767 = vpack.c.bf16 %v2743, %v2742
        %v2768 = vpack.c.bf16 %v2745, %v2744
        %v2769 = vpack.c.bf16 %v2747, %v2746
        %v2770 = vpack.c.bf16 %v2749, %v2748
        %v2771 = vpack.c.bf16 %v2751, %v2750
        %v2772 = vpack.c.bf16 %v2753, %v2752
        %v2773 = vpack.c.bf16 %v2755, %v2754
        %v2774 = vpack.c.bf16 %v2757, %v2756
        %v2775 = vpack.c.bf16 %v2759, %v2758
        %v2776 = vld [vmem:[%s3] sm:$0xf]
        %v2777 = vld [vmem:[%s3 + $0x4] sm:$0xf]
        %v2778 = vld [vmem:[%s3 + $0x8] sm:$0x3]
        %v2779 = vld [vmem:[%s3 + $0xc] sm:$0xf]
        %v2780 = vld [vmem:[%s3 + $0x10] sm:$0xf]
        %v2781 = vld [vmem:[%s3 + $0x14] sm:$0x3]
        %v2782 = vld [vmem:[%s3 + $0x18] sm:$0xf]
        %v2783 = vld [vmem:[%s3 + $0x1c] sm:$0xf]
        %v2784 = vld [vmem:[%s3 + $0x20] sm:$0x3]
        %v2785 = vld [vmem:[%s3 + $0x24] sm:$0xf]
        %v2786 = vld [vmem:[%s3 + $0x28] sm:$0xf]
        %v2787 = vld [vmem:[%s3 + $0x2c] sm:$0x3]
        %v2788 = vld [vmem:[%s3 + $0x30] sm:$0xf]
        %v2789 = vld [vmem:[%s3 + $0x34] sm:$0xf]
        %v2790 = vld [vmem:[%s3 + $0x38] sm:$0x3]
        %v2791 = vld [vmem:[%s3 + $0x3c] sm:$0xf]
        %v2792 = vld [vmem:[%s3 + $0x40] sm:$0xf]
        %v2793 = vld [vmem:[%s3 + $0x44] sm:$0x3]
        %v2794 = vld [vmem:[%s3 + $0x48] sm:$0xf]
        %v2795 = vld [vmem:[%s3 + $0x4c] sm:$0xf]
        %v2796 = vld [vmem:[%s3 + $0x50] sm:$0x3]
        %v2797 = vld [vmem:[%s3 + $0x54] sm:$0xf]
        %v2798 = vld [vmem:[%s3 + $0x58] sm:$0xf]
        %v2799 = vld [vmem:[%s3 + $0x5c] sm:$0x3]
        %v2800 = vld [vmem:[%s3 + $0x60] sm:$0xf]
        %v2801 = vld [vmem:[%s3 + $0x64] sm:$0xf]
        %v2802 = vld [vmem:[%s3 + $0x68] sm:$0x3]
        %v2803 = vld [vmem:[%s3 + $0x6c] sm:$0xf]
        %v2804 = vld [vmem:[%s3 + $0x70] sm:$0xf]
        %v2805 = vld [vmem:[%s3 + $0x74] sm:$0x3]
        %v2806 = vld [vmem:[%s3 + $0x78] sm:$0xf]
        %v2807 = vld [vmem:[%s3 + $0x7c] sm:$0xf]
        %v2808 = vld [vmem:[%s3 + $0x80] sm:$0x3]
        %v2809 = vld [vmem:[%s3 + $0x84] sm:$0xf]
        %v2810 = vld [vmem:[%s3 + $0x88] sm:$0xf]
        %v2811 = vld [vmem:[%s3 + $0x8c] sm:$0x3]
        %v2812 = vld [vmem:[%s3 + $0x90] sm:$0xf]
        %v2813 = vld [vmem:[%s3 + $0x94] sm:$0xf]
        %v2814 = vld [vmem:[%s3 + $0x98] sm:$0x3]
        %v2815 = vld [vmem:[%s3 + $0x9c] sm:$0xf]
        %v2816 = vld [vmem:[%s3 + $0xa0] sm:$0xf]
        %v2817 = vld [vmem:[%s3 + $0xa4] sm:$0x3]
        %v2818 = vld [vmem:[%s3 + $0xa8] sm:$0xf]
        %v2819 = vld [vmem:[%s3 + $0xac] sm:$0xf]
        %v2820 = vld [vmem:[%s3 + $0xb0] sm:$0x3]
        %v2821 = vld [vmem:[%s3 + $0xb4] sm:$0xf]
        %v2822 = vld [vmem:[%s3 + $0xb8] sm:$0xf]
        %v2823 = vld [vmem:[%s3 + $0xbc] sm:$0x3]
        %v2827 = vunpack.c.l.b16 %v2776
        %v2828 = vunpack.c.l.b16 %v2777
        %v2829 = vunpack.c.l.b16 %v2778
        %v2830 = vpack.c.b16 %v2828, %v2827
        %v2831 = vpack.c.b16 %v2829, %v2829
        %v2834 = vsel %vm2400, %v2760, 0
        %vm2836 = vcmask 1041408
        %v2838 = vsel %vm2836, %v2831, 0
        %2840 = vmatprep.subr.bf16.mxu0 0
        %2841 = vmatpush1.bf16.msra.mxu0 0
        %2842 = vmatprep.subr.bf16.mxu0 0
        %2843 = vmatpush1.bf16.msra.mxu0 0
        %2844 = vmatprep.subr.bf16.mxu0 0
        %2845 = vmatpush1.bf16.msra.mxu0 0
        %2846 = vmatprep.subr.bf16.mxu0 0
        %2847 = vmatpush1.bf16.msra.mxu0 0
        %2848 = vmatprep.subr.bf16.mxu0 0
        %2849 = vmatpush1.bf16.msra.mxu0 0
        %2850 = vmatprep.subr.bf16.mxu0 0
        %2851 = vmatpush1.bf16.msra.mxu0 0
        %2852 = vmatprep.subr.bf16.mxu0 0
        %2853 = vmatpush1.bf16.msra.mxu0 %v2838
        %2854 = vmatprep.subr.bf16.mxu0 0
        %2855 = vmatpush1.bf16.msra.mxu0 %v2830
        %2856 = vmatprep.subr.bf16.mxu0 0
        %2857 = vmatpush2.bf16.msra.mxu0 0
        %2858 = vmatprep.subr.bf16.mxu0 0
        %2859 = vmatpush2.bf16.msra.mxu0 0
        %2860 = vmatprep.subr.bf16.mxu0 0
        %2861 = vmatpush2.bf16.msra.mxu0 0
        %2862 = vmatprep.subr.bf16.mxu0 0
        %2863 = vmatpush2.bf16.msra.mxu0 0
        %2864 = vmatprep.subr.bf16.mxu0 0
        %2865 = vmatpush2.bf16.msra.mxu0 0
        %2866 = vmatprep.subr.bf16.mxu0 0
        %2867 = vmatpush2.bf16.msra.mxu0 0
        %2868 = vmatprep.subr.bf16.mxu0 0
        %2869 = vmatpush2.bf16.msra.mxu0 0
        %2870 = vmatprep.subr.bf16.mxu0 0
        %2871 = vmatpush2.bf16.msra.mxu0 0
        %2872 = vmatprep.mubr.bf16.mxu0 0
        %2873 = vmatmul.mubr.bf16.gmra.mxu0 %v2834
        %v2874 = vpop.f32.mrf.mxu0
        %v2875 = vadd.f32 0.0, %v2874
        %v2876 = vpop.f32.mrf.mxu0
        %v2877 = vpop.f32.mrf.mxu0
        %v2878 = vadd.f32 0.0, %v2877
        %v2879 = vpop.f32.mrf.mxu0
        %2880 = vdwg.mxu0
        %v2884 = vunpack.c.l.b16 %v2779
        %v2885 = vunpack.c.l.b16 %v2780
        %v2886 = vunpack.c.l.b16 %v2781
        %v2887 = vpack.c.b16 %v2885, %v2884
        %v2888 = vpack.c.b16 %v2886, %v2886
        %v2891 = vsel %vm2400, %v2761, 0
        %v2894 = vsel %vm2836, %v2888, 0
        %2896 = vmatprep.subr.bf16.mxu0 0
        %2897 = vmatpush1.bf16.msra.mxu0 0
        %2898 = vmatprep.subr.bf16.mxu0 0
        %2899 = vmatpush1.bf16.msra.mxu0 0
        %2900 = vmatprep.subr.bf16.mxu0 0
        %2901 = vmatpush1.bf16.msra.mxu0 0
        %2902 = vmatprep.subr.bf16.mxu0 0
        %2903 = vmatpush1.bf16.msra.mxu0 0
        %2904 = vmatprep.subr.bf16.mxu0 0
        %2905 = vmatpush1.bf16.msra.mxu0 0
        %2906 = vmatprep.subr.bf16.mxu0 0
        %2907 = vmatpush1.bf16.msra.mxu0 0
        %2908 = vmatprep.subr.bf16.mxu0 0
        %2909 = vmatpush1.bf16.msra.mxu0 %v2894
        %2910 = vmatprep.subr.bf16.mxu0 0
        %2911 = vmatpush1.bf16.msra.mxu0 %v2887
        %2912 = vmatprep.subr.bf16.mxu0 0
        %2913 = vmatpush2.bf16.msra.mxu0 0
        %2914 = vmatprep.subr.bf16.mxu0 0
        %2915 = vmatpush2.bf16.msra.mxu0 0
        %2916 = vmatprep.subr.bf16.mxu0 0
        %2917 = vmatpush2.bf16.msra.mxu0 0
        %2918 = vmatprep.subr.bf16.mxu0 0
        %2919 = vmatpush2.bf16.msra.mxu0 0
        %2920 = vmatprep.subr.bf16.mxu0 0
        %2921 = vmatpush2.bf16.msra.mxu0 0
        %2922 = vmatprep.subr.bf16.mxu0 0
        %2923 = vmatpush2.bf16.msra.mxu0 0
        %2924 = vmatprep.subr.bf16.mxu0 0
        %2925 = vmatpush2.bf16.msra.mxu0 0
        %2926 = vmatprep.subr.bf16.mxu0 0
        %2927 = vmatpush2.bf16.msra.mxu0 0
        %2928 = vmatprep.mubr.bf16.mxu0 0
        %2929 = vmatmul.mubr.bf16.gmra.mxu0 %v2891
        %v2930 = vpop.f32.mrf.mxu0
        %v2931 = vadd.f32 0.0, %v2930
        %v2932 = vpop.f32.mrf.mxu0
        %v2933 = vpop.f32.mrf.mxu0
        %v2934 = vadd.f32 0.0, %v2933
        %v2935 = vpop.f32.mrf.mxu0
        %2936 = vdwg.mxu0
        %v2940 = vunpack.c.l.b16 %v2782
        %v2941 = vunpack.c.l.b16 %v2783
        %v2942 = vunpack.c.l.b16 %v2784
        %v2943 = vpack.c.b16 %v2941, %v2940
        %v2944 = vpack.c.b16 %v2942, %v2942
        %v2947 = vsel %vm2400, %v2762, 0
        %v2950 = vsel %vm2836, %v2944, 0
        %2952 = vmatprep.subr.bf16.mxu0 0
        %2953 = vmatpush1.bf16.msra.mxu0 0
        %2954 = vmatprep.subr.bf16.mxu0 0
        %2955 = vmatpush1.bf16.msra.mxu0 0
        %2956 = vmatprep.subr.bf16.mxu0 0
        %2957 = vmatpush1.bf16.msra.mxu0 0
        %2958 = vmatprep.subr.bf16.mxu0 0
        %2959 = vmatpush1.bf16.msra.mxu0 0
        %2960 = vmatprep.subr.bf16.mxu0 0
        %2961 = vmatpush1.bf16.msra.mxu0 0
        %2962 = vmatprep.subr.bf16.mxu0 0
        %2963 = vmatpush1.bf16.msra.mxu0 0
        %2964 = vmatprep.subr.bf16.mxu0 0
        %2965 = vmatpush1.bf16.msra.mxu0 %v2950
        %2966 = vmatprep.subr.bf16.mxu0 0
        %2967 = vmatpush1.bf16.msra.mxu0 %v2943
        %2968 = vmatprep.subr.bf16.mxu0 0
        %2969 = vmatpush2.bf16.msra.mxu0 0
        %2970 = vmatprep.subr.bf16.mxu0 0
        %2971 = vmatpush2.bf16.msra.mxu0 0
        %2972 = vmatprep.subr.bf16.mxu0 0
        %2973 = vmatpush2.bf16.msra.mxu0 0
        %2974 = vmatprep.subr.bf16.mxu0 0
        %2975 = vmatpush2.bf16.msra.mxu0 0
        %2976 = vmatprep.subr.bf16.mxu0 0
        %2977 = vmatpush2.bf16.msra.mxu0 0
        %2978 = vmatprep.subr.bf16.mxu0 0
        %2979 = vmatpush2.bf16.msra.mxu0 0
        %2980 = vmatprep.subr.bf16.mxu0 0
        %2981 = vmatpush2.bf16.msra.mxu0 0
        %2982 = vmatprep.subr.bf16.mxu0 0
        %2983 = vmatpush2.bf16.msra.mxu0 0
        %2984 = vmatprep.mubr.bf16.mxu0 0
        %2985 = vmatmul.mubr.bf16.gmra.mxu0 %v2947
        %v2986 = vpop.f32.mrf.mxu0
        %v2987 = vadd.f32 0.0, %v2986
        %v2988 = vpop.f32.mrf.mxu0
        %v2989 = vpop.f32.mrf.mxu0
        %v2990 = vadd.f32 0.0, %v2989
        %v2991 = vpop.f32.mrf.mxu0
        %2992 = vdwg.mxu0
        %v2996 = vunpack.c.l.b16 %v2785
        %v2997 = vunpack.c.l.b16 %v2786
        %v2998 = vunpack.c.l.b16 %v2787
        %v2999 = vpack.c.b16 %v2997, %v2996
        %v3000 = vpack.c.b16 %v2998, %v2998
        %v3003 = vsel %vm2400, %v2763, 0
        %v3006 = vsel %vm2836, %v3000, 0
        %3008 = vmatprep.subr.bf16.mxu0 0
        %3009 = vmatpush1.bf16.msra.mxu0 0
        %3010 = vmatprep.subr.bf16.mxu0 0
        %3011 = vmatpush1.bf16.msra.mxu0 0
        %3012 = vmatprep.subr.bf16.mxu0 0
        %3013 = vmatpush1.bf16.msra.mxu0 0
        %3014 = vmatprep.subr.bf16.mxu0 0
        %3015 = vmatpush1.bf16.msra.mxu0 0
        %3016 = vmatprep.subr.bf16.mxu0 0
        %3017 = vmatpush1.bf16.msra.mxu0 0
        %3018 = vmatprep.subr.bf16.mxu0 0
        %3019 = vmatpush1.bf16.msra.mxu0 0
        %3020 = vmatprep.subr.bf16.mxu0 0
        %3021 = vmatpush1.bf16.msra.mxu0 %v3006
        %3022 = vmatprep.subr.bf16.mxu0 0
        %3023 = vmatpush1.bf16.msra.mxu0 %v2999
        %3024 = vmatprep.subr.bf16.mxu0 0
        %3025 = vmatpush2.bf16.msra.mxu0 0
        %3026 = vmatprep.subr.bf16.mxu0 0
        %3027 = vmatpush2.bf16.msra.mxu0 0
        %3028 = vmatprep.subr.bf16.mxu0 0
        %3029 = vmatpush2.bf16.msra.mxu0 0
        %3030 = vmatprep.subr.bf16.mxu0 0
        %3031 = vmatpush2.bf16.msra.mxu0 0
        %3032 = vmatprep.subr.bf16.mxu0 0
        %3033 = vmatpush2.bf16.msra.mxu0 0
        %3034 = vmatprep.subr.bf16.mxu0 0
        %3035 = vmatpush2.bf16.msra.mxu0 0
        %3036 = vmatprep.subr.bf16.mxu0 0
        %3037 = vmatpush2.bf16.msra.mxu0 0
        %3038 = vmatprep.subr.bf16.mxu0 0
        %3039 = vmatpush2.bf16.msra.mxu0 0
        %3040 = vmatprep.mubr.bf16.mxu0 0
        %3041 = vmatmul.mubr.bf16.gmra.mxu0 %v3003
        %v3042 = vpop.f32.mrf.mxu0
        %v3043 = vadd.f32 0.0, %v3042
        %v3044 = vpop.f32.mrf.mxu0
        %v3045 = vpop.f32.mrf.mxu0
        %v3046 = vadd.f32 0.0, %v3045
        %v3047 = vpop.f32.mrf.mxu0
        %3048 = vdwg.mxu0
        %v3052 = vunpack.c.l.b16 %v2788
        %v3053 = vunpack.c.l.b16 %v2789
        %v3054 = vunpack.c.l.b16 %v2790
        %v3055 = vpack.c.b16 %v3053, %v3052
        %v3056 = vpack.c.b16 %v3054, %v3054
        %v3059 = vsel %vm2400, %v2764, 0
        %v3062 = vsel %vm2836, %v3056, 0
        %3064 = vmatprep.subr.bf16.mxu0 0
        %3065 = vmatpush1.bf16.msra.mxu0 0
        %3066 = vmatprep.subr.bf16.mxu0 0
        %3067 = vmatpush1.bf16.msra.mxu0 0
        %3068 = vmatprep.subr.bf16.mxu0 0
        %3069 = vmatpush1.bf16.msra.mxu0 0
        %3070 = vmatprep.subr.bf16.mxu0 0
        %3071 = vmatpush1.bf16.msra.mxu0 0
        %3072 = vmatprep.subr.bf16.mxu0 0
        %3073 = vmatpush1.bf16.msra.mxu0 0
        %3074 = vmatprep.subr.bf16.mxu0 0
        %3075 = vmatpush1.bf16.msra.mxu0 0
        %3076 = vmatprep.subr.bf16.mxu0 0
        %3077 = vmatpush1.bf16.msra.mxu0 %v3062
        %3078 = vmatprep.subr.bf16.mxu0 0
        %3079 = vmatpush1.bf16.msra.mxu0 %v3055
        %3080 = vmatprep.subr.bf16.mxu0 0
        %3081 = vmatpush2.bf16.msra.mxu0 0
        %3082 = vmatprep.subr.bf16.mxu0 0
        %3083 = vmatpush2.bf16.msra.mxu0 0
        %3084 = vmatprep.subr.bf16.mxu0 0
        %3085 = vmatpush2.bf16.msra.mxu0 0
        %3086 = vmatprep.subr.bf16.mxu0 0
        %3087 = vmatpush2.bf16.msra.mxu0 0
        %3088 = vmatprep.subr.bf16.mxu0 0
        %3089 = vmatpush2.bf16.msra.mxu0 0
        %3090 = vmatprep.subr.bf16.mxu0 0
        %3091 = vmatpush2.bf16.msra.mxu0 0
        %3092 = vmatprep.subr.bf16.mxu0 0
        %3093 = vmatpush2.bf16.msra.mxu0 0
        %3094 = vmatprep.subr.bf16.mxu0 0
        %3095 = vmatpush2.bf16.msra.mxu0 0
        %3096 = vmatprep.mubr.bf16.mxu0 0
        %3097 = vmatmul.mubr.bf16.gmra.mxu0 %v3059
        %v3098 = vpop.f32.mrf.mxu0
        %v3099 = vadd.f32 0.0, %v3098
        %v3100 = vpop.f32.mrf.mxu0
        %v3101 = vpop.f32.mrf.mxu0
        %v3102 = vadd.f32 0.0, %v3101
        %v3103 = vpop.f32.mrf.mxu0
        %3104 = vdwg.mxu0
        %v3108 = vunpack.c.l.b16 %v2791
        %v3109 = vunpack.c.l.b16 %v2792
        %v3110 = vunpack.c.l.b16 %v2793
        %v3111 = vpack.c.b16 %v3109, %v3108
        %v3112 = vpack.c.b16 %v3110, %v3110
        %v3115 = vsel %vm2400, %v2765, 0
        %v3118 = vsel %vm2836, %v3112, 0
        %3120 = vmatprep.subr.bf16.mxu0 0
        %3121 = vmatpush1.bf16.msra.mxu0 0
        %3122 = vmatprep.subr.bf16.mxu0 0
        %3123 = vmatpush1.bf16.msra.mxu0 0
        %3124 = vmatprep.subr.bf16.mxu0 0
        %3125 = vmatpush1.bf16.msra.mxu0 0
        %3126 = vmatprep.subr.bf16.mxu0 0
        %3127 = vmatpush1.bf16.msra.mxu0 0
        %3128 = vmatprep.subr.bf16.mxu0 0
        %3129 = vmatpush1.bf16.msra.mxu0 0
        %3130 = vmatprep.subr.bf16.mxu0 0
        %3131 = vmatpush1.bf16.msra.mxu0 0
        %3132 = vmatprep.subr.bf16.mxu0 0
        %3133 = vmatpush1.bf16.msra.mxu0 %v3118
        %3134 = vmatprep.subr.bf16.mxu0 0
        %3135 = vmatpush1.bf16.msra.mxu0 %v3111
        %3136 = vmatprep.subr.bf16.mxu0 0
        %3137 = vmatpush2.bf16.msra.mxu0 0
        %3138 = vmatprep.subr.bf16.mxu0 0
        %3139 = vmatpush2.bf16.msra.mxu0 0
        %3140 = vmatprep.subr.bf16.mxu0 0
        %3141 = vmatpush2.bf16.msra.mxu0 0
        %3142 = vmatprep.subr.bf16.mxu0 0
        %3143 = vmatpush2.bf16.msra.mxu0 0
        %3144 = vmatprep.subr.bf16.mxu0 0
        %3145 = vmatpush2.bf16.msra.mxu0 0
        %3146 = vmatprep.subr.bf16.mxu0 0
        %3147 = vmatpush2.bf16.msra.mxu0 0
        %3148 = vmatprep.subr.bf16.mxu0 0
        %3149 = vmatpush2.bf16.msra.mxu0 0
        %3150 = vmatprep.subr.bf16.mxu0 0
        %3151 = vmatpush2.bf16.msra.mxu0 0
        %3152 = vmatprep.mubr.bf16.mxu0 0
        %3153 = vmatmul.mubr.bf16.gmra.mxu0 %v3115
        %v3154 = vpop.f32.mrf.mxu0
        %v3155 = vadd.f32 0.0, %v3154
        %v3156 = vpop.f32.mrf.mxu0
        %v3157 = vpop.f32.mrf.mxu0
        %v3158 = vadd.f32 0.0, %v3157
        %v3159 = vpop.f32.mrf.mxu0
        %3160 = vdwg.mxu0
        %v3164 = vunpack.c.l.b16 %v2794
        %v3165 = vunpack.c.l.b16 %v2795
        %v3166 = vunpack.c.l.b16 %v2796
        %v3167 = vpack.c.b16 %v3165, %v3164
        %v3168 = vpack.c.b16 %v3166, %v3166
        %v3171 = vsel %vm2400, %v2766, 0
        %v3174 = vsel %vm2836, %v3168, 0
        %3176 = vmatprep.subr.bf16.mxu0 0
        %3177 = vmatpush1.bf16.msra.mxu0 0
        %3178 = vmatprep.subr.bf16.mxu0 0
        %3179 = vmatpush1.bf16.msra.mxu0 0
        %3180 = vmatprep.subr.bf16.mxu0 0
        %3181 = vmatpush1.bf16.msra.mxu0 0
        %3182 = vmatprep.subr.bf16.mxu0 0
        %3183 = vmatpush1.bf16.msra.mxu0 0
        %3184 = vmatprep.subr.bf16.mxu0 0
        %3185 = vmatpush1.bf16.msra.mxu0 0
        %3186 = vmatprep.subr.bf16.mxu0 0
        %3187 = vmatpush1.bf16.msra.mxu0 0
        %3188 = vmatprep.subr.bf16.mxu0 0
        %3189 = vmatpush1.bf16.msra.mxu0 %v3174
        %3190 = vmatprep.subr.bf16.mxu0 0
        %3191 = vmatpush1.bf16.msra.mxu0 %v3167
        %3192 = vmatprep.subr.bf16.mxu0 0
        %3193 = vmatpush2.bf16.msra.mxu0 0
        %3194 = vmatprep.subr.bf16.mxu0 0
        %3195 = vmatpush2.bf16.msra.mxu0 0
        %3196 = vmatprep.subr.bf16.mxu0 0
        %3197 = vmatpush2.bf16.msra.mxu0 0
        %3198 = vmatprep.subr.bf16.mxu0 0
        %3199 = vmatpush2.bf16.msra.mxu0 0
        %3200 = vmatprep.subr.bf16.mxu0 0
        %3201 = vmatpush2.bf16.msra.mxu0 0
        %3202 = vmatprep.subr.bf16.mxu0 0
        %3203 = vmatpush2.bf16.msra.mxu0 0
        %3204 = vmatprep.subr.bf16.mxu0 0
        %3205 = vmatpush2.bf16.msra.mxu0 0
        %3206 = vmatprep.subr.bf16.mxu0 0
        %3207 = vmatpush2.bf16.msra.mxu0 0
        %3208 = vmatprep.mubr.bf16.mxu0 0
        %3209 = vmatmul.mubr.bf16.gmra.mxu0 %v3171
        %v3210 = vpop.f32.mrf.mxu0
        %v3211 = vadd.f32 0.0, %v3210
        %v3212 = vpop.f32.mrf.mxu0
        %v3213 = vpop.f32.mrf.mxu0
        %v3214 = vadd.f32 0.0, %v3213
        %v3215 = vpop.f32.mrf.mxu0
        %3216 = vdwg.mxu0
        %v3220 = vunpack.c.l.b16 %v2797
        %v3221 = vunpack.c.l.b16 %v2798
        %v3222 = vunpack.c.l.b16 %v2799
        %v3223 = vpack.c.b16 %v3221, %v3220
        %v3224 = vpack.c.b16 %v3222, %v3222
        %v3227 = vsel %vm2400, %v2767, 0
        %v3230 = vsel %vm2836, %v3224, 0
        %3232 = vmatprep.subr.bf16.mxu0 0
        %3233 = vmatpush1.bf16.msra.mxu0 0
        %3234 = vmatprep.subr.bf16.mxu0 0
        %3235 = vmatpush1.bf16.msra.mxu0 0
        %3236 = vmatprep.subr.bf16.mxu0 0
        %3237 = vmatpush1.bf16.msra.mxu0 0
        %3238 = vmatprep.subr.bf16.mxu0 0
        %3239 = vmatpush1.bf16.msra.mxu0 0
        %3240 = vmatprep.subr.bf16.mxu0 0
        %3241 = vmatpush1.bf16.msra.mxu0 0
        %3242 = vmatprep.subr.bf16.mxu0 0
        %3243 = vmatpush1.bf16.msra.mxu0 0
        %3244 = vmatprep.subr.bf16.mxu0 0
        %3245 = vmatpush1.bf16.msra.mxu0 %v3230
        %3246 = vmatprep.subr.bf16.mxu0 0
        %3247 = vmatpush1.bf16.msra.mxu0 %v3223
        %3248 = vmatprep.subr.bf16.mxu0 0
        %3249 = vmatpush2.bf16.msra.mxu0 0
        %3250 = vmatprep.subr.bf16.mxu0 0
        %3251 = vmatpush2.bf16.msra.mxu0 0
        %3252 = vmatprep.subr.bf16.mxu0 0
        %3253 = vmatpush2.bf16.msra.mxu0 0
        %3254 = vmatprep.subr.bf16.mxu0 0
        %3255 = vmatpush2.bf16.msra.mxu0 0
        %3256 = vmatprep.subr.bf16.mxu0 0
        %3257 = vmatpush2.bf16.msra.mxu0 0
        %3258 = vmatprep.subr.bf16.mxu0 0
        %3259 = vmatpush2.bf16.msra.mxu0 0
        %3260 = vmatprep.subr.bf16.mxu0 0
        %3261 = vmatpush2.bf16.msra.mxu0 0
        %3262 = vmatprep.subr.bf16.mxu0 0
        %3263 = vmatpush2.bf16.msra.mxu0 0
        %3264 = vmatprep.mubr.bf16.mxu0 0
        %3265 = vmatmul.mubr.bf16.gmra.mxu0 %v3227
        %v3266 = vpop.f32.mrf.mxu0
        %v3267 = vadd.f32 0.0, %v3266
        %v3268 = vpop.f32.mrf.mxu0
        %v3269 = vpop.f32.mrf.mxu0
        %v3270 = vadd.f32 0.0, %v3269
        %v3271 = vpop.f32.mrf.mxu0
        %3272 = vdwg.mxu0
        %v3276 = vunpack.c.l.b16 %v2800
        %v3277 = vunpack.c.l.b16 %v2801
        %v3278 = vunpack.c.l.b16 %v2802
        %v3279 = vpack.c.b16 %v3277, %v3276
        %v3280 = vpack.c.b16 %v3278, %v3278
        %v3283 = vsel %vm2400, %v2768, 0
        %v3286 = vsel %vm2836, %v3280, 0
        %3288 = vmatprep.subr.bf16.mxu0 0
        %3289 = vmatpush1.bf16.msra.mxu0 0
        %3290 = vmatprep.subr.bf16.mxu0 0
        %3291 = vmatpush1.bf16.msra.mxu0 0
        %3292 = vmatprep.subr.bf16.mxu0 0
        %3293 = vmatpush1.bf16.msra.mxu0 0
        %3294 = vmatprep.subr.bf16.mxu0 0
        %3295 = vmatpush1.bf16.msra.mxu0 0
        %3296 = vmatprep.subr.bf16.mxu0 0
        %3297 = vmatpush1.bf16.msra.mxu0 0
        %3298 = vmatprep.subr.bf16.mxu0 0
        %3299 = vmatpush1.bf16.msra.mxu0 0
        %3300 = vmatprep.subr.bf16.mxu0 0
        %3301 = vmatpush1.bf16.msra.mxu0 %v3286
        %3302 = vmatprep.subr.bf16.mxu0 0
        %3303 = vmatpush1.bf16.msra.mxu0 %v3279
        %3304 = vmatprep.subr.bf16.mxu0 0
        %3305 = vmatpush2.bf16.msra.mxu0 0
        %3306 = vmatprep.subr.bf16.mxu0 0
        %3307 = vmatpush2.bf16.msra.mxu0 0
        %3308 = vmatprep.subr.bf16.mxu0 0
        %3309 = vmatpush2.bf16.msra.mxu0 0
        %3310 = vmatprep.subr.bf16.mxu0 0
        %3311 = vmatpush2.bf16.msra.mxu0 0
        %3312 = vmatprep.subr.bf16.mxu0 0
        %3313 = vmatpush2.bf16.msra.mxu0 0
        %3314 = vmatprep.subr.bf16.mxu0 0
        %3315 = vmatpush2.bf16.msra.mxu0 0
        %3316 = vmatprep.subr.bf16.mxu0 0
        %3317 = vmatpush2.bf16.msra.mxu0 0
        %3318 = vmatprep.subr.bf16.mxu0 0
        %3319 = vmatpush2.bf16.msra.mxu0 0
        %3320 = vmatprep.mubr.bf16.mxu0 0
        %3321 = vmatmul.mubr.bf16.gmra.mxu0 %v3283
        %v3322 = vpop.f32.mrf.mxu0
        %v3323 = vadd.f32 0.0, %v3322
        %v3324 = vpop.f32.mrf.mxu0
        %v3325 = vpop.f32.mrf.mxu0
        %v3326 = vadd.f32 0.0, %v3325
        %v3327 = vpop.f32.mrf.mxu0
        %3328 = vdwg.mxu0
        %v3332 = vunpack.c.l.b16 %v2803
        %v3333 = vunpack.c.l.b16 %v2804
        %v3334 = vunpack.c.l.b16 %v2805
        %v3335 = vpack.c.b16 %v3333, %v3332
        %v3336 = vpack.c.b16 %v3334, %v3334
        %v3339 = vsel %vm2400, %v2769, 0
        %v3342 = vsel %vm2836, %v3336, 0
        %3344 = vmatprep.subr.bf16.mxu0 0
        %3345 = vmatpush1.bf16.msra.mxu0 0
        %3346 = vmatprep.subr.bf16.mxu0 0
        %3347 = vmatpush1.bf16.msra.mxu0 0
        %3348 = vmatprep.subr.bf16.mxu0 0
        %3349 = vmatpush1.bf16.msra.mxu0 0
        %3350 = vmatprep.subr.bf16.mxu0 0
        %3351 = vmatpush1.bf16.msra.mxu0 0
        %3352 = vmatprep.subr.bf16.mxu0 0
        %3353 = vmatpush1.bf16.msra.mxu0 0
        %3354 = vmatprep.subr.bf16.mxu0 0
        %3355 = vmatpush1.bf16.msra.mxu0 0
        %3356 = vmatprep.subr.bf16.mxu0 0
        %3357 = vmatpush1.bf16.msra.mxu0 %v3342
        %3358 = vmatprep.subr.bf16.mxu0 0
        %3359 = vmatpush1.bf16.msra.mxu0 %v3335
        %3360 = vmatprep.subr.bf16.mxu0 0
        %3361 = vmatpush2.bf16.msra.mxu0 0
        %3362 = vmatprep.subr.bf16.mxu0 0
        %3363 = vmatpush2.bf16.msra.mxu0 0
        %3364 = vmatprep.subr.bf16.mxu0 0
        %3365 = vmatpush2.bf16.msra.mxu0 0
        %3366 = vmatprep.subr.bf16.mxu0 0
        %3367 = vmatpush2.bf16.msra.mxu0 0
        %3368 = vmatprep.subr.bf16.mxu0 0
        %3369 = vmatpush2.bf16.msra.mxu0 0
        %3370 = vmatprep.subr.bf16.mxu0 0
        %3371 = vmatpush2.bf16.msra.mxu0 0
        %3372 = vmatprep.subr.bf16.mxu0 0
        %3373 = vmatpush2.bf16.msra.mxu0 0
        %3374 = vmatprep.subr.bf16.mxu0 0
        %3375 = vmatpush2.bf16.msra.mxu0 0
        %3376 = vmatprep.mubr.bf16.mxu0 0
        %3377 = vmatmul.mubr.bf16.gmra.mxu0 %v3339
        %v3378 = vpop.f32.mrf.mxu0
        %v3379 = vadd.f32 0.0, %v3378
        %v3380 = vpop.f32.mrf.mxu0
        %v3381 = vpop.f32.mrf.mxu0
        %v3382 = vadd.f32 0.0, %v3381
        %v3383 = vpop.f32.mrf.mxu0
        %3384 = vdwg.mxu0
        %v3388 = vunpack.c.l.b16 %v2806
        %v3389 = vunpack.c.l.b16 %v2807
        %v3390 = vunpack.c.l.b16 %v2808
        %v3391 = vpack.c.b16 %v3389, %v3388
        %v3392 = vpack.c.b16 %v3390, %v3390
        %v3395 = vsel %vm2400, %v2770, 0
        %v3398 = vsel %vm2836, %v3392, 0
        %3400 = vmatprep.subr.bf16.mxu0 0
        %3401 = vmatpush1.bf16.msra.mxu0 0
        %3402 = vmatprep.subr.bf16.mxu0 0
        %3403 = vmatpush1.bf16.msra.mxu0 0
        %3404 = vmatprep.subr.bf16.mxu0 0
        %3405 = vmatpush1.bf16.msra.mxu0 0
        %3406 = vmatprep.subr.bf16.mxu0 0
        %3407 = vmatpush1.bf16.msra.mxu0 0
        %3408 = vmatprep.subr.bf16.mxu0 0
        %3409 = vmatpush1.bf16.msra.mxu0 0
        %3410 = vmatprep.subr.bf16.mxu0 0
        %3411 = vmatpush1.bf16.msra.mxu0 0
        %3412 = vmatprep.subr.bf16.mxu0 0
        %3413 = vmatpush1.bf16.msra.mxu0 %v3398
        %3414 = vmatprep.subr.bf16.mxu0 0
        %3415 = vmatpush1.bf16.msra.mxu0 %v3391
        %3416 = vmatprep.subr.bf16.mxu0 0
        %3417 = vmatpush2.bf16.msra.mxu0 0
        %3418 = vmatprep.subr.bf16.mxu0 0
        %3419 = vmatpush2.bf16.msra.mxu0 0
        %3420 = vmatprep.subr.bf16.mxu0 0
        %3421 = vmatpush2.bf16.msra.mxu0 0
        %3422 = vmatprep.subr.bf16.mxu0 0
        %3423 = vmatpush2.bf16.msra.mxu0 0
        %3424 = vmatprep.subr.bf16.mxu0 0
        %3425 = vmatpush2.bf16.msra.mxu0 0
        %3426 = vmatprep.subr.bf16.mxu0 0
        %3427 = vmatpush2.bf16.msra.mxu0 0
        %3428 = vmatprep.subr.bf16.mxu0 0
        %3429 = vmatpush2.bf16.msra.mxu0 0
        %3430 = vmatprep.subr.bf16.mxu0 0
        %3431 = vmatpush2.bf16.msra.mxu0 0
        %3432 = vmatprep.mubr.bf16.mxu0 0
        %3433 = vmatmul.mubr.bf16.gmra.mxu0 %v3395
        %v3434 = vpop.f32.mrf.mxu0
        %v3435 = vadd.f32 0.0, %v3434
        %v3436 = vpop.f32.mrf.mxu0
        %v3437 = vpop.f32.mrf.mxu0
        %v3438 = vadd.f32 0.0, %v3437
        %v3439 = vpop.f32.mrf.mxu0
        %3440 = vdwg.mxu0
        %v3444 = vunpack.c.l.b16 %v2809
        %v3445 = vunpack.c.l.b16 %v2810
        %v3446 = vunpack.c.l.b16 %v2811
        %v3447 = vpack.c.b16 %v3445, %v3444
        %v3448 = vpack.c.b16 %v3446, %v3446
        %v3451 = vsel %vm2400, %v2771, 0
        %v3454 = vsel %vm2836, %v3448, 0
        %3456 = vmatprep.subr.bf16.mxu0 0
        %3457 = vmatpush1.bf16.msra.mxu0 0
        %3458 = vmatprep.subr.bf16.mxu0 0
        %3459 = vmatpush1.bf16.msra.mxu0 0
        %3460 = vmatprep.subr.bf16.mxu0 0
        %3461 = vmatpush1.bf16.msra.mxu0 0
        %3462 = vmatprep.subr.bf16.mxu0 0
        %3463 = vmatpush1.bf16.msra.mxu0 0
        %3464 = vmatprep.subr.bf16.mxu0 0
        %3465 = vmatpush1.bf16.msra.mxu0 0
        %3466 = vmatprep.subr.bf16.mxu0 0
        %3467 = vmatpush1.bf16.msra.mxu0 0
        %3468 = vmatprep.subr.bf16.mxu0 0
        %3469 = vmatpush1.bf16.msra.mxu0 %v3454
        %3470 = vmatprep.subr.bf16.mxu0 0
        %3471 = vmatpush1.bf16.msra.mxu0 %v3447
        %3472 = vmatprep.subr.bf16.mxu0 0
        %3473 = vmatpush2.bf16.msra.mxu0 0
        %3474 = vmatprep.subr.bf16.mxu0 0
        %3475 = vmatpush2.bf16.msra.mxu0 0
        %3476 = vmatprep.subr.bf16.mxu0 0
        %3477 = vmatpush2.bf16.msra.mxu0 0
        %3478 = vmatprep.subr.bf16.mxu0 0
        %3479 = vmatpush2.bf16.msra.mxu0 0
        %3480 = vmatprep.subr.bf16.mxu0 0
        %3481 = vmatpush2.bf16.msra.mxu0 0
        %3482 = vmatprep.subr.bf16.mxu0 0
        %3483 = vmatpush2.bf16.msra.mxu0 0
        %3484 = vmatprep.subr.bf16.mxu0 0
        %3485 = vmatpush2.bf16.msra.mxu0 0
        %3486 = vmatprep.subr.bf16.mxu0 0
        %3487 = vmatpush2.bf16.msra.mxu0 0
        %3488 = vmatprep.mubr.bf16.mxu0 0
        %3489 = vmatmul.mubr.bf16.gmra.mxu0 %v3451
        %v3490 = vpop.f32.mrf.mxu0
        %v3491 = vadd.f32 0.0, %v3490
        %v3492 = vpop.f32.mrf.mxu0
        %v3493 = vpop.f32.mrf.mxu0
        %v3494 = vadd.f32 0.0, %v3493
        %v3495 = vpop.f32.mrf.mxu0
        %3496 = vdwg.mxu0
        %v3500 = vunpack.c.l.b16 %v2812
        %v3501 = vunpack.c.l.b16 %v2813
        %v3502 = vunpack.c.l.b16 %v2814
        %v3503 = vpack.c.b16 %v3501, %v3500
        %v3504 = vpack.c.b16 %v3502, %v3502
        %v3507 = vsel %vm2400, %v2772, 0
        %v3510 = vsel %vm2836, %v3504, 0
        %3512 = vmatprep.subr.bf16.mxu0 0
        %3513 = vmatpush1.bf16.msra.mxu0 0
        %3514 = vmatprep.subr.bf16.mxu0 0
        %3515 = vmatpush1.bf16.msra.mxu0 0
        %3516 = vmatprep.subr.bf16.mxu0 0
        %3517 = vmatpush1.bf16.msra.mxu0 0
        %3518 = vmatprep.subr.bf16.mxu0 0
        %3519 = vmatpush1.bf16.msra.mxu0 0
        %3520 = vmatprep.subr.bf16.mxu0 0
        %3521 = vmatpush1.bf16.msra.mxu0 0
        %3522 = vmatprep.subr.bf16.mxu0 0
        %3523 = vmatpush1.bf16.msra.mxu0 0
        %3524 = vmatprep.subr.bf16.mxu0 0
        %3525 = vmatpush1.bf16.msra.mxu0 %v3510
        %3526 = vmatprep.subr.bf16.mxu0 0
        %3527 = vmatpush1.bf16.msra.mxu0 %v3503
        %3528 = vmatprep.subr.bf16.mxu0 0
        %3529 = vmatpush2.bf16.msra.mxu0 0
        %3530 = vmatprep.subr.bf16.mxu0 0
        %3531 = vmatpush2.bf16.msra.mxu0 0
        %3532 = vmatprep.subr.bf16.mxu0 0
        %3533 = vmatpush2.bf16.msra.mxu0 0
        %3534 = vmatprep.subr.bf16.mxu0 0
        %3535 = vmatpush2.bf16.msra.mxu0 0
        %3536 = vmatprep.subr.bf16.mxu0 0
        %3537 = vmatpush2.bf16.msra.mxu0 0
        %3538 = vmatprep.subr.bf16.mxu0 0
        %3539 = vmatpush2.bf16.msra.mxu0 0
        %3540 = vmatprep.subr.bf16.mxu0 0
        %3541 = vmatpush2.bf16.msra.mxu0 0
        %3542 = vmatprep.subr.bf16.mxu0 0
        %3543 = vmatpush2.bf16.msra.mxu0 0
        %3544 = vmatprep.mubr.bf16.mxu0 0
        %3545 = vmatmul.mubr.bf16.gmra.mxu0 %v3507
        %v3546 = vpop.f32.mrf.mxu0
        %v3547 = vadd.f32 0.0, %v3546
        %v3548 = vpop.f32.mrf.mxu0
        %v3549 = vpop.f32.mrf.mxu0
        %v3550 = vadd.f32 0.0, %v3549
        %v3551 = vpop.f32.mrf.mxu0
        %3552 = vdwg.mxu0
        %v3556 = vunpack.c.l.b16 %v2815
        %v3557 = vunpack.c.l.b16 %v2816
        %v3558 = vunpack.c.l.b16 %v2817
        %v3559 = vpack.c.b16 %v3557, %v3556
        %v3560 = vpack.c.b16 %v3558, %v3558
        %v3563 = vsel %vm2400, %v2773, 0
        %v3566 = vsel %vm2836, %v3560, 0
        %3568 = vmatprep.subr.bf16.mxu0 0
        %3569 = vmatpush1.bf16.msra.mxu0 0
        %3570 = vmatprep.subr.bf16.mxu0 0
        %3571 = vmatpush1.bf16.msra.mxu0 0
        %3572 = vmatprep.subr.bf16.mxu0 0
        %3573 = vmatpush1.bf16.msra.mxu0 0
        %3574 = vmatprep.subr.bf16.mxu0 0
        %3575 = vmatpush1.bf16.msra.mxu0 0
        %3576 = vmatprep.subr.bf16.mxu0 0
        %3577 = vmatpush1.bf16.msra.mxu0 0
        %3578 = vmatprep.subr.bf16.mxu0 0
        %3579 = vmatpush1.bf16.msra.mxu0 0
        %3580 = vmatprep.subr.bf16.mxu0 0
        %3581 = vmatpush1.bf16.msra.mxu0 %v3566
        %3582 = vmatprep.subr.bf16.mxu0 0
        %3583 = vmatpush1.bf16.msra.mxu0 %v3559
        %3584 = vmatprep.subr.bf16.mxu0 0
        %3585 = vmatpush2.bf16.msra.mxu0 0
        %3586 = vmatprep.subr.bf16.mxu0 0
        %3587 = vmatpush2.bf16.msra.mxu0 0
        %3588 = vmatprep.subr.bf16.mxu0 0
        %3589 = vmatpush2.bf16.msra.mxu0 0
        %3590 = vmatprep.subr.bf16.mxu0 0
        %3591 = vmatpush2.bf16.msra.mxu0 0
        %3592 = vmatprep.subr.bf16.mxu0 0
        %3593 = vmatpush2.bf16.msra.mxu0 0
        %3594 = vmatprep.subr.bf16.mxu0 0
        %3595 = vmatpush2.bf16.msra.mxu0 0
        %3596 = vmatprep.subr.bf16.mxu0 0
        %3597 = vmatpush2.bf16.msra.mxu0 0
        %3598 = vmatprep.subr.bf16.mxu0 0
        %3599 = vmatpush2.bf16.msra.mxu0 0
        %3600 = vmatprep.mubr.bf16.mxu0 0
        %3601 = vmatmul.mubr.bf16.gmra.mxu0 %v3563
        %v3602 = vpop.f32.mrf.mxu0
        %v3603 = vadd.f32 0.0, %v3602
        %v3604 = vpop.f32.mrf.mxu0
        %v3605 = vpop.f32.mrf.mxu0
        %v3606 = vadd.f32 0.0, %v3605
        %v3607 = vpop.f32.mrf.mxu0
        %3608 = vdwg.mxu0
        %v3612 = vunpack.c.l.b16 %v2818
        %v3613 = vunpack.c.l.b16 %v2819
        %v3614 = vunpack.c.l.b16 %v2820
        %v3615 = vpack.c.b16 %v3613, %v3612
        %v3616 = vpack.c.b16 %v3614, %v3614
        %v3619 = vsel %vm2400, %v2774, 0
        %v3622 = vsel %vm2836, %v3616, 0
        %3624 = vmatprep.subr.bf16.mxu0 0
        %3625 = vmatpush1.bf16.msra.mxu0 0
        %3626 = vmatprep.subr.bf16.mxu0 0
        %3627 = vmatpush1.bf16.msra.mxu0 0
        %3628 = vmatprep.subr.bf16.mxu0 0
        %3629 = vmatpush1.bf16.msra.mxu0 0
        %3630 = vmatprep.subr.bf16.mxu0 0
        %3631 = vmatpush1.bf16.msra.mxu0 0
        %3632 = vmatprep.subr.bf16.mxu0 0
        %3633 = vmatpush1.bf16.msra.mxu0 0
        %3634 = vmatprep.subr.bf16.mxu0 0
        %3635 = vmatpush1.bf16.msra.mxu0 0
        %3636 = vmatprep.subr.bf16.mxu0 0
        %3637 = vmatpush1.bf16.msra.mxu0 %v3622
        %3638 = vmatprep.subr.bf16.mxu0 0
        %3639 = vmatpush1.bf16.msra.mxu0 %v3615
        %3640 = vmatprep.subr.bf16.mxu0 0
        %3641 = vmatpush2.bf16.msra.mxu0 0
        %3642 = vmatprep.subr.bf16.mxu0 0
        %3643 = vmatpush2.bf16.msra.mxu0 0
        %3644 = vmatprep.subr.bf16.mxu0 0
        %3645 = vmatpush2.bf16.msra.mxu0 0
        %3646 = vmatprep.subr.bf16.mxu0 0
        %3647 = vmatpush2.bf16.msra.mxu0 0
        %3648 = vmatprep.subr.bf16.mxu0 0
        %3649 = vmatpush2.bf16.msra.mxu0 0
        %3650 = vmatprep.subr.bf16.mxu0 0
        %3651 = vmatpush2.bf16.msra.mxu0 0
        %3652 = vmatprep.subr.bf16.mxu0 0
        %3653 = vmatpush2.bf16.msra.mxu0 0
        %3654 = vmatprep.subr.bf16.mxu0 0
        %3655 = vmatpush2.bf16.msra.mxu0 0
        %3656 = vmatprep.mubr.bf16.mxu0 0
        %3657 = vmatmul.mubr.bf16.gmra.mxu0 %v3619
        %v3658 = vpop.f32.mrf.mxu0
        %v3659 = vadd.f32 0.0, %v3658
        %v3660 = vpop.f32.mrf.mxu0
        %v3661 = vpop.f32.mrf.mxu0
        %v3662 = vadd.f32 0.0, %v3661
        %v3663 = vpop.f32.mrf.mxu0
        %3664 = vdwg.mxu0
        %v3668 = vunpack.c.l.b16 %v2821
        %v3669 = vunpack.c.l.b16 %v2822
        %v3670 = vunpack.c.l.b16 %v2823
        %v3671 = vpack.c.b16 %v3669, %v3668
        %v3672 = vpack.c.b16 %v3670, %v3670
        %v3675 = vsel %vm2400, %v2775, 0
        %v3678 = vsel %vm2836, %v3672, 0
        %3680 = vmatprep.subr.bf16.mxu0 0
        %3681 = vmatpush1.bf16.msra.mxu0 0
        %3682 = vmatprep.subr.bf16.mxu0 0
        %3683 = vmatpush1.bf16.msra.mxu0 0
        %3684 = vmatprep.subr.bf16.mxu0 0
        %3685 = vmatpush1.bf16.msra.mxu0 0
        %3686 = vmatprep.subr.bf16.mxu0 0
        %3687 = vmatpush1.bf16.msra.mxu0 0
        %3688 = vmatprep.subr.bf16.mxu0 0
        %3689 = vmatpush1.bf16.msra.mxu0 0
        %3690 = vmatprep.subr.bf16.mxu0 0
        %3691 = vmatpush1.bf16.msra.mxu0 0
        %3692 = vmatprep.subr.bf16.mxu0 0
        %3693 = vmatpush1.bf16.msra.mxu0 %v3678
        %3694 = vmatprep.subr.bf16.mxu0 0
        %3695 = vmatpush1.bf16.msra.mxu0 %v3671
        %3696 = vmatprep.subr.bf16.mxu0 0
        %3697 = vmatpush2.bf16.msra.mxu0 0
        %3698 = vmatprep.subr.bf16.mxu0 0
        %3699 = vmatpush2.bf16.msra.mxu0 0
        %3700 = vmatprep.subr.bf16.mxu0 0
        %3701 = vmatpush2.bf16.msra.mxu0 0
        %3702 = vmatprep.subr.bf16.mxu0 0
        %3703 = vmatpush2.bf16.msra.mxu0 0
        %3704 = vmatprep.subr.bf16.mxu0 0
        %3705 = vmatpush2.bf16.msra.mxu0 0
        %3706 = vmatprep.subr.bf16.mxu0 0
        %3707 = vmatpush2.bf16.msra.mxu0 0
        %3708 = vmatprep.subr.bf16.mxu0 0
        %3709 = vmatpush2.bf16.msra.mxu0 0
        %3710 = vmatprep.subr.bf16.mxu0 0
        %3711 = vmatpush2.bf16.msra.mxu0 0
        %3712 = vmatprep.mubr.bf16.mxu0 0
        %3713 = vmatmul.mubr.bf16.gmra.mxu0 %v3675
        %v3714 = vpop.f32.mrf.mxu0
        %v3715 = vadd.f32 0.0, %v3714
        %v3716 = vpop.f32.mrf.mxu0
        %v3717 = vpop.f32.mrf.mxu0
        %v3718 = vadd.f32 0.0, %v3717
        %v3719 = vpop.f32.mrf.mxu0
        %3720 = vdwg.mxu0
        %vm3721 = vcmask 408576
        %v3722 = vsel %vm3721, %v2875, 0.0
        %v3723 = vsel %vm3721, %v2931, 0.0
        %v3724 = vadd.f32 %v3722, %v3723
        %v3725 = vsel %vm3721, %v2987, 0.0
        %v3726 = vadd.f32 %v3724, %v3725
        %v3727 = vsel %vm3721, %v3043, 0.0
        %v3728 = vadd.f32 %v3726, %v3727
        %v3729 = vsel %vm3721, %v3099, 0.0
        %v3730 = vadd.f32 %v3728, %v3729
        %v3731 = vsel %vm3721, %v3155, 0.0
        %v3732 = vadd.f32 %v3730, %v3731
        %v3733 = vsel %vm3721, %v3211, 0.0
        %v3734 = vadd.f32 %v3732, %v3733
        %v3735 = vsel %vm3721, %v3267, 0.0
        %v3736 = vadd.f32 %v3734, %v3735
        %v3737 = vsel %vm3721, %v3323, 0.0
        %v3738 = vadd.f32 %v3736, %v3737
        %v3739 = vsel %vm3721, %v3379, 0.0
        %v3740 = vadd.f32 %v3738, %v3739
        %v3741 = vsel %vm3721, %v3435, 0.0
        %v3742 = vadd.f32 %v3740, %v3741
        %v3743 = vsel %vm3721, %v3491, 0.0
        %v3744 = vadd.f32 %v3742, %v3743
        %v3745 = vsel %vm3721, %v3547, 0.0
        %v3746 = vadd.f32 %v3744, %v3745
        %v3747 = vsel %vm3721, %v3603, 0.0
        %v3748 = vadd.f32 %v3746, %v3747
        %v3749 = vsel %vm3721, %v3659, 0.0
        %v3750 = vadd.f32 %v3748, %v3749
        %v3751 = vsel %vm3721, %v3715, 0.0
        %v3752 = vadd.f32 %v3750, %v3751
        %v3753 = vsel %vm3721, %v2878, 0.0
        %v3754 = vsel %vm3721, %v2934, 0.0
        %v3755 = vadd.f32 %v3753, %v3754
        %v3756 = vsel %vm3721, %v2990, 0.0
        %v3757 = vadd.f32 %v3755, %v3756
        %v3758 = vsel %vm3721, %v3046, 0.0
        %v3759 = vadd.f32 %v3757, %v3758
        %v3760 = vsel %vm3721, %v3102, 0.0
        %v3761 = vadd.f32 %v3759, %v3760
        %v3762 = vsel %vm3721, %v3158, 0.0
        %v3763 = vadd.f32 %v3761, %v3762
        %v3764 = vsel %vm3721, %v3214, 0.0
        %v3765 = vadd.f32 %v3763, %v3764
        %v3766 = vsel %vm3721, %v3270, 0.0
        %v3767 = vadd.f32 %v3765, %v3766
        %v3768 = vsel %vm3721, %v3326, 0.0
        %v3769 = vadd.f32 %v3767, %v3768
        %v3770 = vsel %vm3721, %v3382, 0.0
        %v3771 = vadd.f32 %v3769, %v3770
        %v3772 = vsel %vm3721, %v3438, 0.0
        %v3773 = vadd.f32 %v3771, %v3772
        %v3774 = vsel %vm3721, %v3494, 0.0
        %v3775 = vadd.f32 %v3773, %v3774
        %v3776 = vsel %vm3721, %v3550, 0.0
        %v3777 = vadd.f32 %v3775, %v3776
        %v3778 = vsel %vm3721, %v3606, 0.0
        %v3779 = vadd.f32 %v3777, %v3778
        %v3780 = vsel %vm3721, %v3662, 0.0
        %v3781 = vadd.f32 %v3779, %v3780
        %v3782 = vsel %vm3721, %v3718, 0.0
        %v3783 = vadd.f32 %v3781, %v3782
        %v3784 = vld [vmem:[%s4] sm:$0x1]
        %v3786 = vlaneseq
        %v3787 = vshrl.u32 %v3786, 7
        %v3788 = vsub.s32 0, %v3787
        %v3789 = vrot.slane %v3784, %v3788
        %v3791 = vadd.f32 %v3752, %v3789
        %v3792 = vadd.f32 %v3783, %v3789
        %v3793 = vmax.f32 %v3791, 0.0
        %v3794 = vmax.f32 %v3792, 0.0
        %v3795 = vpack.c.bf16 %v3794, %v3793
        %v3796 = vld [vmem:[%s5] sm:$0xf]
        %v3797 = vld [vmem:[%s5 + $0x4] sm:$0xf]
        %v3798 = vld [vmem:[%s5 + $0x8] sm:$0xf]
        %v3799 = vld [vmem:[%s5 + $0xc] sm:$0xf]
        %v3800 = vld [vmem:[%s5 + $0x10] sm:$0xf]
        %v3801 = vld [vmem:[%s5 + $0x14] sm:$0xf]
        %v3802 = vld [vmem:[%s5 + $0x18] sm:$0x1]
        %v3803 = vld [vmem:[%s6] sm:$0x1]
        %v3805 = vlaneseq
        %v3806 = vshrl.u32 %v3805, 7
        %v3807 = vsub.s32 0, %v3806
        %v3808 = vrot.slane %v3803, %v3807
        %v3817 = vunpack.c.l.b16 %v3796
        %v3818 = vunpack.c.l.b16 %v3797
        %v3819 = vunpack.c.l.b16 %v3798
        %v3820 = vunpack.c.l.b16 %v3799
        %v3821 = vunpack.c.l.b16 %v3800
        %v3822 = vunpack.c.l.b16 %v3801
        %v3823 = vunpack.c.l.b16 %v3802
        %v3824 = vpack.c.b16 %v3818, %v3817
        %v3825 = vpack.c.b16 %v3820, %v3819
        %v3826 = vpack.c.b16 %v3822, %v3821
        %v3827 = vpack.c.b16 %v3823, %v3823
        %v3832 = vsel %vm3721, %v3795, 0
        %vm3834 = vcmask 1040384
        %v3836 = vsel %vm3834, %v3827, 0
        %3838 = vmatprep.subr.bf16.mxu0 0
        %3839 = vmatpush1.bf16.msra.mxu0 0
        %3840 = vmatprep.subr.bf16.mxu0 0
        %3841 = vmatpush1.bf16.msra.mxu0 0
        %3842 = vmatprep.subr.bf16.mxu0 0
        %3843 = vmatpush1.bf16.msra.mxu0 0
        %3844 = vmatprep.subr.bf16.mxu0 0
        %3845 = vmatpush1.bf16.msra.mxu0 0
        %3846 = vmatprep.subr.bf16.mxu0 0
        %3847 = vmatpush1.bf16.msra.mxu0 %v3836
        %3848 = vmatprep.subr.bf16.mxu0 0
        %3849 = vmatpush1.bf16.msra.mxu0 %v3826
        %3850 = vmatprep.subr.bf16.mxu0 0
        %3851 = vmatpush1.bf16.msra.mxu0 %v3825
        %3852 = vmatprep.subr.bf16.mxu0 0
        %3853 = vmatpush1.bf16.msra.mxu0 %v3824
        %3854 = vmatprep.subr.bf16.mxu0 0
        %3855 = vmatpush2.bf16.msra.mxu0 0
        %3856 = vmatprep.subr.bf16.mxu0 0
        %3857 = vmatpush2.bf16.msra.mxu0 0
        %3858 = vmatprep.subr.bf16.mxu0 0
        %3859 = vmatpush2.bf16.msra.mxu0 0
        %3860 = vmatprep.subr.bf16.mxu0 0
        %3861 = vmatpush2.bf16.msra.mxu0 0
        %3862 = vmatprep.subr.bf16.mxu0 0
        %3863 = vmatpush2.bf16.msra.mxu0 0
        %3864 = vmatprep.subr.bf16.mxu0 0
        %3865 = vmatpush2.bf16.msra.mxu0 0
        %3866 = vmatprep.subr.bf16.mxu0 0
        %3867 = vmatpush2.bf16.msra.mxu0 0
        %3868 = vmatprep.subr.bf16.mxu0 0
        %3869 = vmatpush2.bf16.msra.mxu0 0
        %3870 = vmatprep.mubr.bf16.mxu0 0
        %3871 = vmatmul.mubr.bf16.gmra.mxu0 %v3832
        %v3872 = vpop.f32.mrf.mxu0
        %v3873 = vadd.f32 %v3808, %v3872
        %v3874 = vpop.f32.mrf.mxu0
        %v3875 = vpop.f32.mrf.mxu0
        %v3876 = vadd.f32 %v3808, %v3875
        %v3877 = vpop.f32.mrf.mxu0
        %3878 = vdwg.mxu0
        %vm3879 = vcmask 80896
        %v3880 = vsel %vm3879, %v3873, -inf
        %3881 = vmax.xlane.f32.xlu0 %v3880
        %v3882 = vpop.xlane.xlu0 %3881
        %v3883 = vsel %vm3879, %v3876, -inf
        %3884 = vmax.xlane.f32.xlu0 %v3883
        %v3885 = vpop.xlane.xlu0 %3884
        %v3886 = vsub.f32 %v3873, %v3882
        %v3887 = vsub.f32 %v3876, %v3885
        %v3888 = vmul.f32 %v3886, 1.442695
        %v3889 = vpow.pop %v3888
        %v3890 = vmul.f32 %v3887, 1.442695
        %v3891 = vpow.pop %v3890
        %v3892 = vsel %vm3879, %v3889, 0.0
        %3893 = vadd.xlane.f32.xlu0 %v3892
        %v3894 = vpop.xlane.xlu0 %3893
        %v3895 = vsel %vm3879, %v3891, 0.0
        %3896 = vadd.xlane.f32.xlu0 %v3895
        %v3897 = vpop.xlane.xlu0 %3896
        %v3898 = vlog2.pop %v3894
        %v3899 = vmul.f32 %v3898, 0.6931472
        %v3900 = vlog2.pop %v3897
        %v3901 = vmul.f32 %v3900, 0.6931472
        %v3902 = vadd.f32 %v3882, %v3899
        %v3903 = vadd.f32 %v3885, %v3901
        %v3904 = vsub.f32 %v3873, %v3902
        %v3905 = vsub.f32 %v3876, %v3903
        %3906 = vst.msk [vmem:[%s824] sm:$0xff] %vm3879, %v3904
        %3907 = vst.msk [vmem:[%s824 + $0x8] sm:$0xff] %vm3879, %v3905
        %s3908 = smul.u32 2, %s18
        %p3909 = scmp.lt.s32.totalorder %s3908, 3
        %s3910 = scalar_select %p3909, %s3908, 3
        %s3911 = smul.addr %s3910, 8
        %s3912 = scalar_lea.vmem %s7, %s3911
        // Predicated region
        $region87: #{model_forward.3} parent=81 // pred_check
          %p3913 = pneg %p188
        $region88: #{model_forward.3} parent=81 // pred_check_branch
          %3915 = sbr.rel (%p3913) target = $region90
        $region89: #{model_forward.3} parent=81 // pred_region
          %s3916 = smul.u32 2, %s18
        $region90: #{model_forward.3} parent=81 // pred_fallthru
          _
      $region82: #{model_forward.3} parent=5 // pred_fallthru
        _
      %p3917 = scmp.le.s32.totalorder 2, %s13
      // Predicated region
      $region91: #{model_forward.3} parent=5 // pred_check
        %p3918 = pneg %p3917
      $region92: #{model_forward.3} parent=5 // pred_check_branch
        %3920 = sbr.rel (%p3918) target = $region94
      $region93: #{model_forward.3} parent=5 // pred_region
        %s3921 = ssub.s32 %s13, 2
        // Predicated region
        $region95: #{model_forward.3} parent=93 // pred_check
          %p3922 = pneg %p194
        $region96: #{model_forward.3} parent=93 // pred_check_branch
          %3924 = sbr.rel (%p3922) target = $region98
        $region97: #{model_forward.3} parent=93 // pred_region
          %s3925 = smul.u32 2, %s19
          %p3926 = scmp.lt.s32.totalorder %s3925, 3
          %s3927 = scalar_select %p3926, %s3925, 3
          %s3928 = smul.addr %s3927, 8
          %s3929 = scalar_lea.vmem %s7, %s3928
        $region98: #{model_forward.3} parent=93 // pred_fallthru
          _
      $region94: #{model_forward.3} parent=5 // pred_fallthru
        _
    $region6: #{model_forward.3} parent=1 // loop_footer
      %s17 = sadd.s32 1, %s13
    $region7: #{model_forward.3} parent=1 // loop_footer_branch
      %12 = sbr.rel target = $region3
    $region8: #{model_forward.3} parent=1 // loop_exit
      _

</llo_original>
